<compile_context>
chip_gen: v5e
topology: v5e:2x2
jax: 0.10.0
libtpu: 0.0.40
codegen_flags: <defaults>
</compile_context>

<pallas_src>
import functools

import jax
import jax.numpy as jnp
from jax.experimental import pallas as pl
from jax.experimental.pallas import tpu as pltpu

TM = 512      # im2col rows per grid step (amortizes per-step overhead)
EPS = 1e-5


# ----------------------------------------------------------------------------
# Fused Pallas kernel:  out = PReLU( X @ W + b )     (BN pre-folded into W, b)
# ----------------------------------------------------------------------------
def _fused_matmul_kernel(x_ref, w_ref, b_ref, a_ref, o_ref, *, n_first):
    y = jnp.dot(x_ref[...], w_ref[...], preferred_element_type=jnp.float32)
    y = y + b_ref[...]                         # (1, N) f32 bias (BN shift folded)
    n = y.shape[-1]
    if n_first >= n:                           # single PReLU slope for the layer
        alpha = a_ref[0]
    else:                                      # merged layer: two column groups
        col = jax.lax.broadcasted_iota(jnp.int32, (1, n), 1)
        alpha = jnp.where(col < n_first, a_ref[0], a_ref[1])
    o_ref[...] = jnp.where(y >= 0.0, y, alpha * y).astype(o_ref.dtype)


def fused_layer(x, w, b, alpha2, n_first=None, out_dtype=jnp.bfloat16):
    """x:(M,K), w:(K,N) bf16 (BN folded), b:(1,N) f32, alpha2:(2,) f32 in SMEM."""
    M, K = x.shape
    N = w.shape[1]
    if n_first is None:
        n_first = N
    x = x.astype(jnp.bfloat16)
    if M <= TM:
        bm, grid_m = M, 1
    else:
        bm, grid_m = TM, pl.cdiv(M, TM)        # ragged last block is masked

    return pl.pallas_call(
        functools.partial(_fused_matmul_kernel, n_first=n_first),
        out_shape=jax.ShapeDtypeStruct((M, N), out_dtype),
        grid=(grid_m,),
        in_specs=[
            pl.BlockSpec((bm, K), lambda i: (i, 0)),
            pl.BlockSpec((K, N), lambda i: (0, 0)),   # weights stay VMEM-resident
            pl.BlockSpec((1, N), lambda i: (0, 0)),
            pl.BlockSpec(memory_space=pltpu.MemorySpace.SMEM),   # PReLU slopes
        ],
        out_specs=pl.BlockSpec((bm, N), lambda i: (i, 0)),
        compiler_params=pltpu.CompilerParams(dimension_semantics=("parallel",)),
    )(x, w, b, alpha2)


# ----------------------------------------------------------------------------
# Fused FC head kernel: 3 chained matmuls (+PReLU x2, optional softmax)
# ----------------------------------------------------------------------------
def _head_kernel(x_ref, w1_ref, b1_ref, w2_ref, b2_ref, w3_ref, b3_ref, a_ref,
                 o_ref, *, softmax):
    y = jnp.dot(x_ref[...], w1_ref[...], preferred_element_type=jnp.float32)
    y = y + b1_ref[...]
    y = jnp.where(y >= 0.0, y, a_ref[0] * y)
    y = jnp.dot(y.astype(jnp.bfloat16), w2_ref[...],
                preferred_element_type=jnp.float32) + b2_ref[...]
    y = jnp.where(y >= 0.0, y, a_ref[1] * y)
    y = jnp.dot(y.astype(jnp.bfloat16), w3_ref[...],
                preferred_element_type=jnp.float32) + b3_ref[...]
    if softmax:
        y = y - jnp.max(y, axis=-1, keepdims=True)
        e = jnp.exp(y)
        y = e / jnp.sum(e, axis=-1, keepdims=True)
    o_ref[...] = y


def fused_head(x, head, softmax=False):
    B = x.shape[0]
    nout = head['w3'].shape[1]
    vmem = pl.BlockSpec(memory_space=pltpu.MemorySpace.VMEM)
    smem = pl.BlockSpec(memory_space=pltpu.MemorySpace.SMEM)
    return pl.pallas_call(
        functools.partial(_head_kernel, softmax=softmax),
        out_shape=jax.ShapeDtypeStruct((B, nout), jnp.float32),
        in_specs=[vmem] * 7 + [smem],
        out_specs=vmem,
    )(x.astype(jnp.bfloat16), head['w1'], head['b1'], head['w2'], head['b2'],
      head['w3'], head['b3'], head['a'])


# ----------------------------------------------------------------------------
# Plain-JAX glue: NHWC im2col, conv wrapper, ceil-mode average pooling
# ----------------------------------------------------------------------------
def im2col_nhwc(x, k, stride, pad):
    N, H, W, C = x.shape
    if pad:
        x = jnp.pad(x, ((0, 0), (pad, pad), (pad, pad), (0, 0)))
    Ho = (H + 2 * pad - k) // stride + 1
    Wo = (W + 2 * pad - k) // stride + 1
    taps = []
    for i in range(k):
        for j in range(k):
            taps.append(x[:, i:i + stride * Ho:stride, j:j + stride * Wo:stride, :])
    col = jnp.concatenate(taps, axis=-1)              # (N, Ho, Wo, k*k*C)
    return col.reshape(N * Ho * Wo, k * k * C), N, Ho, Wo


def conv_prelu(x, layer, k, stride, pad, n_first=None):
    col, N, Ho, Wo = im2col_nhwc(x, k, stride, pad)
    y = fused_layer(col, layer['w'], layer['b'], layer['a'], n_first=n_first)
    return y.reshape(N, Ho, Wo, -1)


def avg_pool_2x2_ceil(x):
    """nn.AvgPool2d(2, 2, ceil_mode=True) on NHWC; boundary windows divide by
    the number of in-bounds elements (padding=0, so count_include_pad moot)."""
    N, H, W, C = x.shape
    Ho, Wo = -(-H // 2), -(-W // 2)
    xs = jnp.pad(x, ((0, 0), (0, 2 * Ho - H), (0, 2 * Wo - W), (0, 0)))
    s = xs.astype(jnp.float32).reshape(N, Ho, 2, Wo, 2, C).sum(axis=(2, 4))
    cnt_h = jnp.minimum(jnp.arange(Ho) * 2 + 2, H) - jnp.arange(Ho) * 2
    cnt_w = jnp.minimum(jnp.arange(Wo) * 2 + 2, W) - jnp.arange(Wo) * 2
    cnt = (cnt_h[:, None] * cnt_w[None, :]).astype(jnp.float32)
    return (s / cnt[None, :, :, None]).astype(x.dtype)


# ----------------------------------------------------------------------------
# Parameters: synthetic PyTorch-layout weights + one-time prep (fold BN,
# convert layouts for NHWC im2col, permute FC columns CHW->HWC, cast to bf16,
# merge conv4_2 / conv4_2_cls, bundle PReLU slopes).
# ----------------------------------------------------------------------------
def init_raw_params(key):
    p = {}
    keys = iter(jax.random.split(key, 64))

    def conv(cin, cout, k):
        w = 0.05 * jax.random.normal(next(keys), (cout, cin, k, k), jnp.float32)
        b = 0.02 * jax.random.normal(next(keys), (cout,), jnp.float32)
        return w, b

    def linear(fin, fout):
        w = 0.05 * jax.random.normal(next(keys), (fout, fin), jnp.float32)
        b = 0.02 * jax.random.normal(next(keys), (fout,), jnp.float32)
        return w, b

    def bn(c):   # fresh BatchNorm: gamma=1, beta=0, running mean=0, var=1
        return dict(gamma=jnp.ones((c,), jnp.float32),
                    beta=jnp.zeros((c,), jnp.float32),
                    mean=jnp.zeros((c,), jnp.float32),
                    var=jnp.ones((c,), jnp.float32))

    p['conv1'] = conv(3, 8, 5)
    p['conv2_1'] = conv(8, 16, 3)
    p['conv2_2'] = conv(16, 16, 3)
    p['conv3_1'] = conv(16, 24, 3)
    p['conv3_2'] = conv(24, 24, 3)
    p['conv4_1'] = conv(24, 40, 3)
    p['conv4_2_cls'] = conv(40, 40, 3)
    p['conv4_2'] = conv(40, 80, 3)
    p['ip1_cls'] = linear(4 * 4 * 40, 128)
    p['ip1'] = linear(4 * 4 * 80, 128)
    p['ip2_cls'] = linear(128, 128)
    p['ip2'] = linear(128, 128)
    p['ip3'] = linear(128, 42)
    p['ip3_cls'] = linear(128, 2)
    p['bn_1'] = bn(8)
    p['ip1bn'] = bn(128)
    p['ip2bn'] = bn(128)
    for name in ['a1', 'a2_1', 'a2_2', 'a3_1', 'a3_2', 'a4_1', 'a4_2',
                 'a4_2_cls', 'aip1_cls', 'aip1', 'aip2_cls', 'aip2']:
        p[name] = jnp.float32(0.25)          # PyTorch default PReLU slope
    return p


def _fold_bn(bn):
    s = bn['gamma'] / jnp.sqrt(bn['var'] + EPS)
    return s, bn['beta'] - bn['mean'] * s


def _prep_conv(w, b, bn=None):
    """(Cout,Cin,kh,kw) torch conv -> (kh*kw*Cin, Cout) bf16 matmul weight
    matching NHWC im2col tap ordering; eval-mode BN folded in."""
    cout = w.shape[0]
    if bn is not None:
        s, sh = _fold_bn(bn)
        w = w * s[:, None, None, None]
        b = b * s + sh
    wm = jnp.transpose(w, (2, 3, 1, 0)).reshape(-1, cout)
    return wm.astype(jnp.bfloat16), b.reshape(1, cout).astype(jnp.float32)


def _prep_linear(w, b, bn=None, chw_to_hwc=None):
    """(Fout,Fin) torch linear -> (Fin,Fout) bf16; optional BN fold and
    CHW->HWC input-column permutation so it consumes NHWC-flattened features."""
    if bn is not None:
        s, sh = _fold_bn(bn)
        w = w * s[:, None]
        b = b * s + sh
    if chw_to_hwc is not None:
        c, h, ww = chw_to_hwc
        w = w.reshape(w.shape[0], c, h, ww).transpose(0, 2, 3, 1).reshape(w.shape[0], -1)
    return w.T.astype(jnp.bfloat16), b.reshape(1, -1).astype(jnp.float32)


def prepare_params(raw):
    p = {}

    def a2(x, y=None):
        return jnp.asarray([x, x if y is None else y], jnp.float32)

    w, b = _prep_conv(*raw['conv1'], bn=raw['bn_1'])
    p['conv1'] = dict(w=w, b=b, a=a2(raw['a1']))
    for name, aname in [('conv2_1', 'a2_1'), ('conv2_2', 'a2_2'),
                        ('conv3_1', 'a3_1'), ('conv3_2', 'a3_2'),
                        ('conv4_1', 'a4_1')]:
        w, b = _prep_conv(*raw[name])
        p[name] = dict(w=w, b=b, a=a2(raw[aname]))

    # Merge conv4_2 (80 ch, regression) + conv4_2_cls (40 ch, classification):
    # same input tensor & geometry -> one 120-channel layer, split afterwards.
    wr, br = _prep_conv(*raw['conv4_2'])
    wc, bc = _prep_conv(*raw['conv4_2_cls'])
    p['conv4_2_merged'] = dict(w=jnp.concatenate([wr, wc], axis=1),
                               b=jnp.concatenate([br, bc], axis=1),
                               a=a2(raw['a4_2'], raw['a4_2_cls']))

    # regression head: ip1(+ip1bn) -> ip2(+ip2bn) -> ip3
    w1, b1 = _prep_linear(*raw['ip1'], bn=raw['ip1bn'], chw_to_hwc=(80, 4, 4))
    w2, b2 = _prep_linear(*raw['ip2'], bn=raw['ip2bn'])
    w3, b3 = _prep_linear(*raw['ip3'])
    p['head_reg'] = dict(w1=w1, b1=b1, w2=w2, b2=b2, w3=w3, b3=b3,
                         a=a2(raw['aip1'], raw['aip2']))

    # classification head: ip1_cls -> ip2_cls -> ip3_cls -> softmax
    w1, b1 = _prep_linear(*raw['ip1_cls'], chw_to_hwc=(40, 4, 4))
    w2, b2 = _prep_linear(*raw['ip2_cls'])
    w3, b3 = _prep_linear(*raw['ip3_cls'])
    p['head_cls'] = dict(w1=w1, b1=b1, w2=w2, b2=b2, w3=w3, b3=b3,
                         a=a2(raw['aip1_cls'], raw['aip2_cls']))
    return p


# ----------------------------------------------------------------------------
# Full forward pass (mirrors Net.forward)
# ----------------------------------------------------------------------------
def net_forward(p, x_nchw):
    x = jnp.transpose(x_nchw, (0, 2, 3, 1)).astype(jnp.bfloat16)   # NHWC, bf16
    # x = ave_pool(prelu_1(bn_1(conv1(x))))
    x = conv_prelu(x, p['conv1'], k=5, stride=2, pad=0)
    x = avg_pool_2x2_ceil(x)
    # block 2
    x = conv_prelu(x, p['conv2_1'], k=3, stride=1, pad=0)
    x = conv_prelu(x, p['conv2_2'], k=3, stride=1, pad=0)
    x = avg_pool_2x2_ceil(x)
    # block 3
    x = conv_prelu(x, p['conv3_1'], k=3, stride=1, pad=0)
    x = conv_prelu(x, p['conv3_2'], k=3, stride=1, pad=0)
    x = avg_pool_2x2_ceil(x)
    # block 4
    x = conv_prelu(x, p['conv4_1'], k=3, stride=1, pad=1)          # (B,4,4,40)
    B = x.shape[0]

    # merged conv4_2 / conv4_2_cls; first 80 channels = regression branch
    y = conv_prelu(x, p['conv4_2_merged'], k=3, stride=1, pad=1, n_first=80)
    ip3_feat = y[..., :80].reshape(B, 4 * 4 * 80)   # NHWC flatten (FC weight
    cls_feat = y[..., 80:].reshape(B, 4 * 4 * 40)   # columns permuted CHW->HWC)

    ip3 = fused_head(ip3_feat, p['head_reg'], softmax=False)       # (B, 42)
    ip3_cls = fused_head(cls_feat, p['head_cls'], softmax=True)    # (B, 2)
    return ip3, ip3_cls


if __name__ == "__main__":
    key = jax.random.PRNGKey(0)
    kx, kp = jax.random.split(key)
    params = prepare_params(init_raw_params(kp))
    # 112x112 input -> final 4x4 feature map, matching view(-1, 4*4*80).
    x = jax.random.normal(kx, (2, 3, 112, 112), jnp.float32)

    fwd = jax.jit(functools.partial(net_forward, params))
    ip3, ip3_cls = fwd(x)
    jax.block_until_ready((ip3, ip3_cls))

    assert ip3.shape == (2, 42), ip3.shape
    assert ip3_cls.shape == (2, 2), ip3_cls.shape
    assert jnp.allclose(ip3_cls.sum(axis=1), 1.0, atol=1e-5)
    print("KERNEL_OK")
</pallas_src>

<mosaic_0001>
module attributes {stable_mosaic.version = 11 : i64} {
  func.func @_fused_matmul_kernel(%arg0: i32, %arg1: memref<512x75xbf16, #tpu.memory_space<vmem>>, %arg2: memref<75x8xbf16, #tpu.memory_space<vmem>>, %arg3: memref<1x8xf32, #tpu.memory_space<vmem>>, %arg4: memref<2xf32, #tpu.memory_space<smem>>, %arg5: memref<512x8xbf16, #tpu.memory_space<vmem>>) attributes {dimension_semantics = [#tpu.dimension_semantics<parallel>], iteration_bounds = array<i64: 12>, scalar_prefetch = 0 : i64, scratch_operands = 0 : i64, tpu.core_type = #tpu.core_type<tc>, window_params = [{transform_indices = @transform_0, window_bounds = array<i64: 512, 75>}, {pipeline_mode = #tpu.pipeline_mode<synchronous>, transform_indices = @transform_1, window_bounds = array<i64: 75, 8>}, {pipeline_mode = #tpu.pipeline_mode<synchronous>, transform_indices = @transform_2, window_bounds = array<i64: 1, 8>}, {transform_indices = @transform_3, window_bounds = array<i64: 2>}, {transform_indices = @transform_4, window_bounds = array<i64: 512, 8>}]} {
    %c0 = arith.constant 0 : index
    %c0_0 = arith.constant 0 : index
    %0 = vector.load %arg1[%c0, %c0_0] : memref<512x75xbf16, #tpu.memory_space<vmem>>, vector<512x75xbf16>
    %c0_1 = arith.constant 0 : index
    %c0_2 = arith.constant 0 : index
    %1 = vector.load %arg2[%c0_1, %c0_2] : memref<75x8xbf16, #tpu.memory_space<vmem>>, vector<75x8xbf16>
    %cst = arith.constant dense<0.000000e+00> : vector<512x8xf32>
    %2 = tpu.matmul %0, %1, %cst {dimension_numbers = #tpu.dot_dimension_numbers<[1], [0], [0], [1], [0, 0, 1, 1], [], []>} : vector<512x75xbf16>, vector<75x8xbf16>, vector<512x8xf32> -> vector<512x8xf32>
    %c0_3 = arith.constant 0 : index
    %c0_4 = arith.constant 0 : index
    %3 = vector.load %arg3[%c0_3, %c0_4] : memref<1x8xf32, #tpu.memory_space<vmem>>, vector<1x8xf32>
    %4 = vector.broadcast %3 : vector<1x8xf32> to vector<512x8xf32>
    %5 = arith.addf %2, %4 : vector<512x8xf32>
    %c0_5 = arith.constant 0 : index
    %6 = memref.load %arg4[%c0_5] : memref<2xf32, #tpu.memory_space<smem>>
    %cst_6 = arith.constant 0.000000e+00 : f32
    %7 = vector.broadcast %cst_6 : f32 to vector<512x8xf32>
    %8 = arith.cmpf oge, %5, %7 : vector<512x8xf32>
    %9 = vector.broadcast %6 : f32 to vector<512x8xf32>
    %10 = arith.mulf %9, %5 : vector<512x8xf32>
    %11 = arith.select %8, %5, %10 : vector<512x8xi1>, vector<512x8xf32>
    %12 = arith.truncf %11 : vector<512x8xf32> to vector<512x8xbf16>
    %c0_7 = arith.constant 0 : index
    %c0_8 = arith.constant 0 : index
    %13 = vector.load %arg5[%c0_7, %c0_8] : memref<512x8xbf16, #tpu.memory_space<vmem>>, vector<512x8xbf16>
    tpu.vector_store %arg5[%c0_7, %c0_8], %12 {strides = array<i32>} : memref<512x8xbf16, #tpu.memory_space<vmem>>, vector<512x8xbf16>,
    return
  }
  func.func @transform_0(%arg0: i32) -> (i32, i32) {
    %c0_i32 = arith.constant 0 : i32
    %c0_i32_0 = arith.constant 0 : i32
    return %arg0, %c0_i32 : i32, i32
  }
  func.func @transform_1(%arg0: i32) -> (i32, i32) {
    %c0_i32 = arith.constant 0 : i32
    %c0_i32_0 = arith.constant 0 : i32
    %c0_i32_1 = arith.constant 0 : i32
    return %c0_i32, %c0_i32_0 : i32, i32
  }
  func.func @transform_2(%arg0: i32) -> (i32, i32) {
    %c0_i32 = arith.constant 0 : i32
    %c0_i32_0 = arith.constant 0 : i32
    %c0_i32_1 = arith.constant 0 : i32
    return %c0_i32, %c0_i32_0 : i32, i32
  }
  func.func @transform_3(%arg0: i32) -> i32 {
    %c0_i32 = arith.constant 0 : i32
    %c0_i32_0 = arith.constant 0 : i32
    return %c0_i32 : i32
  }
  func.func @transform_4(%arg0: i32) -> (i32, i32) {
    %c0_i32 = arith.constant 0 : i32
    %c0_i32_0 = arith.constant 0 : i32
    return %arg0, %c0_i32 : i32, i32
  }
}

module attributes {stable_mosaic.version = 11 : i64} {
  func.func @_fused_matmul_kernel(%arg0: i32, %arg1: memref<512x72xbf16, #tpu.memory_space<vmem>>, %arg2: memref<72x16xbf16, #tpu.memory_space<vmem>>, %arg3: memref<1x16xf32, #tpu.memory_space<vmem>>, %arg4: memref<2xf32, #tpu.memory_space<smem>>, %arg5: memref<512x16xbf16, #tpu.memory_space<vmem>>) attributes {dimension_semantics = [#tpu.dimension_semantics<parallel>], iteration_bounds = array<i64: 3>, scalar_prefetch = 0 : i64, scratch_operands = 0 : i64, tpu.core_type = #tpu.core_type<tc>, window_params = [{transform_indices = @transform_0, window_bounds = array<i64: 512, 72>}, {pipeline_mode = #tpu.pipeline_mode<synchronous>, transform_indices = @transform_1, window_bounds = array<i64: 72, 16>}, {pipeline_mode = #tpu.pipeline_mode<synchronous>, transform_indices = @transform_2, window_bounds = array<i64: 1, 16>}, {transform_indices = @transform_3, window_bounds = array<i64: 2>}, {transform_indices = @transform_4, window_bounds = array<i64: 512, 16>}]} {
    %c0 = arith.constant 0 : index
    %c0_0 = arith.constant 0 : index
    %0 = vector.load %arg1[%c0, %c0_0] : memref<512x72xbf16, #tpu.memory_space<vmem>>, vector<512x72xbf16>
    %c0_1 = arith.constant 0 : index
    %c0_2 = arith.constant 0 : index
    %1 = vector.load %arg2[%c0_1, %c0_2] : memref<72x16xbf16, #tpu.memory_space<vmem>>, vector<72x16xbf16>
    %cst = arith.constant dense<0.000000e+00> : vector<512x16xf32>
    %2 = tpu.matmul %0, %1, %cst {dimension_numbers = #tpu.dot_dimension_numbers<[1], [0], [0], [1], [0, 0, 1, 1], [], []>} : vector<512x72xbf16>, vector<72x16xbf16>, vector<512x16xf32> -> vector<512x16xf32>
    %c0_3 = arith.constant 0 : index
    %c0_4 = arith.constant 0 : index
    %3 = vector.load %arg3[%c0_3, %c0_4] : memref<1x16xf32, #tpu.memory_space<vmem>>, vector<1x16xf32>
    %4 = vector.broadcast %3 : vector<1x16xf32> to vector<512x16xf32>
    %5 = arith.addf %2, %4 : vector<512x16xf32>
    %c0_5 = arith.constant 0 : index
    %6 = memref.load %arg4[%c0_5] : memref<2xf32, #tpu.memory_space<smem>>
    %cst_6 = arith.constant 0.000000e+00 : f32
    %7 = vector.broadcast %cst_6 : f32 to vector<512x16xf32>
    %8 = arith.cmpf oge, %5, %7 : vector<512x16xf32>
    %9 = vector.broadcast %6 : f32 to vector<512x16xf32>
    %10 = arith.mulf %9, %5 : vector<512x16xf32>
    %11 = arith.select %8, %5, %10 : vector<512x16xi1>, vector<512x16xf32>
    %12 = arith.truncf %11 : vector<512x16xf32> to vector<512x16xbf16>
    %c0_7 = arith.constant 0 : index
    %c0_8 = arith.constant 0 : index
    %13 = vector.load %arg5[%c0_7, %c0_8] : memref<512x16xbf16, #tpu.memory_space<vmem>>, vector<512x16xbf16>
    tpu.vector_store %arg5[%c0_7, %c0_8], %12 {strides = array<i32>} : memref<512x16xbf16, #tpu.memory_space<vmem>>, vector<512x16xbf16>,
    return
  }
  func.func @transform_0(%arg0: i32) -> (i32, i32) {
    %c0_i32 = arith.constant 0 : i32
    %c0_i32_0 = arith.constant 0 : i32
    return %arg0, %c0_i32 : i32, i32
  }
  func.func @transform_1(%arg0: i32) -> (i32, i32) {
    %c0_i32 = arith.constant 0 : i32
    %c0_i32_0 = arith.constant 0 : i32
    %c0_i32_1 = arith.constant 0 : i32
    return %c0_i32, %c0_i32_0 : i32, i32
  }
  func.func @transform_2(%arg0: i32) -> (i32, i32) {
    %c0_i32 = arith.constant 0 : i32
    %c0_i32_0 = arith.constant 0 : i32
    %c0_i32_1 = arith.constant 0 : i32
    return %c0_i32, %c0_i32_0 : i32, i32
  }
  func.func @transform_3(%arg0: i32) -> i32 {
    %c0_i32 = arith.constant 0 : i32
    %c0_i32_0 = arith.constant 0 : i32
    return %c0_i32 : i32
  }
  func.func @transform_4(%arg0: i32) -> (i32, i32) {
    %c0_i32 = arith.constant 0 : i32
    %c0_i32_0 = arith.constant 0 : i32
    return %arg0, %c0_i32 : i32, i32
  }
}

module attributes {stable_mosaic.version = 11 : i64} {
  func.func @_fused_matmul_kernel(%arg0: i32, %arg1: memref<512x144xbf16, #tpu.memory_space<vmem>>, %arg2: memref<144x16xbf16, #tpu.memory_space<vmem>>, %arg3: memref<1x16xf32, #tpu.memory_space<vmem>>, %arg4: memref<2xf32, #tpu.memory_space<smem>>, %arg5: memref<512x16xbf16, #tpu.memory_space<vmem>>) attributes {dimension_semantics = [#tpu.dimension_semantics<parallel>], iteration_bounds = array<i64: 3>, scalar_prefetch = 0 : i64, scratch_operands = 0 : i64, tpu.core_type = #tpu.core_type<tc>, window_params = [{transform_indices = @transform_0, window_bounds = array<i64: 512, 144>}, {pipeline_mode = #tpu.pipeline_mode<synchronous>, transform_indices = @transform_1, window_bounds = array<i64: 144, 16>}, {pipeline_mode = #tpu.pipeline_mode<synchronous>, transform_indices = @transform_2, window_bounds = array<i64: 1, 16>}, {transform_indices = @transform_3, window_bounds = array<i64: 2>}, {transform_indices = @transform_4, window_bounds = array<i64: 512, 16>}]} {
    %c0 = arith.constant 0 : index
    %c0_0 = arith.constant 0 : index
    %0 = vector.load %arg1[%c0, %c0_0] : memref<512x144xbf16, #tpu.memory_space<vmem>>, vector<512x144xbf16>
    %c0_1 = arith.constant 0 : index
    %c0_2 = arith.constant 0 : index
    %1 = vector.load %arg2[%c0_1, %c0_2] : memref<144x16xbf16, #tpu.memory_space<vmem>>, vector<144x16xbf16>
    %cst = arith.constant dense<0.000000e+00> : vector<512x16xf32>
    %2 = tpu.matmul %0, %1, %cst {dimension_numbers = #tpu.dot_dimension_numbers<[1], [0], [0], [1], [0, 0, 1, 1], [], []>} : vector<512x144xbf16>, vector<144x16xbf16>, vector<512x16xf32> -> vector<512x16xf32>
    %c0_3 = arith.constant 0 : index
    %c0_4 = arith.constant 0 : index
    %3 = vector.load %arg3[%c0_3, %c0_4] : memref<1x16xf32, #tpu.memory_space<vmem>>, vector<1x16xf32>
    %4 = vector.broadcast %3 : vector<1x16xf32> to vector<512x16xf32>
    %5 = arith.addf %2, %4 : vector<512x16xf32>
    %c0_5 = arith.constant 0 : index
    %6 = memref.load %arg4[%c0_5] : memref<2xf32, #tpu.memory_space<smem>>
    %cst_6 = arith.constant 0.000000e+00 : f32
    %7 = vector.broadcast %cst_6 : f32 to vector<512x16xf32>
    %8 = arith.cmpf oge, %5, %7 : vector<512x16xf32>
    %9 = vector.broadcast %6 : f32 to vector<512x16xf32>
    %10 = arith.mulf %9, %5 : vector<512x16xf32>
    %11 = arith.select %8, %5, %10 : vector<512x16xi1>, vector<512x16xf32>
    %12 = arith.truncf %11 : vector<512x16xf32> to vector<512x16xbf16>
    %c0_7 = arith.constant 0 : index
    %c0_8 = arith.constant 0 : index
    %13 = vector.load %arg5[%c0_7, %c0_8] : memref<512x16xbf16, #tpu.memory_space<vmem>>, vector<512x16xbf16>
    tpu.vector_store %arg5[%c0_7, %c0_8], %12 {strides = array<i32>} : memref<512x16xbf16, #tpu.memory_space<vmem>>, vector<512x16xbf16>,
    return
  }
  func.func @transform_0(%arg0: i32) -> (i32, i32) {
    %c0_i32 = arith.constant 0 : i32
    %c0_i32_0 = arith.constant 0 : i32
    return %arg0, %c0_i32 : i32, i32
  }
  func.func @transform_1(%arg0: i32) -> (i32, i32) {
    %c0_i32 = arith.constant 0 : i32
    %c0_i32_0 = arith.constant 0 : i32
    %c0_i32_1 = arith.constant 0 : i32
    return %c0_i32, %c0_i32_0 : i32, i32
  }
  func.func @transform_2(%arg0: i32) -> (i32, i32) {
    %c0_i32 = arith.constant 0 : i32
    %c0_i32_0 = arith.constant 0 : i32
    %c0_i32_1 = arith.constant 0 : i32
    return %c0_i32, %c0_i32_0 : i32, i32
  }
  func.func @transform_3(%arg0: i32) -> i32 {
    %c0_i32 = arith.constant 0 : i32
    %c0_i32_0 = arith.constant 0 : i32
    return %c0_i32 : i32
  }
  func.func @transform_4(%arg0: i32) -> (i32, i32) {
    %c0_i32 = arith.constant 0 : i32
    %c0_i32_0 = arith.constant 0 : i32
    return %arg0, %c0_i32 : i32, i32
  }
}

module attributes {stable_mosaic.version = 11 : i64} {
  func.func @_fused_matmul_kernel(%arg0: i32, %arg1: memref<200x144xbf16, #tpu.memory_space<vmem>>, %arg2: memref<144x24xbf16, #tpu.memory_space<vmem>>, %arg3: memref<1x24xf32, #tpu.memory_space<vmem>>, %arg4: memref<2xf32, #tpu.memory_space<smem>>, %arg5: memref<200x24xbf16, #tpu.memory_space<vmem>>) attributes {dimension_semantics = [#tpu.dimension_semantics<parallel>], iteration_bounds = array<i64: 1>, scalar_prefetch = 0 : i64, scratch_operands = 0 : i64, tpu.core_type = #tpu.core_type<tc>, window_params = [{transform_indices = @transform_0, window_bounds = array<i64: 200, 144>}, {pipeline_mode = #tpu.pipeline_mode<synchronous>, transform_indices = @transform_1, window_bounds = array<i64: 144, 24>}, {pipeline_mode = #tpu.pipeline_mode<synchronous>, transform_indices = @transform_2, window_bounds = array<i64: 1, 24>}, {transform_indices = @transform_3, window_bounds = array<i64: 2>}, {transform_indices = @transform_4, window_bounds = array<i64: 200, 24>}]} {
    %c0 = arith.constant 0 : index
    %c0_0 = arith.constant 0 : index
    %0 = vector.load %arg1[%c0, %c0_0] : memref<200x144xbf16, #tpu.memory_space<vmem>>, vector<200x144xbf16>
    %c0_1 = arith.constant 0 : index
    %c0_2 = arith.constant 0 : index
    %1 = vector.load %arg2[%c0_1, %c0_2] : memref<144x24xbf16, #tpu.memory_space<vmem>>, vector<144x24xbf16>
    %cst = arith.constant dense<0.000000e+00> : vector<200x24xf32>
    %2 = tpu.matmul %0, %1, %cst {dimension_numbers = #tpu.dot_dimension_numbers<[1], [0], [0], [1], [0, 0, 1, 1], [], []>} : vector<200x144xbf16>, vector<144x24xbf16>, vector<200x24xf32> -> vector<200x24xf32>
    %c0_3 = arith.constant 0 : index
    %c0_4 = arith.constant 0 : index
    %3 = vector.load %arg3[%c0_3, %c0_4] : memref<1x24xf32, #tpu.memory_space<vmem>>, vector<1x24xf32>
    %4 = vector.broadcast %3 : vector<1x24xf32> to vector<200x24xf32>
    %5 = arith.addf %2, %4 : vector<200x24xf32>
    %c0_5 = arith.constant 0 : index
    %6 = memref.load %arg4[%c0_5] : memref<2xf32, #tpu.memory_space<smem>>
    %cst_6 = arith.constant 0.000000e+00 : f32
    %7 = vector.broadcast %cst_6 : f32 to vector<200x24xf32>
    %8 = arith.cmpf oge, %5, %7 : vector<200x24xf32>
    %9 = vector.broadcast %6 : f32 to vector<200x24xf32>
    %10 = arith.mulf %9, %5 : vector<200x24xf32>
    %11 = arith.select %8, %5, %10 : vector<200x24xi1>, vector<200x24xf32>
    %12 = arith.truncf %11 : vector<200x24xf32> to vector<200x24xbf16>
    %c0_7 = arith.constant 0 : index
    %c0_8 = arith.constant 0 : index
    %13 = vector.load %arg5[%c0_7, %c0_8] : memref<200x24xbf16, #tpu.memory_space<vmem>>, vector<200x24xbf16>
    tpu.vector_store %arg5[%c0_7, %c0_8], %12 {strides = array<i32>} : memref<200x24xbf16, #tpu.memory_space<vmem>>, vector<200x24xbf16>,
    return
  }
  func.func @transform_0(%arg0: i32) -> (i32, i32) {
    %c0_i32 = arith.constant 0 : i32
    %c0_i32_0 = arith.constant 0 : i32
    return %arg0, %c0_i32 : i32, i32
  }
  func.func @transform_1(%arg0: i32) -> (i32, i32) {
    %c0_i32 = arith.constant 0 : i32
    %c0_i32_0 = arith.constant 0 : i32
    %c0_i32_1 = arith.constant 0 : i32
    return %c0_i32, %c0_i32_0 : i32, i32
  }
  func.func @transform_2(%arg0: i32) -> (i32, i32) {
    %c0_i32 = arith.constant 0 : i32
    %c0_i32_0 = arith.constant 0 : i32
    %c0_i32_1 = arith.constant 0 : i32
    return %c0_i32, %c0_i32_0 : i32, i32
  }
  func.func @transform_3(%arg0: i32) -> i32 {
    %c0_i32 = arith.constant 0 : i32
    %c0_i32_0 = arith.constant 0 : i32
    return %c0_i32 : i32
  }
  func.func @transform_4(%arg0: i32) -> (i32, i32) {
    %c0_i32 = arith.constant 0 : i32
    %c0_i32_0 = arith.constant 0 : i32
    return %arg0, %c0_i32 : i32, i32
  }
}

module attributes {stable_mosaic.version = 11 : i64} {
  func.func @_fused_matmul_kernel(%arg0: i32, %arg1: memref<128x216xbf16, #tpu.memory_space<vmem>>, %arg2: memref<216x24xbf16, #tpu.memory_space<vmem>>, %arg3: memref<1x24xf32, #tpu.memory_space<vmem>>, %arg4: memref<2xf32, #tpu.memory_space<smem>>, %arg5: memref<128x24xbf16, #tpu.memory_space<vmem>>) attributes {dimension_semantics = [#tpu.dimension_semantics<parallel>], iteration_bounds = array<i64: 1>, scalar_prefetch = 0 : i64, scratch_operands = 0 : i64, tpu.core_type = #tpu.core_type<tc>, window_params = [{transform_indices = @transform_0, window_bounds = array<i64: 128, 216>}, {pipeline_mode = #tpu.pipeline_mode<synchronous>, transform_indices = @transform_1, window_bounds = array<i64: 216, 24>}, {pipeline_mode = #tpu.pipeline_mode<synchronous>, transform_indices = @transform_2, window_bounds = array<i64: 1, 24>}, {transform_indices = @transform_3, window_bounds = array<i64: 2>}, {transform_indices = @transform_4, window_bounds = array<i64: 128, 24>}]} {
    %c0 = arith.constant 0 : index
    %c0_0 = arith.constant 0 : index
    %0 = vector.load %arg1[%c0, %c0_0] : memref<128x216xbf16, #tpu.memory_space<vmem>>, vector<128x216xbf16>
    %c0_1 = arith.constant 0 : index
    %c0_2 = arith.constant 0 : index
    %1 = vector.load %arg2[%c0_1, %c0_2] : memref<216x24xbf16, #tpu.memory_space<vmem>>, vector<216x24xbf16>
    %cst = arith.constant dense<0.000000e+00> : vector<128x24xf32>
    %2 = tpu.matmul %0, %1, %cst {dimension_numbers = #tpu.dot_dimension_numbers<[1], [0], [0], [1], [0, 0, 1, 1], [], []>} : vector<128x216xbf16>, vector<216x24xbf16>, vector<128x24xf32> -> vector<128x24xf32>
    %c0_3 = arith.constant 0 : index
    %c0_4 = arith.constant 0 : index
    %3 = vector.load %arg3[%c0_3, %c0_4] : memref<1x24xf32, #tpu.memory_space<vmem>>, vector<1x24xf32>
    %4 = vector.broadcast %3 : vector<1x24xf32> to vector<128x24xf32>
    %5 = arith.addf %2, %4 : vector<128x24xf32>
    %c0_5 = arith.constant 0 : index
    %6 = memref.load %arg4[%c0_5] : memref<2xf32, #tpu.memory_space<smem>>
    %cst_6 = arith.constant 0.000000e+00 : f32
    %7 = vector.broadcast %cst_6 : f32 to vector<128x24xf32>
    %8 = arith.cmpf oge, %5, %7 : vector<128x24xf32>
    %9 = vector.broadcast %6 : f32 to vector<128x24xf32>
    %10 = arith.mulf %9, %5 : vector<128x24xf32>
    %11 = arith.select %8, %5, %10 : vector<128x24xi1>, vector<128x24xf32>
    %12 = arith.truncf %11 : vector<128x24xf32> to vector<128x24xbf16>
    %c0_7 = arith.constant 0 : index
    %c0_8 = arith.constant 0 : index
    %13 = vector.load %arg5[%c0_7, %c0_8] : memref<128x24xbf16, #tpu.memory_space<vmem>>, vector<128x24xbf16>
    tpu.vector_store %arg5[%c0_7, %c0_8], %12 {strides = array<i32>} : memref<128x24xbf16, #tpu.memory_space<vmem>>, vector<128x24xbf16>,
    return
  }
  func.func @transform_0(%arg0: i32) -> (i32, i32) {
    %c0_i32 = arith.constant 0 : i32
    %c0_i32_0 = arith.constant 0 : i32
    return %arg0, %c0_i32 : i32, i32
  }
  func.func @transform_1(%arg0: i32) -> (i32, i32) {
    %c0_i32 = arith.constant 0 : i32
    %c0_i32_0 = arith.constant 0 : i32
    %c0_i32_1 = arith.constant 0 : i32
    return %c0_i32, %c0_i32_0 : i32, i32
  }
  func.func @transform_2(%arg0: i32) -> (i32, i32) {
    %c0_i32 = arith.constant 0 : i32
    %c0_i32_0 = arith.constant 0 : i32
    %c0_i32_1 = arith.constant 0 : i32
    return %c0_i32, %c0_i32_0 : i32, i32
  }
  func.func @transform_3(%arg0: i32) -> i32 {
    %c0_i32 = arith.constant 0 : i32
    %c0_i32_0 = arith.constant 0 : i32
    return %c0_i32 : i32
  }
  func.func @transform_4(%arg0: i32) -> (i32, i32) {
    %c0_i32 = arith.constant 0 : i32
    %c0_i32_0 = arith.constant 0 : i32
    return %arg0, %c0_i32 : i32, i32
  }
}

module attributes {stable_mosaic.version = 11 : i64} {
  func.func @_fused_matmul_kernel(%arg0: i32, %arg1: memref<32x216xbf16, #tpu.memory_space<vmem>>, %arg2: memref<216x40xbf16, #tpu.memory_space<vmem>>, %arg3: memref<1x40xf32, #tpu.memory_space<vmem>>, %arg4: memref<2xf32, #tpu.memory_space<smem>>, %arg5: memref<32x40xbf16, #tpu.memory_space<vmem>>) attributes {dimension_semantics = [#tpu.dimension_semantics<parallel>], iteration_bounds = array<i64: 1>, scalar_prefetch = 0 : i64, scratch_operands = 0 : i64, tpu.core_type = #tpu.core_type<tc>, window_params = [{transform_indices = @transform_0, window_bounds = array<i64: 32, 216>}, {pipeline_mode = #tpu.pipeline_mode<synchronous>, transform_indices = @transform_1, window_bounds = array<i64: 216, 40>}, {pipeline_mode = #tpu.pipeline_mode<synchronous>, transform_indices = @transform_2, window_bounds = array<i64: 1, 40>}, {transform_indices = @transform_3, window_bounds = array<i64: 2>}, {transform_indices = @transform_4, window_bounds = array<i64: 32, 40>}]} {
    %c0 = arith.constant 0 : index
    %c0_0 = arith.constant 0 : index
    %0 = vector.load %arg1[%c0, %c0_0] : memref<32x216xbf16, #tpu.memory_space<vmem>>, vector<32x216xbf16>
    %c0_1 = arith.constant 0 : index
    %c0_2 = arith.constant 0 : index
    %1 = vector.load %arg2[%c0_1, %c0_2] : memref<216x40xbf16, #tpu.memory_space<vmem>>, vector<216x40xbf16>
    %cst = arith.constant dense<0.000000e+00> : vector<32x40xf32>
    %2 = tpu.matmul %0, %1, %cst {dimension_numbers = #tpu.dot_dimension_numbers<[1], [0], [0], [1], [0, 0, 1, 1], [], []>} : vector<32x216xbf16>, vector<216x40xbf16>, vector<32x40xf32> -> vector<32x40xf32>
    %c0_3 = arith.constant 0 : index
    %c0_4 = arith.constant 0 : index
    %3 = vector.load %arg3[%c0_3, %c0_4] : memref<1x40xf32, #tpu.memory_space<vmem>>, vector<1x40xf32>
    %4 = vector.broadcast %3 : vector<1x40xf32> to vector<32x40xf32>
    %5 = arith.addf %2, %4 : vector<32x40xf32>
    %c0_5 = arith.constant 0 : index
    %6 = memref.load %arg4[%c0_5] : memref<2xf32, #tpu.memory_space<smem>>
    %cst_6 = arith.constant 0.000000e+00 : f32
    %7 = vector.broadcast %cst_6 : f32 to vector<32x40xf32>
    %8 = arith.cmpf oge, %5, %7 : vector<32x40xf32>
    %9 = vector.broadcast %6 : f32 to vector<32x40xf32>
    %10 = arith.mulf %9, %5 : vector<32x40xf32>
    %11 = arith.select %8, %5, %10 : vector<32x40xi1>, vector<32x40xf32>
    %12 = arith.truncf %11 : vector<32x40xf32> to vector<32x40xbf16>
    %c0_7 = arith.constant 0 : index
    %c0_8 = arith.constant 0 : index
    %13 = vector.load %arg5[%c0_7, %c0_8] : memref<32x40xbf16, #tpu.memory_space<vmem>>, vector<32x40xbf16>
    tpu.vector_store %arg5[%c0_7, %c0_8], %12 {strides = array<i32>} : memref<32x40xbf16, #tpu.memory_space<vmem>>, vector<32x40xbf16>,
    return
  }
  func.func @transform_0(%arg0: i32) -> (i32, i32) {
    %c0_i32 = arith.constant 0 : i32
    %c0_i32_0 = arith.constant 0 : i32
    return %arg0, %c0_i32 : i32, i32
  }
  func.func @transform_1(%arg0: i32) -> (i32, i32) {
    %c0_i32 = arith.constant 0 : i32
    %c0_i32_0 = arith.constant 0 : i32
    %c0_i32_1 = arith.constant 0 : i32
    return %c0_i32, %c0_i32_0 : i32, i32
  }
  func.func @transform_2(%arg0: i32) -> (i32, i32) {
    %c0_i32 = arith.constant 0 : i32
    %c0_i32_0 = arith.constant 0 : i32
    %c0_i32_1 = arith.constant 0 : i32
    return %c0_i32, %c0_i32_0 : i32, i32
  }
  func.func @transform_3(%arg0: i32) -> i32 {
    %c0_i32 = arith.constant 0 : i32
    %c0_i32_0 = arith.constant 0 : i32
    return %c0_i32 : i32
  }
  func.func @transform_4(%arg0: i32) -> (i32, i32) {
    %c0_i32 = arith.constant 0 : i32
    %c0_i32_0 = arith.constant 0 : i32
    return %arg0, %c0_i32 : i32, i32
  }
}

module attributes {stable_mosaic.version = 11 : i64} {
  func.func @_fused_matmul_kernel(%arg0: i32, %arg1: memref<32x360xbf16, #tpu.memory_space<vmem>>, %arg2: memref<360x120xbf16, #tpu.memory_space<vmem>>, %arg3: memref<1x120xf32, #tpu.memory_space<vmem>>, %arg4: memref<2xf32, #tpu.memory_space<smem>>, %arg5: memref<32x120xbf16, #tpu.memory_space<vmem>>) attributes {dimension_semantics = [#tpu.dimension_semantics<parallel>], iteration_bounds = array<i64: 1>, scalar_prefetch = 0 : i64, scratch_operands = 0 : i64, tpu.core_type = #tpu.core_type<tc>, window_params = [{transform_indices = @transform_0, window_bounds = array<i64: 32, 360>}, {pipeline_mode = #tpu.pipeline_mode<synchronous>, transform_indices = @transform_1, window_bounds = array<i64: 360, 120>}, {pipeline_mode = #tpu.pipeline_mode<synchronous>, transform_indices = @transform_2, window_bounds = array<i64: 1, 120>}, {transform_indices = @transform_3, window_bounds = array<i64: 2>}, {transform_indices = @transform_4, window_bounds = array<i64: 32, 120>}]} {
    %c0 = arith.constant 0 : index
    %c0_0 = arith.constant 0 : index
    %0 = vector.load %arg1[%c0, %c0_0] : memref<32x360xbf16, #tpu.memory_space<vmem>>, vector<32x360xbf16>
    %c0_1 = arith.constant 0 : index
    %c0_2 = arith.constant 0 : index
    %1 = vector.load %arg2[%c0_1, %c0_2] : memref<360x120xbf16, #tpu.memory_space<vmem>>, vector<360x120xbf16>
    %cst = arith.constant dense<0.000000e+00> : vector<32x120xf32>
    %2 = tpu.matmul %0, %1, %cst {dimension_numbers = #tpu.dot_dimension_numbers<[1], [0], [0], [1], [0, 0, 1, 1], [], []>} : vector<32x360xbf16>, vector<360x120xbf16>, vector<32x120xf32> -> vector<32x120xf32>
    %c0_3 = arith.constant 0 : index
    %c0_4 = arith.constant 0 : index
    %3 = vector.load %arg3[%c0_3, %c0_4] : memref<1x120xf32, #tpu.memory_space<vmem>>, vector<1x120xf32>
    %4 = vector.broadcast %3 : vector<1x120xf32> to vector<32x120xf32>
    %5 = arith.addf %2, %4 : vector<32x120xf32>
    %6 = tpu.iota {dimensions = array<i32: 1>} : vector<1x120xi32>
    %c80_i32 = arith.constant 80 : i32
    %7 = vector.broadcast %c80_i32 : i32 to vector<1x120xi32>
    %8 = arith.cmpi slt, %6, %7 : vector<1x120xi32>
    %c0_5 = arith.constant 0 : index
    %9 = memref.load %arg4[%c0_5] : memref<2xf32, #tpu.memory_space<smem>>
    %c1 = arith.constant 1 : index
    %10 = memref.load %arg4[%c1] : memref<2xf32, #tpu.memory_space<smem>>
    %11 = vector.broadcast %9 : f32 to vector<1x120xf32>
    %12 = vector.broadcast %10 : f32 to vector<1x120xf32>
    %13 = arith.select %8, %11, %12 : vector<1x120xi1>, vector<1x120xf32>
    %cst_6 = arith.constant 0.000000e+00 : f32
    %14 = vector.broadcast %cst_6 : f32 to vector<32x120xf32>
    %15 = arith.cmpf oge, %5, %14 : vector<32x120xf32>
    %16 = vector.broadcast %13 : vector<1x120xf32> to vector<32x120xf32>
    %17 = arith.mulf %16, %5 : vector<32x120xf32>
    %18 = arith.select %15, %5, %17 : vector<32x120xi1>, vector<32x120xf32>
    %19 = arith.truncf %18 : vector<32x120xf32> to vector<32x120xbf16>
    %c0_7 = arith.constant 0 : index
    %c0_8 = arith.constant 0 : index
    %20 = vector.load %arg5[%c0_7, %c0_8] : memref<32x120xbf16, #tpu.memory_space<vmem>>, vector<32x120xbf16>
    tpu.vector_store %arg5[%c0_7, %c0_8], %19 {strides = array<i32>} : memref<32x120xbf16, #tpu.memory_space<vmem>>, vector<32x120xbf16>,
    return
  }
  func.func @transform_0(%arg0: i32) -> (i32, i32) {
    %c0_i32 = arith.constant 0 : i32
    %c0_i32_0 = arith.constant 0 : i32
    return %arg0, %c0_i32 : i32, i32
  }
  func.func @transform_1(%arg0: i32) -> (i32, i32) {
    %c0_i32 = arith.constant 0 : i32
    %c0_i32_0 = arith.constant 0 : i32
    %c0_i32_1 = arith.constant 0 : i32
    return %c0_i32, %c0_i32_0 : i32, i32
  }
  func.func @transform_2(%arg0: i32) -> (i32, i32) {
    %c0_i32 = arith.constant 0 : i32
    %c0_i32_0 = arith.constant 0 : i32
    %c0_i32_1 = arith.constant 0 : i32
    return %c0_i32, %c0_i32_0 : i32, i32
  }
  func.func @transform_3(%arg0: i32) -> i32 {
    %c0_i32 = arith.constant 0 : i32
    %c0_i32_0 = arith.constant 0 : i32
    return %c0_i32 : i32
  }
  func.func @transform_4(%arg0: i32) -> (i32, i32) {
    %c0_i32 = arith.constant 0 : i32
    %c0_i32_0 = arith.constant 0 : i32
    return %arg0, %c0_i32 : i32, i32
  }
}

module attributes {stable_mosaic.version = 11 : i64} {
  func.func @_head_kernel(%arg0: memref<2x640xbf16, #tpu.memory_space<vmem>>, %arg1: memref<640x128xbf16, #tpu.memory_space<vmem>>, %arg2: memref<1x128xf32, #tpu.memory_space<vmem>>, %arg3: memref<128x128xbf16, #tpu.memory_space<vmem>>, %arg4: memref<1x128xf32, #tpu.memory_space<vmem>>, %arg5: memref<128x2xbf16, #tpu.memory_space<vmem>>, %arg6: memref<1x2xf32, #tpu.memory_space<vmem>>, %arg7: memref<2xf32, #tpu.memory_space<smem>>, %arg8: memref<2x2xf32, #tpu.memory_space<vmem>>) attributes {dimension_semantics = [], scalar_prefetch = 0 : i64, scratch_operands = 0 : i64, tpu.core_type = #tpu.core_type<tc>} {
    %c0 = arith.constant 0 : index
    %c0_0 = arith.constant 0 : index
    %0 = vector.load %arg0[%c0, %c0_0] : memref<2x640xbf16, #tpu.memory_space<vmem>>, vector<2x640xbf16>
    %c0_1 = arith.constant 0 : index
    %c0_2 = arith.constant 0 : index
    %1 = vector.load %arg1[%c0_1, %c0_2] : memref<640x128xbf16, #tpu.memory_space<vmem>>, vector<640x128xbf16>
    %cst = arith.constant dense<0.000000e+00> : vector<2x128xf32>
    %2 = tpu.matmul %0, %1, %cst {dimension_numbers = #tpu.dot_dimension_numbers<[1], [0], [0], [1], [0, 0, 1, 1], [], []>} : vector<2x640xbf16>, vector<640x128xbf16>, vector<2x128xf32> -> vector<2x128xf32>
    %c0_3 = arith.constant 0 : index
    %c0_4 = arith.constant 0 : index
    %3 = vector.load %arg2[%c0_3, %c0_4] : memref<1x128xf32, #tpu.memory_space<vmem>>, vector<1x128xf32>
    %4 = vector.broadcast %3 : vector<1x128xf32> to vector<2x128xf32>
    %5 = arith.addf %2, %4 : vector<2x128xf32>
    %cst_5 = arith.constant 0.000000e+00 : f32
    %6 = vector.broadcast %cst_5 : f32 to vector<2x128xf32>
    %7 = arith.cmpf oge, %5, %6 : vector<2x128xf32>
    %c0_6 = arith.constant 0 : index
    %8 = memref.load %arg7[%c0_6] : memref<2xf32, #tpu.memory_space<smem>>
    %9 = vector.broadcast %8 : f32 to vector<2x128xf32>
    %10 = arith.mulf %9, %5 : vector<2x128xf32>
    %11 = arith.select %7, %5, %10 : vector<2x128xi1>, vector<2x128xf32>
    %12 = arith.truncf %11 : vector<2x128xf32> to vector<2x128xbf16>
    %c0_7 = arith.constant 0 : index
    %c0_8 = arith.constant 0 : index
    %13 = vector.load %arg3[%c0_7, %c0_8] : memref<128x128xbf16, #tpu.memory_space<vmem>>, vector<128x128xbf16>
    %cst_9 = arith.constant dense<0.000000e+00> : vector<2x128xf32>
    %14 = tpu.matmul %12, %13, %cst_9 {dimension_numbers = #tpu.dot_dimension_numbers<[1], [0], [0], [1], [0, 0, 1, 1], [], []>} : vector<2x128xbf16>, vector<128x128xbf16>, vector<2x128xf32> -> vector<2x128xf32>
    %c0_10 = arith.constant 0 : index
    %c0_11 = arith.constant 0 : index
    %15 = vector.load %arg4[%c0_10, %c0_11] : memref<1x128xf32, #tpu.memory_space<vmem>>, vector<1x128xf32>
    %16 = vector.broadcast %15 : vector<1x128xf32> to vector<2x128xf32>
    %17 = arith.addf %14, %16 : vector<2x128xf32>
    %cst_12 = arith.constant 0.000000e+00 : f32
    %18 = vector.broadcast %cst_12 : f32 to vector<2x128xf32>
    %19 = arith.cmpf oge, %17, %18 : vector<2x128xf32>
    %c1 = arith.constant 1 : index
    %20 = memref.load %arg7[%c1] : memref<2xf32, #tpu.memory_space<smem>>
    %21 = vector.broadcast %20 : f32 to vector<2x128xf32>
    %22 = arith.mulf %21, %17 : vector<2x128xf32>
    %23 = arith.select %19, %17, %22 : vector<2x128xi1>, vector<2x128xf32>
    %24 = arith.truncf %23 : vector<2x128xf32> to vector<2x128xbf16>
    %c0_13 = arith.constant 0 : index
    %c0_14 = arith.constant 0 : index
    %25 = vector.load %arg5[%c0_13, %c0_14] : memref<128x2xbf16, #tpu.memory_space<vmem>>, vector<128x2xbf16>
    %cst_15 = arith.constant dense<0.000000e+00> : vector<2x2xf32>
    %26 = tpu.matmul %24, %25, %cst_15 {dimension_numbers = #tpu.dot_dimension_numbers<[1], [0], [0], [1], [0, 0, 1, 1], [], []>} : vector<2x128xbf16>, vector<128x2xbf16>, vector<2x2xf32> -> vector<2x2xf32>
    %c0_16 = arith.constant 0 : index
    %c0_17 = arith.constant 0 : index
    %27 = vector.load %arg6[%c0_16, %c0_17] : memref<1x2xf32, #tpu.memory_space<vmem>>, vector<1x2xf32>
    %28 = vector.broadcast %27 : vector<1x2xf32> to vector<2x2xf32>
    %29 = arith.addf %26, %28 : vector<2x2xf32>
    %cst_18 = arith.constant dense<0xFF800000> : vector<2xf32>
    %30 = vector.multi_reduction <maximumf>, %29, %cst_18 [1] : vector<2x2xf32> to vector<2xf32>
    %31 = vector.shape_cast %30 : vector<2xf32> to vector<2x1xf32>
    %32 = vector.broadcast %31 : vector<2x1xf32> to vector<2x2xf32>
    %33 = arith.subf %29, %32 : vector<2x2xf32>
    %34 = math.exp %33 : vector<2x2xf32>
    %cst_19 = arith.constant dense<0.000000e+00> : vector<2xf32>
    %35 = vector.multi_reduction <add>, %34, %cst_19 [1] : vector<2x2xf32> to vector<2xf32>
    %36 = vector.shape_cast %35 : vector<2xf32> to vector<2x1xf32>
    %37 = vector.broadcast %36 : vector<2x1xf32> to vector<2x2xf32>
    %38 = arith.divf %34, %37 : vector<2x2xf32>
    %c0_20 = arith.constant 0 : index
    %c0_21 = arith.constant 0 : index
    %39 = vector.load %arg8[%c0_20, %c0_21] : memref<2x2xf32, #tpu.memory_space<vmem>>, vector<2x2xf32>
    tpu.vector_store %arg8[%c0_20, %c0_21], %38 {strides = array<i32>} : memref<2x2xf32, #tpu.memory_space<vmem>>, vector<2x2xf32>,
    return
  }
}

module attributes {stable_mosaic.version = 11 : i64} {
  func.func @_head_kernel(%arg0: memref<2x1280xbf16, #tpu.memory_space<vmem>>, %arg1: memref<1280x128xbf16, #tpu.memory_space<vmem>>, %arg2: memref<1x128xf32, #tpu.memory_space<vmem>>, %arg3: memref<128x128xbf16, #tpu.memory_space<vmem>>, %arg4: memref<1x128xf32, #tpu.memory_space<vmem>>, %arg5: memref<128x42xbf16, #tpu.memory_space<vmem>>, %arg6: memref<1x42xf32, #tpu.memory_space<vmem>>, %arg7: memref<2xf32, #tpu.memory_space<smem>>, %arg8: memref<2x42xf32, #tpu.memory_space<vmem>>) attributes {dimension_semantics = [], scalar_prefetch = 0 : i64, scratch_operands = 0 : i64, tpu.core_type = #tpu.core_type<tc>} {
    %c0 = arith.constant 0 : index
    %c0_0 = arith.constant 0 : index
    %0 = vector.load %arg0[%c0, %c0_0] : memref<2x1280xbf16, #tpu.memory_space<vmem>>, vector<2x1280xbf16>
    %c0_1 = arith.constant 0 : index
    %c0_2 = arith.constant 0 : index
    %1 = vector.load %arg1[%c0_1, %c0_2] : memref<1280x128xbf16, #tpu.memory_space<vmem>>, vector<1280x128xbf16>
    %cst = arith.constant dense<0.000000e+00> : vector<2x128xf32>
    %2 = tpu.matmul %0, %1, %cst {dimension_numbers = #tpu.dot_dimension_numbers<[1], [0], [0], [1], [0, 0, 1, 1], [], []>} : vector<2x1280xbf16>, vector<1280x128xbf16>, vector<2x128xf32> -> vector<2x128xf32>
    %c0_3 = arith.constant 0 : index
    %c0_4 = arith.constant 0 : index
    %3 = vector.load %arg2[%c0_3, %c0_4] : memref<1x128xf32, #tpu.memory_space<vmem>>, vector<1x128xf32>
    %4 = vector.broadcast %3 : vector<1x128xf32> to vector<2x128xf32>
    %5 = arith.addf %2, %4 : vector<2x128xf32>
    %cst_5 = arith.constant 0.000000e+00 : f32
    %6 = vector.broadcast %cst_5 : f32 to vector<2x128xf32>
    %7 = arith.cmpf oge, %5, %6 : vector<2x128xf32>
    %c0_6 = arith.constant 0 : index
    %8 = memref.load %arg7[%c0_6] : memref<2xf32, #tpu.memory_space<smem>>
    %9 = vector.broadcast %8 : f32 to vector<2x128xf32>
    %10 = arith.mulf %9, %5 : vector<2x128xf32>
    %11 = arith.select %7, %5, %10 : vector<2x128xi1>, vector<2x128xf32>
    %12 = arith.truncf %11 : vector<2x128xf32> to vector<2x128xbf16>
    %c0_7 = arith.constant 0 : index
    %c0_8 = arith.constant 0 : index
    %13 = vector.load %arg3[%c0_7, %c0_8] : memref<128x128xbf16, #tpu.memory_space<vmem>>, vector<128x128xbf16>
    %cst_9 = arith.constant dense<0.000000e+00> : vector<2x128xf32>
    %14 = tpu.matmul %12, %13, %cst_9 {dimension_numbers = #tpu.dot_dimension_numbers<[1], [0], [0], [1], [0, 0, 1, 1], [], []>} : vector<2x128xbf16>, vector<128x128xbf16>, vector<2x128xf32> -> vector<2x128xf32>
    %c0_10 = arith.constant 0 : index
    %c0_11 = arith.constant 0 : index
    %15 = vector.load %arg4[%c0_10, %c0_11] : memref<1x128xf32, #tpu.memory_space<vmem>>, vector<1x128xf32>
    %16 = vector.broadcast %15 : vector<1x128xf32> to vector<2x128xf32>
    %17 = arith.addf %14, %16 : vector<2x128xf32>
    %cst_12 = arith.constant 0.000000e+00 : f32
    %18 = vector.broadcast %cst_12 : f32 to vector<2x128xf32>
    %19 = arith.cmpf oge, %17, %18 : vector<2x128xf32>
    %c1 = arith.constant 1 : index
    %20 = memref.load %arg7[%c1] : memref<2xf32, #tpu.memory_space<smem>>
    %21 = vector.broadcast %20 : f32 to vector<2x128xf32>
    %22 = arith.mulf %21, %17 : vector<2x128xf32>
    %23 = arith.select %19, %17, %22 : vector<2x128xi1>, vector<2x128xf32>
    %24 = arith.truncf %23 : vector<2x128xf32> to vector<2x128xbf16>
    %c0_13 = arith.constant 0 : index
    %c0_14 = arith.constant 0 : index
    %25 = vector.load %arg5[%c0_13, %c0_14] : memref<128x42xbf16, #tpu.memory_space<vmem>>, vector<128x42xbf16>
    %cst_15 = arith.constant dense<0.000000e+00> : vector<2x42xf32>
    %26 = tpu.matmul %24, %25, %cst_15 {dimension_numbers = #tpu.dot_dimension_numbers<[1], [0], [0], [1], [0, 0, 1, 1], [], []>} : vector<2x128xbf16>, vector<128x42xbf16>, vector<2x42xf32> -> vector<2x42xf32>
    %c0_16 = arith.constant 0 : index
    %c0_17 = arith.constant 0 : index
    %27 = vector.load %arg6[%c0_16, %c0_17] : memref<1x42xf32, #tpu.memory_space<vmem>>, vector<1x42xf32>
    %28 = vector.broadcast %27 : vector<1x42xf32> to vector<2x42xf32>
    %29 = arith.addf %26, %28 : vector<2x42xf32>
    %c0_18 = arith.constant 0 : index
    %c0_19 = arith.constant 0 : index
    %30 = vector.load %arg8[%c0_18, %c0_19] : memref<2x42xf32, #tpu.memory_space<vmem>>, vector<2x42xf32>
    tpu.vector_store %arg8[%c0_18, %c0_19], %29 {strides = array<i32>} : memref<2x42xf32, #tpu.memory_space<vmem>>, vector<2x42xf32>,
    return
  }
}

</mosaic_0001>

<llo_original>
// kernel: net_forward.9
$region0: #{net_forward.9}
  #allocation0 [shape = 'u32[]', space=smem, size = 0x4, offset = 0x4, fixed_abs, tag = 'smem constant byte address 0x4 - core index']
  #allocation1 [shape = 'u32[72,128]{1,0:T(1,128)}', space=vmem, size = 0x9000, scoped, tag = 'internal scratch']
  %s0 = inlined_call_operand.vmem [shape: bf16[5832,75], index: 0, kind: input, shape index: {}]
  %s1 = inlined_call_operand.vmem [shape: bf16[75,8], index: 1, kind: input, shape index: {}]
  %s2 = inlined_call_operand.vmem [shape: f32[1,8], index: 2, kind: input, shape index: {}]
  %s3 = inlined_call_operand.vmem [shape: f32[2], index: 3, kind: input, shape index: {}]
  %s4 = inlined_call_operand.vmem [shape: bf16[5832,8], index: 4, kind: output, shape index: {}]
  %s5 = sld [smem:[#allocation0]]
  $region97: #{net_forward.9} parent=0
    _
  %s7 = ssub.s32 1, %s5
  %s8 = scalar_select 0, %s7, %s5
  $region1: #{net_forward.9} parent=0
    #allocation2 [shape = 'u8[512]{0}', space=smem, size = 0x200, scoped, tag = 'input window, operand 3, single buffered']
    #allocation3 [shape = 's32[2]{0}', space=sflag, size = 0x8, scoped, tag = 'scoped memory for net_forward.9']
    #allocation4 [shape = 'u8[262144]{0}', space=vmem, size = 0x40000, scoped, tag = 'output window, operand 0']
    %9 = vsyncpa [#allocation3], 0
    loop: start=0, step=1, limit=14
    $region2: #{net_forward.9} parent=1 // loop_pre_header
      _
    $region3: #{net_forward.9} parent=1 // loop_header
      %s11 = sphi 0, %s15
      %p12 = scmp.ge.s32.totalorder %s11, 14
      %s21 = sphi 0, %s23
      %s24 = sphi 0, %s21
      %s25 = sphi 0, %s24
      %s41 = sphi 0, %s25
      %s45 = sphi 0, %s45
      %s47 = sphi 0, %s45
      %s48 = sphi 0, %s47
      %s62 = sphi 0, %s48
      %s66 = sphi 0, %s66
      %s68 = sphi 0, %s66
      %s69 = sphi 0, %s68
      %s83 = sphi 0, %s69
      %s87 = sphi 0, %s87
      %s89 = sphi 0, %s87
      %s90 = sphi 0, %s89
      %s104 = sphi 0, %s90
      %s110 = sphi 0, %s112
      %s113 = sphi 0, %s110
      %s114 = sphi 0, %s113
      %s130 = sphi 0, %s114
    $region4: #{net_forward.9} parent=1 // loop_header_branch
      %14 = sbr.rel (%p12) target = $region8
    $region5: #{net_forward.9} parent=1 // loop_body
      %s16 = ssub.s32 %s11, 1
      %s17 = ssub.s32 %s11, 2
      %s18 = sadd.s32 %s11, 1
      %s19 = ssub.s32 %s11, %s18
      %p20 = scmp.eq.s32.totalorder %s19, 0
      %s22 = sadd.s32 %s21, 1
      %s23 = scalar_select %p20, %s21, %s22
      %p26 = pneg %p20
      %p27 = scmp.eq.s32.totalorder %s11, 11
      %p28 = por %p26, %p27
      %p29 = scmp.ne.s32.totalorder %s21, %s24
      %p30 = scmp.eq.s32.totalorder %s11, 0
      %p31 = por %p29, %p30
      %p32 = scmp.ne.s32.totalorder %s21, %s24
      %p33 = scmp.eq.s32.totalorder %s16, 11
      %p34 = por %p32, %p33
      %p35 = scmp.ne.s32.totalorder %s24, %s25
      %p36 = scmp.eq.s32.totalorder %s16, 0
      %p37 = por %p35, %p36
      %p38 = scmp.ne.s32.totalorder %s24, %s25
      %p39 = scmp.eq.s32.totalorder %s17, 11
      %p40 = por %p38, %p39
      %p42 = scmp.ne.s32.totalorder %s25, %s41
      %p43 = scmp.eq.s32.totalorder %s17, 0
      %p44 = por %p42, %p43
      %s46 = sadd.s32 %s45, 1
      %p49 = scmp.eq.s32.totalorder %s11, 11
      %p50 = scmp.ne.s32.totalorder %s45, %s47
      %p51 = scmp.eq.s32.totalorder %s11, 0
      %p52 = por %p50, %p51
      %p53 = scmp.ne.s32.totalorder %s45, %s47
      %p54 = scmp.eq.s32.totalorder %s16, 11
      %p55 = por %p53, %p54
      %p56 = scmp.ne.s32.totalorder %s47, %s48
      %p57 = scmp.eq.s32.totalorder %s16, 0
      %p58 = por %p56, %p57
      %p59 = scmp.ne.s32.totalorder %s47, %s48
      %p60 = scmp.eq.s32.totalorder %s17, 11
      %p61 = por %p59, %p60
      %p63 = scmp.ne.s32.totalorder %s48, %s62
      %p64 = scmp.eq.s32.totalorder %s17, 0
      %p65 = por %p63, %p64
      %s67 = sadd.s32 %s66, 1
      %p70 = scmp.eq.s32.totalorder %s11, 11
      %p71 = scmp.ne.s32.totalorder %s66, %s68
      %p72 = scmp.eq.s32.totalorder %s11, 0
      %p73 = por %p71, %p72
      %p74 = scmp.ne.s32.totalorder %s66, %s68
      %p75 = scmp.eq.s32.totalorder %s16, 11
      %p76 = por %p74, %p75
      %p77 = scmp.ne.s32.totalorder %s68, %s69
      %p78 = scmp.eq.s32.totalorder %s16, 0
      %p79 = por %p77, %p78
      %p80 = scmp.ne.s32.totalorder %s68, %s69
      %p81 = scmp.eq.s32.totalorder %s17, 11
      %p82 = por %p80, %p81
      %p84 = scmp.ne.s32.totalorder %s69, %s83
      %p85 = scmp.eq.s32.totalorder %s17, 0
      %p86 = por %p84, %p85
      %s88 = sadd.s32 %s87, 1
      %p91 = scmp.eq.s32.totalorder %s11, 11
      %p92 = scmp.ne.s32.totalorder %s87, %s89
      %p93 = scmp.eq.s32.totalorder %s11, 0
      %p94 = por %p92, %p93
      %p95 = scmp.ne.s32.totalorder %s87, %s89
      %p96 = scmp.eq.s32.totalorder %s16, 11
      %p97 = por %p95, %p96
      %p98 = scmp.ne.s32.totalorder %s89, %s90
      %p99 = scmp.eq.s32.totalorder %s16, 0
      %p100 = por %p98, %p99
      %p101 = scmp.ne.s32.totalorder %s89, %s90
      %p102 = scmp.eq.s32.totalorder %s17, 11
      %p103 = por %p101, %p102
      %p105 = scmp.ne.s32.totalorder %s90, %s104
      %p106 = scmp.eq.s32.totalorder %s17, 0
      %p107 = por %p105, %p106
      %s108 = ssub.s32 %s11, %s18
      %p109 = scmp.eq.s32.totalorder %s108, 0
      %s111 = sadd.s32 %s110, 1
      %s112 = scalar_select %p109, %s110, %s111
      %p115 = pneg %p109
      %p116 = scmp.eq.s32.totalorder %s11, 11
      %p117 = por %p115, %p116
      %p118 = scmp.ne.s32.totalorder %s110, %s113
      %p119 = scmp.eq.s32.totalorder %s11, 0
      %p120 = por %p118, %p119
      %p121 = scmp.ne.s32.totalorder %s110, %s113
      %p122 = scmp.eq.s32.totalorder %s16, 11
      %p123 = por %p121, %p122
      %p124 = scmp.ne.s32.totalorder %s113, %s114
      %p125 = scmp.eq.s32.totalorder %s16, 0
      %p126 = por %p124, %p125
      %p127 = scmp.ne.s32.totalorder %s113, %s114
      %p128 = scmp.eq.s32.totalorder %s17, 11
      %p129 = por %p127, %p128
      %p131 = scmp.ne.s32.totalorder %s114, %s130
      %p132 = scmp.eq.s32.totalorder %s17, 0
      %p133 = por %p131, %p132
      %p134 = scmp.le.s32.totalorder 1, %s11
      %p135 = scmp.lt.s32.totalorder %s11, 13
      %p136 = pnand %p134, %p135
      %p137 = pneg %p136
      // Predicated region
      $region9: #{net_forward.9} parent=5 // pred_check
        _
      $region10: #{net_forward.9} parent=5 // pred_check_branch
        %139 = sbr.rel (%p136) target = $region12
      $region11: #{net_forward.9} parent=5 // pred_region
        %s140 = ssub.s32 %s11, 1
        // Predicated region
        $region13: #{net_forward.9} parent=11 // pred_check
          %p141 = pneg %p58
        $region14: #{net_forward.9} parent=11 // pred_check_branch
          %143 = sbr.rel (%p141) target = $region16
        $region15: #{net_forward.9} parent=11 // pred_region
          _
        $region16: #{net_forward.9} parent=11 // pred_fallthru
          _
        // Predicated region
        $region17: #{net_forward.9} parent=11 // pred_check
          %p144 = pneg %p79
        $region18: #{net_forward.9} parent=11 // pred_check_branch
          %146 = sbr.rel (%p144) target = $region20
        $region19: #{net_forward.9} parent=11 // pred_region
          _
        $region20: #{net_forward.9} parent=11 // pred_fallthru
          _
        // Predicated region
        $region21: #{net_forward.9} parent=11 // pred_check
          %p147 = pneg %p100
        $region22: #{net_forward.9} parent=11 // pred_check_branch
          %149 = sbr.rel (%p147) target = $region24
        $region23: #{net_forward.9} parent=11 // pred_region
          %151 = vsyncadd [#allocation3], 0
          %s153 = sshll.u32 %s3, 4
          %s154 = int_to_ptr.vmem [resolvable:$true] %s153
          %156 = dma.vmem_to_smem %s154, 16, [#allocation2], [#allocation3]
        $region24: #{net_forward.9} parent=11 // pred_fallthru
          _
      $region12: #{net_forward.9} parent=5 // pred_fallthru
        _
      %p157 = scmp.lt.s32.totalorder %s11, 12
      // Predicated region
      $region25: #{net_forward.9} parent=5 // pred_check
        %p158 = pneg %p157
      $region26: #{net_forward.9} parent=5 // pred_check_branch
        %160 = sbr.rel (%p158) target = $region28
      $region27: #{net_forward.9} parent=5 // pred_region
        // Predicated region
        $region29: #{net_forward.9} parent=27 // pred_check
          %p161 = pneg %p31
        $region30: #{net_forward.9} parent=27 // pred_check_branch
          %163 = sbr.rel (%p161) target = $region32
        $region31: #{net_forward.9} parent=27 // pred_region
          %s164 = smul.u32 64, %s11
          %s165 = ssub.s32 729, %s164
          %p166 = scmp.lt.s32.totalorder %s165, 64
          %s167 = scalar_select %p166, %s165, 64
          %s168 = smul.u32 4, %s167
          %p169 = scmp.lt.s32.totalorder %s164, 728
          %s170 = scalar_select %p169, %s164, 728
          %s171 = smul.addr %s170, 4
          %s172 = scalar_lea.vmem %s0, %s171
          %s173 = smul.u32 64, %s11
          %s174 = ssub.s32 729, %s173
          %p175 = scmp.lt.s32.totalorder %s174, 64
          %s176 = scalar_select %p175, %s174, 64
          %s177 = smul.u32 4, %s176
        $region32: #{net_forward.9} parent=27 // pred_fallthru
          _
      $region28: #{net_forward.9} parent=5 // pred_fallthru
        _
      %p178 = scmp.le.s32.totalorder 1, %s11
      %p179 = scmp.lt.s32.totalorder %s11, 13
      %p180 = pnand %p178, %p179
      %p181 = pneg %p180
      // Predicated region
      $region33: #{net_forward.9} parent=5 // pred_check
        _
      $region34: #{net_forward.9} parent=5 // pred_check_branch
        %183 = sbr.rel (%p180) target = $region36
      $region35: #{net_forward.9} parent=5 // pred_region
        %s184 = ssub.s32 %s11, 1
        // Predicated region
        $region37: #{net_forward.9} parent=35 // pred_check
          %p185 = pneg %p100
        $region38: #{net_forward.9} parent=35 // pred_check_branch
          %187 = sbr.rel (%p185) target = $region40
        $region39: #{net_forward.9} parent=35 // pred_region
          %189 = dma.done [#allocation3], 16
        $region40: #{net_forward.9} parent=35 // pred_fallthru
          _
        %190 = sfence
        %s191 = smul.u32 64, %s16
        %s192 = ssub.s32 729, %s191
        %p193 = scmp.lt.s32.totalorder %s192, 64
        %s194 = scalar_select %p193, %s192, 64
        %s195 = smul.u32 4, %s194
        %p196 = scmp.lt.s32.totalorder %s191, 728
        %s197 = scalar_select %p196, %s191, 728
        %s198 = smul.addr %s197, 4
        %s199 = scalar_lea.vmem %s0, %s198
        %p200 = pneg %p37
        %p201 = pneg %p34
        %p202 = pneg %p58
        %p203 = pneg %p55
        %p204 = pneg %p79
        %p205 = pneg %p76
        %p206 = pneg %p100
        %p207 = pneg %p97
        %p208 = pneg %p126
        %p209 = pneg %p123
        %s210 = sand.u32 %s113, 1
        %s211 = sand.u32 %s113, 1
        %s212 = smul.addr %s211, 256
        %s213 = scalar_lea.vmem [#allocation4], %s212
        %s214 = smul.u32 64, %s16
        %s215 = ssub.s32 729, %s214
        %p216 = scmp.lt.s32.totalorder %s215, 64
        %s217 = scalar_select %p216, %s215, 64
        %s218 = smul.u32 4, %s217
        %p219 = scmp.lt.s32.totalorder %s214, 728
        %s220 = scalar_select %p219, %s214, 728
        %s221 = smul.addr %s220, 4
        %s222 = scalar_lea.vmem %s0, %s221
        %s223 = smul.u32 64, %s16
        %s224 = ssub.s32 729, %s223
        %p225 = scmp.lt.s32.totalorder %s224, 64
        %s226 = scalar_select %p225, %s224, 64
        %s227 = smul.u32 4, %s226
        %s228 = smul.u32 64, %s16
        %s229 = ssub.s32 729, %s228
        %p230 = scmp.lt.s32.totalorder %s229, 64
        %s231 = scalar_select %p230, %s229, 64
        %s232 = smul.u32 4, %s231
        %v234 = vld [vmem:[%s222] sm:$0xf]
        %v235 = vld [vmem:[%s222 + $0x4] sm:$0xf]
        %v236 = vld [vmem:[%s222 + $0x8] sm:$0xf]
        %v237 = vld [vmem:[%s222 + $0xc] sm:$0xf]
        %v238 = vld [vmem:[%s222 + $0x10] sm:$0xf]
        %v239 = vld [vmem:[%s222 + $0x14] sm:$0xf]
        %v240 = vld [vmem:[%s222 + $0x18] sm:$0xf]
        %v241 = vld [vmem:[%s222 + $0x1c] sm:$0xf]
        %v242 = vld [vmem:[%s222 + $0x20] sm:$0xf]
        %v243 = vld [vmem:[%s222 + $0x24] sm:$0xf]
        %v244 = vld [vmem:[%s222 + $0x28] sm:$0xf]
        %v245 = vld [vmem:[%s222 + $0x2c] sm:$0xf]
        %v246 = vld [vmem:[%s222 + $0x30] sm:$0xf]
        %v247 = vld [vmem:[%s222 + $0x34] sm:$0xf]
        %v248 = vld [vmem:[%s222 + $0x38] sm:$0xf]
        %v249 = vld [vmem:[%s222 + $0x3c] sm:$0xf]
        %v250 = vld [vmem:[%s222 + $0x40] sm:$0xf]
        %v251 = vld [vmem:[%s222 + $0x44] sm:$0xf]
        %v252 = vld [vmem:[%s222 + $0x48] sm:$0xf]
        %v253 = vld [vmem:[%s222 + $0x4c] sm:$0xf]
        %v254 = vld [vmem:[%s222 + $0x50] sm:$0xf]
        %v255 = vld [vmem:[%s222 + $0x54] sm:$0xf]
        %v256 = vld [vmem:[%s222 + $0x58] sm:$0xf]
        %v257 = vld [vmem:[%s222 + $0x5c] sm:$0xf]
        %v258 = vld [vmem:[%s222 + $0x60] sm:$0xf]
        %v259 = vld [vmem:[%s222 + $0x64] sm:$0xf]
        %v260 = vld [vmem:[%s222 + $0x68] sm:$0xf]
        %v261 = vld [vmem:[%s222 + $0x6c] sm:$0xf]
        %v262 = vld [vmem:[%s222 + $0x70] sm:$0xf]
        %v263 = vld [vmem:[%s222 + $0x74] sm:$0xf]
        %v264 = vld [vmem:[%s222 + $0x78] sm:$0xf]
        %v265 = vld [vmem:[%s222 + $0x7c] sm:$0xf]
        %v266 = vld [vmem:[%s222 + $0x80] sm:$0xf]
        %v267 = vld [vmem:[%s222 + $0x84] sm:$0xf]
        %v268 = vld [vmem:[%s222 + $0x88] sm:$0xf]
        %v269 = vld [vmem:[%s222 + $0x8c] sm:$0xf]
        %v270 = vld [vmem:[%s222 + $0x90] sm:$0xf]
        %v271 = vld [vmem:[%s222 + $0x94] sm:$0xf]
        %v272 = vld [vmem:[%s222 + $0x98] sm:$0xf]
        %v273 = vld [vmem:[%s222 + $0x9c] sm:$0xf]
        %v274 = vld [vmem:[%s222 + $0xa0] sm:$0xf]
        %v275 = vld [vmem:[%s222 + $0xa4] sm:$0xf]
        %v276 = vld [vmem:[%s222 + $0xa8] sm:$0xf]
        %v277 = vld [vmem:[%s222 + $0xac] sm:$0xf]
        %v278 = vld [vmem:[%s222 + $0xb0] sm:$0xf]
        %v279 = vld [vmem:[%s222 + $0xb4] sm:$0xf]
        %v280 = vld [vmem:[%s222 + $0xb8] sm:$0xf]
        %v281 = vld [vmem:[%s222 + $0xbc] sm:$0xf]
        %v282 = vld [vmem:[%s222 + $0xc0] sm:$0xf]
        %v283 = vld [vmem:[%s222 + $0xc4] sm:$0xf]
        %v284 = vld [vmem:[%s222 + $0xc8] sm:$0xf]
        %v285 = vld [vmem:[%s222 + $0xcc] sm:$0xf]
        %v286 = vld [vmem:[%s222 + $0xd0] sm:$0xf]
        %v287 = vld [vmem:[%s222 + $0xd4] sm:$0xf]
        %v288 = vld [vmem:[%s222 + $0xd8] sm:$0xf]
        %v289 = vld [vmem:[%s222 + $0xdc] sm:$0xf]
        %v290 = vld [vmem:[%s222 + $0xe0] sm:$0xf]
        %v291 = vld [vmem:[%s222 + $0xe4] sm:$0xf]
        %v292 = vld [vmem:[%s222 + $0xe8] sm:$0xf]
        %v293 = vld [vmem:[%s222 + $0xec] sm:$0xf]
        %v294 = vld [vmem:[%s222 + $0xf0] sm:$0xf]
        %v295 = vld [vmem:[%s222 + $0xf4] sm:$0xf]
        %v296 = vld [vmem:[%s222 + $0xf8] sm:$0xf]
        %v297 = vld [vmem:[%s222 + $0xfc] sm:$0xf]
        %v298 = vld [vmem:[%s1] sm:$0xf]
        %v299 = vld [vmem:[%s1 + $0x4] sm:$0xf]
        %v300 = vld [vmem:[%s1 + $0x8] sm:$0xf]
        %v301 = vld [vmem:[%s1 + $0xc] sm:$0xf]
        %v302 = vld [vmem:[%s1 + $0x10] sm:$0xf]
        %v303 = vld [vmem:[%s1 + $0x14] sm:$0xf]
        %v304 = vld [vmem:[%s1 + $0x18] sm:$0xf]
        %v305 = vld [vmem:[%s1 + $0x1c] sm:$0xf]
        %v306 = vld [vmem:[%s1 + $0x20] sm:$0xf]
        %v307 = vld [vmem:[%s1 + $0x24] sm:$0x3]
        %v308 = vld [vmem:[%s2] sm:$0x1]
        %v310 = vperm.slane %v308, 0
        %v376 = vunpack.c.l.b16 %v234
        %v377 = vunpack.c.l.b16 %v235
        %v378 = vunpack.c.l.b16 %v236
        %v379 = vunpack.c.l.b16 %v237
        %v380 = vunpack.c.l.b16 %v238
        %v381 = vunpack.c.l.b16 %v239
        %v382 = vunpack.c.l.b16 %v240
        %v383 = vunpack.c.l.b16 %v241
        %v384 = vunpack.c.l.b16 %v242
        %v385 = vunpack.c.l.b16 %v243
        %v386 = vunpack.c.l.b16 %v244
        %v387 = vunpack.c.l.b16 %v245
        %v388 = vunpack.c.l.b16 %v246
        %v389 = vunpack.c.l.b16 %v247
        %v390 = vunpack.c.l.b16 %v248
        %v391 = vunpack.c.l.b16 %v249
        %v392 = vunpack.c.l.b16 %v250
        %v393 = vunpack.c.l.b16 %v251
        %v394 = vunpack.c.l.b16 %v252
        %v395 = vunpack.c.l.b16 %v253
        %v396 = vunpack.c.l.b16 %v254
        %v397 = vunpack.c.l.b16 %v255
        %v398 = vunpack.c.l.b16 %v256
        %v399 = vunpack.c.l.b16 %v257
        %v400 = vunpack.c.l.b16 %v258
        %v401 = vunpack.c.l.b16 %v259
        %v402 = vunpack.c.l.b16 %v260
        %v403 = vunpack.c.l.b16 %v261
        %v404 = vunpack.c.l.b16 %v262
        %v405 = vunpack.c.l.b16 %v263
        %v406 = vunpack.c.l.b16 %v264
        %v407 = vunpack.c.l.b16 %v265
        %v408 = vunpack.c.l.b16 %v266
        %v409 = vunpack.c.l.b16 %v267
        %v410 = vunpack.c.l.b16 %v268
        %v411 = vunpack.c.l.b16 %v269
        %v412 = vunpack.c.l.b16 %v270
        %v413 = vunpack.c.l.b16 %v271
        %v414 = vunpack.c.l.b16 %v272
        %v415 = vunpack.c.l.b16 %v273
        %v416 = vunpack.c.l.b16 %v274
        %v417 = vunpack.c.l.b16 %v275
        %v418 = vunpack.c.l.b16 %v276
        %v419 = vunpack.c.l.b16 %v277
        %v420 = vunpack.c.l.b16 %v278
        %v421 = vunpack.c.l.b16 %v279
        %v422 = vunpack.c.l.b16 %v280
        %v423 = vunpack.c.l.b16 %v281
        %v424 = vunpack.c.l.b16 %v282
        %v425 = vunpack.c.l.b16 %v283
        %v426 = vunpack.c.l.b16 %v284
        %v427 = vunpack.c.l.b16 %v285
        %v428 = vunpack.c.l.b16 %v286
        %v429 = vunpack.c.l.b16 %v287
        %v430 = vunpack.c.l.b16 %v288
        %v431 = vunpack.c.l.b16 %v289
        %v432 = vunpack.c.l.b16 %v290
        %v433 = vunpack.c.l.b16 %v291
        %v434 = vunpack.c.l.b16 %v292
        %v435 = vunpack.c.l.b16 %v293
        %v436 = vunpack.c.l.b16 %v294
        %v437 = vunpack.c.l.b16 %v295
        %v438 = vunpack.c.l.b16 %v296
        %v439 = vunpack.c.l.b16 %v297
        %v440 = vpack.c.b16 %v377, %v376
        %v441 = vpack.c.b16 %v379, %v378
        %v442 = vpack.c.b16 %v381, %v380
        %v443 = vpack.c.b16 %v383, %v382
        %v444 = vpack.c.b16 %v385, %v384
        %v445 = vpack.c.b16 %v387, %v386
        %v446 = vpack.c.b16 %v389, %v388
        %v447 = vpack.c.b16 %v391, %v390
        %v448 = vpack.c.b16 %v393, %v392
        %v449 = vpack.c.b16 %v395, %v394
        %v450 = vpack.c.b16 %v397, %v396
        %v451 = vpack.c.b16 %v399, %v398
        %v452 = vpack.c.b16 %v401, %v400
        %v453 = vpack.c.b16 %v403, %v402
        %v454 = vpack.c.b16 %v405, %v404
        %v455 = vpack.c.b16 %v407, %v406
        %v456 = vpack.c.b16 %v409, %v408
        %v457 = vpack.c.b16 %v411, %v410
        %v458 = vpack.c.b16 %v413, %v412
        %v459 = vpack.c.b16 %v415, %v414
        %v460 = vpack.c.b16 %v417, %v416
        %v461 = vpack.c.b16 %v419, %v418
        %v462 = vpack.c.b16 %v421, %v420
        %v463 = vpack.c.b16 %v423, %v422
        %v464 = vpack.c.b16 %v425, %v424
        %v465 = vpack.c.b16 %v427, %v426
        %v466 = vpack.c.b16 %v429, %v428
        %v467 = vpack.c.b16 %v431, %v430
        %v468 = vpack.c.b16 %v433, %v432
        %v469 = vpack.c.b16 %v435, %v434
        %v470 = vpack.c.b16 %v437, %v436
        %v471 = vpack.c.b16 %v439, %v438
        %v482 = vunpack.c.l.b16 %v298
        %v483 = vunpack.c.l.b16 %v299
        %v484 = vunpack.c.l.b16 %v300
        %v485 = vunpack.c.l.b16 %v301
        %v486 = vunpack.c.l.b16 %v302
        %v487 = vunpack.c.l.b16 %v303
        %v488 = vunpack.c.l.b16 %v304
        %v489 = vunpack.c.l.b16 %v305
        %v490 = vunpack.c.l.b16 %v306
        %v491 = vunpack.c.l.b16 %v307
        %v492 = vpack.c.b16 %v483, %v482
        %v493 = vpack.c.b16 %v485, %v484
        %v494 = vpack.c.b16 %v487, %v486
        %v495 = vpack.c.b16 %v489, %v488
        %v496 = vpack.c.b16 %v491, %v490
        %vm501 = vcmask 613376
        %v503 = vsel %vm501, %v440, 0
        %v506 = vsel %vm501, %v441, 0
        %v509 = vsel %vm501, %v442, 0
        %v512 = vsel %vm501, %v443, 0
        %v515 = vsel %vm501, %v444, 0
        %v518 = vsel %vm501, %v445, 0
        %v521 = vsel %vm501, %v446, 0
        %v524 = vsel %vm501, %v447, 0
        %v527 = vsel %vm501, %v448, 0
        %v530 = vsel %vm501, %v449, 0
        %v533 = vsel %vm501, %v450, 0
        %v536 = vsel %vm501, %v451, 0
        %v539 = vsel %vm501, %v452, 0
        %v542 = vsel %vm501, %v453, 0
        %v545 = vsel %vm501, %v454, 0
        %v548 = vsel %vm501, %v455, 0
        %v551 = vsel %vm501, %v456, 0
        %v554 = vsel %vm501, %v457, 0
        %v557 = vsel %vm501, %v458, 0
        %v560 = vsel %vm501, %v459, 0
        %v563 = vsel %vm501, %v460, 0
        %v566 = vsel %vm501, %v461, 0
        %v569 = vsel %vm501, %v462, 0
        %v572 = vsel %vm501, %v463, 0
        %v575 = vsel %vm501, %v464, 0
        %v578 = vsel %vm501, %v465, 0
        %v581 = vsel %vm501, %v466, 0
        %v584 = vsel %vm501, %v467, 0
        %v587 = vsel %vm501, %v468, 0
        %v590 = vsel %vm501, %v469, 0
        %v593 = vsel %vm501, %v470, 0
        %v596 = vsel %vm501, %v471, 0
        %vm598 = vcmask 1044480
        %vm599 = vcmask 1045504
        %v600 = vsel %vm598, 4294967295, 65535
        %v601 = vsel %vm599, %v600, 0
        %v603 = vand.u32 %v496, %v601
        %605 = vmatpush.bf16.msra.mxu0 0
        %606 = vmatpush.bf16.msra.mxu0 0
        %607 = vmatpush.bf16.msra.mxu0 0
        %608 = vmatpush.bf16.msra.mxu0 %v603
        %609 = vmatpush.bf16.msra.mxu0 %v495
        %610 = vmatpush.bf16.msra.mxu0 %v494
        %611 = vmatpush.bf16.msra.mxu0 %v493
        %612 = vmatpush.bf16.msra.mxu0 %v492
        %613 = vmatmul.bf16.gmra.mxu0 %v503
        %v614 = vpop.f32.mrf.mxu0
        %v615 = vadd.f32 %v310, %v614
        %v616 = vpop.f32.mrf.mxu0
        %v617 = vadd.f32 %v310, %v616
        %618 = vmatmul.bf16.gmra.mxu0 %v506
        %v619 = vpop.f32.mrf.mxu0
        %v620 = vadd.f32 %v310, %v619
        %v621 = vpop.f32.mrf.mxu0
        %v622 = vadd.f32 %v310, %v621
        %623 = vmatmul.bf16.gmra.mxu0 %v509
        %v624 = vpop.f32.mrf.mxu0
        %v625 = vadd.f32 %v310, %v624
        %v626 = vpop.f32.mrf.mxu0
        %v627 = vadd.f32 %v310, %v626
        %628 = vmatmul.bf16.gmra.mxu0 %v512
        %v629 = vpop.f32.mrf.mxu0
        %v630 = vadd.f32 %v310, %v629
        %v631 = vpop.f32.mrf.mxu0
        %v632 = vadd.f32 %v310, %v631
        %633 = vmatmul.bf16.gmra.mxu0 %v515
        %v634 = vpop.f32.mrf.mxu0
        %v635 = vadd.f32 %v310, %v634
        %v636 = vpop.f32.mrf.mxu0
        %v637 = vadd.f32 %v310, %v636
        %638 = vmatmul.bf16.gmra.mxu0 %v518
        %v639 = vpop.f32.mrf.mxu0
        %v640 = vadd.f32 %v310, %v639
        %v641 = vpop.f32.mrf.mxu0
        %v642 = vadd.f32 %v310, %v641
        %643 = vmatmul.bf16.gmra.mxu0 %v521
        %v644 = vpop.f32.mrf.mxu0
        %v645 = vadd.f32 %v310, %v644
        %v646 = vpop.f32.mrf.mxu0
        %v647 = vadd.f32 %v310, %v646
        %648 = vmatmul.bf16.gmra.mxu0 %v524
        %v649 = vpop.f32.mrf.mxu0
        %v650 = vadd.f32 %v310, %v649
        %v651 = vpop.f32.mrf.mxu0
        %v652 = vadd.f32 %v310, %v651
        %653 = vmatmul.bf16.gmra.mxu0 %v527
        %v654 = vpop.f32.mrf.mxu0
        %v655 = vadd.f32 %v310, %v654
        %v656 = vpop.f32.mrf.mxu0
        %v657 = vadd.f32 %v310, %v656
        %658 = vmatmul.bf16.gmra.mxu0 %v530
        %v659 = vpop.f32.mrf.mxu0
        %v660 = vadd.f32 %v310, %v659
        %v661 = vpop.f32.mrf.mxu0
        %v662 = vadd.f32 %v310, %v661
        %663 = vmatmul.bf16.gmra.mxu0 %v533
        %v664 = vpop.f32.mrf.mxu0
        %v665 = vadd.f32 %v310, %v664
        %v666 = vpop.f32.mrf.mxu0
        %v667 = vadd.f32 %v310, %v666
        %668 = vmatmul.bf16.gmra.mxu0 %v536
        %v669 = vpop.f32.mrf.mxu0
        %v670 = vadd.f32 %v310, %v669
        %v671 = vpop.f32.mrf.mxu0
        %v672 = vadd.f32 %v310, %v671
        %673 = vmatmul.bf16.gmra.mxu0 %v539
        %v674 = vpop.f32.mrf.mxu0
        %v675 = vadd.f32 %v310, %v674
        %v676 = vpop.f32.mrf.mxu0
        %v677 = vadd.f32 %v310, %v676
        %678 = vmatmul.bf16.gmra.mxu0 %v542
        %v679 = vpop.f32.mrf.mxu0
        %v680 = vadd.f32 %v310, %v679
        %v681 = vpop.f32.mrf.mxu0
        %v682 = vadd.f32 %v310, %v681
        %683 = vmatmul.bf16.gmra.mxu0 %v545
        %v684 = vpop.f32.mrf.mxu0
        %v685 = vadd.f32 %v310, %v684
        %v686 = vpop.f32.mrf.mxu0
        %v687 = vadd.f32 %v310, %v686
        %688 = vmatmul.bf16.gmra.mxu0 %v548
        %v689 = vpop.f32.mrf.mxu0
        %v690 = vadd.f32 %v310, %v689
        %v691 = vpop.f32.mrf.mxu0
        %v692 = vadd.f32 %v310, %v691
        %693 = vmatmul.bf16.gmra.mxu0 %v551
        %v694 = vpop.f32.mrf.mxu0
        %v695 = vadd.f32 %v310, %v694
        %v696 = vpop.f32.mrf.mxu0
        %v697 = vadd.f32 %v310, %v696
        %698 = vmatmul.bf16.gmra.mxu0 %v554
        %v699 = vpop.f32.mrf.mxu0
        %v700 = vadd.f32 %v310, %v699
        %v701 = vpop.f32.mrf.mxu0
        %v702 = vadd.f32 %v310, %v701
        %703 = vmatmul.bf16.gmra.mxu0 %v557
        %v704 = vpop.f32.mrf.mxu0
        %v705 = vadd.f32 %v310, %v704
        %v706 = vpop.f32.mrf.mxu0
        %v707 = vadd.f32 %v310, %v706
        %708 = vmatmul.bf16.gmra.mxu0 %v560
        %v709 = vpop.f32.mrf.mxu0
        %v710 = vadd.f32 %v310, %v709
        %v711 = vpop.f32.mrf.mxu0
        %v712 = vadd.f32 %v310, %v711
        %713 = vmatmul.bf16.gmra.mxu0 %v563
        %v714 = vpop.f32.mrf.mxu0
        %v715 = vadd.f32 %v310, %v714
        %v716 = vpop.f32.mrf.mxu0
        %v717 = vadd.f32 %v310, %v716
        %718 = vmatmul.bf16.gmra.mxu0 %v566
        %v719 = vpop.f32.mrf.mxu0
        %v720 = vadd.f32 %v310, %v719
        %v721 = vpop.f32.mrf.mxu0
        %v722 = vadd.f32 %v310, %v721
        %723 = vmatmul.bf16.gmra.mxu0 %v569
        %v724 = vpop.f32.mrf.mxu0
        %v725 = vadd.f32 %v310, %v724
        %v726 = vpop.f32.mrf.mxu0
        %v727 = vadd.f32 %v310, %v726
        %728 = vmatmul.bf16.gmra.mxu0 %v572
        %v729 = vpop.f32.mrf.mxu0
        %v730 = vadd.f32 %v310, %v729
        %v731 = vpop.f32.mrf.mxu0
        %v732 = vadd.f32 %v310, %v731
        %733 = vmatmul.bf16.gmra.mxu0 %v575
        %v734 = vpop.f32.mrf.mxu0
        %v735 = vadd.f32 %v310, %v734
        %v736 = vpop.f32.mrf.mxu0
        %v737 = vadd.f32 %v310, %v736
        %738 = vmatmul.bf16.gmra.mxu0 %v578
        %v739 = vpop.f32.mrf.mxu0
        %v740 = vadd.f32 %v310, %v739
        %v741 = vpop.f32.mrf.mxu0
        %v742 = vadd.f32 %v310, %v741
        %743 = vmatmul.bf16.gmra.mxu0 %v581
        %v744 = vpop.f32.mrf.mxu0
        %v745 = vadd.f32 %v310, %v744
        %v746 = vpop.f32.mrf.mxu0
        %v747 = vadd.f32 %v310, %v746
        %748 = vmatmul.bf16.gmra.mxu0 %v584
        %v749 = vpop.f32.mrf.mxu0
        %v750 = vadd.f32 %v310, %v749
        %v751 = vpop.f32.mrf.mxu0
        %v752 = vadd.f32 %v310, %v751
        %753 = vmatmul.bf16.gmra.mxu0 %v587
        %v754 = vpop.f32.mrf.mxu0
        %v755 = vadd.f32 %v310, %v754
        %v756 = vpop.f32.mrf.mxu0
        %v757 = vadd.f32 %v310, %v756
        %758 = vmatmul.bf16.gmra.mxu0 %v590
        %v759 = vpop.f32.mrf.mxu0
        %v760 = vadd.f32 %v310, %v759
        %v761 = vpop.f32.mrf.mxu0
        %v762 = vadd.f32 %v310, %v761
        %763 = vmatmul.bf16.gmra.mxu0 %v593
        %v764 = vpop.f32.mrf.mxu0
        %v765 = vadd.f32 %v310, %v764
        %v766 = vpop.f32.mrf.mxu0
        %v767 = vadd.f32 %v310, %v766
        %768 = vmatmul.bf16.gmra.mxu0 %v596
        %v769 = vpop.f32.mrf.mxu0
        %v770 = vadd.f32 %v310, %v769
        %v771 = vpop.f32.mrf.mxu0
        %v772 = vadd.f32 %v310, %v771
        %773 = vdwg.mxu0
        %s774 = sld [smem:[#allocation2]]
        %vm775 = vcmp.ge.f32.partialorder %v615, 0.0
        %vm776 = vcmp.ge.f32.partialorder %v617, 0.0
        %vm777 = vcmp.ge.f32.partialorder %v620, 0.0
        %vm778 = vcmp.ge.f32.partialorder %v622, 0.0
        %vm779 = vcmp.ge.f32.partialorder %v625, 0.0
        %vm780 = vcmp.ge.f32.partialorder %v627, 0.0
        %vm781 = vcmp.ge.f32.partialorder %v630, 0.0
        %vm782 = vcmp.ge.f32.partialorder %v632, 0.0
        %vm783 = vcmp.ge.f32.partialorder %v635, 0.0
        %vm784 = vcmp.ge.f32.partialorder %v637, 0.0
        %vm785 = vcmp.ge.f32.partialorder %v640, 0.0
        %vm786 = vcmp.ge.f32.partialorder %v642, 0.0
        %vm787 = vcmp.ge.f32.partialorder %v645, 0.0
        %vm788 = vcmp.ge.f32.partialorder %v647, 0.0
        %vm789 = vcmp.ge.f32.partialorder %v650, 0.0
        %vm790 = vcmp.ge.f32.partialorder %v652, 0.0
        %vm791 = vcmp.ge.f32.partialorder %v655, 0.0
        %vm792 = vcmp.ge.f32.partialorder %v657, 0.0
        %vm793 = vcmp.ge.f32.partialorder %v660, 0.0
        %vm794 = vcmp.ge.f32.partialorder %v662, 0.0
        %vm795 = vcmp.ge.f32.partialorder %v665, 0.0
        %vm796 = vcmp.ge.f32.partialorder %v667, 0.0
        %vm797 = vcmp.ge.f32.partialorder %v670, 0.0
        %vm798 = vcmp.ge.f32.partialorder %v672, 0.0
        %vm799 = vcmp.ge.f32.partialorder %v675, 0.0
        %vm800 = vcmp.ge.f32.partialorder %v677, 0.0
        %vm801 = vcmp.ge.f32.partialorder %v680, 0.0
        %vm802 = vcmp.ge.f32.partialorder %v682, 0.0
        %vm803 = vcmp.ge.f32.partialorder %v685, 0.0
        %vm804 = vcmp.ge.f32.partialorder %v687, 0.0
        %vm805 = vcmp.ge.f32.partialorder %v690, 0.0
        %vm806 = vcmp.ge.f32.partialorder %v692, 0.0
        %vm807 = vcmp.ge.f32.partialorder %v695, 0.0
        %vm808 = vcmp.ge.f32.partialorder %v697, 0.0
        %vm809 = vcmp.ge.f32.partialorder %v700, 0.0
        %vm810 = vcmp.ge.f32.partialorder %v702, 0.0
        %vm811 = vcmp.ge.f32.partialorder %v705, 0.0
        %vm812 = vcmp.ge.f32.partialorder %v707, 0.0
        %vm813 = vcmp.ge.f32.partialorder %v710, 0.0
        %vm814 = vcmp.ge.f32.partialorder %v712, 0.0
        %vm815 = vcmp.ge.f32.partialorder %v715, 0.0
        %vm816 = vcmp.ge.f32.partialorder %v717, 0.0
        %vm817 = vcmp.ge.f32.partialorder %v720, 0.0
        %vm818 = vcmp.ge.f32.partialorder %v722, 0.0
        %vm819 = vcmp.ge.f32.partialorder %v725, 0.0
        %vm820 = vcmp.ge.f32.partialorder %v727, 0.0
        %vm821 = vcmp.ge.f32.partialorder %v730, 0.0
        %vm822 = vcmp.ge.f32.partialorder %v732, 0.0
        %vm823 = vcmp.ge.f32.partialorder %v735, 0.0
        %vm824 = vcmp.ge.f32.partialorder %v737, 0.0
        %vm825 = vcmp.ge.f32.partialorder %v740, 0.0
        %vm826 = vcmp.ge.f32.partialorder %v742, 0.0
        %vm827 = vcmp.ge.f32.partialorder %v745, 0.0
        %vm828 = vcmp.ge.f32.partialorder %v747, 0.0
        %vm829 = vcmp.ge.f32.partialorder %v750, 0.0
        %vm830 = vcmp.ge.f32.partialorder %v752, 0.0
        %vm831 = vcmp.ge.f32.partialorder %v755, 0.0
        %vm832 = vcmp.ge.f32.partialorder %v757, 0.0
        %vm833 = vcmp.ge.f32.partialorder %v760, 0.0
        %vm834 = vcmp.ge.f32.partialorder %v762, 0.0
        %vm835 = vcmp.ge.f32.partialorder %v765, 0.0
        %vm836 = vcmp.ge.f32.partialorder %v767, 0.0
        %vm837 = vcmp.ge.f32.partialorder %v770, 0.0
        %vm838 = vcmp.ge.f32.partialorder %v772, 0.0
        %v839 = vstv %s774
        %v840 = vmul.f32 %v839, %v615
        %v841 = vmul.f32 %v839, %v617
        %v842 = vmul.f32 %v839, %v620
        %v843 = vmul.f32 %v839, %v622
        %v844 = vmul.f32 %v839, %v625
        %v845 = vmul.f32 %v839, %v627
        %v846 = vmul.f32 %v839, %v630
        %v847 = vmul.f32 %v839, %v632
        %v848 = vmul.f32 %v839, %v635
        %v849 = vmul.f32 %v839, %v637
        %v850 = vmul.f32 %v839, %v640
        %v851 = vmul.f32 %v839, %v642
        %v852 = vmul.f32 %v839, %v645
        %v853 = vmul.f32 %v839, %v647
        %v854 = vmul.f32 %v839, %v650
        %v855 = vmul.f32 %v839, %v652
        %v856 = vmul.f32 %v839, %v655
        %v857 = vmul.f32 %v839, %v657
        %v858 = vmul.f32 %v839, %v660
        %v859 = vmul.f32 %v839, %v662
        %v860 = vmul.f32 %v839, %v665
        %v861 = vmul.f32 %v839, %v667
        %v862 = vmul.f32 %v839, %v670
        %v863 = vmul.f32 %v839, %v672
        %v864 = vmul.f32 %v839, %v675
        %v865 = vmul.f32 %v839, %v677
        %v866 = vmul.f32 %v839, %v680
        %v867 = vmul.f32 %v839, %v682
        %v868 = vmul.f32 %v839, %v685
        %v869 = vmul.f32 %v839, %v687
        %v870 = vmul.f32 %v839, %v690
        %v871 = vmul.f32 %v839, %v692
        %v872 = vmul.f32 %v839, %v695
        %v873 = vmul.f32 %v839, %v697
        %v874 = vmul.f32 %v839, %v700
        %v875 = vmul.f32 %v839, %v702
        %v876 = vmul.f32 %v839, %v705
        %v877 = vmul.f32 %v839, %v707
        %v878 = vmul.f32 %v839, %v710
        %v879 = vmul.f32 %v839, %v712
        %v880 = vmul.f32 %v839, %v715
        %v881 = vmul.f32 %v839, %v717
        %v882 = vmul.f32 %v839, %v720
        %v883 = vmul.f32 %v839, %v722
        %v884 = vmul.f32 %v839, %v725
        %v885 = vmul.f32 %v839, %v727
        %v886 = vmul.f32 %v839, %v730
        %v887 = vmul.f32 %v839, %v732
        %v888 = vmul.f32 %v839, %v735
        %v889 = vmul.f32 %v839, %v737
        %v890 = vmul.f32 %v839, %v740
        %v891 = vmul.f32 %v839, %v742
        %v892 = vmul.f32 %v839, %v745
        %v893 = vmul.f32 %v839, %v747
        %v894 = vmul.f32 %v839, %v750
        %v895 = vmul.f32 %v839, %v752
        %v896 = vmul.f32 %v839, %v755
        %v897 = vmul.f32 %v839, %v757
        %v898 = vmul.f32 %v839, %v760
        %v899 = vmul.f32 %v839, %v762
        %v900 = vmul.f32 %v839, %v765
        %v901 = vmul.f32 %v839, %v767
        %v902 = vmul.f32 %v839, %v770
        %v903 = vmul.f32 %v839, %v772
        %v904 = vsel %vm775, %v615, %v840
        %v905 = vsel %vm776, %v617, %v841
        %v906 = vsel %vm777, %v620, %v842
        %v907 = vsel %vm778, %v622, %v843
        %v908 = vsel %vm779, %v625, %v844
        %v909 = vsel %vm780, %v627, %v845
        %v910 = vsel %vm781, %v630, %v846
        %v911 = vsel %vm782, %v632, %v847
        %v912 = vsel %vm783, %v635, %v848
        %v913 = vsel %vm784, %v637, %v849
        %v914 = vsel %vm785, %v640, %v850
        %v915 = vsel %vm786, %v642, %v851
        %v916 = vsel %vm787, %v645, %v852
        %v917 = vsel %vm788, %v647, %v853
        %v918 = vsel %vm789, %v650, %v854
        %v919 = vsel %vm790, %v652, %v855
        %v920 = vsel %vm791, %v655, %v856
        %v921 = vsel %vm792, %v657, %v857
        %v922 = vsel %vm793, %v660, %v858
        %v923 = vsel %vm794, %v662, %v859
        %v924 = vsel %vm795, %v665, %v860
        %v925 = vsel %vm796, %v667, %v861
        %v926 = vsel %vm797, %v670, %v862
        %v927 = vsel %vm798, %v672, %v863
        %v928 = vsel %vm799, %v675, %v864
        %v929 = vsel %vm800, %v677, %v865
        %v930 = vsel %vm801, %v680, %v866
        %v931 = vsel %vm802, %v682, %v867
        %v932 = vsel %vm803, %v685, %v868
        %v933 = vsel %vm804, %v687, %v869
        %v934 = vsel %vm805, %v690, %v870
        %v935 = vsel %vm806, %v692, %v871
        %v936 = vsel %vm807, %v695, %v872
        %v937 = vsel %vm808, %v697, %v873
        %v938 = vsel %vm809, %v700, %v874
        %v939 = vsel %vm810, %v702, %v875
        %v940 = vsel %vm811, %v705, %v876
        %v941 = vsel %vm812, %v707, %v877
        %v942 = vsel %vm813, %v710, %v878
        %v943 = vsel %vm814, %v712, %v879
        %v944 = vsel %vm815, %v715, %v880
        %v945 = vsel %vm816, %v717, %v881
        %v946 = vsel %vm817, %v720, %v882
        %v947 = vsel %vm818, %v722, %v883
        %v948 = vsel %vm819, %v725, %v884
        %v949 = vsel %vm820, %v727, %v885
        %v950 = vsel %vm821, %v730, %v886
        %v951 = vsel %vm822, %v732, %v887
        %v952 = vsel %vm823, %v735, %v888
        %v953 = vsel %vm824, %v737, %v889
        %v954 = vsel %vm825, %v740, %v890
        %v955 = vsel %vm826, %v742, %v891
        %v956 = vsel %vm827, %v745, %v892
        %v957 = vsel %vm828, %v747, %v893
        %v958 = vsel %vm829, %v750, %v894
        %v959 = vsel %vm830, %v752, %v895
        %v960 = vsel %vm831, %v755, %v896
        %v961 = vsel %vm832, %v757, %v897
        %v962 = vsel %vm833, %v760, %v898
        %v963 = vsel %vm834, %v762, %v899
        %v964 = vsel %vm835, %v765, %v900
        %v965 = vsel %vm836, %v767, %v901
        %v966 = vsel %vm837, %v770, %v902
        %v967 = vsel %vm838, %v772, %v903
        %v968 = vpack.c.bf16 %v904, %v904
        %v969 = vpack.c.bf16 %v905, %v905
        %v970 = vpack.c.bf16 %v906, %v906
        %v971 = vpack.c.bf16 %v907, %v907
        %v972 = vpack.c.bf16 %v908, %v908
        %v973 = vpack.c.bf16 %v909, %v909
        %v974 = vpack.c.bf16 %v910, %v910
        %v975 = vpack.c.bf16 %v911, %v911
        %v976 = vpack.c.bf16 %v912, %v912
        %v977 = vpack.c.bf16 %v913, %v913
        %v978 = vpack.c.bf16 %v914, %v914
        %v979 = vpack.c.bf16 %v915, %v915
        %v980 = vpack.c.bf16 %v916, %v916
        %v981 = vpack.c.bf16 %v917, %v917
        %v982 = vpack.c.bf16 %v918, %v918
        %v983 = vpack.c.bf16 %v919, %v919
        %v984 = vpack.c.bf16 %v920, %v920
        %v985 = vpack.c.bf16 %v921, %v921
        %v986 = vpack.c.bf16 %v922, %v922
        %v987 = vpack.c.bf16 %v923, %v923
        %v988 = vpack.c.bf16 %v924, %v924
        %v989 = vpack.c.bf16 %v925, %v925
        %v990 = vpack.c.bf16 %v926, %v926
        %v991 = vpack.c.bf16 %v927, %v927
        %v992 = vpack.c.bf16 %v928, %v928
        %v993 = vpack.c.bf16 %v929, %v929
        %v994 = vpack.c.bf16 %v930, %v930
        %v995 = vpack.c.bf16 %v931, %v931
        %v996 = vpack.c.bf16 %v932, %v932
        %v997 = vpack.c.bf16 %v933, %v933
        %v998 = vpack.c.bf16 %v934, %v934
        %v999 = vpack.c.bf16 %v935, %v935
        %v1000 = vpack.c.bf16 %v936, %v936
        %v1001 = vpack.c.bf16 %v937, %v937
        %v1002 = vpack.c.bf16 %v938, %v938
        %v1003 = vpack.c.bf16 %v939, %v939
        %v1004 = vpack.c.bf16 %v940, %v940
        %v1005 = vpack.c.bf16 %v941, %v941
        %v1006 = vpack.c.bf16 %v942, %v942
        %v1007 = vpack.c.bf16 %v943, %v943
        %v1008 = vpack.c.bf16 %v944, %v944
        %v1009 = vpack.c.bf16 %v945, %v945
        %v1010 = vpack.c.bf16 %v946, %v946
        %v1011 = vpack.c.bf16 %v947, %v947
        %v1012 = vpack.c.bf16 %v948, %v948
        %v1013 = vpack.c.bf16 %v949, %v949
        %v1014 = vpack.c.bf16 %v950, %v950
        %v1015 = vpack.c.bf16 %v951, %v951
        %v1016 = vpack.c.bf16 %v952, %v952
        %v1017 = vpack.c.bf16 %v953, %v953
        %v1018 = vpack.c.bf16 %v954, %v954
        %v1019 = vpack.c.bf16 %v955, %v955
        %v1020 = vpack.c.bf16 %v956, %v956
        %v1021 = vpack.c.bf16 %v957, %v957
        %v1022 = vpack.c.bf16 %v958, %v958
        %v1023 = vpack.c.bf16 %v959, %v959
        %v1024 = vpack.c.bf16 %v960, %v960
        %v1025 = vpack.c.bf16 %v961, %v961
        %v1026 = vpack.c.bf16 %v962, %v962
        %v1027 = vpack.c.bf16 %v963, %v963
        %v1028 = vpack.c.bf16 %v964, %v964
        %v1029 = vpack.c.bf16 %v965, %v965
        %v1030 = vpack.c.bf16 %v966, %v966
        %v1031 = vpack.c.bf16 %v967, %v967
        %vm1032 = vcmask 60416
        %1033 = vst.msk [vmem:[%s213] sm:$0xf] %vm1032, %v968
        %1034 = vst.msk [vmem:[%s213 + $0x4] sm:$0xf] %vm1032, %v969
        %1035 = vst.msk [vmem:[%s213 + $0x8] sm:$0xf] %vm1032, %v970
        %1036 = vst.msk [vmem:[%s213 + $0xc] sm:$0xf] %vm1032, %v971
        %1037 = vst.msk [vmem:[%s213 + $0x10] sm:$0xf] %vm1032, %v972
        %1038 = vst.msk [vmem:[%s213 + $0x14] sm:$0xf] %vm1032, %v973
        %1039 = vst.msk [vmem:[%s213 + $0x18] sm:$0xf] %vm1032, %v974
        %1040 = vst.msk [vmem:[%s213 + $0x1c] sm:$0xf] %vm1032, %v975
        %1041 = vst.msk [vmem:[%s213 + $0x20] sm:$0xf] %vm1032, %v976
        %1042 = vst.msk [vmem:[%s213 + $0x24] sm:$0xf] %vm1032, %v977
        %1043 = vst.msk [vmem:[%s213 + $0x28] sm:$0xf] %vm1032, %v978
        %1044 = vst.msk [vmem:[%s213 + $0x2c] sm:$0xf] %vm1032, %v979
        %1045 = vst.msk [vmem:[%s213 + $0x30] sm:$0xf] %vm1032, %v980
        %1046 = vst.msk [vmem:[%s213 + $0x34] sm:$0xf] %vm1032, %v981
        %1047 = vst.msk [vmem:[%s213 + $0x38] sm:$0xf] %vm1032, %v982
        %1048 = vst.msk [vmem:[%s213 + $0x3c] sm:$0xf] %vm1032, %v983
        %1049 = vst.msk [vmem:[%s213 + $0x40] sm:$0xf] %vm1032, %v984
        %1050 = vst.msk [vmem:[%s213 + $0x44] sm:$0xf] %vm1032, %v985
        %1051 = vst.msk [vmem:[%s213 + $0x48] sm:$0xf] %vm1032, %v986
        %1052 = vst.msk [vmem:[%s213 + $0x4c] sm:$0xf] %vm1032, %v987
        %1053 = vst.msk [vmem:[%s213 + $0x50] sm:$0xf] %vm1032, %v988
        %1054 = vst.msk [vmem:[%s213 + $0x54] sm:$0xf] %vm1032, %v989
        %1055 = vst.msk [vmem:[%s213 + $0x58] sm:$0xf] %vm1032, %v990
        %1056 = vst.msk [vmem:[%s213 + $0x5c] sm:$0xf] %vm1032, %v991
        %1057 = vst.msk [vmem:[%s213 + $0x60] sm:$0xf] %vm1032, %v992
        %1058 = vst.msk [vmem:[%s213 + $0x64] sm:$0xf] %vm1032, %v993
        %1059 = vst.msk [vmem:[%s213 + $0x68] sm:$0xf] %vm1032, %v994
        %1060 = vst.msk [vmem:[%s213 + $0x6c] sm:$0xf] %vm1032, %v995
        %1061 = vst.msk [vmem:[%s213 + $0x70] sm:$0xf] %vm1032, %v996
        %1062 = vst.msk [vmem:[%s213 + $0x74] sm:$0xf] %vm1032, %v997
        %1063 = vst.msk [vmem:[%s213 + $0x78] sm:$0xf] %vm1032, %v998
        %1064 = vst.msk [vmem:[%s213 + $0x7c] sm:$0xf] %vm1032, %v999
        %1065 = vst.msk [vmem:[%s213 + $0x80] sm:$0xf] %vm1032, %v1000
        %1066 = vst.msk [vmem:[%s213 + $0x84] sm:$0xf] %vm1032, %v1001
        %1067 = vst.msk [vmem:[%s213 + $0x88] sm:$0xf] %vm1032, %v1002
        %1068 = vst.msk [vmem:[%s213 + $0x8c] sm:$0xf] %vm1032, %v1003
        %1069 = vst.msk [vmem:[%s213 + $0x90] sm:$0xf] %vm1032, %v1004
        %1070 = vst.msk [vmem:[%s213 + $0x94] sm:$0xf] %vm1032, %v1005
        %1071 = vst.msk [vmem:[%s213 + $0x98] sm:$0xf] %vm1032, %v1006
        %1072 = vst.msk [vmem:[%s213 + $0x9c] sm:$0xf] %vm1032, %v1007
        %1073 = vst.msk [vmem:[%s213 + $0xa0] sm:$0xf] %vm1032, %v1008
        %1074 = vst.msk [vmem:[%s213 + $0xa4] sm:$0xf] %vm1032, %v1009
        %1075 = vst.msk [vmem:[%s213 + $0xa8] sm:$0xf] %vm1032, %v1010
        %1076 = vst.msk [vmem:[%s213 + $0xac] sm:$0xf] %vm1032, %v1011
        %1077 = vst.msk [vmem:[%s213 + $0xb0] sm:$0xf] %vm1032, %v1012
        %1078 = vst.msk [vmem:[%s213 + $0xb4] sm:$0xf] %vm1032, %v1013
        %1079 = vst.msk [vmem:[%s213 + $0xb8] sm:$0xf] %vm1032, %v1014
        %1080 = vst.msk [vmem:[%s213 + $0xbc] sm:$0xf] %vm1032, %v1015
        %1081 = vst.msk [vmem:[%s213 + $0xc0] sm:$0xf] %vm1032, %v1016
        %1082 = vst.msk [vmem:[%s213 + $0xc4] sm:$0xf] %vm1032, %v1017
        %1083 = vst.msk [vmem:[%s213 + $0xc8] sm:$0xf] %vm1032, %v1018
        %1084 = vst.msk [vmem:[%s213 + $0xcc] sm:$0xf] %vm1032, %v1019
        %1085 = vst.msk [vmem:[%s213 + $0xd0] sm:$0xf] %vm1032, %v1020
        %1086 = vst.msk [vmem:[%s213 + $0xd4] sm:$0xf] %vm1032, %v1021
        %1087 = vst.msk [vmem:[%s213 + $0xd8] sm:$0xf] %vm1032, %v1022
        %1088 = vst.msk [vmem:[%s213 + $0xdc] sm:$0xf] %vm1032, %v1023
        %1089 = vst.msk [vmem:[%s213 + $0xe0] sm:$0xf] %vm1032, %v1024
        %1090 = vst.msk [vmem:[%s213 + $0xe4] sm:$0xf] %vm1032, %v1025
        %1091 = vst.msk [vmem:[%s213 + $0xe8] sm:$0xf] %vm1032, %v1026
        %1092 = vst.msk [vmem:[%s213 + $0xec] sm:$0xf] %vm1032, %v1027
        %1093 = vst.msk [vmem:[%s213 + $0xf0] sm:$0xf] %vm1032, %v1028
        %1094 = vst.msk [vmem:[%s213 + $0xf4] sm:$0xf] %vm1032, %v1029
        %1095 = vst.msk [vmem:[%s213 + $0xf8] sm:$0xf] %vm1032, %v1030
        %1096 = vst.msk [vmem:[%s213 + $0xfc] sm:$0xf] %vm1032, %v1031
        %s1097 = sand.u32 %s113, 1
        %s1098 = sand.u32 %s113, 1
        %s1099 = smul.addr %s1098, 256
        %s1100 = scalar_lea.vmem [#allocation4], %s1099
        // Predicated region
        $region41: #{net_forward.9} parent=35 // pred_check
          %p1101 = pneg %p123
        $region42: #{net_forward.9} parent=35 // pred_check_branch
          %1103 = sbr.rel (%p1101) target = $region44
        $region43: #{net_forward.9} parent=35 // pred_region
          %s1104 = smul.u32 64, %s16
          %s1105 = ssub.s32 729, %s1104
          %p1106 = scmp.lt.s32.totalorder %s1105, 64
          %s1107 = scalar_select %p1106, %s1105, 64
          %s1108 = smul.u32 4, %s1107
          %p1109 = scmp.ne.s32.totalorder 0, %s1108
          %s1110 = smul.addr %s1104, 4
          %s1111 = scalar_lea.vmem %s4, %s1110
          // Predicated region
          $region45: #{net_forward.9} parent=43 // pred_check
            %p1112 = pneg %p1109
          $region46: #{net_forward.9} parent=43 // pred_check_branch
            %1114 = sbr.rel (%p1112) target = $region48
          $region47: #{net_forward.9} parent=43 // pred_region
            // Predicated region
            $region49: #{net_forward.9} parent=47 // pred_check
              _
            $region50: #{net_forward.9} parent=47 // pred_check_branch
              %1116 = sbr.rel target = $region52
            $region51: #{net_forward.9} parent=47 // pred_region
              // Predicated region
              $region71: #{net_forward.9} parent=51 // pred_check
                _
              $region72: #{net_forward.9} parent=51 // pred_check_branch
                %1228 = sbr.rel (0) target = $region74
              $region73: #{net_forward.9} parent=51 // pred_region
                %s1230 = ssub.s32 16, 1
                %s1231 = sshrl.u32 %s1107, 5
                // While loop
                $region75: #{net_forward.9} parent=73 // loop_pre_header
                  _
                $region76: #{net_forward.9} parent=73 // loop_header
                  %s1233 = sphi 0, %s1235
                  %p1234 = scmp.ge.s32.totalorder %s1233, %s1231
                  %s1238 = sphi 0, %s1307
                  %s1239 = sphi %s1100, %s1310
                  %s1240 = sphi %s1111, %s1311
                $region77: #{net_forward.9} parent=73 // loop_header_branch
                  %1237 = sbr.rel (%p1234) target = $region81
                $region78: #{net_forward.9} parent=73 // loop_body
                  %v1241 = vld [vmem:[%s1239] sm:%s1230]
                  %1242 = vst [vmem:[%s1240] sm:%s1230] %v1241
                  %v1243 = vld [vmem:[%s1239 + $0x4] sm:%s1230]
                  %1244 = vst [vmem:[%s1240 + $0x4] sm:%s1230] %v1243
                  %v1245 = vld [vmem:[%s1239 + $0x8] sm:%s1230]
                  %1246 = vst [vmem:[%s1240 + $0x8] sm:%s1230] %v1245
                  %v1247 = vld [vmem:[%s1239 + $0xc] sm:%s1230]
                  %1248 = vst [vmem:[%s1240 + $0xc] sm:%s1230] %v1247
                  %v1249 = vld [vmem:[%s1239 + $0x10] sm:%s1230]
                  %1250 = vst [vmem:[%s1240 + $0x10] sm:%s1230] %v1249
                  %v1251 = vld [vmem:[%s1239 + $0x14] sm:%s1230]
                  %1252 = vst [vmem:[%s1240 + $0x14] sm:%s1230] %v1251
                  %v1253 = vld [vmem:[%s1239 + $0x18] sm:%s1230]
                  %1254 = vst [vmem:[%s1240 + $0x18] sm:%s1230] %v1253
                  %v1255 = vld [vmem:[%s1239 + $0x1c] sm:%s1230]
                  %1256 = vst [vmem:[%s1240 + $0x1c] sm:%s1230] %v1255
                  %v1257 = vld [vmem:[%s1239 + $0x20] sm:%s1230]
                  %1258 = vst [vmem:[%s1240 + $0x20] sm:%s1230] %v1257
                  %v1259 = vld [vmem:[%s1239 + $0x24] sm:%s1230]
                  %1260 = vst [vmem:[%s1240 + $0x24] sm:%s1230] %v1259
                  %v1261 = vld [vmem:[%s1239 + $0x28] sm:%s1230]
                  %1262 = vst [vmem:[%s1240 + $0x28] sm:%s1230] %v1261
                  %v1263 = vld [vmem:[%s1239 + $0x2c] sm:%s1230]
                  %1264 = vst [vmem:[%s1240 + $0x2c] sm:%s1230] %v1263
                  %v1265 = vld [vmem:[%s1239 + $0x30] sm:%s1230]
                  %1266 = vst [vmem:[%s1240 + $0x30] sm:%s1230] %v1265
                  %v1267 = vld [vmem:[%s1239 + $0x34] sm:%s1230]
                  %1268 = vst [vmem:[%s1240 + $0x34] sm:%s1230] %v1267
                  %v1269 = vld [vmem:[%s1239 + $0x38] sm:%s1230]
                  %1270 = vst [vmem:[%s1240 + $0x38] sm:%s1230] %v1269
                  %v1271 = vld [vmem:[%s1239 + $0x3c] sm:%s1230]
                  %1272 = vst [vmem:[%s1240 + $0x3c] sm:%s1230] %v1271
                  %v1273 = vld [vmem:[%s1239 + $0x40] sm:%s1230]
                  %1274 = vst [vmem:[%s1240 + $0x40] sm:%s1230] %v1273
                  %v1275 = vld [vmem:[%s1239 + $0x44] sm:%s1230]
                  %1276 = vst [vmem:[%s1240 + $0x44] sm:%s1230] %v1275
                  %v1277 = vld [vmem:[%s1239 + $0x48] sm:%s1230]
                  %1278 = vst [vmem:[%s1240 + $0x48] sm:%s1230] %v1277
                  %v1279 = vld [vmem:[%s1239 + $0x4c] sm:%s1230]
                  %1280 = vst [vmem:[%s1240 + $0x4c] sm:%s1230] %v1279
                  %v1281 = vld [vmem:[%s1239 + $0x50] sm:%s1230]
                  %1282 = vst [vmem:[%s1240 + $0x50] sm:%s1230] %v1281
                  %v1283 = vld [vmem:[%s1239 + $0x54] sm:%s1230]
                  %1284 = vst [vmem:[%s1240 + $0x54] sm:%s1230] %v1283
                  %v1285 = vld [vmem:[%s1239 + $0x58] sm:%s1230]
                  %1286 = vst [vmem:[%s1240 + $0x58] sm:%s1230] %v1285
                  %v1287 = vld [vmem:[%s1239 + $0x5c] sm:%s1230]
                  %1288 = vst [vmem:[%s1240 + $0x5c] sm:%s1230] %v1287
                  %v1289 = vld [vmem:[%s1239 + $0x60] sm:%s1230]
                  %1290 = vst [vmem:[%s1240 + $0x60] sm:%s1230] %v1289
                  %v1291 = vld [vmem:[%s1239 + $0x64] sm:%s1230]
                  %1292 = vst [vmem:[%s1240 + $0x64] sm:%s1230] %v1291
                  %v1293 = vld [vmem:[%s1239 + $0x68] sm:%s1230]
                  %1294 = vst [vmem:[%s1240 + $0x68] sm:%s1230] %v1293
                  %v1295 = vld [vmem:[%s1239 + $0x6c] sm:%s1230]
                  %1296 = vst [vmem:[%s1240 + $0x6c] sm:%s1230] %v1295
                  %v1297 = vld [vmem:[%s1239 + $0x70] sm:%s1230]
                  %1298 = vst [vmem:[%s1240 + $0x70] sm:%s1230] %v1297
                  %v1299 = vld [vmem:[%s1239 + $0x74] sm:%s1230]
                  %1300 = vst [vmem:[%s1240 + $0x74] sm:%s1230] %v1299
                  %v1301 = vld [vmem:[%s1239 + $0x78] sm:%s1230]
                  %1302 = vst [vmem:[%s1240 + $0x78] sm:%s1230] %v1301
                  %v1303 = vld [vmem:[%s1239 + $0x7c] sm:%s1230]
                  %1304 = vst [vmem:[%s1240 + $0x7c] sm:%s1230] %v1303
                  %s1305 = sadd.s32 1, %s1238
                  %p1306 = scmp.ge.s32.totalorder %s1305, %s1231
                  %s1307 = scalar_select %p1306, 0, %s1305
                  %s1308 = smul.u32 %s1307, 128
                  %s1309 = smul.u32 %s1307, 128
                  %s1310 = scalar_lea.vmem %s1100, %s1308 [#allocation4]
                  %s1311 = scalar_lea.vmem %s1111, %s1309
                $region79: #{net_forward.9} parent=73 // loop_footer
                  %s1235 = sadd.s32 %s1233, 1
                $region80: #{net_forward.9} parent=73 // loop_footer_branch
                  %1232 = sbr.rel target = $region76
                $region81: #{net_forward.9} parent=73 // loop_exit
                  _
                %s1312 = sshrl.u32 %s1107, 5
                %s1313 = sand.u32 %s1107, 31
                %s1314 = smul.u32 %s1312, 32
                %s1315 = smul.u32 4, %s1314
                %s1316 = scalar_lea.vmem %s1100, %s1315 [#allocation4]
                %s1317 = smul.u32 4, %s1314
                %s1318 = scalar_lea.vmem %s1111, %s1317
                // While loop
                $region82: #{net_forward.9} parent=73 // loop_pre_header
                  _
                $region83: #{net_forward.9} parent=73 // loop_header
                  %s1320 = sphi 0, %s1322
                  %p1321 = scmp.ge.s32.totalorder %s1320, %s1313
                  %s1325 = sphi 0, %s1332
                  %s1326 = sphi %s1316, %s1335
                  %s1327 = sphi %s1318, %s1336
                $region84: #{net_forward.9} parent=73 // loop_header_branch
                  %1324 = sbr.rel (%p1321) target = $region88
                $region85: #{net_forward.9} parent=73 // loop_body
                  %v1328 = vld [vmem:[%s1326] sm:%s1230]
                  %1329 = vst [vmem:[%s1327] sm:%s1230] %v1328
                  %s1330 = sadd.s32 1, %s1325
                  %p1331 = scmp.ge.s32.totalorder %s1330, %s1313
                  %s1332 = scalar_select %p1331, 0, %s1330
                  %s1333 = smul.u32 %s1332, 4
                  %s1334 = smul.u32 %s1332, 4
                  %s1335 = scalar_lea.vmem %s1316, %s1333 [#allocation4]
                  %s1336 = scalar_lea.vmem %s1318, %s1334
                $region86: #{net_forward.9} parent=73 // loop_footer
                  %s1322 = sadd.s32 %s1320, 1
                $region87: #{net_forward.9} parent=73 // loop_footer_branch
                  %1319 = sbr.rel target = $region83
                $region88: #{net_forward.9} parent=73 // loop_exit
                  _
              $region74: #{net_forward.9} parent=51 // pred_fallthru
                _
            $region52: #{net_forward.9} parent=47 // pred_fallthru
              _
            // Predicated region
            $region53: #{net_forward.9} parent=47 // pred_check
              _
            $region54: #{net_forward.9} parent=47 // pred_check_branch
              %1118 = sbr.rel (0) target = $region56
            $region55: #{net_forward.9} parent=47 // pred_region
              %s1120 = ssub.s32 16, 1
              %s1121 = sshrl.u32 %s1107, 5
              // While loop
              $region57: #{net_forward.9} parent=55 // loop_pre_header
                _
              $region58: #{net_forward.9} parent=55 // loop_header
                %s1123 = sphi 0, %s1125
                %p1124 = scmp.ge.s32.totalorder %s1123, %s1121
                %s1128 = sphi 0, %s1197
                %s1129 = sphi %s1100, %s1200
                %s1130 = sphi %s1111, %s1201
              $region59: #{net_forward.9} parent=55 // loop_header_branch
                %1127 = sbr.rel (%p1124) target = $region63
              $region60: #{net_forward.9} parent=55 // loop_body
                %v1131 = vld [vmem:[%s1129] sm:%s1120]
                %1132 = vst [vmem:[%s1130] sm:%s1120] %v1131
                %v1133 = vld [vmem:[%s1129 + $0x4] sm:%s1120]
                %1134 = vst [vmem:[%s1130 + $0x4] sm:%s1120] %v1133
                %v1135 = vld [vmem:[%s1129 + $0x8] sm:%s1120]
                %1136 = vst [vmem:[%s1130 + $0x8] sm:%s1120] %v1135
                %v1137 = vld [vmem:[%s1129 + $0xc] sm:%s1120]
                %1138 = vst [vmem:[%s1130 + $0xc] sm:%s1120] %v1137
                %v1139 = vld [vmem:[%s1129 + $0x10] sm:%s1120]
                %1140 = vst [vmem:[%s1130 + $0x10] sm:%s1120] %v1139
                %v1141 = vld [vmem:[%s1129 + $0x14] sm:%s1120]
                %1142 = vst [vmem:[%s1130 + $0x14] sm:%s1120] %v1141
                %v1143 = vld [vmem:[%s1129 + $0x18] sm:%s1120]
                %1144 = vst [vmem:[%s1130 + $0x18] sm:%s1120] %v1143
                %v1145 = vld [vmem:[%s1129 + $0x1c] sm:%s1120]
                %1146 = vst [vmem:[%s1130 + $0x1c] sm:%s1120] %v1145
                %v1147 = vld [vmem:[%s1129 + $0x20] sm:%s1120]
                %1148 = vst [vmem:[%s1130 + $0x20] sm:%s1120] %v1147
                %v1149 = vld [vmem:[%s1129 + $0x24] sm:%s1120]
                %1150 = vst [vmem:[%s1130 + $0x24] sm:%s1120] %v1149
                %v1151 = vld [vmem:[%s1129 + $0x28] sm:%s1120]
                %1152 = vst [vmem:[%s1130 + $0x28] sm:%s1120] %v1151
                %v1153 = vld [vmem:[%s1129 + $0x2c] sm:%s1120]
                %1154 = vst [vmem:[%s1130 + $0x2c] sm:%s1120] %v1153
                %v1155 = vld [vmem:[%s1129 + $0x30] sm:%s1120]
                %1156 = vst [vmem:[%s1130 + $0x30] sm:%s1120] %v1155
                %v1157 = vld [vmem:[%s1129 + $0x34] sm:%s1120]
                %1158 = vst [vmem:[%s1130 + $0x34] sm:%s1120] %v1157
                %v1159 = vld [vmem:[%s1129 + $0x38] sm:%s1120]
                %1160 = vst [vmem:[%s1130 + $0x38] sm:%s1120] %v1159
                %v1161 = vld [vmem:[%s1129 + $0x3c] sm:%s1120]
                %1162 = vst [vmem:[%s1130 + $0x3c] sm:%s1120] %v1161
                %v1163 = vld [vmem:[%s1129 + $0x40] sm:%s1120]
                %1164 = vst [vmem:[%s1130 + $0x40] sm:%s1120] %v1163
                %v1165 = vld [vmem:[%s1129 + $0x44] sm:%s1120]
                %1166 = vst [vmem:[%s1130 + $0x44] sm:%s1120] %v1165
                %v1167 = vld [vmem:[%s1129 + $0x48] sm:%s1120]
                %1168 = vst [vmem:[%s1130 + $0x48] sm:%s1120] %v1167
                %v1169 = vld [vmem:[%s1129 + $0x4c] sm:%s1120]
                %1170 = vst [vmem:[%s1130 + $0x4c] sm:%s1120] %v1169
                %v1171 = vld [vmem:[%s1129 + $0x50] sm:%s1120]
                %1172 = vst [vmem:[%s1130 + $0x50] sm:%s1120] %v1171
                %v1173 = vld [vmem:[%s1129 + $0x54] sm:%s1120]
                %1174 = vst [vmem:[%s1130 + $0x54] sm:%s1120] %v1173
                %v1175 = vld [vmem:[%s1129 + $0x58] sm:%s1120]
                %1176 = vst [vmem:[%s1130 + $0x58] sm:%s1120] %v1175
                %v1177 = vld [vmem:[%s1129 + $0x5c] sm:%s1120]
                %1178 = vst [vmem:[%s1130 + $0x5c] sm:%s1120] %v1177
                %v1179 = vld [vmem:[%s1129 + $0x60] sm:%s1120]
                %1180 = vst [vmem:[%s1130 + $0x60] sm:%s1120] %v1179
                %v1181 = vld [vmem:[%s1129 + $0x64] sm:%s1120]
                %1182 = vst [vmem:[%s1130 + $0x64] sm:%s1120] %v1181
                %v1183 = vld [vmem:[%s1129 + $0x68] sm:%s1120]
                %1184 = vst [vmem:[%s1130 + $0x68] sm:%s1120] %v1183
                %v1185 = vld [vmem:[%s1129 + $0x6c] sm:%s1120]
                %1186 = vst [vmem:[%s1130 + $0x6c] sm:%s1120] %v1185
                %v1187 = vld [vmem:[%s1129 + $0x70] sm:%s1120]
                %1188 = vst [vmem:[%s1130 + $0x70] sm:%s1120] %v1187
                %v1189 = vld [vmem:[%s1129 + $0x74] sm:%s1120]
                %1190 = vst [vmem:[%s1130 + $0x74] sm:%s1120] %v1189
                %v1191 = vld [vmem:[%s1129 + $0x78] sm:%s1120]
                %1192 = vst [vmem:[%s1130 + $0x78] sm:%s1120] %v1191
                %v1193 = vld [vmem:[%s1129 + $0x7c] sm:%s1120]
                %1194 = vst [vmem:[%s1130 + $0x7c] sm:%s1120] %v1193
                %s1195 = sadd.s32 1, %s1128
                %p1196 = scmp.ge.s32.totalorder %s1195, %s1121
                %s1197 = scalar_select %p1196, 0, %s1195
                %s1198 = smul.u32 %s1197, 128
                %s1199 = smul.u32 %s1197, 128
                %s1200 = scalar_lea.vmem %s1100, %s1198 [#allocation4]
                %s1201 = scalar_lea.vmem %s1111, %s1199
              $region61: #{net_forward.9} parent=55 // loop_footer
                %s1125 = sadd.s32 %s1123, 1
              $region62: #{net_forward.9} parent=55 // loop_footer_branch
                %1122 = sbr.rel target = $region58
              $region63: #{net_forward.9} parent=55 // loop_exit
                _
              %s1202 = sshrl.u32 %s1107, 5
              %s1203 = sand.u32 %s1107, 31
              %s1204 = smul.u32 %s1202, 32
              %s1205 = smul.u32 4, %s1204
              %s1206 = scalar_lea.vmem %s1100, %s1205 [#allocation4]
              %s1207 = smul.u32 4, %s1204
              %s1208 = scalar_lea.vmem %s1111, %s1207
              // While loop
              $region64: #{net_forward.9} parent=55 // loop_pre_header
                _
              $region65: #{net_forward.9} parent=55 // loop_header
                %s1210 = sphi 0, %s1212
                %p1211 = scmp.ge.s32.totalorder %s1210, %s1203
                %s1215 = sphi 0, %s1222
                %s1216 = sphi %s1206, %s1225
                %s1217 = sphi %s1208, %s1226
              $region66: #{net_forward.9} parent=55 // loop_header_branch
                %1214 = sbr.rel (%p1211) target = $region70
              $region67: #{net_forward.9} parent=55 // loop_body
                %v1218 = vld [vmem:[%s1216] sm:%s1120]
                %1219 = vst [vmem:[%s1217] sm:%s1120] %v1218
                %s1220 = sadd.s32 1, %s1215
                %p1221 = scmp.ge.s32.totalorder %s1220, %s1203
                %s1222 = scalar_select %p1221, 0, %s1220
                %s1223 = smul.u32 %s1222, 4
                %s1224 = smul.u32 %s1222, 4
                %s1225 = scalar_lea.vmem %s1206, %s1223 [#allocation4]
                %s1226 = scalar_lea.vmem %s1208, %s1224
              $region68: #{net_forward.9} parent=55 // loop_footer
                %s1212 = sadd.s32 %s1210, 1
              $region69: #{net_forward.9} parent=55 // loop_footer_branch
                %1209 = sbr.rel target = $region65
              $region70: #{net_forward.9} parent=55 // loop_exit
                _
            $region56: #{net_forward.9} parent=47 // pred_fallthru
              _
          $region48: #{net_forward.9} parent=43 // pred_fallthru
            _
          %1337 = vnop
        $region44: #{net_forward.9} parent=35 // pred_fallthru
          _
      $region36: #{net_forward.9} parent=5 // pred_fallthru
        _
      %p1338 = scmp.le.s32.totalorder 2, %s11
      // Predicated region
      $region89: #{net_forward.9} parent=5 // pred_check
        %p1339 = pneg %p1338
      $region90: #{net_forward.9} parent=5 // pred_check_branch
        %1341 = sbr.rel (%p1339) target = $region92
      $region91: #{net_forward.9} parent=5 // pred_region
        %s1342 = ssub.s32 %s11, 2
        // Predicated region
        $region93: #{net_forward.9} parent=91 // pred_check
          %p1343 = pneg %p129
        $region94: #{net_forward.9} parent=91 // pred_check_branch
          %1345 = sbr.rel (%p1343) target = $region96
        $region95: #{net_forward.9} parent=91 // pred_region
          %s1346 = sand.u32 %s114, 1
          %s1347 = sand.u32 %s114, 1
          %s1348 = smul.addr %s1347, 256
          %s1349 = scalar_lea.vmem [#allocation4], %s1348
        $region96: #{net_forward.9} parent=91 // pred_fallthru
          _
      $region92: #{net_forward.9} parent=5 // pred_fallthru
        _
    $region6: #{net_forward.9} parent=1 // loop_footer
      %s15 = sadd.s32 1, %s11
    $region7: #{net_forward.9} parent=1 // loop_footer_branch
      %10 = sbr.rel target = $region3
    $region8: #{net_forward.9} parent=1 // loop_exit
      _
    %1350 = vsyncpa [#allocation3], 1
    %s1351 = scalar_lea.sflag [#allocation3], 1
    %1352 = vsyncpa %s1351, 1

// kernel: net_forward.10
$region0: #{net_forward.10}
  #allocation0 [shape = 'u32[]', space=smem, size = 0x4, offset = 0x4, fixed_abs, tag = 'smem constant byte address 0x4 - core index']
  #allocation1 [shape = 'u32[72,128]{1,0:T(1,128)}', space=vmem, size = 0x9000, scoped, tag = 'internal scratch']
  %s0 = inlined_call_operand.vmem [shape: bf16[1250,72], index: 0, kind: input, shape index: {}]
  %s1 = inlined_call_operand.vmem [shape: bf16[72,16], index: 1, kind: input, shape index: {}]
  %s2 = inlined_call_operand.vmem [shape: f32[1,16], index: 2, kind: input, shape index: {}]
  %s3 = inlined_call_operand.vmem [shape: f32[2], index: 3, kind: input, shape index: {}]
  %s4 = inlined_call_operand.vmem [shape: bf16[1250,16], index: 4, kind: output, shape index: {}]
  %s5 = sld [smem:[#allocation0]]
  $region97: #{net_forward.10} parent=0
    _
  %s7 = ssub.s32 1, %s5
  %s8 = scalar_select 0, %s7, %s5
  $region1: #{net_forward.10} parent=0
    #allocation2 [shape = 'u8[512]{0}', space=smem, size = 0x200, scoped, tag = 'input window, operand 3, single buffered']
    #allocation3 [shape = 's32[2]{0}', space=sflag, size = 0x8, scoped, tag = 'scoped memory for net_forward.10']
    #allocation4 [shape = 'u8[262144]{0}', space=vmem, size = 0x40000, scoped, tag = 'output window, operand 0']
    %9 = vsyncpa [#allocation3], 0
    loop: start=0, step=1, limit=5
    $region2: #{net_forward.10} parent=1 // loop_pre_header
      _
    $region3: #{net_forward.10} parent=1 // loop_header
      %s11 = sphi 0, %s15
      %p12 = scmp.ge.s32.totalorder %s11, 5
      %s21 = sphi 0, %s23
      %s24 = sphi 0, %s21
      %s25 = sphi 0, %s24
      %s41 = sphi 0, %s25
      %s45 = sphi 0, %s45
      %s47 = sphi 0, %s45
      %s48 = sphi 0, %s47
      %s62 = sphi 0, %s48
      %s66 = sphi 0, %s66
      %s68 = sphi 0, %s66
      %s69 = sphi 0, %s68
      %s83 = sphi 0, %s69
      %s87 = sphi 0, %s87
      %s89 = sphi 0, %s87
      %s90 = sphi 0, %s89
      %s104 = sphi 0, %s90
      %s110 = sphi 0, %s112
      %s113 = sphi 0, %s110
      %s114 = sphi 0, %s113
      %s130 = sphi 0, %s114
    $region4: #{net_forward.10} parent=1 // loop_header_branch
      %14 = sbr.rel (%p12) target = $region8
    $region5: #{net_forward.10} parent=1 // loop_body
      %s16 = ssub.s32 %s11, 1
      %s17 = ssub.s32 %s11, 2
      %s18 = sadd.s32 %s11, 1
      %s19 = ssub.s32 %s11, %s18
      %p20 = scmp.eq.s32.totalorder %s19, 0
      %s22 = sadd.s32 %s21, 1
      %s23 = scalar_select %p20, %s21, %s22
      %p26 = pneg %p20
      %p27 = scmp.eq.s32.totalorder %s11, 2
      %p28 = por %p26, %p27
      %p29 = scmp.ne.s32.totalorder %s21, %s24
      %p30 = scmp.eq.s32.totalorder %s11, 0
      %p31 = por %p29, %p30
      %p32 = scmp.ne.s32.totalorder %s21, %s24
      %p33 = scmp.eq.s32.totalorder %s16, 2
      %p34 = por %p32, %p33
      %p35 = scmp.ne.s32.totalorder %s24, %s25
      %p36 = scmp.eq.s32.totalorder %s16, 0
      %p37 = por %p35, %p36
      %p38 = scmp.ne.s32.totalorder %s24, %s25
      %p39 = scmp.eq.s32.totalorder %s17, 2
      %p40 = por %p38, %p39
      %p42 = scmp.ne.s32.totalorder %s25, %s41
      %p43 = scmp.eq.s32.totalorder %s17, 0
      %p44 = por %p42, %p43
      %s46 = sadd.s32 %s45, 1
      %p49 = scmp.eq.s32.totalorder %s11, 2
      %p50 = scmp.ne.s32.totalorder %s45, %s47
      %p51 = scmp.eq.s32.totalorder %s11, 0
      %p52 = por %p50, %p51
      %p53 = scmp.ne.s32.totalorder %s45, %s47
      %p54 = scmp.eq.s32.totalorder %s16, 2
      %p55 = por %p53, %p54
      %p56 = scmp.ne.s32.totalorder %s47, %s48
      %p57 = scmp.eq.s32.totalorder %s16, 0
      %p58 = por %p56, %p57
      %p59 = scmp.ne.s32.totalorder %s47, %s48
      %p60 = scmp.eq.s32.totalorder %s17, 2
      %p61 = por %p59, %p60
      %p63 = scmp.ne.s32.totalorder %s48, %s62
      %p64 = scmp.eq.s32.totalorder %s17, 0
      %p65 = por %p63, %p64
      %s67 = sadd.s32 %s66, 1
      %p70 = scmp.eq.s32.totalorder %s11, 2
      %p71 = scmp.ne.s32.totalorder %s66, %s68
      %p72 = scmp.eq.s32.totalorder %s11, 0
      %p73 = por %p71, %p72
      %p74 = scmp.ne.s32.totalorder %s66, %s68
      %p75 = scmp.eq.s32.totalorder %s16, 2
      %p76 = por %p74, %p75
      %p77 = scmp.ne.s32.totalorder %s68, %s69
      %p78 = scmp.eq.s32.totalorder %s16, 0
      %p79 = por %p77, %p78
      %p80 = scmp.ne.s32.totalorder %s68, %s69
      %p81 = scmp.eq.s32.totalorder %s17, 2
      %p82 = por %p80, %p81
      %p84 = scmp.ne.s32.totalorder %s69, %s83
      %p85 = scmp.eq.s32.totalorder %s17, 0
      %p86 = por %p84, %p85
      %s88 = sadd.s32 %s87, 1
      %p91 = scmp.eq.s32.totalorder %s11, 2
      %p92 = scmp.ne.s32.totalorder %s87, %s89
      %p93 = scmp.eq.s32.totalorder %s11, 0
      %p94 = por %p92, %p93
      %p95 = scmp.ne.s32.totalorder %s87, %s89
      %p96 = scmp.eq.s32.totalorder %s16, 2
      %p97 = por %p95, %p96
      %p98 = scmp.ne.s32.totalorder %s89, %s90
      %p99 = scmp.eq.s32.totalorder %s16, 0
      %p100 = por %p98, %p99
      %p101 = scmp.ne.s32.totalorder %s89, %s90
      %p102 = scmp.eq.s32.totalorder %s17, 2
      %p103 = por %p101, %p102
      %p105 = scmp.ne.s32.totalorder %s90, %s104
      %p106 = scmp.eq.s32.totalorder %s17, 0
      %p107 = por %p105, %p106
      %s108 = ssub.s32 %s11, %s18
      %p109 = scmp.eq.s32.totalorder %s108, 0
      %s111 = sadd.s32 %s110, 1
      %s112 = scalar_select %p109, %s110, %s111
      %p115 = pneg %p109
      %p116 = scmp.eq.s32.totalorder %s11, 2
      %p117 = por %p115, %p116
      %p118 = scmp.ne.s32.totalorder %s110, %s113
      %p119 = scmp.eq.s32.totalorder %s11, 0
      %p120 = por %p118, %p119
      %p121 = scmp.ne.s32.totalorder %s110, %s113
      %p122 = scmp.eq.s32.totalorder %s16, 2
      %p123 = por %p121, %p122
      %p124 = scmp.ne.s32.totalorder %s113, %s114
      %p125 = scmp.eq.s32.totalorder %s16, 0
      %p126 = por %p124, %p125
      %p127 = scmp.ne.s32.totalorder %s113, %s114
      %p128 = scmp.eq.s32.totalorder %s17, 2
      %p129 = por %p127, %p128
      %p131 = scmp.ne.s32.totalorder %s114, %s130
      %p132 = scmp.eq.s32.totalorder %s17, 0
      %p133 = por %p131, %p132
      %p134 = scmp.le.s32.totalorder 1, %s11
      %p135 = scmp.lt.s32.totalorder %s11, 4
      %p136 = pnand %p134, %p135
      %p137 = pneg %p136
      // Predicated region
      $region9: #{net_forward.10} parent=5 // pred_check
        _
      $region10: #{net_forward.10} parent=5 // pred_check_branch
        %139 = sbr.rel (%p136) target = $region12
      $region11: #{net_forward.10} parent=5 // pred_region
        %s140 = ssub.s32 %s11, 1
        // Predicated region
        $region13: #{net_forward.10} parent=11 // pred_check
          %p141 = pneg %p58
        $region14: #{net_forward.10} parent=11 // pred_check_branch
          %143 = sbr.rel (%p141) target = $region16
        $region15: #{net_forward.10} parent=11 // pred_region
          _
        $region16: #{net_forward.10} parent=11 // pred_fallthru
          _
        // Predicated region
        $region17: #{net_forward.10} parent=11 // pred_check
          %p144 = pneg %p79
        $region18: #{net_forward.10} parent=11 // pred_check_branch
          %146 = sbr.rel (%p144) target = $region20
        $region19: #{net_forward.10} parent=11 // pred_region
          _
        $region20: #{net_forward.10} parent=11 // pred_fallthru
          _
        // Predicated region
        $region21: #{net_forward.10} parent=11 // pred_check
          %p147 = pneg %p100
        $region22: #{net_forward.10} parent=11 // pred_check_branch
          %149 = sbr.rel (%p147) target = $region24
        $region23: #{net_forward.10} parent=11 // pred_region
          %151 = vsyncadd [#allocation3], 0
          %s153 = sshll.u32 %s3, 4
          %s154 = int_to_ptr.vmem [resolvable:$true] %s153
          %156 = dma.vmem_to_smem %s154, 16, [#allocation2], [#allocation3]
        $region24: #{net_forward.10} parent=11 // pred_fallthru
          _
      $region12: #{net_forward.10} parent=5 // pred_fallthru
        _
      %p157 = scmp.lt.s32.totalorder %s11, 3
      // Predicated region
      $region25: #{net_forward.10} parent=5 // pred_check
        %p158 = pneg %p157
      $region26: #{net_forward.10} parent=5 // pred_check_branch
        %160 = sbr.rel (%p158) target = $region28
      $region27: #{net_forward.10} parent=5 // pred_region
        // Predicated region
        $region29: #{net_forward.10} parent=27 // pred_check
          %p161 = pneg %p31
        $region30: #{net_forward.10} parent=27 // pred_check_branch
          %163 = sbr.rel (%p161) target = $region32
        $region31: #{net_forward.10} parent=27 // pred_region
          %s164 = smul.u32 64, %s11
          %s165 = ssub.s32 157, %s164
          %p166 = scmp.lt.s32.totalorder %s165, 64
          %s167 = scalar_select %p166, %s165, 64
          %s168 = smul.u32 4, %s167
          %p169 = scmp.lt.s32.totalorder %s164, 156
          %s170 = scalar_select %p169, %s164, 156
          %s171 = smul.addr %s170, 4
          %s172 = scalar_lea.vmem %s0, %s171
          %s173 = smul.u32 64, %s11
          %s174 = ssub.s32 157, %s173
          %p175 = scmp.lt.s32.totalorder %s174, 64
          %s176 = scalar_select %p175, %s174, 64
          %s177 = smul.u32 4, %s176
        $region32: #{net_forward.10} parent=27 // pred_fallthru
          _
      $region28: #{net_forward.10} parent=5 // pred_fallthru
        _
      %p178 = scmp.le.s32.totalorder 1, %s11
      %p179 = scmp.lt.s32.totalorder %s11, 4
      %p180 = pnand %p178, %p179
      %p181 = pneg %p180
      // Predicated region
      $region33: #{net_forward.10} parent=5 // pred_check
        _
      $region34: #{net_forward.10} parent=5 // pred_check_branch
        %183 = sbr.rel (%p180) target = $region36
      $region35: #{net_forward.10} parent=5 // pred_region
        %s184 = ssub.s32 %s11, 1
        // Predicated region
        $region37: #{net_forward.10} parent=35 // pred_check
          %p185 = pneg %p100
        $region38: #{net_forward.10} parent=35 // pred_check_branch
          %187 = sbr.rel (%p185) target = $region40
        $region39: #{net_forward.10} parent=35 // pred_region
          %189 = dma.done [#allocation3], 16
        $region40: #{net_forward.10} parent=35 // pred_fallthru
          _
        %190 = sfence
        %s191 = smul.u32 64, %s16
        %s192 = ssub.s32 157, %s191
        %p193 = scmp.lt.s32.totalorder %s192, 64
        %s194 = scalar_select %p193, %s192, 64
        %s195 = smul.u32 4, %s194
        %p196 = scmp.lt.s32.totalorder %s191, 156
        %s197 = scalar_select %p196, %s191, 156
        %s198 = smul.addr %s197, 4
        %s199 = scalar_lea.vmem %s0, %s198
        %p200 = pneg %p37
        %p201 = pneg %p34
        %p202 = pneg %p58
        %p203 = pneg %p55
        %p204 = pneg %p79
        %p205 = pneg %p76
        %p206 = pneg %p100
        %p207 = pneg %p97
        %p208 = pneg %p126
        %p209 = pneg %p123
        %s210 = sand.u32 %s113, 1
        %s211 = sand.u32 %s113, 1
        %s212 = smul.addr %s211, 256
        %s213 = scalar_lea.vmem [#allocation4], %s212
        %s214 = smul.u32 64, %s16
        %s215 = ssub.s32 157, %s214
        %p216 = scmp.lt.s32.totalorder %s215, 64
        %s217 = scalar_select %p216, %s215, 64
        %s218 = smul.u32 4, %s217
        %p219 = scmp.lt.s32.totalorder %s214, 156
        %s220 = scalar_select %p219, %s214, 156
        %s221 = smul.addr %s220, 4
        %s222 = scalar_lea.vmem %s0, %s221
        %s223 = smul.u32 64, %s16
        %s224 = ssub.s32 157, %s223
        %p225 = scmp.lt.s32.totalorder %s224, 64
        %s226 = scalar_select %p225, %s224, 64
        %s227 = smul.u32 4, %s226
        %s228 = smul.u32 64, %s16
        %s229 = ssub.s32 157, %s228
        %p230 = scmp.lt.s32.totalorder %s229, 64
        %s231 = scalar_select %p230, %s229, 64
        %s232 = smul.u32 4, %s231
        %v234 = vld [vmem:[%s222] sm:$0xf]
        %v235 = vld [vmem:[%s222 + $0x4] sm:$0xf]
        %v236 = vld [vmem:[%s222 + $0x8] sm:$0xf]
        %v237 = vld [vmem:[%s222 + $0xc] sm:$0xf]
        %v238 = vld [vmem:[%s222 + $0x10] sm:$0xf]
        %v239 = vld [vmem:[%s222 + $0x14] sm:$0xf]
        %v240 = vld [vmem:[%s222 + $0x18] sm:$0xf]
        %v241 = vld [vmem:[%s222 + $0x1c] sm:$0xf]
        %v242 = vld [vmem:[%s222 + $0x20] sm:$0xf]
        %v243 = vld [vmem:[%s222 + $0x24] sm:$0xf]
        %v244 = vld [vmem:[%s222 + $0x28] sm:$0xf]
        %v245 = vld [vmem:[%s222 + $0x2c] sm:$0xf]
        %v246 = vld [vmem:[%s222 + $0x30] sm:$0xf]
        %v247 = vld [vmem:[%s222 + $0x34] sm:$0xf]
        %v248 = vld [vmem:[%s222 + $0x38] sm:$0xf]
        %v249 = vld [vmem:[%s222 + $0x3c] sm:$0xf]
        %v250 = vld [vmem:[%s222 + $0x40] sm:$0xf]
        %v251 = vld [vmem:[%s222 + $0x44] sm:$0xf]
        %v252 = vld [vmem:[%s222 + $0x48] sm:$0xf]
        %v253 = vld [vmem:[%s222 + $0x4c] sm:$0xf]
        %v254 = vld [vmem:[%s222 + $0x50] sm:$0xf]
        %v255 = vld [vmem:[%s222 + $0x54] sm:$0xf]
        %v256 = vld [vmem:[%s222 + $0x58] sm:$0xf]
        %v257 = vld [vmem:[%s222 + $0x5c] sm:$0xf]
        %v258 = vld [vmem:[%s222 + $0x60] sm:$0xf]
        %v259 = vld [vmem:[%s222 + $0x64] sm:$0xf]
        %v260 = vld [vmem:[%s222 + $0x68] sm:$0xf]
        %v261 = vld [vmem:[%s222 + $0x6c] sm:$0xf]
        %v262 = vld [vmem:[%s222 + $0x70] sm:$0xf]
        %v263 = vld [vmem:[%s222 + $0x74] sm:$0xf]
        %v264 = vld [vmem:[%s222 + $0x78] sm:$0xf]
        %v265 = vld [vmem:[%s222 + $0x7c] sm:$0xf]
        %v266 = vld [vmem:[%s222 + $0x80] sm:$0xf]
        %v267 = vld [vmem:[%s222 + $0x84] sm:$0xf]
        %v268 = vld [vmem:[%s222 + $0x88] sm:$0xf]
        %v269 = vld [vmem:[%s222 + $0x8c] sm:$0xf]
        %v270 = vld [vmem:[%s222 + $0x90] sm:$0xf]
        %v271 = vld [vmem:[%s222 + $0x94] sm:$0xf]
        %v272 = vld [vmem:[%s222 + $0x98] sm:$0xf]
        %v273 = vld [vmem:[%s222 + $0x9c] sm:$0xf]
        %v274 = vld [vmem:[%s222 + $0xa0] sm:$0xf]
        %v275 = vld [vmem:[%s222 + $0xa4] sm:$0xf]
        %v276 = vld [vmem:[%s222 + $0xa8] sm:$0xf]
        %v277 = vld [vmem:[%s222 + $0xac] sm:$0xf]
        %v278 = vld [vmem:[%s222 + $0xb0] sm:$0xf]
        %v279 = vld [vmem:[%s222 + $0xb4] sm:$0xf]
        %v280 = vld [vmem:[%s222 + $0xb8] sm:$0xf]
        %v281 = vld [vmem:[%s222 + $0xbc] sm:$0xf]
        %v282 = vld [vmem:[%s222 + $0xc0] sm:$0xf]
        %v283 = vld [vmem:[%s222 + $0xc4] sm:$0xf]
        %v284 = vld [vmem:[%s222 + $0xc8] sm:$0xf]
        %v285 = vld [vmem:[%s222 + $0xcc] sm:$0xf]
        %v286 = vld [vmem:[%s222 + $0xd0] sm:$0xf]
        %v287 = vld [vmem:[%s222 + $0xd4] sm:$0xf]
        %v288 = vld [vmem:[%s222 + $0xd8] sm:$0xf]
        %v289 = vld [vmem:[%s222 + $0xdc] sm:$0xf]
        %v290 = vld [vmem:[%s222 + $0xe0] sm:$0xf]
        %v291 = vld [vmem:[%s222 + $0xe4] sm:$0xf]
        %v292 = vld [vmem:[%s222 + $0xe8] sm:$0xf]
        %v293 = vld [vmem:[%s222 + $0xec] sm:$0xf]
        %v294 = vld [vmem:[%s222 + $0xf0] sm:$0xf]
        %v295 = vld [vmem:[%s222 + $0xf4] sm:$0xf]
        %v296 = vld [vmem:[%s222 + $0xf8] sm:$0xf]
        %v297 = vld [vmem:[%s222 + $0xfc] sm:$0xf]
        %v298 = vld [vmem:[%s1] sm:$0xf]
        %v299 = vld [vmem:[%s1 + $0x4] sm:$0xf]
        %v300 = vld [vmem:[%s1 + $0x8] sm:$0xf]
        %v301 = vld [vmem:[%s1 + $0xc] sm:$0xf]
        %v302 = vld [vmem:[%s1 + $0x10] sm:$0xf]
        %v303 = vld [vmem:[%s1 + $0x14] sm:$0xf]
        %v304 = vld [vmem:[%s1 + $0x18] sm:$0xf]
        %v305 = vld [vmem:[%s1 + $0x1c] sm:$0xf]
        %v306 = vld [vmem:[%s1 + $0x20] sm:$0xf]
        %v307 = vld [vmem:[%s2] sm:$0x1]
        %v309 = vperm.slane %v307, 0
        %v375 = vunpack.c.l.b16 %v234
        %v376 = vunpack.c.l.b16 %v235
        %v377 = vunpack.c.l.b16 %v236
        %v378 = vunpack.c.l.b16 %v237
        %v379 = vunpack.c.l.b16 %v238
        %v380 = vunpack.c.l.b16 %v239
        %v381 = vunpack.c.l.b16 %v240
        %v382 = vunpack.c.l.b16 %v241
        %v383 = vunpack.c.l.b16 %v242
        %v384 = vunpack.c.l.b16 %v243
        %v385 = vunpack.c.l.b16 %v244
        %v386 = vunpack.c.l.b16 %v245
        %v387 = vunpack.c.l.b16 %v246
        %v388 = vunpack.c.l.b16 %v247
        %v389 = vunpack.c.l.b16 %v248
        %v390 = vunpack.c.l.b16 %v249
        %v391 = vunpack.c.l.b16 %v250
        %v392 = vunpack.c.l.b16 %v251
        %v393 = vunpack.c.l.b16 %v252
        %v394 = vunpack.c.l.b16 %v253
        %v395 = vunpack.c.l.b16 %v254
        %v396 = vunpack.c.l.b16 %v255
        %v397 = vunpack.c.l.b16 %v256
        %v398 = vunpack.c.l.b16 %v257
        %v399 = vunpack.c.l.b16 %v258
        %v400 = vunpack.c.l.b16 %v259
        %v401 = vunpack.c.l.b16 %v260
        %v402 = vunpack.c.l.b16 %v261
        %v403 = vunpack.c.l.b16 %v262
        %v404 = vunpack.c.l.b16 %v263
        %v405 = vunpack.c.l.b16 %v264
        %v406 = vunpack.c.l.b16 %v265
        %v407 = vunpack.c.l.b16 %v266
        %v408 = vunpack.c.l.b16 %v267
        %v409 = vunpack.c.l.b16 %v268
        %v410 = vunpack.c.l.b16 %v269
        %v411 = vunpack.c.l.b16 %v270
        %v412 = vunpack.c.l.b16 %v271
        %v413 = vunpack.c.l.b16 %v272
        %v414 = vunpack.c.l.b16 %v273
        %v415 = vunpack.c.l.b16 %v274
        %v416 = vunpack.c.l.b16 %v275
        %v417 = vunpack.c.l.b16 %v276
        %v418 = vunpack.c.l.b16 %v277
        %v419 = vunpack.c.l.b16 %v278
        %v420 = vunpack.c.l.b16 %v279
        %v421 = vunpack.c.l.b16 %v280
        %v422 = vunpack.c.l.b16 %v281
        %v423 = vunpack.c.l.b16 %v282
        %v424 = vunpack.c.l.b16 %v283
        %v425 = vunpack.c.l.b16 %v284
        %v426 = vunpack.c.l.b16 %v285
        %v427 = vunpack.c.l.b16 %v286
        %v428 = vunpack.c.l.b16 %v287
        %v429 = vunpack.c.l.b16 %v288
        %v430 = vunpack.c.l.b16 %v289
        %v431 = vunpack.c.l.b16 %v290
        %v432 = vunpack.c.l.b16 %v291
        %v433 = vunpack.c.l.b16 %v292
        %v434 = vunpack.c.l.b16 %v293
        %v435 = vunpack.c.l.b16 %v294
        %v436 = vunpack.c.l.b16 %v295
        %v437 = vunpack.c.l.b16 %v296
        %v438 = vunpack.c.l.b16 %v297
        %v439 = vpack.c.b16 %v376, %v375
        %v440 = vpack.c.b16 %v378, %v377
        %v441 = vpack.c.b16 %v380, %v379
        %v442 = vpack.c.b16 %v382, %v381
        %v443 = vpack.c.b16 %v384, %v383
        %v444 = vpack.c.b16 %v386, %v385
        %v445 = vpack.c.b16 %v388, %v387
        %v446 = vpack.c.b16 %v390, %v389
        %v447 = vpack.c.b16 %v392, %v391
        %v448 = vpack.c.b16 %v394, %v393
        %v449 = vpack.c.b16 %v396, %v395
        %v450 = vpack.c.b16 %v398, %v397
        %v451 = vpack.c.b16 %v400, %v399
        %v452 = vpack.c.b16 %v402, %v401
        %v453 = vpack.c.b16 %v404, %v403
        %v454 = vpack.c.b16 %v406, %v405
        %v455 = vpack.c.b16 %v408, %v407
        %v456 = vpack.c.b16 %v410, %v409
        %v457 = vpack.c.b16 %v412, %v411
        %v458 = vpack.c.b16 %v414, %v413
        %v459 = vpack.c.b16 %v416, %v415
        %v460 = vpack.c.b16 %v418, %v417
        %v461 = vpack.c.b16 %v420, %v419
        %v462 = vpack.c.b16 %v422, %v421
        %v463 = vpack.c.b16 %v424, %v423
        %v464 = vpack.c.b16 %v426, %v425
        %v465 = vpack.c.b16 %v428, %v427
        %v466 = vpack.c.b16 %v430, %v429
        %v467 = vpack.c.b16 %v432, %v431
        %v468 = vpack.c.b16 %v434, %v433
        %v469 = vpack.c.b16 %v436, %v435
        %v470 = vpack.c.b16 %v438, %v437
        %v480 = vunpack.c.l.b16 %v298
        %v481 = vunpack.c.l.b16 %v299
        %v482 = vunpack.c.l.b16 %v300
        %v483 = vunpack.c.l.b16 %v301
        %v484 = vunpack.c.l.b16 %v302
        %v485 = vunpack.c.l.b16 %v303
        %v486 = vunpack.c.l.b16 %v304
        %v487 = vunpack.c.l.b16 %v305
        %v488 = vunpack.c.l.b16 %v306
        %v489 = vpack.c.b16 %v481, %v480
        %v490 = vpack.c.b16 %v483, %v482
        %v491 = vpack.c.b16 %v485, %v484
        %v492 = vpack.c.b16 %v487, %v486
        %v493 = vpack.c.b16 %v488, %v488
        %vm498 = vcmask 588800
        %v500 = vsel %vm498, %v439, 0
        %v503 = vsel %vm498, %v440, 0
        %v506 = vsel %vm498, %v441, 0
        %v509 = vsel %vm498, %v442, 0
        %v512 = vsel %vm498, %v443, 0
        %v515 = vsel %vm498, %v444, 0
        %v518 = vsel %vm498, %v445, 0
        %v521 = vsel %vm498, %v446, 0
        %v524 = vsel %vm498, %v447, 0
        %v527 = vsel %vm498, %v448, 0
        %v530 = vsel %vm498, %v449, 0
        %v533 = vsel %vm498, %v450, 0
        %v536 = vsel %vm498, %v451, 0
        %v539 = vsel %vm498, %v452, 0
        %v542 = vsel %vm498, %v453, 0
        %v545 = vsel %vm498, %v454, 0
        %v548 = vsel %vm498, %v455, 0
        %v551 = vsel %vm498, %v456, 0
        %v554 = vsel %vm498, %v457, 0
        %v557 = vsel %vm498, %v458, 0
        %v560 = vsel %vm498, %v459, 0
        %v563 = vsel %vm498, %v460, 0
        %v566 = vsel %vm498, %v461, 0
        %v569 = vsel %vm498, %v462, 0
        %v572 = vsel %vm498, %v463, 0
        %v575 = vsel %vm498, %v464, 0
        %v578 = vsel %vm498, %v465, 0
        %v581 = vsel %vm498, %v466, 0
        %v584 = vsel %vm498, %v467, 0
        %v587 = vsel %vm498, %v468, 0
        %v590 = vsel %vm498, %v469, 0
        %v593 = vsel %vm498, %v470, 0
        %vm595 = vcmask 1043456
        %v597 = vsel %vm595, %v493, 0
        %599 = vmatpush.bf16.msra.mxu0 0
        %600 = vmatpush.bf16.msra.mxu0 0
        %601 = vmatpush.bf16.msra.mxu0 0
        %602 = vmatpush.bf16.msra.mxu0 %v597
        %603 = vmatpush.bf16.msra.mxu0 %v492
        %604 = vmatpush.bf16.msra.mxu0 %v491
        %605 = vmatpush.bf16.msra.mxu0 %v490
        %606 = vmatpush.bf16.msra.mxu0 %v489
        %607 = vmatmul.bf16.gmra.mxu0 %v500
        %v608 = vpop.f32.mrf.mxu0
        %v609 = vadd.f32 %v309, %v608
        %v610 = vpop.f32.mrf.mxu0
        %v611 = vadd.f32 %v309, %v610
        %612 = vmatmul.bf16.gmra.mxu0 %v503
        %v613 = vpop.f32.mrf.mxu0
        %v614 = vadd.f32 %v309, %v613
        %v615 = vpop.f32.mrf.mxu0
        %v616 = vadd.f32 %v309, %v615
        %617 = vmatmul.bf16.gmra.mxu0 %v506
        %v618 = vpop.f32.mrf.mxu0
        %v619 = vadd.f32 %v309, %v618
        %v620 = vpop.f32.mrf.mxu0
        %v621 = vadd.f32 %v309, %v620
        %622 = vmatmul.bf16.gmra.mxu0 %v509
        %v623 = vpop.f32.mrf.mxu0
        %v624 = vadd.f32 %v309, %v623
        %v625 = vpop.f32.mrf.mxu0
        %v626 = vadd.f32 %v309, %v625
        %627 = vmatmul.bf16.gmra.mxu0 %v512
        %v628 = vpop.f32.mrf.mxu0
        %v629 = vadd.f32 %v309, %v628
        %v630 = vpop.f32.mrf.mxu0
        %v631 = vadd.f32 %v309, %v630
        %632 = vmatmul.bf16.gmra.mxu0 %v515
        %v633 = vpop.f32.mrf.mxu0
        %v634 = vadd.f32 %v309, %v633
        %v635 = vpop.f32.mrf.mxu0
        %v636 = vadd.f32 %v309, %v635
        %637 = vmatmul.bf16.gmra.mxu0 %v518
        %v638 = vpop.f32.mrf.mxu0
        %v639 = vadd.f32 %v309, %v638
        %v640 = vpop.f32.mrf.mxu0
        %v641 = vadd.f32 %v309, %v640
        %642 = vmatmul.bf16.gmra.mxu0 %v521
        %v643 = vpop.f32.mrf.mxu0
        %v644 = vadd.f32 %v309, %v643
        %v645 = vpop.f32.mrf.mxu0
        %v646 = vadd.f32 %v309, %v645
        %647 = vmatmul.bf16.gmra.mxu0 %v524
        %v648 = vpop.f32.mrf.mxu0
        %v649 = vadd.f32 %v309, %v648
        %v650 = vpop.f32.mrf.mxu0
        %v651 = vadd.f32 %v309, %v650
        %652 = vmatmul.bf16.gmra.mxu0 %v527
        %v653 = vpop.f32.mrf.mxu0
        %v654 = vadd.f32 %v309, %v653
        %v655 = vpop.f32.mrf.mxu0
        %v656 = vadd.f32 %v309, %v655
        %657 = vmatmul.bf16.gmra.mxu0 %v530
        %v658 = vpop.f32.mrf.mxu0
        %v659 = vadd.f32 %v309, %v658
        %v660 = vpop.f32.mrf.mxu0
        %v661 = vadd.f32 %v309, %v660
        %662 = vmatmul.bf16.gmra.mxu0 %v533
        %v663 = vpop.f32.mrf.mxu0
        %v664 = vadd.f32 %v309, %v663
        %v665 = vpop.f32.mrf.mxu0
        %v666 = vadd.f32 %v309, %v665
        %667 = vmatmul.bf16.gmra.mxu0 %v536
        %v668 = vpop.f32.mrf.mxu0
        %v669 = vadd.f32 %v309, %v668
        %v670 = vpop.f32.mrf.mxu0
        %v671 = vadd.f32 %v309, %v670
        %672 = vmatmul.bf16.gmra.mxu0 %v539
        %v673 = vpop.f32.mrf.mxu0
        %v674 = vadd.f32 %v309, %v673
        %v675 = vpop.f32.mrf.mxu0
        %v676 = vadd.f32 %v309, %v675
        %677 = vmatmul.bf16.gmra.mxu0 %v542
        %v678 = vpop.f32.mrf.mxu0
        %v679 = vadd.f32 %v309, %v678
        %v680 = vpop.f32.mrf.mxu0
        %v681 = vadd.f32 %v309, %v680
        %682 = vmatmul.bf16.gmra.mxu0 %v545
        %v683 = vpop.f32.mrf.mxu0
        %v684 = vadd.f32 %v309, %v683
        %v685 = vpop.f32.mrf.mxu0
        %v686 = vadd.f32 %v309, %v685
        %687 = vmatmul.bf16.gmra.mxu0 %v548
        %v688 = vpop.f32.mrf.mxu0
        %v689 = vadd.f32 %v309, %v688
        %v690 = vpop.f32.mrf.mxu0
        %v691 = vadd.f32 %v309, %v690
        %692 = vmatmul.bf16.gmra.mxu0 %v551
        %v693 = vpop.f32.mrf.mxu0
        %v694 = vadd.f32 %v309, %v693
        %v695 = vpop.f32.mrf.mxu0
        %v696 = vadd.f32 %v309, %v695
        %697 = vmatmul.bf16.gmra.mxu0 %v554
        %v698 = vpop.f32.mrf.mxu0
        %v699 = vadd.f32 %v309, %v698
        %v700 = vpop.f32.mrf.mxu0
        %v701 = vadd.f32 %v309, %v700
        %702 = vmatmul.bf16.gmra.mxu0 %v557
        %v703 = vpop.f32.mrf.mxu0
        %v704 = vadd.f32 %v309, %v703
        %v705 = vpop.f32.mrf.mxu0
        %v706 = vadd.f32 %v309, %v705
        %707 = vmatmul.bf16.gmra.mxu0 %v560
        %v708 = vpop.f32.mrf.mxu0
        %v709 = vadd.f32 %v309, %v708
        %v710 = vpop.f32.mrf.mxu0
        %v711 = vadd.f32 %v309, %v710
        %712 = vmatmul.bf16.gmra.mxu0 %v563
        %v713 = vpop.f32.mrf.mxu0
        %v714 = vadd.f32 %v309, %v713
        %v715 = vpop.f32.mrf.mxu0
        %v716 = vadd.f32 %v309, %v715
        %717 = vmatmul.bf16.gmra.mxu0 %v566
        %v718 = vpop.f32.mrf.mxu0
        %v719 = vadd.f32 %v309, %v718
        %v720 = vpop.f32.mrf.mxu0
        %v721 = vadd.f32 %v309, %v720
        %722 = vmatmul.bf16.gmra.mxu0 %v569
        %v723 = vpop.f32.mrf.mxu0
        %v724 = vadd.f32 %v309, %v723
        %v725 = vpop.f32.mrf.mxu0
        %v726 = vadd.f32 %v309, %v725
        %727 = vmatmul.bf16.gmra.mxu0 %v572
        %v728 = vpop.f32.mrf.mxu0
        %v729 = vadd.f32 %v309, %v728
        %v730 = vpop.f32.mrf.mxu0
        %v731 = vadd.f32 %v309, %v730
        %732 = vmatmul.bf16.gmra.mxu0 %v575
        %v733 = vpop.f32.mrf.mxu0
        %v734 = vadd.f32 %v309, %v733
        %v735 = vpop.f32.mrf.mxu0
        %v736 = vadd.f32 %v309, %v735
        %737 = vmatmul.bf16.gmra.mxu0 %v578
        %v738 = vpop.f32.mrf.mxu0
        %v739 = vadd.f32 %v309, %v738
        %v740 = vpop.f32.mrf.mxu0
        %v741 = vadd.f32 %v309, %v740
        %742 = vmatmul.bf16.gmra.mxu0 %v581
        %v743 = vpop.f32.mrf.mxu0
        %v744 = vadd.f32 %v309, %v743
        %v745 = vpop.f32.mrf.mxu0
        %v746 = vadd.f32 %v309, %v745
        %747 = vmatmul.bf16.gmra.mxu0 %v584
        %v748 = vpop.f32.mrf.mxu0
        %v749 = vadd.f32 %v309, %v748
        %v750 = vpop.f32.mrf.mxu0
        %v751 = vadd.f32 %v309, %v750
        %752 = vmatmul.bf16.gmra.mxu0 %v587
        %v753 = vpop.f32.mrf.mxu0
        %v754 = vadd.f32 %v309, %v753
        %v755 = vpop.f32.mrf.mxu0
        %v756 = vadd.f32 %v309, %v755
        %757 = vmatmul.bf16.gmra.mxu0 %v590
        %v758 = vpop.f32.mrf.mxu0
        %v759 = vadd.f32 %v309, %v758
        %v760 = vpop.f32.mrf.mxu0
        %v761 = vadd.f32 %v309, %v760
        %762 = vmatmul.bf16.gmra.mxu0 %v593
        %v763 = vpop.f32.mrf.mxu0
        %v764 = vadd.f32 %v309, %v763
        %v765 = vpop.f32.mrf.mxu0
        %v766 = vadd.f32 %v309, %v765
        %767 = vdwg.mxu0
        %s768 = sld [smem:[#allocation2]]
        %vm769 = vcmp.ge.f32.partialorder %v609, 0.0
        %vm770 = vcmp.ge.f32.partialorder %v611, 0.0
        %vm771 = vcmp.ge.f32.partialorder %v614, 0.0
        %vm772 = vcmp.ge.f32.partialorder %v616, 0.0
        %vm773 = vcmp.ge.f32.partialorder %v619, 0.0
        %vm774 = vcmp.ge.f32.partialorder %v621, 0.0
        %vm775 = vcmp.ge.f32.partialorder %v624, 0.0
        %vm776 = vcmp.ge.f32.partialorder %v626, 0.0
        %vm777 = vcmp.ge.f32.partialorder %v629, 0.0
        %vm778 = vcmp.ge.f32.partialorder %v631, 0.0
        %vm779 = vcmp.ge.f32.partialorder %v634, 0.0
        %vm780 = vcmp.ge.f32.partialorder %v636, 0.0
        %vm781 = vcmp.ge.f32.partialorder %v639, 0.0
        %vm782 = vcmp.ge.f32.partialorder %v641, 0.0
        %vm783 = vcmp.ge.f32.partialorder %v644, 0.0
        %vm784 = vcmp.ge.f32.partialorder %v646, 0.0
        %vm785 = vcmp.ge.f32.partialorder %v649, 0.0
        %vm786 = vcmp.ge.f32.partialorder %v651, 0.0
        %vm787 = vcmp.ge.f32.partialorder %v654, 0.0
        %vm788 = vcmp.ge.f32.partialorder %v656, 0.0
        %vm789 = vcmp.ge.f32.partialorder %v659, 0.0
        %vm790 = vcmp.ge.f32.partialorder %v661, 0.0
        %vm791 = vcmp.ge.f32.partialorder %v664, 0.0
        %vm792 = vcmp.ge.f32.partialorder %v666, 0.0
        %vm793 = vcmp.ge.f32.partialorder %v669, 0.0
        %vm794 = vcmp.ge.f32.partialorder %v671, 0.0
        %vm795 = vcmp.ge.f32.partialorder %v674, 0.0
        %vm796 = vcmp.ge.f32.partialorder %v676, 0.0
        %vm797 = vcmp.ge.f32.partialorder %v679, 0.0
        %vm798 = vcmp.ge.f32.partialorder %v681, 0.0
        %vm799 = vcmp.ge.f32.partialorder %v684, 0.0
        %vm800 = vcmp.ge.f32.partialorder %v686, 0.0
        %vm801 = vcmp.ge.f32.partialorder %v689, 0.0
        %vm802 = vcmp.ge.f32.partialorder %v691, 0.0
        %vm803 = vcmp.ge.f32.partialorder %v694, 0.0
        %vm804 = vcmp.ge.f32.partialorder %v696, 0.0
        %vm805 = vcmp.ge.f32.partialorder %v699, 0.0
        %vm806 = vcmp.ge.f32.partialorder %v701, 0.0
        %vm807 = vcmp.ge.f32.partialorder %v704, 0.0
        %vm808 = vcmp.ge.f32.partialorder %v706, 0.0
        %vm809 = vcmp.ge.f32.partialorder %v709, 0.0
        %vm810 = vcmp.ge.f32.partialorder %v711, 0.0
        %vm811 = vcmp.ge.f32.partialorder %v714, 0.0
        %vm812 = vcmp.ge.f32.partialorder %v716, 0.0
        %vm813 = vcmp.ge.f32.partialorder %v719, 0.0
        %vm814 = vcmp.ge.f32.partialorder %v721, 0.0
        %vm815 = vcmp.ge.f32.partialorder %v724, 0.0
        %vm816 = vcmp.ge.f32.partialorder %v726, 0.0
        %vm817 = vcmp.ge.f32.partialorder %v729, 0.0
        %vm818 = vcmp.ge.f32.partialorder %v731, 0.0
        %vm819 = vcmp.ge.f32.partialorder %v734, 0.0
        %vm820 = vcmp.ge.f32.partialorder %v736, 0.0
        %vm821 = vcmp.ge.f32.partialorder %v739, 0.0
        %vm822 = vcmp.ge.f32.partialorder %v741, 0.0
        %vm823 = vcmp.ge.f32.partialorder %v744, 0.0
        %vm824 = vcmp.ge.f32.partialorder %v746, 0.0
        %vm825 = vcmp.ge.f32.partialorder %v749, 0.0
        %vm826 = vcmp.ge.f32.partialorder %v751, 0.0
        %vm827 = vcmp.ge.f32.partialorder %v754, 0.0
        %vm828 = vcmp.ge.f32.partialorder %v756, 0.0
        %vm829 = vcmp.ge.f32.partialorder %v759, 0.0
        %vm830 = vcmp.ge.f32.partialorder %v761, 0.0
        %vm831 = vcmp.ge.f32.partialorder %v764, 0.0
        %vm832 = vcmp.ge.f32.partialorder %v766, 0.0
        %v833 = vstv %s768
        %v834 = vmul.f32 %v833, %v609
        %v835 = vmul.f32 %v833, %v611
        %v836 = vmul.f32 %v833, %v614
        %v837 = vmul.f32 %v833, %v616
        %v838 = vmul.f32 %v833, %v619
        %v839 = vmul.f32 %v833, %v621
        %v840 = vmul.f32 %v833, %v624
        %v841 = vmul.f32 %v833, %v626
        %v842 = vmul.f32 %v833, %v629
        %v843 = vmul.f32 %v833, %v631
        %v844 = vmul.f32 %v833, %v634
        %v845 = vmul.f32 %v833, %v636
        %v846 = vmul.f32 %v833, %v639
        %v847 = vmul.f32 %v833, %v641
        %v848 = vmul.f32 %v833, %v644
        %v849 = vmul.f32 %v833, %v646
        %v850 = vmul.f32 %v833, %v649
        %v851 = vmul.f32 %v833, %v651
        %v852 = vmul.f32 %v833, %v654
        %v853 = vmul.f32 %v833, %v656
        %v854 = vmul.f32 %v833, %v659
        %v855 = vmul.f32 %v833, %v661
        %v856 = vmul.f32 %v833, %v664
        %v857 = vmul.f32 %v833, %v666
        %v858 = vmul.f32 %v833, %v669
        %v859 = vmul.f32 %v833, %v671
        %v860 = vmul.f32 %v833, %v674
        %v861 = vmul.f32 %v833, %v676
        %v862 = vmul.f32 %v833, %v679
        %v863 = vmul.f32 %v833, %v681
        %v864 = vmul.f32 %v833, %v684
        %v865 = vmul.f32 %v833, %v686
        %v866 = vmul.f32 %v833, %v689
        %v867 = vmul.f32 %v833, %v691
        %v868 = vmul.f32 %v833, %v694
        %v869 = vmul.f32 %v833, %v696
        %v870 = vmul.f32 %v833, %v699
        %v871 = vmul.f32 %v833, %v701
        %v872 = vmul.f32 %v833, %v704
        %v873 = vmul.f32 %v833, %v706
        %v874 = vmul.f32 %v833, %v709
        %v875 = vmul.f32 %v833, %v711
        %v876 = vmul.f32 %v833, %v714
        %v877 = vmul.f32 %v833, %v716
        %v878 = vmul.f32 %v833, %v719
        %v879 = vmul.f32 %v833, %v721
        %v880 = vmul.f32 %v833, %v724
        %v881 = vmul.f32 %v833, %v726
        %v882 = vmul.f32 %v833, %v729
        %v883 = vmul.f32 %v833, %v731
        %v884 = vmul.f32 %v833, %v734
        %v885 = vmul.f32 %v833, %v736
        %v886 = vmul.f32 %v833, %v739
        %v887 = vmul.f32 %v833, %v741
        %v888 = vmul.f32 %v833, %v744
        %v889 = vmul.f32 %v833, %v746
        %v890 = vmul.f32 %v833, %v749
        %v891 = vmul.f32 %v833, %v751
        %v892 = vmul.f32 %v833, %v754
        %v893 = vmul.f32 %v833, %v756
        %v894 = vmul.f32 %v833, %v759
        %v895 = vmul.f32 %v833, %v761
        %v896 = vmul.f32 %v833, %v764
        %v897 = vmul.f32 %v833, %v766
        %v898 = vsel %vm769, %v609, %v834
        %v899 = vsel %vm770, %v611, %v835
        %v900 = vsel %vm771, %v614, %v836
        %v901 = vsel %vm772, %v616, %v837
        %v902 = vsel %vm773, %v619, %v838
        %v903 = vsel %vm774, %v621, %v839
        %v904 = vsel %vm775, %v624, %v840
        %v905 = vsel %vm776, %v626, %v841
        %v906 = vsel %vm777, %v629, %v842
        %v907 = vsel %vm778, %v631, %v843
        %v908 = vsel %vm779, %v634, %v844
        %v909 = vsel %vm780, %v636, %v845
        %v910 = vsel %vm781, %v639, %v846
        %v911 = vsel %vm782, %v641, %v847
        %v912 = vsel %vm783, %v644, %v848
        %v913 = vsel %vm784, %v646, %v849
        %v914 = vsel %vm785, %v649, %v850
        %v915 = vsel %vm786, %v651, %v851
        %v916 = vsel %vm787, %v654, %v852
        %v917 = vsel %vm788, %v656, %v853
        %v918 = vsel %vm789, %v659, %v854
        %v919 = vsel %vm790, %v661, %v855
        %v920 = vsel %vm791, %v664, %v856
        %v921 = vsel %vm792, %v666, %v857
        %v922 = vsel %vm793, %v669, %v858
        %v923 = vsel %vm794, %v671, %v859
        %v924 = vsel %vm795, %v674, %v860
        %v925 = vsel %vm796, %v676, %v861
        %v926 = vsel %vm797, %v679, %v862
        %v927 = vsel %vm798, %v681, %v863
        %v928 = vsel %vm799, %v684, %v864
        %v929 = vsel %vm800, %v686, %v865
        %v930 = vsel %vm801, %v689, %v866
        %v931 = vsel %vm802, %v691, %v867
        %v932 = vsel %vm803, %v694, %v868
        %v933 = vsel %vm804, %v696, %v869
        %v934 = vsel %vm805, %v699, %v870
        %v935 = vsel %vm806, %v701, %v871
        %v936 = vsel %vm807, %v704, %v872
        %v937 = vsel %vm808, %v706, %v873
        %v938 = vsel %vm809, %v709, %v874
        %v939 = vsel %vm810, %v711, %v875
        %v940 = vsel %vm811, %v714, %v876
        %v941 = vsel %vm812, %v716, %v877
        %v942 = vsel %vm813, %v719, %v878
        %v943 = vsel %vm814, %v721, %v879
        %v944 = vsel %vm815, %v724, %v880
        %v945 = vsel %vm816, %v726, %v881
        %v946 = vsel %vm817, %v729, %v882
        %v947 = vsel %vm818, %v731, %v883
        %v948 = vsel %vm819, %v734, %v884
        %v949 = vsel %vm820, %v736, %v885
        %v950 = vsel %vm821, %v739, %v886
        %v951 = vsel %vm822, %v741, %v887
        %v952 = vsel %vm823, %v744, %v888
        %v953 = vsel %vm824, %v746, %v889
        %v954 = vsel %vm825, %v749, %v890
        %v955 = vsel %vm826, %v751, %v891
        %v956 = vsel %vm827, %v754, %v892
        %v957 = vsel %vm828, %v756, %v893
        %v958 = vsel %vm829, %v759, %v894
        %v959 = vsel %vm830, %v761, %v895
        %v960 = vsel %vm831, %v764, %v896
        %v961 = vsel %vm832, %v766, %v897
        %v962 = vpack.c.bf16 %v898, %v898
        %v963 = vpack.c.bf16 %v899, %v899
        %v964 = vpack.c.bf16 %v900, %v900
        %v965 = vpack.c.bf16 %v901, %v901
        %v966 = vpack.c.bf16 %v902, %v902
        %v967 = vpack.c.bf16 %v903, %v903
        %v968 = vpack.c.bf16 %v904, %v904
        %v969 = vpack.c.bf16 %v905, %v905
        %v970 = vpack.c.bf16 %v906, %v906
        %v971 = vpack.c.bf16 %v907, %v907
        %v972 = vpack.c.bf16 %v908, %v908
        %v973 = vpack.c.bf16 %v909, %v909
        %v974 = vpack.c.bf16 %v910, %v910
        %v975 = vpack.c.bf16 %v911, %v911
        %v976 = vpack.c.bf16 %v912, %v912
        %v977 = vpack.c.bf16 %v913, %v913
        %v978 = vpack.c.bf16 %v914, %v914
        %v979 = vpack.c.bf16 %v915, %v915
        %v980 = vpack.c.bf16 %v916, %v916
        %v981 = vpack.c.bf16 %v917, %v917
        %v982 = vpack.c.bf16 %v918, %v918
        %v983 = vpack.c.bf16 %v919, %v919
        %v984 = vpack.c.bf16 %v920, %v920
        %v985 = vpack.c.bf16 %v921, %v921
        %v986 = vpack.c.bf16 %v922, %v922
        %v987 = vpack.c.bf16 %v923, %v923
        %v988 = vpack.c.bf16 %v924, %v924
        %v989 = vpack.c.bf16 %v925, %v925
        %v990 = vpack.c.bf16 %v926, %v926
        %v991 = vpack.c.bf16 %v927, %v927
        %v992 = vpack.c.bf16 %v928, %v928
        %v993 = vpack.c.bf16 %v929, %v929
        %v994 = vpack.c.bf16 %v930, %v930
        %v995 = vpack.c.bf16 %v931, %v931
        %v996 = vpack.c.bf16 %v932, %v932
        %v997 = vpack.c.bf16 %v933, %v933
        %v998 = vpack.c.bf16 %v934, %v934
        %v999 = vpack.c.bf16 %v935, %v935
        %v1000 = vpack.c.bf16 %v936, %v936
        %v1001 = vpack.c.bf16 %v937, %v937
        %v1002 = vpack.c.bf16 %v938, %v938
        %v1003 = vpack.c.bf16 %v939, %v939
        %v1004 = vpack.c.bf16 %v940, %v940
        %v1005 = vpack.c.bf16 %v941, %v941
        %v1006 = vpack.c.bf16 %v942, %v942
        %v1007 = vpack.c.bf16 %v943, %v943
        %v1008 = vpack.c.bf16 %v944, %v944
        %v1009 = vpack.c.bf16 %v945, %v945
        %v1010 = vpack.c.bf16 %v946, %v946
        %v1011 = vpack.c.bf16 %v947, %v947
        %v1012 = vpack.c.bf16 %v948, %v948
        %v1013 = vpack.c.bf16 %v949, %v949
        %v1014 = vpack.c.bf16 %v950, %v950
        %v1015 = vpack.c.bf16 %v951, %v951
        %v1016 = vpack.c.bf16 %v952, %v952
        %v1017 = vpack.c.bf16 %v953, %v953
        %v1018 = vpack.c.bf16 %v954, %v954
        %v1019 = vpack.c.bf16 %v955, %v955
        %v1020 = vpack.c.bf16 %v956, %v956
        %v1021 = vpack.c.bf16 %v957, %v957
        %v1022 = vpack.c.bf16 %v958, %v958
        %v1023 = vpack.c.bf16 %v959, %v959
        %v1024 = vpack.c.bf16 %v960, %v960
        %v1025 = vpack.c.bf16 %v961, %v961
        %vm1026 = vcmask 125952
        %1027 = vst.msk [vmem:[%s213] sm:$0xf] %vm1026, %v962
        %1028 = vst.msk [vmem:[%s213 + $0x4] sm:$0xf] %vm1026, %v963
        %1029 = vst.msk [vmem:[%s213 + $0x8] sm:$0xf] %vm1026, %v964
        %1030 = vst.msk [vmem:[%s213 + $0xc] sm:$0xf] %vm1026, %v965
        %1031 = vst.msk [vmem:[%s213 + $0x10] sm:$0xf] %vm1026, %v966
        %1032 = vst.msk [vmem:[%s213 + $0x14] sm:$0xf] %vm1026, %v967
        %1033 = vst.msk [vmem:[%s213 + $0x18] sm:$0xf] %vm1026, %v968
        %1034 = vst.msk [vmem:[%s213 + $0x1c] sm:$0xf] %vm1026, %v969
        %1035 = vst.msk [vmem:[%s213 + $0x20] sm:$0xf] %vm1026, %v970
        %1036 = vst.msk [vmem:[%s213 + $0x24] sm:$0xf] %vm1026, %v971
        %1037 = vst.msk [vmem:[%s213 + $0x28] sm:$0xf] %vm1026, %v972
        %1038 = vst.msk [vmem:[%s213 + $0x2c] sm:$0xf] %vm1026, %v973
        %1039 = vst.msk [vmem:[%s213 + $0x30] sm:$0xf] %vm1026, %v974
        %1040 = vst.msk [vmem:[%s213 + $0x34] sm:$0xf] %vm1026, %v975
        %1041 = vst.msk [vmem:[%s213 + $0x38] sm:$0xf] %vm1026, %v976
        %1042 = vst.msk [vmem:[%s213 + $0x3c] sm:$0xf] %vm1026, %v977
        %1043 = vst.msk [vmem:[%s213 + $0x40] sm:$0xf] %vm1026, %v978
        %1044 = vst.msk [vmem:[%s213 + $0x44] sm:$0xf] %vm1026, %v979
        %1045 = vst.msk [vmem:[%s213 + $0x48] sm:$0xf] %vm1026, %v980
        %1046 = vst.msk [vmem:[%s213 + $0x4c] sm:$0xf] %vm1026, %v981
        %1047 = vst.msk [vmem:[%s213 + $0x50] sm:$0xf] %vm1026, %v982
        %1048 = vst.msk [vmem:[%s213 + $0x54] sm:$0xf] %vm1026, %v983
        %1049 = vst.msk [vmem:[%s213 + $0x58] sm:$0xf] %vm1026, %v984
        %1050 = vst.msk [vmem:[%s213 + $0x5c] sm:$0xf] %vm1026, %v985
        %1051 = vst.msk [vmem:[%s213 + $0x60] sm:$0xf] %vm1026, %v986
        %1052 = vst.msk [vmem:[%s213 + $0x64] sm:$0xf] %vm1026, %v987
        %1053 = vst.msk [vmem:[%s213 + $0x68] sm:$0xf] %vm1026, %v988
        %1054 = vst.msk [vmem:[%s213 + $0x6c] sm:$0xf] %vm1026, %v989
        %1055 = vst.msk [vmem:[%s213 + $0x70] sm:$0xf] %vm1026, %v990
        %1056 = vst.msk [vmem:[%s213 + $0x74] sm:$0xf] %vm1026, %v991
        %1057 = vst.msk [vmem:[%s213 + $0x78] sm:$0xf] %vm1026, %v992
        %1058 = vst.msk [vmem:[%s213 + $0x7c] sm:$0xf] %vm1026, %v993
        %1059 = vst.msk [vmem:[%s213 + $0x80] sm:$0xf] %vm1026, %v994
        %1060 = vst.msk [vmem:[%s213 + $0x84] sm:$0xf] %vm1026, %v995
        %1061 = vst.msk [vmem:[%s213 + $0x88] sm:$0xf] %vm1026, %v996
        %1062 = vst.msk [vmem:[%s213 + $0x8c] sm:$0xf] %vm1026, %v997
        %1063 = vst.msk [vmem:[%s213 + $0x90] sm:$0xf] %vm1026, %v998
        %1064 = vst.msk [vmem:[%s213 + $0x94] sm:$0xf] %vm1026, %v999
        %1065 = vst.msk [vmem:[%s213 + $0x98] sm:$0xf] %vm1026, %v1000
        %1066 = vst.msk [vmem:[%s213 + $0x9c] sm:$0xf] %vm1026, %v1001
        %1067 = vst.msk [vmem:[%s213 + $0xa0] sm:$0xf] %vm1026, %v1002
        %1068 = vst.msk [vmem:[%s213 + $0xa4] sm:$0xf] %vm1026, %v1003
        %1069 = vst.msk [vmem:[%s213 + $0xa8] sm:$0xf] %vm1026, %v1004
        %1070 = vst.msk [vmem:[%s213 + $0xac] sm:$0xf] %vm1026, %v1005
        %1071 = vst.msk [vmem:[%s213 + $0xb0] sm:$0xf] %vm1026, %v1006
        %1072 = vst.msk [vmem:[%s213 + $0xb4] sm:$0xf] %vm1026, %v1007
        %1073 = vst.msk [vmem:[%s213 + $0xb8] sm:$0xf] %vm1026, %v1008
        %1074 = vst.msk [vmem:[%s213 + $0xbc] sm:$0xf] %vm1026, %v1009
        %1075 = vst.msk [vmem:[%s213 + $0xc0] sm:$0xf] %vm1026, %v1010
        %1076 = vst.msk [vmem:[%s213 + $0xc4] sm:$0xf] %vm1026, %v1011
        %1077 = vst.msk [vmem:[%s213 + $0xc8] sm:$0xf] %vm1026, %v1012
        %1078 = vst.msk [vmem:[%s213 + $0xcc] sm:$0xf] %vm1026, %v1013
        %1079 = vst.msk [vmem:[%s213 + $0xd0] sm:$0xf] %vm1026, %v1014
        %1080 = vst.msk [vmem:[%s213 + $0xd4] sm:$0xf] %vm1026, %v1015
        %1081 = vst.msk [vmem:[%s213 + $0xd8] sm:$0xf] %vm1026, %v1016
        %1082 = vst.msk [vmem:[%s213 + $0xdc] sm:$0xf] %vm1026, %v1017
        %1083 = vst.msk [vmem:[%s213 + $0xe0] sm:$0xf] %vm1026, %v1018
        %1084 = vst.msk [vmem:[%s213 + $0xe4] sm:$0xf] %vm1026, %v1019
        %1085 = vst.msk [vmem:[%s213 + $0xe8] sm:$0xf] %vm1026, %v1020
        %1086 = vst.msk [vmem:[%s213 + $0xec] sm:$0xf] %vm1026, %v1021
        %1087 = vst.msk [vmem:[%s213 + $0xf0] sm:$0xf] %vm1026, %v1022
        %1088 = vst.msk [vmem:[%s213 + $0xf4] sm:$0xf] %vm1026, %v1023
        %1089 = vst.msk [vmem:[%s213 + $0xf8] sm:$0xf] %vm1026, %v1024
        %1090 = vst.msk [vmem:[%s213 + $0xfc] sm:$0xf] %vm1026, %v1025
        %s1091 = sand.u32 %s113, 1
        %s1092 = sand.u32 %s113, 1
        %s1093 = smul.addr %s1092, 256
        %s1094 = scalar_lea.vmem [#allocation4], %s1093
        // Predicated region
        $region41: #{net_forward.10} parent=35 // pred_check
          %p1095 = pneg %p123
        $region42: #{net_forward.10} parent=35 // pred_check_branch
          %1097 = sbr.rel (%p1095) target = $region44
        $region43: #{net_forward.10} parent=35 // pred_region
          %s1098 = smul.u32 64, %s16
          %s1099 = ssub.s32 157, %s1098
          %p1100 = scmp.lt.s32.totalorder %s1099, 64
          %s1101 = scalar_select %p1100, %s1099, 64
          %s1102 = smul.u32 4, %s1101
          %p1103 = scmp.ne.s32.totalorder 0, %s1102
          %s1104 = smul.addr %s1098, 4
          %s1105 = scalar_lea.vmem %s4, %s1104
          // Predicated region
          $region45: #{net_forward.10} parent=43 // pred_check
            %p1106 = pneg %p1103
          $region46: #{net_forward.10} parent=43 // pred_check_branch
            %1108 = sbr.rel (%p1106) target = $region48
          $region47: #{net_forward.10} parent=43 // pred_region
            // Predicated region
            $region49: #{net_forward.10} parent=47 // pred_check
              _
            $region50: #{net_forward.10} parent=47 // pred_check_branch
              %1110 = sbr.rel target = $region52
            $region51: #{net_forward.10} parent=47 // pred_region
              // Predicated region
              $region71: #{net_forward.10} parent=51 // pred_check
                _
              $region72: #{net_forward.10} parent=51 // pred_check_branch
                %1222 = sbr.rel (0) target = $region74
              $region73: #{net_forward.10} parent=51 // pred_region
                %s1224 = ssub.s32 16, 1
                %s1225 = sshrl.u32 %s1101, 5
                // While loop
                $region75: #{net_forward.10} parent=73 // loop_pre_header
                  _
                $region76: #{net_forward.10} parent=73 // loop_header
                  %s1227 = sphi 0, %s1229
                  %p1228 = scmp.ge.s32.totalorder %s1227, %s1225
                  %s1232 = sphi 0, %s1301
                  %s1233 = sphi %s1094, %s1304
                  %s1234 = sphi %s1105, %s1305
                $region77: #{net_forward.10} parent=73 // loop_header_branch
                  %1231 = sbr.rel (%p1228) target = $region81
                $region78: #{net_forward.10} parent=73 // loop_body
                  %v1235 = vld [vmem:[%s1233] sm:%s1224]
                  %1236 = vst [vmem:[%s1234] sm:%s1224] %v1235
                  %v1237 = vld [vmem:[%s1233 + $0x4] sm:%s1224]
                  %1238 = vst [vmem:[%s1234 + $0x4] sm:%s1224] %v1237
                  %v1239 = vld [vmem:[%s1233 + $0x8] sm:%s1224]
                  %1240 = vst [vmem:[%s1234 + $0x8] sm:%s1224] %v1239
                  %v1241 = vld [vmem:[%s1233 + $0xc] sm:%s1224]
                  %1242 = vst [vmem:[%s1234 + $0xc] sm:%s1224] %v1241
                  %v1243 = vld [vmem:[%s1233 + $0x10] sm:%s1224]
                  %1244 = vst [vmem:[%s1234 + $0x10] sm:%s1224] %v1243
                  %v1245 = vld [vmem:[%s1233 + $0x14] sm:%s1224]
                  %1246 = vst [vmem:[%s1234 + $0x14] sm:%s1224] %v1245
                  %v1247 = vld [vmem:[%s1233 + $0x18] sm:%s1224]
                  %1248 = vst [vmem:[%s1234 + $0x18] sm:%s1224] %v1247
                  %v1249 = vld [vmem:[%s1233 + $0x1c] sm:%s1224]
                  %1250 = vst [vmem:[%s1234 + $0x1c] sm:%s1224] %v1249
                  %v1251 = vld [vmem:[%s1233 + $0x20] sm:%s1224]
                  %1252 = vst [vmem:[%s1234 + $0x20] sm:%s1224] %v1251
                  %v1253 = vld [vmem:[%s1233 + $0x24] sm:%s1224]
                  %1254 = vst [vmem:[%s1234 + $0x24] sm:%s1224] %v1253
                  %v1255 = vld [vmem:[%s1233 + $0x28] sm:%s1224]
                  %1256 = vst [vmem:[%s1234 + $0x28] sm:%s1224] %v1255
                  %v1257 = vld [vmem:[%s1233 + $0x2c] sm:%s1224]
                  %1258 = vst [vmem:[%s1234 + $0x2c] sm:%s1224] %v1257
                  %v1259 = vld [vmem:[%s1233 + $0x30] sm:%s1224]
                  %1260 = vst [vmem:[%s1234 + $0x30] sm:%s1224] %v1259
                  %v1261 = vld [vmem:[%s1233 + $0x34] sm:%s1224]
                  %1262 = vst [vmem:[%s1234 + $0x34] sm:%s1224] %v1261
                  %v1263 = vld [vmem:[%s1233 + $0x38] sm:%s1224]
                  %1264 = vst [vmem:[%s1234 + $0x38] sm:%s1224] %v1263
                  %v1265 = vld [vmem:[%s1233 + $0x3c] sm:%s1224]
                  %1266 = vst [vmem:[%s1234 + $0x3c] sm:%s1224] %v1265
                  %v1267 = vld [vmem:[%s1233 + $0x40] sm:%s1224]
                  %1268 = vst [vmem:[%s1234 + $0x40] sm:%s1224] %v1267
                  %v1269 = vld [vmem:[%s1233 + $0x44] sm:%s1224]
                  %1270 = vst [vmem:[%s1234 + $0x44] sm:%s1224] %v1269
                  %v1271 = vld [vmem:[%s1233 + $0x48] sm:%s1224]
                  %1272 = vst [vmem:[%s1234 + $0x48] sm:%s1224] %v1271
                  %v1273 = vld [vmem:[%s1233 + $0x4c] sm:%s1224]
                  %1274 = vst [vmem:[%s1234 + $0x4c] sm:%s1224] %v1273
                  %v1275 = vld [vmem:[%s1233 + $0x50] sm:%s1224]
                  %1276 = vst [vmem:[%s1234 + $0x50] sm:%s1224] %v1275
                  %v1277 = vld [vmem:[%s1233 + $0x54] sm:%s1224]
                  %1278 = vst [vmem:[%s1234 + $0x54] sm:%s1224] %v1277
                  %v1279 = vld [vmem:[%s1233 + $0x58] sm:%s1224]
                  %1280 = vst [vmem:[%s1234 + $0x58] sm:%s1224] %v1279
                  %v1281 = vld [vmem:[%s1233 + $0x5c] sm:%s1224]
                  %1282 = vst [vmem:[%s1234 + $0x5c] sm:%s1224] %v1281
                  %v1283 = vld [vmem:[%s1233 + $0x60] sm:%s1224]
                  %1284 = vst [vmem:[%s1234 + $0x60] sm:%s1224] %v1283
                  %v1285 = vld [vmem:[%s1233 + $0x64] sm:%s1224]
                  %1286 = vst [vmem:[%s1234 + $0x64] sm:%s1224] %v1285
                  %v1287 = vld [vmem:[%s1233 + $0x68] sm:%s1224]
                  %1288 = vst [vmem:[%s1234 + $0x68] sm:%s1224] %v1287
                  %v1289 = vld [vmem:[%s1233 + $0x6c] sm:%s1224]
                  %1290 = vst [vmem:[%s1234 + $0x6c] sm:%s1224] %v1289
                  %v1291 = vld [vmem:[%s1233 + $0x70] sm:%s1224]
                  %1292 = vst [vmem:[%s1234 + $0x70] sm:%s1224] %v1291
                  %v1293 = vld [vmem:[%s1233 + $0x74] sm:%s1224]
                  %1294 = vst [vmem:[%s1234 + $0x74] sm:%s1224] %v1293
                  %v1295 = vld [vmem:[%s1233 + $0x78] sm:%s1224]
                  %1296 = vst [vmem:[%s1234 + $0x78] sm:%s1224] %v1295
                  %v1297 = vld [vmem:[%s1233 + $0x7c] sm:%s1224]
                  %1298 = vst [vmem:[%s1234 + $0x7c] sm:%s1224] %v1297
                  %s1299 = sadd.s32 1, %s1232
                  %p1300 = scmp.ge.s32.totalorder %s1299, %s1225
                  %s1301 = scalar_select %p1300, 0, %s1299
                  %s1302 = smul.u32 %s1301, 128
                  %s1303 = smul.u32 %s1301, 128
                  %s1304 = scalar_lea.vmem %s1094, %s1302 [#allocation4]
                  %s1305 = scalar_lea.vmem %s1105, %s1303
                $region79: #{net_forward.10} parent=73 // loop_footer
                  %s1229 = sadd.s32 %s1227, 1
                $region80: #{net_forward.10} parent=73 // loop_footer_branch
                  %1226 = sbr.rel target = $region76
                $region81: #{net_forward.10} parent=73 // loop_exit
                  _
                %s1306 = sshrl.u32 %s1101, 5
                %s1307 = sand.u32 %s1101, 31
                %s1308 = smul.u32 %s1306, 32
                %s1309 = smul.u32 4, %s1308
                %s1310 = scalar_lea.vmem %s1094, %s1309 [#allocation4]
                %s1311 = smul.u32 4, %s1308
                %s1312 = scalar_lea.vmem %s1105, %s1311
                // While loop
                $region82: #{net_forward.10} parent=73 // loop_pre_header
                  _
                $region83: #{net_forward.10} parent=73 // loop_header
                  %s1314 = sphi 0, %s1316
                  %p1315 = scmp.ge.s32.totalorder %s1314, %s1307
                  %s1319 = sphi 0, %s1326
                  %s1320 = sphi %s1310, %s1329
                  %s1321 = sphi %s1312, %s1330
                $region84: #{net_forward.10} parent=73 // loop_header_branch
                  %1318 = sbr.rel (%p1315) target = $region88
                $region85: #{net_forward.10} parent=73 // loop_body
                  %v1322 = vld [vmem:[%s1320] sm:%s1224]
                  %1323 = vst [vmem:[%s1321] sm:%s1224] %v1322
                  %s1324 = sadd.s32 1, %s1319
                  %p1325 = scmp.ge.s32.totalorder %s1324, %s1307
                  %s1326 = scalar_select %p1325, 0, %s1324
                  %s1327 = smul.u32 %s1326, 4
                  %s1328 = smul.u32 %s1326, 4
                  %s1329 = scalar_lea.vmem %s1310, %s1327 [#allocation4]
                  %s1330 = scalar_lea.vmem %s1312, %s1328
                $region86: #{net_forward.10} parent=73 // loop_footer
                  %s1316 = sadd.s32 %s1314, 1
                $region87: #{net_forward.10} parent=73 // loop_footer_branch
                  %1313 = sbr.rel target = $region83
                $region88: #{net_forward.10} parent=73 // loop_exit
                  _
              $region74: #{net_forward.10} parent=51 // pred_fallthru
                _
            $region52: #{net_forward.10} parent=47 // pred_fallthru
              _
            // Predicated region
            $region53: #{net_forward.10} parent=47 // pred_check
              _
            $region54: #{net_forward.10} parent=47 // pred_check_branch
              %1112 = sbr.rel (0) target = $region56
            $region55: #{net_forward.10} parent=47 // pred_region
              %s1114 = ssub.s32 16, 1
              %s1115 = sshrl.u32 %s1101, 5
              // While loop
              $region57: #{net_forward.10} parent=55 // loop_pre_header
                _
              $region58: #{net_forward.10} parent=55 // loop_header
                %s1117 = sphi 0, %s1119
                %p1118 = scmp.ge.s32.totalorder %s1117, %s1115
                %s1122 = sphi 0, %s1191
                %s1123 = sphi %s1094, %s1194
                %s1124 = sphi %s1105, %s1195
              $region59: #{net_forward.10} parent=55 // loop_header_branch
                %1121 = sbr.rel (%p1118) target = $region63
              $region60: #{net_forward.10} parent=55 // loop_body
                %v1125 = vld [vmem:[%s1123] sm:%s1114]
                %1126 = vst [vmem:[%s1124] sm:%s1114] %v1125
                %v1127 = vld [vmem:[%s1123 + $0x4] sm:%s1114]
                %1128 = vst [vmem:[%s1124 + $0x4] sm:%s1114] %v1127
                %v1129 = vld [vmem:[%s1123 + $0x8] sm:%s1114]
                %1130 = vst [vmem:[%s1124 + $0x8] sm:%s1114] %v1129
                %v1131 = vld [vmem:[%s1123 + $0xc] sm:%s1114]
                %1132 = vst [vmem:[%s1124 + $0xc] sm:%s1114] %v1131
                %v1133 = vld [vmem:[%s1123 + $0x10] sm:%s1114]
                %1134 = vst [vmem:[%s1124 + $0x10] sm:%s1114] %v1133
                %v1135 = vld [vmem:[%s1123 + $0x14] sm:%s1114]
                %1136 = vst [vmem:[%s1124 + $0x14] sm:%s1114] %v1135
                %v1137 = vld [vmem:[%s1123 + $0x18] sm:%s1114]
                %1138 = vst [vmem:[%s1124 + $0x18] sm:%s1114] %v1137
                %v1139 = vld [vmem:[%s1123 + $0x1c] sm:%s1114]
                %1140 = vst [vmem:[%s1124 + $0x1c] sm:%s1114] %v1139
                %v1141 = vld [vmem:[%s1123 + $0x20] sm:%s1114]
                %1142 = vst [vmem:[%s1124 + $0x20] sm:%s1114] %v1141
                %v1143 = vld [vmem:[%s1123 + $0x24] sm:%s1114]
                %1144 = vst [vmem:[%s1124 + $0x24] sm:%s1114] %v1143
                %v1145 = vld [vmem:[%s1123 + $0x28] sm:%s1114]
                %1146 = vst [vmem:[%s1124 + $0x28] sm:%s1114] %v1145
                %v1147 = vld [vmem:[%s1123 + $0x2c] sm:%s1114]
                %1148 = vst [vmem:[%s1124 + $0x2c] sm:%s1114] %v1147
                %v1149 = vld [vmem:[%s1123 + $0x30] sm:%s1114]
                %1150 = vst [vmem:[%s1124 + $0x30] sm:%s1114] %v1149
                %v1151 = vld [vmem:[%s1123 + $0x34] sm:%s1114]
                %1152 = vst [vmem:[%s1124 + $0x34] sm:%s1114] %v1151
                %v1153 = vld [vmem:[%s1123 + $0x38] sm:%s1114]
                %1154 = vst [vmem:[%s1124 + $0x38] sm:%s1114] %v1153
                %v1155 = vld [vmem:[%s1123 + $0x3c] sm:%s1114]
                %1156 = vst [vmem:[%s1124 + $0x3c] sm:%s1114] %v1155
                %v1157 = vld [vmem:[%s1123 + $0x40] sm:%s1114]
                %1158 = vst [vmem:[%s1124 + $0x40] sm:%s1114] %v1157
                %v1159 = vld [vmem:[%s1123 + $0x44] sm:%s1114]
                %1160 = vst [vmem:[%s1124 + $0x44] sm:%s1114] %v1159
                %v1161 = vld [vmem:[%s1123 + $0x48] sm:%s1114]
                %1162 = vst [vmem:[%s1124 + $0x48] sm:%s1114] %v1161
                %v1163 = vld [vmem:[%s1123 + $0x4c] sm:%s1114]
                %1164 = vst [vmem:[%s1124 + $0x4c] sm:%s1114] %v1163
                %v1165 = vld [vmem:[%s1123 + $0x50] sm:%s1114]
                %1166 = vst [vmem:[%s1124 + $0x50] sm:%s1114] %v1165
                %v1167 = vld [vmem:[%s1123 + $0x54] sm:%s1114]
                %1168 = vst [vmem:[%s1124 + $0x54] sm:%s1114] %v1167
                %v1169 = vld [vmem:[%s1123 + $0x58] sm:%s1114]
                %1170 = vst [vmem:[%s1124 + $0x58] sm:%s1114] %v1169
                %v1171 = vld [vmem:[%s1123 + $0x5c] sm:%s1114]
                %1172 = vst [vmem:[%s1124 + $0x5c] sm:%s1114] %v1171
                %v1173 = vld [vmem:[%s1123 + $0x60] sm:%s1114]
                %1174 = vst [vmem:[%s1124 + $0x60] sm:%s1114] %v1173
                %v1175 = vld [vmem:[%s1123 + $0x64] sm:%s1114]
                %1176 = vst [vmem:[%s1124 + $0x64] sm:%s1114] %v1175
                %v1177 = vld [vmem:[%s1123 + $0x68] sm:%s1114]
                %1178 = vst [vmem:[%s1124 + $0x68] sm:%s1114] %v1177
                %v1179 = vld [vmem:[%s1123 + $0x6c] sm:%s1114]
                %1180 = vst [vmem:[%s1124 + $0x6c] sm:%s1114] %v1179
                %v1181 = vld [vmem:[%s1123 + $0x70] sm:%s1114]
                %1182 = vst [vmem:[%s1124 + $0x70] sm:%s1114] %v1181
                %v1183 = vld [vmem:[%s1123 + $0x74] sm:%s1114]
                %1184 = vst [vmem:[%s1124 + $0x74] sm:%s1114] %v1183
                %v1185 = vld [vmem:[%s1123 + $0x78] sm:%s1114]
                %1186 = vst [vmem:[%s1124 + $0x78] sm:%s1114] %v1185
                %v1187 = vld [vmem:[%s1123 + $0x7c] sm:%s1114]
                %1188 = vst [vmem:[%s1124 + $0x7c] sm:%s1114] %v1187
                %s1189 = sadd.s32 1, %s1122
                %p1190 = scmp.ge.s32.totalorder %s1189, %s1115
                %s1191 = scalar_select %p1190, 0, %s1189
                %s1192 = smul.u32 %s1191, 128
                %s1193 = smul.u32 %s1191, 128
                %s1194 = scalar_lea.vmem %s1094, %s1192 [#allocation4]
                %s1195 = scalar_lea.vmem %s1105, %s1193
              $region61: #{net_forward.10} parent=55 // loop_footer
                %s1119 = sadd.s32 %s1117, 1
              $region62: #{net_forward.10} parent=55 // loop_footer_branch
                %1116 = sbr.rel target = $region58
              $region63: #{net_forward.10} parent=55 // loop_exit
                _
              %s1196 = sshrl.u32 %s1101, 5
              %s1197 = sand.u32 %s1101, 31
              %s1198 = smul.u32 %s1196, 32
              %s1199 = smul.u32 4, %s1198
              %s1200 = scalar_lea.vmem %s1094, %s1199 [#allocation4]
              %s1201 = smul.u32 4, %s1198
              %s1202 = scalar_lea.vmem %s1105, %s1201
              // While loop
              $region64: #{net_forward.10} parent=55 // loop_pre_header
                _
              $region65: #{net_forward.10} parent=55 // loop_header
                %s1204 = sphi 0, %s1206
                %p1205 = scmp.ge.s32.totalorder %s1204, %s1197
                %s1209 = sphi 0, %s1216
                %s1210 = sphi %s1200, %s1219
                %s1211 = sphi %s1202, %s1220
              $region66: #{net_forward.10} parent=55 // loop_header_branch
                %1208 = sbr.rel (%p1205) target = $region70
              $region67: #{net_forward.10} parent=55 // loop_body
                %v1212 = vld [vmem:[%s1210] sm:%s1114]
                %1213 = vst [vmem:[%s1211] sm:%s1114] %v1212
                %s1214 = sadd.s32 1, %s1209
                %p1215 = scmp.ge.s32.totalorder %s1214, %s1197
                %s1216 = scalar_select %p1215, 0, %s1214
                %s1217 = smul.u32 %s1216, 4
                %s1218 = smul.u32 %s1216, 4
                %s1219 = scalar_lea.vmem %s1200, %s1217 [#allocation4]
                %s1220 = scalar_lea.vmem %s1202, %s1218
              $region68: #{net_forward.10} parent=55 // loop_footer
                %s1206 = sadd.s32 %s1204, 1
              $region69: #{net_forward.10} parent=55 // loop_footer_branch
                %1203 = sbr.rel target = $region65
              $region70: #{net_forward.10} parent=55 // loop_exit
                _
            $region56: #{net_forward.10} parent=47 // pred_fallthru
              _
          $region48: #{net_forward.10} parent=43 // pred_fallthru
            _
          %1331 = vnop
        $region44: #{net_forward.10} parent=35 // pred_fallthru
          _
      $region36: #{net_forward.10} parent=5 // pred_fallthru
        _
      %p1332 = scmp.le.s32.totalorder 2, %s11
      // Predicated region
      $region89: #{net_forward.10} parent=5 // pred_check
        %p1333 = pneg %p1332
      $region90: #{net_forward.10} parent=5 // pred_check_branch
        %1335 = sbr.rel (%p1333) target = $region92
      $region91: #{net_forward.10} parent=5 // pred_region
        %s1336 = ssub.s32 %s11, 2
        // Predicated region
        $region93: #{net_forward.10} parent=91 // pred_check
          %p1337 = pneg %p129
        $region94: #{net_forward.10} parent=91 // pred_check_branch
          %1339 = sbr.rel (%p1337) target = $region96
        $region95: #{net_forward.10} parent=91 // pred_region
          %s1340 = sand.u32 %s114, 1
          %s1341 = sand.u32 %s114, 1
          %s1342 = smul.addr %s1341, 256
          %s1343 = scalar_lea.vmem [#allocation4], %s1342
        $region96: #{net_forward.10} parent=91 // pred_fallthru
          _
      $region92: #{net_forward.10} parent=5 // pred_fallthru
        _
    $region6: #{net_forward.10} parent=1 // loop_footer
      %s15 = sadd.s32 1, %s11
    $region7: #{net_forward.10} parent=1 // loop_footer_branch
      %10 = sbr.rel target = $region3
    $region8: #{net_forward.10} parent=1 // loop_exit
      _
    %1344 = vsyncpa [#allocation3], 1
    %s1345 = scalar_lea.sflag [#allocation3], 1
    %1346 = vsyncpa %s1345, 1

// kernel: net_forward.11
$region0: #{net_forward.11}
  #allocation0 [shape = 'u32[]', space=smem, size = 0x4, offset = 0x4, fixed_abs, tag = 'smem constant byte address 0x4 - core index']
  #allocation1 [shape = 'u32[72,128]{1,0:T(1,128)}', space=vmem, size = 0x9000, scoped, tag = 'internal scratch']
  %s0 = inlined_call_operand.vmem [shape: bf16[1058,144], index: 0, kind: input, shape index: {}]
  %s1 = inlined_call_operand.vmem [shape: bf16[144,16], index: 1, kind: input, shape index: {}]
  %s2 = inlined_call_operand.vmem [shape: f32[1,16], index: 2, kind: input, shape index: {}]
  %s3 = inlined_call_operand.vmem [shape: f32[2], index: 3, kind: input, shape index: {}]
  %s4 = inlined_call_operand.vmem [shape: bf16[1058,16], index: 4, kind: output, shape index: {}]
  %s5 = sld [smem:[#allocation0]]
  $region97: #{net_forward.11} parent=0
    _
  %s7 = ssub.s32 1, %s5
  %s8 = scalar_select 0, %s7, %s5
  $region1: #{net_forward.11} parent=0
    #allocation2 [shape = 'u8[512]{0}', space=smem, size = 0x200, scoped, tag = 'input window, operand 3, single buffered']
    #allocation3 [shape = 's32[2]{0}', space=sflag, size = 0x8, scoped, tag = 'scoped memory for net_forward.11']
    #allocation4 [shape = 'u8[262144]{0}', space=vmem, size = 0x40000, scoped, tag = 'output window, operand 0']
    %9 = vsyncpa [#allocation3], 0
    loop: start=0, step=1, limit=5
    $region2: #{net_forward.11} parent=1 // loop_pre_header
      _
    $region3: #{net_forward.11} parent=1 // loop_header
      %s11 = sphi 0, %s15
      %p12 = scmp.ge.s32.totalorder %s11, 5
      %s21 = sphi 0, %s23
      %s24 = sphi 0, %s21
      %s25 = sphi 0, %s24
      %s41 = sphi 0, %s25
      %s45 = sphi 0, %s45
      %s47 = sphi 0, %s45
      %s48 = sphi 0, %s47
      %s62 = sphi 0, %s48
      %s66 = sphi 0, %s66
      %s68 = sphi 0, %s66
      %s69 = sphi 0, %s68
      %s83 = sphi 0, %s69
      %s87 = sphi 0, %s87
      %s89 = sphi 0, %s87
      %s90 = sphi 0, %s89
      %s104 = sphi 0, %s90
      %s110 = sphi 0, %s112
      %s113 = sphi 0, %s110
      %s114 = sphi 0, %s113
      %s130 = sphi 0, %s114
    $region4: #{net_forward.11} parent=1 // loop_header_branch
      %14 = sbr.rel (%p12) target = $region8
    $region5: #{net_forward.11} parent=1 // loop_body
      %s16 = ssub.s32 %s11, 1
      %s17 = ssub.s32 %s11, 2
      %s18 = sadd.s32 %s11, 1
      %s19 = ssub.s32 %s11, %s18
      %p20 = scmp.eq.s32.totalorder %s19, 0
      %s22 = sadd.s32 %s21, 1
      %s23 = scalar_select %p20, %s21, %s22
      %p26 = pneg %p20
      %p27 = scmp.eq.s32.totalorder %s11, 2
      %p28 = por %p26, %p27
      %p29 = scmp.ne.s32.totalorder %s21, %s24
      %p30 = scmp.eq.s32.totalorder %s11, 0
      %p31 = por %p29, %p30
      %p32 = scmp.ne.s32.totalorder %s21, %s24
      %p33 = scmp.eq.s32.totalorder %s16, 2
      %p34 = por %p32, %p33
      %p35 = scmp.ne.s32.totalorder %s24, %s25
      %p36 = scmp.eq.s32.totalorder %s16, 0
      %p37 = por %p35, %p36
      %p38 = scmp.ne.s32.totalorder %s24, %s25
      %p39 = scmp.eq.s32.totalorder %s17, 2
      %p40 = por %p38, %p39
      %p42 = scmp.ne.s32.totalorder %s25, %s41
      %p43 = scmp.eq.s32.totalorder %s17, 0
      %p44 = por %p42, %p43
      %s46 = sadd.s32 %s45, 1
      %p49 = scmp.eq.s32.totalorder %s11, 2
      %p50 = scmp.ne.s32.totalorder %s45, %s47
      %p51 = scmp.eq.s32.totalorder %s11, 0
      %p52 = por %p50, %p51
      %p53 = scmp.ne.s32.totalorder %s45, %s47
      %p54 = scmp.eq.s32.totalorder %s16, 2
      %p55 = por %p53, %p54
      %p56 = scmp.ne.s32.totalorder %s47, %s48
      %p57 = scmp.eq.s32.totalorder %s16, 0
      %p58 = por %p56, %p57
      %p59 = scmp.ne.s32.totalorder %s47, %s48
      %p60 = scmp.eq.s32.totalorder %s17, 2
      %p61 = por %p59, %p60
      %p63 = scmp.ne.s32.totalorder %s48, %s62
      %p64 = scmp.eq.s32.totalorder %s17, 0
      %p65 = por %p63, %p64
      %s67 = sadd.s32 %s66, 1
      %p70 = scmp.eq.s32.totalorder %s11, 2
      %p71 = scmp.ne.s32.totalorder %s66, %s68
      %p72 = scmp.eq.s32.totalorder %s11, 0
      %p73 = por %p71, %p72
      %p74 = scmp.ne.s32.totalorder %s66, %s68
      %p75 = scmp.eq.s32.totalorder %s16, 2
      %p76 = por %p74, %p75
      %p77 = scmp.ne.s32.totalorder %s68, %s69
      %p78 = scmp.eq.s32.totalorder %s16, 0
      %p79 = por %p77, %p78
      %p80 = scmp.ne.s32.totalorder %s68, %s69
      %p81 = scmp.eq.s32.totalorder %s17, 2
      %p82 = por %p80, %p81
      %p84 = scmp.ne.s32.totalorder %s69, %s83
      %p85 = scmp.eq.s32.totalorder %s17, 0
      %p86 = por %p84, %p85
      %s88 = sadd.s32 %s87, 1
      %p91 = scmp.eq.s32.totalorder %s11, 2
      %p92 = scmp.ne.s32.totalorder %s87, %s89
      %p93 = scmp.eq.s32.totalorder %s11, 0
      %p94 = por %p92, %p93
      %p95 = scmp.ne.s32.totalorder %s87, %s89
      %p96 = scmp.eq.s32.totalorder %s16, 2
      %p97 = por %p95, %p96
      %p98 = scmp.ne.s32.totalorder %s89, %s90
      %p99 = scmp.eq.s32.totalorder %s16, 0
      %p100 = por %p98, %p99
      %p101 = scmp.ne.s32.totalorder %s89, %s90
      %p102 = scmp.eq.s32.totalorder %s17, 2
      %p103 = por %p101, %p102
      %p105 = scmp.ne.s32.totalorder %s90, %s104
      %p106 = scmp.eq.s32.totalorder %s17, 0
      %p107 = por %p105, %p106
      %s108 = ssub.s32 %s11, %s18
      %p109 = scmp.eq.s32.totalorder %s108, 0
      %s111 = sadd.s32 %s110, 1
      %s112 = scalar_select %p109, %s110, %s111
      %p115 = pneg %p109
      %p116 = scmp.eq.s32.totalorder %s11, 2
      %p117 = por %p115, %p116
      %p118 = scmp.ne.s32.totalorder %s110, %s113
      %p119 = scmp.eq.s32.totalorder %s11, 0
      %p120 = por %p118, %p119
      %p121 = scmp.ne.s32.totalorder %s110, %s113
      %p122 = scmp.eq.s32.totalorder %s16, 2
      %p123 = por %p121, %p122
      %p124 = scmp.ne.s32.totalorder %s113, %s114
      %p125 = scmp.eq.s32.totalorder %s16, 0
      %p126 = por %p124, %p125
      %p127 = scmp.ne.s32.totalorder %s113, %s114
      %p128 = scmp.eq.s32.totalorder %s17, 2
      %p129 = por %p127, %p128
      %p131 = scmp.ne.s32.totalorder %s114, %s130
      %p132 = scmp.eq.s32.totalorder %s17, 0
      %p133 = por %p131, %p132
      %p134 = scmp.le.s32.totalorder 1, %s11
      %p135 = scmp.lt.s32.totalorder %s11, 4
      %p136 = pnand %p134, %p135
      %p137 = pneg %p136
      // Predicated region
      $region9: #{net_forward.11} parent=5 // pred_check
        _
      $region10: #{net_forward.11} parent=5 // pred_check_branch
        %139 = sbr.rel (%p136) target = $region12
      $region11: #{net_forward.11} parent=5 // pred_region
        %s140 = ssub.s32 %s11, 1
        // Predicated region
        $region13: #{net_forward.11} parent=11 // pred_check
          %p141 = pneg %p58
        $region14: #{net_forward.11} parent=11 // pred_check_branch
          %143 = sbr.rel (%p141) target = $region16
        $region15: #{net_forward.11} parent=11 // pred_region
          _
        $region16: #{net_forward.11} parent=11 // pred_fallthru
          _
        // Predicated region
        $region17: #{net_forward.11} parent=11 // pred_check
          %p144 = pneg %p79
        $region18: #{net_forward.11} parent=11 // pred_check_branch
          %146 = sbr.rel (%p144) target = $region20
        $region19: #{net_forward.11} parent=11 // pred_region
          _
        $region20: #{net_forward.11} parent=11 // pred_fallthru
          _
        // Predicated region
        $region21: #{net_forward.11} parent=11 // pred_check
          %p147 = pneg %p100
        $region22: #{net_forward.11} parent=11 // pred_check_branch
          %149 = sbr.rel (%p147) target = $region24
        $region23: #{net_forward.11} parent=11 // pred_region
          %151 = vsyncadd [#allocation3], 0
          %s153 = sshll.u32 %s3, 4
          %s154 = int_to_ptr.vmem [resolvable:$true] %s153
          %156 = dma.vmem_to_smem %s154, 16, [#allocation2], [#allocation3]
        $region24: #{net_forward.11} parent=11 // pred_fallthru
          _
      $region12: #{net_forward.11} parent=5 // pred_fallthru
        _
      %p157 = scmp.lt.s32.totalorder %s11, 3
      // Predicated region
      $region25: #{net_forward.11} parent=5 // pred_check
        %p158 = pneg %p157
      $region26: #{net_forward.11} parent=5 // pred_check_branch
        %160 = sbr.rel (%p158) target = $region28
      $region27: #{net_forward.11} parent=5 // pred_region
        // Predicated region
        $region29: #{net_forward.11} parent=27 // pred_check
          %p161 = pneg %p31
        $region30: #{net_forward.11} parent=27 // pred_check_branch
          %163 = sbr.rel (%p161) target = $region32
        $region31: #{net_forward.11} parent=27 // pred_region
          %s164 = smul.u32 64, %s11
          %s165 = ssub.s32 133, %s164
          %p166 = scmp.lt.s32.totalorder %s165, 64
          %s167 = scalar_select %p166, %s165, 64
          %s168 = smul.u32 4, %s167
          %s169 = smul.u32 %s168, 2
          %p170 = scmp.lt.s32.totalorder %s164, 132
          %s171 = scalar_select %p170, %s164, 132
          %s172 = smul.addr %s171, 2
          %s173 = smul.addr %s172, 4
          %s174 = scalar_lea.vmem %s0, %s173
          %s175 = smul.u32 64, %s11
          %s176 = ssub.s32 133, %s175
          %p177 = scmp.lt.s32.totalorder %s176, 64
          %s178 = scalar_select %p177, %s176, 64
          %s179 = smul.u32 4, %s178
          %s180 = smul.u32 %s179, 2
        $region32: #{net_forward.11} parent=27 // pred_fallthru
          _
      $region28: #{net_forward.11} parent=5 // pred_fallthru
        _
      %p181 = scmp.le.s32.totalorder 1, %s11
      %p182 = scmp.lt.s32.totalorder %s11, 4
      %p183 = pnand %p181, %p182
      %p184 = pneg %p183
      // Predicated region
      $region33: #{net_forward.11} parent=5 // pred_check
        _
      $region34: #{net_forward.11} parent=5 // pred_check_branch
        %186 = sbr.rel (%p183) target = $region36
      $region35: #{net_forward.11} parent=5 // pred_region
        %s187 = ssub.s32 %s11, 1
        // Predicated region
        $region37: #{net_forward.11} parent=35 // pred_check
          %p188 = pneg %p100
        $region38: #{net_forward.11} parent=35 // pred_check_branch
          %190 = sbr.rel (%p188) target = $region40
        $region39: #{net_forward.11} parent=35 // pred_region
          %192 = dma.done [#allocation3], 16
        $region40: #{net_forward.11} parent=35 // pred_fallthru
          _
        %193 = sfence
        %s194 = smul.u32 64, %s16
        %s195 = ssub.s32 133, %s194
        %p196 = scmp.lt.s32.totalorder %s195, 64
        %s197 = scalar_select %p196, %s195, 64
        %s198 = smul.u32 4, %s197
        %s199 = smul.u32 %s198, 2
        %p200 = scmp.lt.s32.totalorder %s194, 132
        %s201 = scalar_select %p200, %s194, 132
        %s202 = smul.addr %s201, 2
        %s203 = smul.addr %s202, 4
        %s204 = scalar_lea.vmem %s0, %s203
        %p205 = pneg %p37
        %p206 = pneg %p34
        %p207 = pneg %p58
        %p208 = pneg %p55
        %p209 = pneg %p79
        %p210 = pneg %p76
        %p211 = pneg %p100
        %p212 = pneg %p97
        %p213 = pneg %p126
        %p214 = pneg %p123
        %s215 = sand.u32 %s113, 1
        %s216 = sand.u32 %s113, 1
        %s217 = smul.addr %s216, 256
        %s218 = scalar_lea.vmem [#allocation4], %s217
        %s219 = smul.u32 64, %s16
        %s220 = ssub.s32 133, %s219
        %p221 = scmp.lt.s32.totalorder %s220, 64
        %s222 = scalar_select %p221, %s220, 64
        %s223 = smul.u32 4, %s222
        %s224 = smul.u32 %s223, 2
        %p225 = scmp.lt.s32.totalorder %s219, 132
        %s226 = scalar_select %p225, %s219, 132
        %s227 = smul.addr %s226, 2
        %s228 = smul.addr %s227, 4
        %s229 = scalar_lea.vmem %s0, %s228
        %s230 = smul.u32 64, %s16
        %s231 = ssub.s32 133, %s230
        %p232 = scmp.lt.s32.totalorder %s231, 64
        %s233 = scalar_select %p232, %s231, 64
        %s234 = smul.u32 4, %s233
        %s235 = smul.u32 %s234, 2
        %s236 = smul.u32 64, %s16
        %s237 = ssub.s32 133, %s236
        %p238 = scmp.lt.s32.totalorder %s237, 64
        %s239 = scalar_select %p238, %s237, 64
        %s240 = smul.u32 4, %s239
        %v242 = vld [vmem:[%s229] sm:$0xff]
        %v243 = vld [vmem:[%s229 + $0x8] sm:$0xff]
        %v244 = vld [vmem:[%s229 + $0x10] sm:$0xff]
        %v245 = vld [vmem:[%s229 + $0x18] sm:$0xff]
        %v246 = vld [vmem:[%s229 + $0x20] sm:$0xff]
        %v247 = vld [vmem:[%s229 + $0x28] sm:$0xff]
        %v248 = vld [vmem:[%s229 + $0x30] sm:$0xff]
        %v249 = vld [vmem:[%s229 + $0x38] sm:$0xff]
        %v250 = vld [vmem:[%s229 + $0x40] sm:$0xff]
        %v251 = vld [vmem:[%s229 + $0x48] sm:$0xff]
        %v252 = vld [vmem:[%s229 + $0x50] sm:$0xff]
        %v253 = vld [vmem:[%s229 + $0x58] sm:$0xff]
        %v254 = vld [vmem:[%s229 + $0x60] sm:$0xff]
        %v255 = vld [vmem:[%s229 + $0x68] sm:$0xff]
        %v256 = vld [vmem:[%s229 + $0x70] sm:$0xff]
        %v257 = vld [vmem:[%s229 + $0x78] sm:$0xff]
        %v258 = vld [vmem:[%s229 + $0x80] sm:$0xff]
        %v259 = vld [vmem:[%s229 + $0x88] sm:$0xff]
        %v260 = vld [vmem:[%s229 + $0x90] sm:$0xff]
        %v261 = vld [vmem:[%s229 + $0x98] sm:$0xff]
        %v262 = vld [vmem:[%s229 + $0xa0] sm:$0xff]
        %v263 = vld [vmem:[%s229 + $0xa8] sm:$0xff]
        %v264 = vld [vmem:[%s229 + $0xb0] sm:$0xff]
        %v265 = vld [vmem:[%s229 + $0xb8] sm:$0xff]
        %v266 = vld [vmem:[%s229 + $0xc0] sm:$0xff]
        %v267 = vld [vmem:[%s229 + $0xc8] sm:$0xff]
        %v268 = vld [vmem:[%s229 + $0xd0] sm:$0xff]
        %v269 = vld [vmem:[%s229 + $0xd8] sm:$0xff]
        %v270 = vld [vmem:[%s229 + $0xe0] sm:$0xff]
        %v271 = vld [vmem:[%s229 + $0xe8] sm:$0xff]
        %v272 = vld [vmem:[%s229 + $0xf0] sm:$0xff]
        %v273 = vld [vmem:[%s229 + $0xf8] sm:$0xff]
        %v274 = vld [vmem:[%s229 + $0x100] sm:$0xff]
        %v275 = vld [vmem:[%s229 + $0x108] sm:$0xff]
        %v276 = vld [vmem:[%s229 + $0x110] sm:$0xff]
        %v277 = vld [vmem:[%s229 + $0x118] sm:$0xff]
        %v278 = vld [vmem:[%s229 + $0x120] sm:$0xff]
        %v279 = vld [vmem:[%s229 + $0x128] sm:$0xff]
        %v280 = vld [vmem:[%s229 + $0x130] sm:$0xff]
        %v281 = vld [vmem:[%s229 + $0x138] sm:$0xff]
        %v282 = vld [vmem:[%s229 + $0x140] sm:$0xff]
        %v283 = vld [vmem:[%s229 + $0x148] sm:$0xff]
        %v284 = vld [vmem:[%s229 + $0x150] sm:$0xff]
        %v285 = vld [vmem:[%s229 + $0x158] sm:$0xff]
        %v286 = vld [vmem:[%s229 + $0x160] sm:$0xff]
        %v287 = vld [vmem:[%s229 + $0x168] sm:$0xff]
        %v288 = vld [vmem:[%s229 + $0x170] sm:$0xff]
        %v289 = vld [vmem:[%s229 + $0x178] sm:$0xff]
        %v290 = vld [vmem:[%s229 + $0x180] sm:$0xff]
        %v291 = vld [vmem:[%s229 + $0x188] sm:$0xff]
        %v292 = vld [vmem:[%s229 + $0x190] sm:$0xff]
        %v293 = vld [vmem:[%s229 + $0x198] sm:$0xff]
        %v294 = vld [vmem:[%s229 + $0x1a0] sm:$0xff]
        %v295 = vld [vmem:[%s229 + $0x1a8] sm:$0xff]
        %v296 = vld [vmem:[%s229 + $0x1b0] sm:$0xff]
        %v297 = vld [vmem:[%s229 + $0x1b8] sm:$0xff]
        %v298 = vld [vmem:[%s229 + $0x1c0] sm:$0xff]
        %v299 = vld [vmem:[%s229 + $0x1c8] sm:$0xff]
        %v300 = vld [vmem:[%s229 + $0x1d0] sm:$0xff]
        %v301 = vld [vmem:[%s229 + $0x1d8] sm:$0xff]
        %v302 = vld [vmem:[%s229 + $0x1e0] sm:$0xff]
        %v303 = vld [vmem:[%s229 + $0x1e8] sm:$0xff]
        %v304 = vld [vmem:[%s229 + $0x1f0] sm:$0xff]
        %v305 = vld [vmem:[%s229 + $0x1f8] sm:$0xff]
        %v306 = vld [vmem:[%s1] sm:$0xf]
        %v307 = vld [vmem:[%s1 + $0x4] sm:$0xf]
        %v308 = vld [vmem:[%s1 + $0x8] sm:$0xf]
        %v309 = vld [vmem:[%s1 + $0xc] sm:$0xf]
        %v310 = vld [vmem:[%s1 + $0x10] sm:$0xf]
        %v311 = vld [vmem:[%s1 + $0x14] sm:$0xf]
        %v312 = vld [vmem:[%s1 + $0x18] sm:$0xf]
        %v313 = vld [vmem:[%s1 + $0x1c] sm:$0xf]
        %v314 = vld [vmem:[%s1 + $0x20] sm:$0xf]
        %v315 = vld [vmem:[%s1 + $0x24] sm:$0xf]
        %v316 = vld [vmem:[%s1 + $0x28] sm:$0xf]
        %v317 = vld [vmem:[%s1 + $0x2c] sm:$0xf]
        %v318 = vld [vmem:[%s1 + $0x30] sm:$0xf]
        %v319 = vld [vmem:[%s1 + $0x34] sm:$0xf]
        %v320 = vld [vmem:[%s1 + $0x38] sm:$0xf]
        %v321 = vld [vmem:[%s1 + $0x3c] sm:$0xf]
        %v322 = vld [vmem:[%s1 + $0x40] sm:$0xf]
        %v323 = vld [vmem:[%s1 + $0x44] sm:$0xf]
        %v324 = vld [vmem:[%s2] sm:$0x1]
        %v326 = vperm.slane %v324, 0
        %v392 = vunpack.c.l.b16 %v242
        %v393 = vunpack.c.h.b16 %v242
        %v394 = vunpack.c.l.b16 %v243
        %v395 = vunpack.c.h.b16 %v243
        %v396 = vunpack.c.l.b16 %v244
        %v397 = vunpack.c.h.b16 %v244
        %v398 = vunpack.c.l.b16 %v245
        %v399 = vunpack.c.h.b16 %v245
        %v400 = vunpack.c.l.b16 %v246
        %v401 = vunpack.c.h.b16 %v246
        %v402 = vunpack.c.l.b16 %v247
        %v403 = vunpack.c.h.b16 %v247
        %v404 = vunpack.c.l.b16 %v248
        %v405 = vunpack.c.h.b16 %v248
        %v406 = vunpack.c.l.b16 %v249
        %v407 = vunpack.c.h.b16 %v249
        %v408 = vunpack.c.l.b16 %v250
        %v409 = vunpack.c.h.b16 %v250
        %v410 = vunpack.c.l.b16 %v251
        %v411 = vunpack.c.h.b16 %v251
        %v412 = vunpack.c.l.b16 %v252
        %v413 = vunpack.c.h.b16 %v252
        %v414 = vunpack.c.l.b16 %v253
        %v415 = vunpack.c.h.b16 %v253
        %v416 = vunpack.c.l.b16 %v254
        %v417 = vunpack.c.h.b16 %v254
        %v418 = vunpack.c.l.b16 %v255
        %v419 = vunpack.c.h.b16 %v255
        %v420 = vunpack.c.l.b16 %v256
        %v421 = vunpack.c.h.b16 %v256
        %v422 = vunpack.c.l.b16 %v257
        %v423 = vunpack.c.h.b16 %v257
        %v424 = vunpack.c.l.b16 %v258
        %v425 = vunpack.c.h.b16 %v258
        %v426 = vunpack.c.l.b16 %v259
        %v427 = vunpack.c.h.b16 %v259
        %v428 = vunpack.c.l.b16 %v260
        %v429 = vunpack.c.h.b16 %v260
        %v430 = vunpack.c.l.b16 %v261
        %v431 = vunpack.c.h.b16 %v261
        %v432 = vunpack.c.l.b16 %v262
        %v433 = vunpack.c.h.b16 %v262
        %v434 = vunpack.c.l.b16 %v263
        %v435 = vunpack.c.h.b16 %v263
        %v436 = vunpack.c.l.b16 %v264
        %v437 = vunpack.c.h.b16 %v264
        %v438 = vunpack.c.l.b16 %v265
        %v439 = vunpack.c.h.b16 %v265
        %v440 = vunpack.c.l.b16 %v266
        %v441 = vunpack.c.h.b16 %v266
        %v442 = vunpack.c.l.b16 %v267
        %v443 = vunpack.c.h.b16 %v267
        %v444 = vunpack.c.l.b16 %v268
        %v445 = vunpack.c.h.b16 %v268
        %v446 = vunpack.c.l.b16 %v269
        %v447 = vunpack.c.h.b16 %v269
        %v448 = vunpack.c.l.b16 %v270
        %v449 = vunpack.c.h.b16 %v270
        %v450 = vunpack.c.l.b16 %v271
        %v451 = vunpack.c.h.b16 %v271
        %v452 = vunpack.c.l.b16 %v272
        %v453 = vunpack.c.h.b16 %v272
        %v454 = vunpack.c.l.b16 %v273
        %v455 = vunpack.c.h.b16 %v273
        %v456 = vunpack.c.l.b16 %v274
        %v457 = vunpack.c.h.b16 %v274
        %v458 = vunpack.c.l.b16 %v275
        %v459 = vunpack.c.h.b16 %v275
        %v460 = vunpack.c.l.b16 %v276
        %v461 = vunpack.c.h.b16 %v276
        %v462 = vunpack.c.l.b16 %v277
        %v463 = vunpack.c.h.b16 %v277
        %v464 = vunpack.c.l.b16 %v278
        %v465 = vunpack.c.h.b16 %v278
        %v466 = vunpack.c.l.b16 %v279
        %v467 = vunpack.c.h.b16 %v279
        %v468 = vunpack.c.l.b16 %v280
        %v469 = vunpack.c.h.b16 %v280
        %v470 = vunpack.c.l.b16 %v281
        %v471 = vunpack.c.h.b16 %v281
        %v472 = vunpack.c.l.b16 %v282
        %v473 = vunpack.c.h.b16 %v282
        %v474 = vunpack.c.l.b16 %v283
        %v475 = vunpack.c.h.b16 %v283
        %v476 = vunpack.c.l.b16 %v284
        %v477 = vunpack.c.h.b16 %v284
        %v478 = vunpack.c.l.b16 %v285
        %v479 = vunpack.c.h.b16 %v285
        %v480 = vunpack.c.l.b16 %v286
        %v481 = vunpack.c.h.b16 %v286
        %v482 = vunpack.c.l.b16 %v287
        %v483 = vunpack.c.h.b16 %v287
        %v484 = vunpack.c.l.b16 %v288
        %v485 = vunpack.c.h.b16 %v288
        %v486 = vunpack.c.l.b16 %v289
        %v487 = vunpack.c.h.b16 %v289
        %v488 = vunpack.c.l.b16 %v290
        %v489 = vunpack.c.h.b16 %v290
        %v490 = vunpack.c.l.b16 %v291
        %v491 = vunpack.c.h.b16 %v291
        %v492 = vunpack.c.l.b16 %v292
        %v493 = vunpack.c.h.b16 %v292
        %v494 = vunpack.c.l.b16 %v293
        %v495 = vunpack.c.h.b16 %v293
        %v496 = vunpack.c.l.b16 %v294
        %v497 = vunpack.c.h.b16 %v294
        %v498 = vunpack.c.l.b16 %v295
        %v499 = vunpack.c.h.b16 %v295
        %v500 = vunpack.c.l.b16 %v296
        %v501 = vunpack.c.h.b16 %v296
        %v502 = vunpack.c.l.b16 %v297
        %v503 = vunpack.c.h.b16 %v297
        %v504 = vunpack.c.l.b16 %v298
        %v505 = vunpack.c.h.b16 %v298
        %v506 = vunpack.c.l.b16 %v299
        %v507 = vunpack.c.h.b16 %v299
        %v508 = vunpack.c.l.b16 %v300
        %v509 = vunpack.c.h.b16 %v300
        %v510 = vunpack.c.l.b16 %v301
        %v511 = vunpack.c.h.b16 %v301
        %v512 = vunpack.c.l.b16 %v302
        %v513 = vunpack.c.h.b16 %v302
        %v514 = vunpack.c.l.b16 %v303
        %v515 = vunpack.c.h.b16 %v303
        %v516 = vunpack.c.l.b16 %v304
        %v517 = vunpack.c.h.b16 %v304
        %v518 = vunpack.c.l.b16 %v305
        %v519 = vunpack.c.h.b16 %v305
        %v520 = vpack.c.b16 %v394, %v392
        %v521 = vpack.c.b16 %v395, %v393
        %v522 = vpack.c.b16 %v398, %v396
        %v523 = vpack.c.b16 %v399, %v397
        %v524 = vpack.c.b16 %v402, %v400
        %v525 = vpack.c.b16 %v403, %v401
        %v526 = vpack.c.b16 %v406, %v404
        %v527 = vpack.c.b16 %v407, %v405
        %v528 = vpack.c.b16 %v410, %v408
        %v529 = vpack.c.b16 %v411, %v409
        %v530 = vpack.c.b16 %v414, %v412
        %v531 = vpack.c.b16 %v415, %v413
        %v532 = vpack.c.b16 %v418, %v416
        %v533 = vpack.c.b16 %v419, %v417
        %v534 = vpack.c.b16 %v422, %v420
        %v535 = vpack.c.b16 %v423, %v421
        %v536 = vpack.c.b16 %v426, %v424
        %v537 = vpack.c.b16 %v427, %v425
        %v538 = vpack.c.b16 %v430, %v428
        %v539 = vpack.c.b16 %v431, %v429
        %v540 = vpack.c.b16 %v434, %v432
        %v541 = vpack.c.b16 %v435, %v433
        %v542 = vpack.c.b16 %v438, %v436
        %v543 = vpack.c.b16 %v439, %v437
        %v544 = vpack.c.b16 %v442, %v440
        %v545 = vpack.c.b16 %v443, %v441
        %v546 = vpack.c.b16 %v446, %v444
        %v547 = vpack.c.b16 %v447, %v445
        %v548 = vpack.c.b16 %v450, %v448
        %v549 = vpack.c.b16 %v451, %v449
        %v550 = vpack.c.b16 %v454, %v452
        %v551 = vpack.c.b16 %v455, %v453
        %v552 = vpack.c.b16 %v458, %v456
        %v553 = vpack.c.b16 %v459, %v457
        %v554 = vpack.c.b16 %v462, %v460
        %v555 = vpack.c.b16 %v463, %v461
        %v556 = vpack.c.b16 %v466, %v464
        %v557 = vpack.c.b16 %v467, %v465
        %v558 = vpack.c.b16 %v470, %v468
        %v559 = vpack.c.b16 %v471, %v469
        %v560 = vpack.c.b16 %v474, %v472
        %v561 = vpack.c.b16 %v475, %v473
        %v562 = vpack.c.b16 %v478, %v476
        %v563 = vpack.c.b16 %v479, %v477
        %v564 = vpack.c.b16 %v482, %v480
        %v565 = vpack.c.b16 %v483, %v481
        %v566 = vpack.c.b16 %v486, %v484
        %v567 = vpack.c.b16 %v487, %v485
        %v568 = vpack.c.b16 %v490, %v488
        %v569 = vpack.c.b16 %v491, %v489
        %v570 = vpack.c.b16 %v494, %v492
        %v571 = vpack.c.b16 %v495, %v493
        %v572 = vpack.c.b16 %v498, %v496
        %v573 = vpack.c.b16 %v499, %v497
        %v574 = vpack.c.b16 %v502, %v500
        %v575 = vpack.c.b16 %v503, %v501
        %v576 = vpack.c.b16 %v506, %v504
        %v577 = vpack.c.b16 %v507, %v505
        %v578 = vpack.c.b16 %v510, %v508
        %v579 = vpack.c.b16 %v511, %v509
        %v580 = vpack.c.b16 %v514, %v512
        %v581 = vpack.c.b16 %v515, %v513
        %v582 = vpack.c.b16 %v518, %v516
        %v583 = vpack.c.b16 %v519, %v517
        %v634 = vunpack.c.l.b16 %v306
        %v635 = vunpack.c.l.b16 %v307
        %v636 = vunpack.c.l.b16 %v308
        %v637 = vunpack.c.l.b16 %v309
        %v638 = vunpack.c.l.b16 %v310
        %v639 = vunpack.c.l.b16 %v311
        %v640 = vunpack.c.l.b16 %v312
        %v641 = vunpack.c.l.b16 %v313
        %v642 = vunpack.c.l.b16 %v314
        %v643 = vunpack.c.l.b16 %v315
        %v644 = vunpack.c.l.b16 %v316
        %v645 = vunpack.c.l.b16 %v317
        %v646 = vunpack.c.l.b16 %v318
        %v647 = vunpack.c.l.b16 %v319
        %v648 = vunpack.c.l.b16 %v320
        %v649 = vunpack.c.l.b16 %v321
        %v650 = vunpack.c.l.b16 %v322
        %v651 = vunpack.c.l.b16 %v323
        %v652 = vpack.c.b16 %v635, %v634
        %v653 = vpack.c.b16 %v637, %v636
        %v654 = vpack.c.b16 %v639, %v638
        %v655 = vpack.c.b16 %v641, %v640
        %v656 = vpack.c.b16 %v643, %v642
        %v657 = vpack.c.b16 %v645, %v644
        %v658 = vpack.c.b16 %v647, %v646
        %v659 = vpack.c.b16 %v649, %v648
        %v660 = vpack.c.b16 %v651, %v650
        %vm670 = vcmask 130048
        %v672 = vsel %vm670, %v521, 0
        %v675 = vsel %vm670, %v523, 0
        %v678 = vsel %vm670, %v525, 0
        %v681 = vsel %vm670, %v527, 0
        %v684 = vsel %vm670, %v529, 0
        %v687 = vsel %vm670, %v531, 0
        %v690 = vsel %vm670, %v533, 0
        %v693 = vsel %vm670, %v535, 0
        %v696 = vsel %vm670, %v537, 0
        %v699 = vsel %vm670, %v539, 0
        %v702 = vsel %vm670, %v541, 0
        %v705 = vsel %vm670, %v543, 0
        %v708 = vsel %vm670, %v545, 0
        %v711 = vsel %vm670, %v547, 0
        %v714 = vsel %vm670, %v549, 0
        %v717 = vsel %vm670, %v551, 0
        %v720 = vsel %vm670, %v553, 0
        %v723 = vsel %vm670, %v555, 0
        %v726 = vsel %vm670, %v557, 0
        %v729 = vsel %vm670, %v559, 0
        %v732 = vsel %vm670, %v561, 0
        %v735 = vsel %vm670, %v563, 0
        %v738 = vsel %vm670, %v565, 0
        %v741 = vsel %vm670, %v567, 0
        %v744 = vsel %vm670, %v569, 0
        %v747 = vsel %vm670, %v571, 0
        %v750 = vsel %vm670, %v573, 0
        %v753 = vsel %vm670, %v575, 0
        %v756 = vsel %vm670, %v577, 0
        %v759 = vsel %vm670, %v579, 0
        %v762 = vsel %vm670, %v581, 0
        %v765 = vsel %vm670, %v583, 0
        %767 = vmatpush.bf16.msra.mxu0 %v659
        %768 = vmatpush.bf16.msra.mxu0 %v658
        %769 = vmatpush.bf16.msra.mxu0 %v657
        %770 = vmatpush.bf16.msra.mxu0 %v656
        %771 = vmatpush.bf16.msra.mxu0 %v655
        %772 = vmatpush.bf16.msra.mxu0 %v654
        %773 = vmatpush.bf16.msra.mxu0 %v653
        %774 = vmatpush.bf16.msra.mxu0 %v652
        %775 = vmatmul.bf16.gmra.mxu0 %v520
        %v776 = vpop.f32.mrf.mxu0
        %v777 = vadd.f32 %v326, %v776
        %v778 = vpop.f32.mrf.mxu0
        %v779 = vadd.f32 %v326, %v778
        %780 = vmatmul.bf16.gmra.mxu0 %v522
        %v781 = vpop.f32.mrf.mxu0
        %v782 = vadd.f32 %v326, %v781
        %v783 = vpop.f32.mrf.mxu0
        %v784 = vadd.f32 %v326, %v783
        %785 = vmatmul.bf16.gmra.mxu0 %v524
        %v786 = vpop.f32.mrf.mxu0
        %v787 = vadd.f32 %v326, %v786
        %v788 = vpop.f32.mrf.mxu0
        %v789 = vadd.f32 %v326, %v788
        %790 = vmatmul.bf16.gmra.mxu0 %v526
        %v791 = vpop.f32.mrf.mxu0
        %v792 = vadd.f32 %v326, %v791
        %v793 = vpop.f32.mrf.mxu0
        %v794 = vadd.f32 %v326, %v793
        %795 = vmatmul.bf16.gmra.mxu0 %v528
        %v796 = vpop.f32.mrf.mxu0
        %v797 = vadd.f32 %v326, %v796
        %v798 = vpop.f32.mrf.mxu0
        %v799 = vadd.f32 %v326, %v798
        %800 = vmatmul.bf16.gmra.mxu0 %v530
        %v801 = vpop.f32.mrf.mxu0
        %v802 = vadd.f32 %v326, %v801
        %v803 = vpop.f32.mrf.mxu0
        %v804 = vadd.f32 %v326, %v803
        %805 = vmatmul.bf16.gmra.mxu0 %v532
        %v806 = vpop.f32.mrf.mxu0
        %v807 = vadd.f32 %v326, %v806
        %v808 = vpop.f32.mrf.mxu0
        %v809 = vadd.f32 %v326, %v808
        %810 = vmatmul.bf16.gmra.mxu0 %v534
        %v811 = vpop.f32.mrf.mxu0
        %v812 = vadd.f32 %v326, %v811
        %v813 = vpop.f32.mrf.mxu0
        %v814 = vadd.f32 %v326, %v813
        %815 = vmatmul.bf16.gmra.mxu0 %v536
        %v816 = vpop.f32.mrf.mxu0
        %v817 = vadd.f32 %v326, %v816
        %v818 = vpop.f32.mrf.mxu0
        %v819 = vadd.f32 %v326, %v818
        %820 = vmatmul.bf16.gmra.mxu0 %v538
        %v821 = vpop.f32.mrf.mxu0
        %v822 = vadd.f32 %v326, %v821
        %v823 = vpop.f32.mrf.mxu0
        %v824 = vadd.f32 %v326, %v823
        %825 = vmatmul.bf16.gmra.mxu0 %v540
        %v826 = vpop.f32.mrf.mxu0
        %v827 = vadd.f32 %v326, %v826
        %v828 = vpop.f32.mrf.mxu0
        %v829 = vadd.f32 %v326, %v828
        %830 = vmatmul.bf16.gmra.mxu0 %v542
        %v831 = vpop.f32.mrf.mxu0
        %v832 = vadd.f32 %v326, %v831
        %v833 = vpop.f32.mrf.mxu0
        %v834 = vadd.f32 %v326, %v833
        %835 = vmatmul.bf16.gmra.mxu0 %v544
        %v836 = vpop.f32.mrf.mxu0
        %v837 = vadd.f32 %v326, %v836
        %v838 = vpop.f32.mrf.mxu0
        %v839 = vadd.f32 %v326, %v838
        %840 = vmatmul.bf16.gmra.mxu0 %v546
        %v841 = vpop.f32.mrf.mxu0
        %v842 = vadd.f32 %v326, %v841
        %v843 = vpop.f32.mrf.mxu0
        %v844 = vadd.f32 %v326, %v843
        %845 = vmatmul.bf16.gmra.mxu0 %v548
        %v846 = vpop.f32.mrf.mxu0
        %v847 = vadd.f32 %v326, %v846
        %v848 = vpop.f32.mrf.mxu0
        %v849 = vadd.f32 %v326, %v848
        %850 = vmatmul.bf16.gmra.mxu0 %v550
        %v851 = vpop.f32.mrf.mxu0
        %v852 = vadd.f32 %v326, %v851
        %v853 = vpop.f32.mrf.mxu0
        %v854 = vadd.f32 %v326, %v853
        %855 = vmatmul.bf16.gmra.mxu0 %v552
        %v856 = vpop.f32.mrf.mxu0
        %v857 = vadd.f32 %v326, %v856
        %v858 = vpop.f32.mrf.mxu0
        %v859 = vadd.f32 %v326, %v858
        %860 = vmatmul.bf16.gmra.mxu0 %v554
        %v861 = vpop.f32.mrf.mxu0
        %v862 = vadd.f32 %v326, %v861
        %v863 = vpop.f32.mrf.mxu0
        %v864 = vadd.f32 %v326, %v863
        %865 = vmatmul.bf16.gmra.mxu0 %v556
        %v866 = vpop.f32.mrf.mxu0
        %v867 = vadd.f32 %v326, %v866
        %v868 = vpop.f32.mrf.mxu0
        %v869 = vadd.f32 %v326, %v868
        %870 = vmatmul.bf16.gmra.mxu0 %v558
        %v871 = vpop.f32.mrf.mxu0
        %v872 = vadd.f32 %v326, %v871
        %v873 = vpop.f32.mrf.mxu0
        %v874 = vadd.f32 %v326, %v873
        %875 = vmatmul.bf16.gmra.mxu0 %v560
        %v876 = vpop.f32.mrf.mxu0
        %v877 = vadd.f32 %v326, %v876
        %v878 = vpop.f32.mrf.mxu0
        %v879 = vadd.f32 %v326, %v878
        %880 = vmatmul.bf16.gmra.mxu0 %v562
        %v881 = vpop.f32.mrf.mxu0
        %v882 = vadd.f32 %v326, %v881
        %v883 = vpop.f32.mrf.mxu0
        %v884 = vadd.f32 %v326, %v883
        %885 = vmatmul.bf16.gmra.mxu0 %v564
        %v886 = vpop.f32.mrf.mxu0
        %v887 = vadd.f32 %v326, %v886
        %v888 = vpop.f32.mrf.mxu0
        %v889 = vadd.f32 %v326, %v888
        %890 = vmatmul.bf16.gmra.mxu0 %v566
        %v891 = vpop.f32.mrf.mxu0
        %v892 = vadd.f32 %v326, %v891
        %v893 = vpop.f32.mrf.mxu0
        %v894 = vadd.f32 %v326, %v893
        %895 = vmatmul.bf16.gmra.mxu0 %v568
        %v896 = vpop.f32.mrf.mxu0
        %v897 = vadd.f32 %v326, %v896
        %v898 = vpop.f32.mrf.mxu0
        %v899 = vadd.f32 %v326, %v898
        %900 = vmatmul.bf16.gmra.mxu0 %v570
        %v901 = vpop.f32.mrf.mxu0
        %v902 = vadd.f32 %v326, %v901
        %v903 = vpop.f32.mrf.mxu0
        %v904 = vadd.f32 %v326, %v903
        %905 = vmatmul.bf16.gmra.mxu0 %v572
        %v906 = vpop.f32.mrf.mxu0
        %v907 = vadd.f32 %v326, %v906
        %v908 = vpop.f32.mrf.mxu0
        %v909 = vadd.f32 %v326, %v908
        %910 = vmatmul.bf16.gmra.mxu0 %v574
        %v911 = vpop.f32.mrf.mxu0
        %v912 = vadd.f32 %v326, %v911
        %v913 = vpop.f32.mrf.mxu0
        %v914 = vadd.f32 %v326, %v913
        %915 = vmatmul.bf16.gmra.mxu0 %v576
        %v916 = vpop.f32.mrf.mxu0
        %v917 = vadd.f32 %v326, %v916
        %v918 = vpop.f32.mrf.mxu0
        %v919 = vadd.f32 %v326, %v918
        %920 = vmatmul.bf16.gmra.mxu0 %v578
        %v921 = vpop.f32.mrf.mxu0
        %v922 = vadd.f32 %v326, %v921
        %v923 = vpop.f32.mrf.mxu0
        %v924 = vadd.f32 %v326, %v923
        %925 = vmatmul.bf16.gmra.mxu0 %v580
        %v926 = vpop.f32.mrf.mxu0
        %v927 = vadd.f32 %v326, %v926
        %v928 = vpop.f32.mrf.mxu0
        %v929 = vadd.f32 %v326, %v928
        %930 = vmatmul.bf16.gmra.mxu0 %v582
        %v931 = vpop.f32.mrf.mxu0
        %v932 = vadd.f32 %v326, %v931
        %v933 = vpop.f32.mrf.mxu0
        %v934 = vadd.f32 %v326, %v933
        %935 = vdwg.mxu0
        %936 = vmatpush.bf16.msra.mxu0 0
        %937 = vmatpush.bf16.msra.mxu0 0
        %938 = vmatpush.bf16.msra.mxu0 0
        %939 = vmatpush.bf16.msra.mxu0 0
        %940 = vmatpush.bf16.msra.mxu0 0
        %941 = vmatpush.bf16.msra.mxu0 0
        %942 = vmatpush.bf16.msra.mxu0 0
        %943 = vmatpush.bf16.msra.mxu0 %v660
        %944 = vmatmul.bf16.gmra.mxu0 %v672
        %v945 = vpop.f32.mrf.mxu0
        %v946 = vadd.f32 %v777, %v945
        %v947 = vpop.f32.mrf.mxu0
        %v948 = vadd.f32 %v779, %v947
        %949 = vmatmul.bf16.gmra.mxu0 %v675
        %v950 = vpop.f32.mrf.mxu0
        %v951 = vadd.f32 %v782, %v950
        %v952 = vpop.f32.mrf.mxu0
        %v953 = vadd.f32 %v784, %v952
        %954 = vmatmul.bf16.gmra.mxu0 %v678
        %v955 = vpop.f32.mrf.mxu0
        %v956 = vadd.f32 %v787, %v955
        %v957 = vpop.f32.mrf.mxu0
        %v958 = vadd.f32 %v789, %v957
        %959 = vmatmul.bf16.gmra.mxu0 %v681
        %v960 = vpop.f32.mrf.mxu0
        %v961 = vadd.f32 %v792, %v960
        %v962 = vpop.f32.mrf.mxu0
        %v963 = vadd.f32 %v794, %v962
        %964 = vmatmul.bf16.gmra.mxu0 %v684
        %v965 = vpop.f32.mrf.mxu0
        %v966 = vadd.f32 %v797, %v965
        %v967 = vpop.f32.mrf.mxu0
        %v968 = vadd.f32 %v799, %v967
        %969 = vmatmul.bf16.gmra.mxu0 %v687
        %v970 = vpop.f32.mrf.mxu0
        %v971 = vadd.f32 %v802, %v970
        %v972 = vpop.f32.mrf.mxu0
        %v973 = vadd.f32 %v804, %v972
        %974 = vmatmul.bf16.gmra.mxu0 %v690
        %v975 = vpop.f32.mrf.mxu0
        %v976 = vadd.f32 %v807, %v975
        %v977 = vpop.f32.mrf.mxu0
        %v978 = vadd.f32 %v809, %v977
        %979 = vmatmul.bf16.gmra.mxu0 %v693
        %v980 = vpop.f32.mrf.mxu0
        %v981 = vadd.f32 %v812, %v980
        %v982 = vpop.f32.mrf.mxu0
        %v983 = vadd.f32 %v814, %v982
        %984 = vmatmul.bf16.gmra.mxu0 %v696
        %v985 = vpop.f32.mrf.mxu0
        %v986 = vadd.f32 %v817, %v985
        %v987 = vpop.f32.mrf.mxu0
        %v988 = vadd.f32 %v819, %v987
        %989 = vmatmul.bf16.gmra.mxu0 %v699
        %v990 = vpop.f32.mrf.mxu0
        %v991 = vadd.f32 %v822, %v990
        %v992 = vpop.f32.mrf.mxu0
        %v993 = vadd.f32 %v824, %v992
        %994 = vmatmul.bf16.gmra.mxu0 %v702
        %v995 = vpop.f32.mrf.mxu0
        %v996 = vadd.f32 %v827, %v995
        %v997 = vpop.f32.mrf.mxu0
        %v998 = vadd.f32 %v829, %v997
        %999 = vmatmul.bf16.gmra.mxu0 %v705
        %v1000 = vpop.f32.mrf.mxu0
        %v1001 = vadd.f32 %v832, %v1000
        %v1002 = vpop.f32.mrf.mxu0
        %v1003 = vadd.f32 %v834, %v1002
        %1004 = vmatmul.bf16.gmra.mxu0 %v708
        %v1005 = vpop.f32.mrf.mxu0
        %v1006 = vadd.f32 %v837, %v1005
        %v1007 = vpop.f32.mrf.mxu0
        %v1008 = vadd.f32 %v839, %v1007
        %1009 = vmatmul.bf16.gmra.mxu0 %v711
        %v1010 = vpop.f32.mrf.mxu0
        %v1011 = vadd.f32 %v842, %v1010
        %v1012 = vpop.f32.mrf.mxu0
        %v1013 = vadd.f32 %v844, %v1012
        %1014 = vmatmul.bf16.gmra.mxu0 %v714
        %v1015 = vpop.f32.mrf.mxu0
        %v1016 = vadd.f32 %v847, %v1015
        %v1017 = vpop.f32.mrf.mxu0
        %v1018 = vadd.f32 %v849, %v1017
        %1019 = vmatmul.bf16.gmra.mxu0 %v717
        %v1020 = vpop.f32.mrf.mxu0
        %v1021 = vadd.f32 %v852, %v1020
        %v1022 = vpop.f32.mrf.mxu0
        %v1023 = vadd.f32 %v854, %v1022
        %1024 = vmatmul.bf16.gmra.mxu0 %v720
        %v1025 = vpop.f32.mrf.mxu0
        %v1026 = vadd.f32 %v857, %v1025
        %v1027 = vpop.f32.mrf.mxu0
        %v1028 = vadd.f32 %v859, %v1027
        %1029 = vmatmul.bf16.gmra.mxu0 %v723
        %v1030 = vpop.f32.mrf.mxu0
        %v1031 = vadd.f32 %v862, %v1030
        %v1032 = vpop.f32.mrf.mxu0
        %v1033 = vadd.f32 %v864, %v1032
        %1034 = vmatmul.bf16.gmra.mxu0 %v726
        %v1035 = vpop.f32.mrf.mxu0
        %v1036 = vadd.f32 %v867, %v1035
        %v1037 = vpop.f32.mrf.mxu0
        %v1038 = vadd.f32 %v869, %v1037
        %1039 = vmatmul.bf16.gmra.mxu0 %v729
        %v1040 = vpop.f32.mrf.mxu0
        %v1041 = vadd.f32 %v872, %v1040
        %v1042 = vpop.f32.mrf.mxu0
        %v1043 = vadd.f32 %v874, %v1042
        %1044 = vmatmul.bf16.gmra.mxu0 %v732
        %v1045 = vpop.f32.mrf.mxu0
        %v1046 = vadd.f32 %v877, %v1045
        %v1047 = vpop.f32.mrf.mxu0
        %v1048 = vadd.f32 %v879, %v1047
        %1049 = vmatmul.bf16.gmra.mxu0 %v735
        %v1050 = vpop.f32.mrf.mxu0
        %v1051 = vadd.f32 %v882, %v1050
        %v1052 = vpop.f32.mrf.mxu0
        %v1053 = vadd.f32 %v884, %v1052
        %1054 = vmatmul.bf16.gmra.mxu0 %v738
        %v1055 = vpop.f32.mrf.mxu0
        %v1056 = vadd.f32 %v887, %v1055
        %v1057 = vpop.f32.mrf.mxu0
        %v1058 = vadd.f32 %v889, %v1057
        %1059 = vmatmul.bf16.gmra.mxu0 %v741
        %v1060 = vpop.f32.mrf.mxu0
        %v1061 = vadd.f32 %v892, %v1060
        %v1062 = vpop.f32.mrf.mxu0
        %v1063 = vadd.f32 %v894, %v1062
        %1064 = vmatmul.bf16.gmra.mxu0 %v744
        %v1065 = vpop.f32.mrf.mxu0
        %v1066 = vadd.f32 %v897, %v1065
        %v1067 = vpop.f32.mrf.mxu0
        %v1068 = vadd.f32 %v899, %v1067
        %1069 = vmatmul.bf16.gmra.mxu0 %v747
        %v1070 = vpop.f32.mrf.mxu0
        %v1071 = vadd.f32 %v902, %v1070
        %v1072 = vpop.f32.mrf.mxu0
        %v1073 = vadd.f32 %v904, %v1072
        %1074 = vmatmul.bf16.gmra.mxu0 %v750
        %v1075 = vpop.f32.mrf.mxu0
        %v1076 = vadd.f32 %v907, %v1075
        %v1077 = vpop.f32.mrf.mxu0
        %v1078 = vadd.f32 %v909, %v1077
        %1079 = vmatmul.bf16.gmra.mxu0 %v753
        %v1080 = vpop.f32.mrf.mxu0
        %v1081 = vadd.f32 %v912, %v1080
        %v1082 = vpop.f32.mrf.mxu0
        %v1083 = vadd.f32 %v914, %v1082
        %1084 = vmatmul.bf16.gmra.mxu0 %v756
        %v1085 = vpop.f32.mrf.mxu0
        %v1086 = vadd.f32 %v917, %v1085
        %v1087 = vpop.f32.mrf.mxu0
        %v1088 = vadd.f32 %v919, %v1087
        %1089 = vmatmul.bf16.gmra.mxu0 %v759
        %v1090 = vpop.f32.mrf.mxu0
        %v1091 = vadd.f32 %v922, %v1090
        %v1092 = vpop.f32.mrf.mxu0
        %v1093 = vadd.f32 %v924, %v1092
        %1094 = vmatmul.bf16.gmra.mxu0 %v762
        %v1095 = vpop.f32.mrf.mxu0
        %v1096 = vadd.f32 %v927, %v1095
        %v1097 = vpop.f32.mrf.mxu0
        %v1098 = vadd.f32 %v929, %v1097
        %1099 = vmatmul.bf16.gmra.mxu0 %v765
        %v1100 = vpop.f32.mrf.mxu0
        %v1101 = vadd.f32 %v932, %v1100
        %v1102 = vpop.f32.mrf.mxu0
        %v1103 = vadd.f32 %v934, %v1102
        %1104 = vdwg.mxu0
        %s1105 = sld [smem:[#allocation2]]
        %vm1106 = vcmp.ge.f32.partialorder %v946, 0.0
        %vm1107 = vcmp.ge.f32.partialorder %v948, 0.0
        %vm1108 = vcmp.ge.f32.partialorder %v951, 0.0
        %vm1109 = vcmp.ge.f32.partialorder %v953, 0.0
        %vm1110 = vcmp.ge.f32.partialorder %v956, 0.0
        %vm1111 = vcmp.ge.f32.partialorder %v958, 0.0
        %vm1112 = vcmp.ge.f32.partialorder %v961, 0.0
        %vm1113 = vcmp.ge.f32.partialorder %v963, 0.0
        %vm1114 = vcmp.ge.f32.partialorder %v966, 0.0
        %vm1115 = vcmp.ge.f32.partialorder %v968, 0.0
        %vm1116 = vcmp.ge.f32.partialorder %v971, 0.0
        %vm1117 = vcmp.ge.f32.partialorder %v973, 0.0
        %vm1118 = vcmp.ge.f32.partialorder %v976, 0.0
        %vm1119 = vcmp.ge.f32.partialorder %v978, 0.0
        %vm1120 = vcmp.ge.f32.partialorder %v981, 0.0
        %vm1121 = vcmp.ge.f32.partialorder %v983, 0.0
        %vm1122 = vcmp.ge.f32.partialorder %v986, 0.0
        %vm1123 = vcmp.ge.f32.partialorder %v988, 0.0
        %vm1124 = vcmp.ge.f32.partialorder %v991, 0.0
        %vm1125 = vcmp.ge.f32.partialorder %v993, 0.0
        %vm1126 = vcmp.ge.f32.partialorder %v996, 0.0
        %vm1127 = vcmp.ge.f32.partialorder %v998, 0.0
        %vm1128 = vcmp.ge.f32.partialorder %v1001, 0.0
        %vm1129 = vcmp.ge.f32.partialorder %v1003, 0.0
        %vm1130 = vcmp.ge.f32.partialorder %v1006, 0.0
        %vm1131 = vcmp.ge.f32.partialorder %v1008, 0.0
        %vm1132 = vcmp.ge.f32.partialorder %v1011, 0.0
        %vm1133 = vcmp.ge.f32.partialorder %v1013, 0.0
        %vm1134 = vcmp.ge.f32.partialorder %v1016, 0.0
        %vm1135 = vcmp.ge.f32.partialorder %v1018, 0.0
        %vm1136 = vcmp.ge.f32.partialorder %v1021, 0.0
        %vm1137 = vcmp.ge.f32.partialorder %v1023, 0.0
        %vm1138 = vcmp.ge.f32.partialorder %v1026, 0.0
        %vm1139 = vcmp.ge.f32.partialorder %v1028, 0.0
        %vm1140 = vcmp.ge.f32.partialorder %v1031, 0.0
        %vm1141 = vcmp.ge.f32.partialorder %v1033, 0.0
        %vm1142 = vcmp.ge.f32.partialorder %v1036, 0.0
        %vm1143 = vcmp.ge.f32.partialorder %v1038, 0.0
        %vm1144 = vcmp.ge.f32.partialorder %v1041, 0.0
        %vm1145 = vcmp.ge.f32.partialorder %v1043, 0.0
        %vm1146 = vcmp.ge.f32.partialorder %v1046, 0.0
        %vm1147 = vcmp.ge.f32.partialorder %v1048, 0.0
        %vm1148 = vcmp.ge.f32.partialorder %v1051, 0.0
        %vm1149 = vcmp.ge.f32.partialorder %v1053, 0.0
        %vm1150 = vcmp.ge.f32.partialorder %v1056, 0.0
        %vm1151 = vcmp.ge.f32.partialorder %v1058, 0.0
        %vm1152 = vcmp.ge.f32.partialorder %v1061, 0.0
        %vm1153 = vcmp.ge.f32.partialorder %v1063, 0.0
        %vm1154 = vcmp.ge.f32.partialorder %v1066, 0.0
        %vm1155 = vcmp.ge.f32.partialorder %v1068, 0.0
        %vm1156 = vcmp.ge.f32.partialorder %v1071, 0.0
        %vm1157 = vcmp.ge.f32.partialorder %v1073, 0.0
        %vm1158 = vcmp.ge.f32.partialorder %v1076, 0.0
        %vm1159 = vcmp.ge.f32.partialorder %v1078, 0.0
        %vm1160 = vcmp.ge.f32.partialorder %v1081, 0.0
        %vm1161 = vcmp.ge.f32.partialorder %v1083, 0.0
        %vm1162 = vcmp.ge.f32.partialorder %v1086, 0.0
        %vm1163 = vcmp.ge.f32.partialorder %v1088, 0.0
        %vm1164 = vcmp.ge.f32.partialorder %v1091, 0.0
        %vm1165 = vcmp.ge.f32.partialorder %v1093, 0.0
        %vm1166 = vcmp.ge.f32.partialorder %v1096, 0.0
        %vm1167 = vcmp.ge.f32.partialorder %v1098, 0.0
        %vm1168 = vcmp.ge.f32.partialorder %v1101, 0.0
        %vm1169 = vcmp.ge.f32.partialorder %v1103, 0.0
        %v1170 = vstv %s1105
        %v1171 = vmul.f32 %v1170, %v946
        %v1172 = vmul.f32 %v1170, %v948
        %v1173 = vmul.f32 %v1170, %v951
        %v1174 = vmul.f32 %v1170, %v953
        %v1175 = vmul.f32 %v1170, %v956
        %v1176 = vmul.f32 %v1170, %v958
        %v1177 = vmul.f32 %v1170, %v961
        %v1178 = vmul.f32 %v1170, %v963
        %v1179 = vmul.f32 %v1170, %v966
        %v1180 = vmul.f32 %v1170, %v968
        %v1181 = vmul.f32 %v1170, %v971
        %v1182 = vmul.f32 %v1170, %v973
        %v1183 = vmul.f32 %v1170, %v976
        %v1184 = vmul.f32 %v1170, %v978
        %v1185 = vmul.f32 %v1170, %v981
        %v1186 = vmul.f32 %v1170, %v983
        %v1187 = vmul.f32 %v1170, %v986
        %v1188 = vmul.f32 %v1170, %v988
        %v1189 = vmul.f32 %v1170, %v991
        %v1190 = vmul.f32 %v1170, %v993
        %v1191 = vmul.f32 %v1170, %v996
        %v1192 = vmul.f32 %v1170, %v998
        %v1193 = vmul.f32 %v1170, %v1001
        %v1194 = vmul.f32 %v1170, %v1003
        %v1195 = vmul.f32 %v1170, %v1006
        %v1196 = vmul.f32 %v1170, %v1008
        %v1197 = vmul.f32 %v1170, %v1011
        %v1198 = vmul.f32 %v1170, %v1013
        %v1199 = vmul.f32 %v1170, %v1016
        %v1200 = vmul.f32 %v1170, %v1018
        %v1201 = vmul.f32 %v1170, %v1021
        %v1202 = vmul.f32 %v1170, %v1023
        %v1203 = vmul.f32 %v1170, %v1026
        %v1204 = vmul.f32 %v1170, %v1028
        %v1205 = vmul.f32 %v1170, %v1031
        %v1206 = vmul.f32 %v1170, %v1033
        %v1207 = vmul.f32 %v1170, %v1036
        %v1208 = vmul.f32 %v1170, %v1038
        %v1209 = vmul.f32 %v1170, %v1041
        %v1210 = vmul.f32 %v1170, %v1043
        %v1211 = vmul.f32 %v1170, %v1046
        %v1212 = vmul.f32 %v1170, %v1048
        %v1213 = vmul.f32 %v1170, %v1051
        %v1214 = vmul.f32 %v1170, %v1053
        %v1215 = vmul.f32 %v1170, %v1056
        %v1216 = vmul.f32 %v1170, %v1058
        %v1217 = vmul.f32 %v1170, %v1061
        %v1218 = vmul.f32 %v1170, %v1063
        %v1219 = vmul.f32 %v1170, %v1066
        %v1220 = vmul.f32 %v1170, %v1068
        %v1221 = vmul.f32 %v1170, %v1071
        %v1222 = vmul.f32 %v1170, %v1073
        %v1223 = vmul.f32 %v1170, %v1076
        %v1224 = vmul.f32 %v1170, %v1078
        %v1225 = vmul.f32 %v1170, %v1081
        %v1226 = vmul.f32 %v1170, %v1083
        %v1227 = vmul.f32 %v1170, %v1086
        %v1228 = vmul.f32 %v1170, %v1088
        %v1229 = vmul.f32 %v1170, %v1091
        %v1230 = vmul.f32 %v1170, %v1093
        %v1231 = vmul.f32 %v1170, %v1096
        %v1232 = vmul.f32 %v1170, %v1098
        %v1233 = vmul.f32 %v1170, %v1101
        %v1234 = vmul.f32 %v1170, %v1103
        %v1235 = vsel %vm1106, %v946, %v1171
        %v1236 = vsel %vm1107, %v948, %v1172
        %v1237 = vsel %vm1108, %v951, %v1173
        %v1238 = vsel %vm1109, %v953, %v1174
        %v1239 = vsel %vm1110, %v956, %v1175
        %v1240 = vsel %vm1111, %v958, %v1176
        %v1241 = vsel %vm1112, %v961, %v1177
        %v1242 = vsel %vm1113, %v963, %v1178
        %v1243 = vsel %vm1114, %v966, %v1179
        %v1244 = vsel %vm1115, %v968, %v1180
        %v1245 = vsel %vm1116, %v971, %v1181
        %v1246 = vsel %vm1117, %v973, %v1182
        %v1247 = vsel %vm1118, %v976, %v1183
        %v1248 = vsel %vm1119, %v978, %v1184
        %v1249 = vsel %vm1120, %v981, %v1185
        %v1250 = vsel %vm1121, %v983, %v1186
        %v1251 = vsel %vm1122, %v986, %v1187
        %v1252 = vsel %vm1123, %v988, %v1188
        %v1253 = vsel %vm1124, %v991, %v1189
        %v1254 = vsel %vm1125, %v993, %v1190
        %v1255 = vsel %vm1126, %v996, %v1191
        %v1256 = vsel %vm1127, %v998, %v1192
        %v1257 = vsel %vm1128, %v1001, %v1193
        %v1258 = vsel %vm1129, %v1003, %v1194
        %v1259 = vsel %vm1130, %v1006, %v1195
        %v1260 = vsel %vm1131, %v1008, %v1196
        %v1261 = vsel %vm1132, %v1011, %v1197
        %v1262 = vsel %vm1133, %v1013, %v1198
        %v1263 = vsel %vm1134, %v1016, %v1199
        %v1264 = vsel %vm1135, %v1018, %v1200
        %v1265 = vsel %vm1136, %v1021, %v1201
        %v1266 = vsel %vm1137, %v1023, %v1202
        %v1267 = vsel %vm1138, %v1026, %v1203
        %v1268 = vsel %vm1139, %v1028, %v1204
        %v1269 = vsel %vm1140, %v1031, %v1205
        %v1270 = vsel %vm1141, %v1033, %v1206
        %v1271 = vsel %vm1142, %v1036, %v1207
        %v1272 = vsel %vm1143, %v1038, %v1208
        %v1273 = vsel %vm1144, %v1041, %v1209
        %v1274 = vsel %vm1145, %v1043, %v1210
        %v1275 = vsel %vm1146, %v1046, %v1211
        %v1276 = vsel %vm1147, %v1048, %v1212
        %v1277 = vsel %vm1148, %v1051, %v1213
        %v1278 = vsel %vm1149, %v1053, %v1214
        %v1279 = vsel %vm1150, %v1056, %v1215
        %v1280 = vsel %vm1151, %v1058, %v1216
        %v1281 = vsel %vm1152, %v1061, %v1217
        %v1282 = vsel %vm1153, %v1063, %v1218
        %v1283 = vsel %vm1154, %v1066, %v1219
        %v1284 = vsel %vm1155, %v1068, %v1220
        %v1285 = vsel %vm1156, %v1071, %v1221
        %v1286 = vsel %vm1157, %v1073, %v1222
        %v1287 = vsel %vm1158, %v1076, %v1223
        %v1288 = vsel %vm1159, %v1078, %v1224
        %v1289 = vsel %vm1160, %v1081, %v1225
        %v1290 = vsel %vm1161, %v1083, %v1226
        %v1291 = vsel %vm1162, %v1086, %v1227
        %v1292 = vsel %vm1163, %v1088, %v1228
        %v1293 = vsel %vm1164, %v1091, %v1229
        %v1294 = vsel %vm1165, %v1093, %v1230
        %v1295 = vsel %vm1166, %v1096, %v1231
        %v1296 = vsel %vm1167, %v1098, %v1232
        %v1297 = vsel %vm1168, %v1101, %v1233
        %v1298 = vsel %vm1169, %v1103, %v1234
        %v1299 = vpack.c.bf16 %v1235, %v1235
        %v1300 = vpack.c.bf16 %v1236, %v1236
        %v1301 = vpack.c.bf16 %v1237, %v1237
        %v1302 = vpack.c.bf16 %v1238, %v1238
        %v1303 = vpack.c.bf16 %v1239, %v1239
        %v1304 = vpack.c.bf16 %v1240, %v1240
        %v1305 = vpack.c.bf16 %v1241, %v1241
        %v1306 = vpack.c.bf16 %v1242, %v1242
        %v1307 = vpack.c.bf16 %v1243, %v1243
        %v1308 = vpack.c.bf16 %v1244, %v1244
        %v1309 = vpack.c.bf16 %v1245, %v1245
        %v1310 = vpack.c.bf16 %v1246, %v1246
        %v1311 = vpack.c.bf16 %v1247, %v1247
        %v1312 = vpack.c.bf16 %v1248, %v1248
        %v1313 = vpack.c.bf16 %v1249, %v1249
        %v1314 = vpack.c.bf16 %v1250, %v1250
        %v1315 = vpack.c.bf16 %v1251, %v1251
        %v1316 = vpack.c.bf16 %v1252, %v1252
        %v1317 = vpack.c.bf16 %v1253, %v1253
        %v1318 = vpack.c.bf16 %v1254, %v1254
        %v1319 = vpack.c.bf16 %v1255, %v1255
        %v1320 = vpack.c.bf16 %v1256, %v1256
        %v1321 = vpack.c.bf16 %v1257, %v1257
        %v1322 = vpack.c.bf16 %v1258, %v1258
        %v1323 = vpack.c.bf16 %v1259, %v1259
        %v1324 = vpack.c.bf16 %v1260, %v1260
        %v1325 = vpack.c.bf16 %v1261, %v1261
        %v1326 = vpack.c.bf16 %v1262, %v1262
        %v1327 = vpack.c.bf16 %v1263, %v1263
        %v1328 = vpack.c.bf16 %v1264, %v1264
        %v1329 = vpack.c.bf16 %v1265, %v1265
        %v1330 = vpack.c.bf16 %v1266, %v1266
        %v1331 = vpack.c.bf16 %v1267, %v1267
        %v1332 = vpack.c.bf16 %v1268, %v1268
        %v1333 = vpack.c.bf16 %v1269, %v1269
        %v1334 = vpack.c.bf16 %v1270, %v1270
        %v1335 = vpack.c.bf16 %v1271, %v1271
        %v1336 = vpack.c.bf16 %v1272, %v1272
        %v1337 = vpack.c.bf16 %v1273, %v1273
        %v1338 = vpack.c.bf16 %v1274, %v1274
        %v1339 = vpack.c.bf16 %v1275, %v1275
        %v1340 = vpack.c.bf16 %v1276, %v1276
        %v1341 = vpack.c.bf16 %v1277, %v1277
        %v1342 = vpack.c.bf16 %v1278, %v1278
        %v1343 = vpack.c.bf16 %v1279, %v1279
        %v1344 = vpack.c.bf16 %v1280, %v1280
        %v1345 = vpack.c.bf16 %v1281, %v1281
        %v1346 = vpack.c.bf16 %v1282, %v1282
        %v1347 = vpack.c.bf16 %v1283, %v1283
        %v1348 = vpack.c.bf16 %v1284, %v1284
        %v1349 = vpack.c.bf16 %v1285, %v1285
        %v1350 = vpack.c.bf16 %v1286, %v1286
        %v1351 = vpack.c.bf16 %v1287, %v1287
        %v1352 = vpack.c.bf16 %v1288, %v1288
        %v1353 = vpack.c.bf16 %v1289, %v1289
        %v1354 = vpack.c.bf16 %v1290, %v1290
        %v1355 = vpack.c.bf16 %v1291, %v1291
        %v1356 = vpack.c.bf16 %v1292, %v1292
        %v1357 = vpack.c.bf16 %v1293, %v1293
        %v1358 = vpack.c.bf16 %v1294, %v1294
        %v1359 = vpack.c.bf16 %v1295, %v1295
        %v1360 = vpack.c.bf16 %v1296, %v1296
        %v1361 = vpack.c.bf16 %v1297, %v1297
        %v1362 = vpack.c.bf16 %v1298, %v1298
        %vm1363 = vcmask 125952
        %1364 = vst.msk [vmem:[%s218] sm:$0xf] %vm1363, %v1299
        %1365 = vst.msk [vmem:[%s218 + $0x4] sm:$0xf] %vm1363, %v1300
        %1366 = vst.msk [vmem:[%s218 + $0x8] sm:$0xf] %vm1363, %v1301
        %1367 = vst.msk [vmem:[%s218 + $0xc] sm:$0xf] %vm1363, %v1302
        %1368 = vst.msk [vmem:[%s218 + $0x10] sm:$0xf] %vm1363, %v1303
        %1369 = vst.msk [vmem:[%s218 + $0x14] sm:$0xf] %vm1363, %v1304
        %1370 = vst.msk [vmem:[%s218 + $0x18] sm:$0xf] %vm1363, %v1305
        %1371 = vst.msk [vmem:[%s218 + $0x1c] sm:$0xf] %vm1363, %v1306
        %1372 = vst.msk [vmem:[%s218 + $0x20] sm:$0xf] %vm1363, %v1307
        %1373 = vst.msk [vmem:[%s218 + $0x24] sm:$0xf] %vm1363, %v1308
        %1374 = vst.msk [vmem:[%s218 + $0x28] sm:$0xf] %vm1363, %v1309
        %1375 = vst.msk [vmem:[%s218 + $0x2c] sm:$0xf] %vm1363, %v1310
        %1376 = vst.msk [vmem:[%s218 + $0x30] sm:$0xf] %vm1363, %v1311
        %1377 = vst.msk [vmem:[%s218 + $0x34] sm:$0xf] %vm1363, %v1312
        %1378 = vst.msk [vmem:[%s218 + $0x38] sm:$0xf] %vm1363, %v1313
        %1379 = vst.msk [vmem:[%s218 + $0x3c] sm:$0xf] %vm1363, %v1314
        %1380 = vst.msk [vmem:[%s218 + $0x40] sm:$0xf] %vm1363, %v1315
        %1381 = vst.msk [vmem:[%s218 + $0x44] sm:$0xf] %vm1363, %v1316
        %1382 = vst.msk [vmem:[%s218 + $0x48] sm:$0xf] %vm1363, %v1317
        %1383 = vst.msk [vmem:[%s218 + $0x4c] sm:$0xf] %vm1363, %v1318
        %1384 = vst.msk [vmem:[%s218 + $0x50] sm:$0xf] %vm1363, %v1319
        %1385 = vst.msk [vmem:[%s218 + $0x54] sm:$0xf] %vm1363, %v1320
        %1386 = vst.msk [vmem:[%s218 + $0x58] sm:$0xf] %vm1363, %v1321
        %1387 = vst.msk [vmem:[%s218 + $0x5c] sm:$0xf] %vm1363, %v1322
        %1388 = vst.msk [vmem:[%s218 + $0x60] sm:$0xf] %vm1363, %v1323
        %1389 = vst.msk [vmem:[%s218 + $0x64] sm:$0xf] %vm1363, %v1324
        %1390 = vst.msk [vmem:[%s218 + $0x68] sm:$0xf] %vm1363, %v1325
        %1391 = vst.msk [vmem:[%s218 + $0x6c] sm:$0xf] %vm1363, %v1326
        %1392 = vst.msk [vmem:[%s218 + $0x70] sm:$0xf] %vm1363, %v1327
        %1393 = vst.msk [vmem:[%s218 + $0x74] sm:$0xf] %vm1363, %v1328
        %1394 = vst.msk [vmem:[%s218 + $0x78] sm:$0xf] %vm1363, %v1329
        %1395 = vst.msk [vmem:[%s218 + $0x7c] sm:$0xf] %vm1363, %v1330
        %1396 = vst.msk [vmem:[%s218 + $0x80] sm:$0xf] %vm1363, %v1331
        %1397 = vst.msk [vmem:[%s218 + $0x84] sm:$0xf] %vm1363, %v1332
        %1398 = vst.msk [vmem:[%s218 + $0x88] sm:$0xf] %vm1363, %v1333
        %1399 = vst.msk [vmem:[%s218 + $0x8c] sm:$0xf] %vm1363, %v1334
        %1400 = vst.msk [vmem:[%s218 + $0x90] sm:$0xf] %vm1363, %v1335
        %1401 = vst.msk [vmem:[%s218 + $0x94] sm:$0xf] %vm1363, %v1336
        %1402 = vst.msk [vmem:[%s218 + $0x98] sm:$0xf] %vm1363, %v1337
        %1403 = vst.msk [vmem:[%s218 + $0x9c] sm:$0xf] %vm1363, %v1338
        %1404 = vst.msk [vmem:[%s218 + $0xa0] sm:$0xf] %vm1363, %v1339
        %1405 = vst.msk [vmem:[%s218 + $0xa4] sm:$0xf] %vm1363, %v1340
        %1406 = vst.msk [vmem:[%s218 + $0xa8] sm:$0xf] %vm1363, %v1341
        %1407 = vst.msk [vmem:[%s218 + $0xac] sm:$0xf] %vm1363, %v1342
        %1408 = vst.msk [vmem:[%s218 + $0xb0] sm:$0xf] %vm1363, %v1343
        %1409 = vst.msk [vmem:[%s218 + $0xb4] sm:$0xf] %vm1363, %v1344
        %1410 = vst.msk [vmem:[%s218 + $0xb8] sm:$0xf] %vm1363, %v1345
        %1411 = vst.msk [vmem:[%s218 + $0xbc] sm:$0xf] %vm1363, %v1346
        %1412 = vst.msk [vmem:[%s218 + $0xc0] sm:$0xf] %vm1363, %v1347
        %1413 = vst.msk [vmem:[%s218 + $0xc4] sm:$0xf] %vm1363, %v1348
        %1414 = vst.msk [vmem:[%s218 + $0xc8] sm:$0xf] %vm1363, %v1349
        %1415 = vst.msk [vmem:[%s218 + $0xcc] sm:$0xf] %vm1363, %v1350
        %1416 = vst.msk [vmem:[%s218 + $0xd0] sm:$0xf] %vm1363, %v1351
        %1417 = vst.msk [vmem:[%s218 + $0xd4] sm:$0xf] %vm1363, %v1352
        %1418 = vst.msk [vmem:[%s218 + $0xd8] sm:$0xf] %vm1363, %v1353
        %1419 = vst.msk [vmem:[%s218 + $0xdc] sm:$0xf] %vm1363, %v1354
        %1420 = vst.msk [vmem:[%s218 + $0xe0] sm:$0xf] %vm1363, %v1355
        %1421 = vst.msk [vmem:[%s218 + $0xe4] sm:$0xf] %vm1363, %v1356
        %1422 = vst.msk [vmem:[%s218 + $0xe8] sm:$0xf] %vm1363, %v1357
        %1423 = vst.msk [vmem:[%s218 + $0xec] sm:$0xf] %vm1363, %v1358
        %1424 = vst.msk [vmem:[%s218 + $0xf0] sm:$0xf] %vm1363, %v1359
        %1425 = vst.msk [vmem:[%s218 + $0xf4] sm:$0xf] %vm1363, %v1360
        %1426 = vst.msk [vmem:[%s218 + $0xf8] sm:$0xf] %vm1363, %v1361
        %1427 = vst.msk [vmem:[%s218 + $0xfc] sm:$0xf] %vm1363, %v1362
        %s1428 = sand.u32 %s113, 1
        %s1429 = sand.u32 %s113, 1
        %s1430 = smul.addr %s1429, 256
        %s1431 = scalar_lea.vmem [#allocation4], %s1430
        // Predicated region
        $region41: #{net_forward.11} parent=35 // pred_check
          %p1432 = pneg %p123
        $region42: #{net_forward.11} parent=35 // pred_check_branch
          %1434 = sbr.rel (%p1432) target = $region44
        $region43: #{net_forward.11} parent=35 // pred_region
          %s1435 = smul.u32 64, %s16
          %s1436 = ssub.s32 133, %s1435
          %p1437 = scmp.lt.s32.totalorder %s1436, 64
          %s1438 = scalar_select %p1437, %s1436, 64
          %s1439 = smul.u32 4, %s1438
          %p1440 = scmp.ne.s32.totalorder 0, %s1439
          %s1441 = smul.addr %s1435, 4
          %s1442 = scalar_lea.vmem %s4, %s1441
          // Predicated region
          $region45: #{net_forward.11} parent=43 // pred_check
            %p1443 = pneg %p1440
          $region46: #{net_forward.11} parent=43 // pred_check_branch
            %1445 = sbr.rel (%p1443) target = $region48
          $region47: #{net_forward.11} parent=43 // pred_region
            // Predicated region
            $region49: #{net_forward.11} parent=47 // pred_check
              _
            $region50: #{net_forward.11} parent=47 // pred_check_branch
              %1447 = sbr.rel target = $region52
            $region51: #{net_forward.11} parent=47 // pred_region
              // Predicated region
              $region71: #{net_forward.11} parent=51 // pred_check
                _
              $region72: #{net_forward.11} parent=51 // pred_check_branch
                %1559 = sbr.rel (0) target = $region74
              $region73: #{net_forward.11} parent=51 // pred_region
                %s1561 = ssub.s32 16, 1
                %s1562 = sshrl.u32 %s1438, 5
                // While loop
                $region75: #{net_forward.11} parent=73 // loop_pre_header
                  _
                $region76: #{net_forward.11} parent=73 // loop_header
                  %s1564 = sphi 0, %s1566
                  %p1565 = scmp.ge.s32.totalorder %s1564, %s1562
                  %s1569 = sphi 0, %s1638
                  %s1570 = sphi %s1431, %s1641
                  %s1571 = sphi %s1442, %s1642
                $region77: #{net_forward.11} parent=73 // loop_header_branch
                  %1568 = sbr.rel (%p1565) target = $region81
                $region78: #{net_forward.11} parent=73 // loop_body
                  %v1572 = vld [vmem:[%s1570] sm:%s1561]
                  %1573 = vst [vmem:[%s1571] sm:%s1561] %v1572
                  %v1574 = vld [vmem:[%s1570 + $0x4] sm:%s1561]
                  %1575 = vst [vmem:[%s1571 + $0x4] sm:%s1561] %v1574
                  %v1576 = vld [vmem:[%s1570 + $0x8] sm:%s1561]
                  %1577 = vst [vmem:[%s1571 + $0x8] sm:%s1561] %v1576
                  %v1578 = vld [vmem:[%s1570 + $0xc] sm:%s1561]
                  %1579 = vst [vmem:[%s1571 + $0xc] sm:%s1561] %v1578
                  %v1580 = vld [vmem:[%s1570 + $0x10] sm:%s1561]
                  %1581 = vst [vmem:[%s1571 + $0x10] sm:%s1561] %v1580
                  %v1582 = vld [vmem:[%s1570 + $0x14] sm:%s1561]
                  %1583 = vst [vmem:[%s1571 + $0x14] sm:%s1561] %v1582
                  %v1584 = vld [vmem:[%s1570 + $0x18] sm:%s1561]
                  %1585 = vst [vmem:[%s1571 + $0x18] sm:%s1561] %v1584
                  %v1586 = vld [vmem:[%s1570 + $0x1c] sm:%s1561]
                  %1587 = vst [vmem:[%s1571 + $0x1c] sm:%s1561] %v1586
                  %v1588 = vld [vmem:[%s1570 + $0x20] sm:%s1561]
                  %1589 = vst [vmem:[%s1571 + $0x20] sm:%s1561] %v1588
                  %v1590 = vld [vmem:[%s1570 + $0x24] sm:%s1561]
                  %1591 = vst [vmem:[%s1571 + $0x24] sm:%s1561] %v1590
                  %v1592 = vld [vmem:[%s1570 + $0x28] sm:%s1561]
                  %1593 = vst [vmem:[%s1571 + $0x28] sm:%s1561] %v1592
                  %v1594 = vld [vmem:[%s1570 + $0x2c] sm:%s1561]
                  %1595 = vst [vmem:[%s1571 + $0x2c] sm:%s1561] %v1594
                  %v1596 = vld [vmem:[%s1570 + $0x30] sm:%s1561]
                  %1597 = vst [vmem:[%s1571 + $0x30] sm:%s1561] %v1596
                  %v1598 = vld [vmem:[%s1570 + $0x34] sm:%s1561]
                  %1599 = vst [vmem:[%s1571 + $0x34] sm:%s1561] %v1598
                  %v1600 = vld [vmem:[%s1570 + $0x38] sm:%s1561]
                  %1601 = vst [vmem:[%s1571 + $0x38] sm:%s1561] %v1600
                  %v1602 = vld [vmem:[%s1570 + $0x3c] sm:%s1561]
                  %1603 = vst [vmem:[%s1571 + $0x3c] sm:%s1561] %v1602
                  %v1604 = vld [vmem:[%s1570 + $0x40] sm:%s1561]
                  %1605 = vst [vmem:[%s1571 + $0x40] sm:%s1561] %v1604
                  %v1606 = vld [vmem:[%s1570 + $0x44] sm:%s1561]
                  %1607 = vst [vmem:[%s1571 + $0x44] sm:%s1561] %v1606
                  %v1608 = vld [vmem:[%s1570 + $0x48] sm:%s1561]
                  %1609 = vst [vmem:[%s1571 + $0x48] sm:%s1561] %v1608
                  %v1610 = vld [vmem:[%s1570 + $0x4c] sm:%s1561]
                  %1611 = vst [vmem:[%s1571 + $0x4c] sm:%s1561] %v1610
                  %v1612 = vld [vmem:[%s1570 + $0x50] sm:%s1561]
                  %1613 = vst [vmem:[%s1571 + $0x50] sm:%s1561] %v1612
                  %v1614 = vld [vmem:[%s1570 + $0x54] sm:%s1561]
                  %1615 = vst [vmem:[%s1571 + $0x54] sm:%s1561] %v1614
                  %v1616 = vld [vmem:[%s1570 + $0x58] sm:%s1561]
                  %1617 = vst [vmem:[%s1571 + $0x58] sm:%s1561] %v1616
                  %v1618 = vld [vmem:[%s1570 + $0x5c] sm:%s1561]
                  %1619 = vst [vmem:[%s1571 + $0x5c] sm:%s1561] %v1618
                  %v1620 = vld [vmem:[%s1570 + $0x60] sm:%s1561]
                  %1621 = vst [vmem:[%s1571 + $0x60] sm:%s1561] %v1620
                  %v1622 = vld [vmem:[%s1570 + $0x64] sm:%s1561]
                  %1623 = vst [vmem:[%s1571 + $0x64] sm:%s1561] %v1622
                  %v1624 = vld [vmem:[%s1570 + $0x68] sm:%s1561]
                  %1625 = vst [vmem:[%s1571 + $0x68] sm:%s1561] %v1624
                  %v1626 = vld [vmem:[%s1570 + $0x6c] sm:%s1561]
                  %1627 = vst [vmem:[%s1571 + $0x6c] sm:%s1561] %v1626
                  %v1628 = vld [vmem:[%s1570 + $0x70] sm:%s1561]
                  %1629 = vst [vmem:[%s1571 + $0x70] sm:%s1561] %v1628
                  %v1630 = vld [vmem:[%s1570 + $0x74] sm:%s1561]
                  %1631 = vst [vmem:[%s1571 + $0x74] sm:%s1561] %v1630
                  %v1632 = vld [vmem:[%s1570 + $0x78] sm:%s1561]
                  %1633 = vst [vmem:[%s1571 + $0x78] sm:%s1561] %v1632
                  %v1634 = vld [vmem:[%s1570 + $0x7c] sm:%s1561]
                  %1635 = vst [vmem:[%s1571 + $0x7c] sm:%s1561] %v1634
                  %s1636 = sadd.s32 1, %s1569
                  %p1637 = scmp.ge.s32.totalorder %s1636, %s1562
                  %s1638 = scalar_select %p1637, 0, %s1636
                  %s1639 = smul.u32 %s1638, 128
                  %s1640 = smul.u32 %s1638, 128
                  %s1641 = scalar_lea.vmem %s1431, %s1639 [#allocation4]
                  %s1642 = scalar_lea.vmem %s1442, %s1640
                $region79: #{net_forward.11} parent=73 // loop_footer
                  %s1566 = sadd.s32 %s1564, 1
                $region80: #{net_forward.11} parent=73 // loop_footer_branch
                  %1563 = sbr.rel target = $region76
                $region81: #{net_forward.11} parent=73 // loop_exit
                  _
                %s1643 = sshrl.u32 %s1438, 5
                %s1644 = sand.u32 %s1438, 31
                %s1645 = smul.u32 %s1643, 32
                %s1646 = smul.u32 4, %s1645
                %s1647 = scalar_lea.vmem %s1431, %s1646 [#allocation4]
                %s1648 = smul.u32 4, %s1645
                %s1649 = scalar_lea.vmem %s1442, %s1648
                // While loop
                $region82: #{net_forward.11} parent=73 // loop_pre_header
                  _
                $region83: #{net_forward.11} parent=73 // loop_header
                  %s1651 = sphi 0, %s1653
                  %p1652 = scmp.ge.s32.totalorder %s1651, %s1644
                  %s1656 = sphi 0, %s1663
                  %s1657 = sphi %s1647, %s1666
                  %s1658 = sphi %s1649, %s1667
                $region84: #{net_forward.11} parent=73 // loop_header_branch
                  %1655 = sbr.rel (%p1652) target = $region88
                $region85: #{net_forward.11} parent=73 // loop_body
                  %v1659 = vld [vmem:[%s1657] sm:%s1561]
                  %1660 = vst [vmem:[%s1658] sm:%s1561] %v1659
                  %s1661 = sadd.s32 1, %s1656
                  %p1662 = scmp.ge.s32.totalorder %s1661, %s1644
                  %s1663 = scalar_select %p1662, 0, %s1661
                  %s1664 = smul.u32 %s1663, 4
                  %s1665 = smul.u32 %s1663, 4
                  %s1666 = scalar_lea.vmem %s1647, %s1664 [#allocation4]
                  %s1667 = scalar_lea.vmem %s1649, %s1665
                $region86: #{net_forward.11} parent=73 // loop_footer
                  %s1653 = sadd.s32 %s1651, 1
                $region87: #{net_forward.11} parent=73 // loop_footer_branch
                  %1650 = sbr.rel target = $region83
                $region88: #{net_forward.11} parent=73 // loop_exit
                  _
              $region74: #{net_forward.11} parent=51 // pred_fallthru
                _
            $region52: #{net_forward.11} parent=47 // pred_fallthru
              _
            // Predicated region
            $region53: #{net_forward.11} parent=47 // pred_check
              _
            $region54: #{net_forward.11} parent=47 // pred_check_branch
              %1449 = sbr.rel (0) target = $region56
            $region55: #{net_forward.11} parent=47 // pred_region
              %s1451 = ssub.s32 16, 1
              %s1452 = sshrl.u32 %s1438, 5
              // While loop
              $region57: #{net_forward.11} parent=55 // loop_pre_header
                _
              $region58: #{net_forward.11} parent=55 // loop_header
                %s1454 = sphi 0, %s1456
                %p1455 = scmp.ge.s32.totalorder %s1454, %s1452
                %s1459 = sphi 0, %s1528
                %s1460 = sphi %s1431, %s1531
                %s1461 = sphi %s1442, %s1532
              $region59: #{net_forward.11} parent=55 // loop_header_branch
                %1458 = sbr.rel (%p1455) target = $region63
              $region60: #{net_forward.11} parent=55 // loop_body
                %v1462 = vld [vmem:[%s1460] sm:%s1451]
                %1463 = vst [vmem:[%s1461] sm:%s1451] %v1462
                %v1464 = vld [vmem:[%s1460 + $0x4] sm:%s1451]
                %1465 = vst [vmem:[%s1461 + $0x4] sm:%s1451] %v1464
                %v1466 = vld [vmem:[%s1460 + $0x8] sm:%s1451]
                %1467 = vst [vmem:[%s1461 + $0x8] sm:%s1451] %v1466
                %v1468 = vld [vmem:[%s1460 + $0xc] sm:%s1451]
                %1469 = vst [vmem:[%s1461 + $0xc] sm:%s1451] %v1468
                %v1470 = vld [vmem:[%s1460 + $0x10] sm:%s1451]
                %1471 = vst [vmem:[%s1461 + $0x10] sm:%s1451] %v1470
                %v1472 = vld [vmem:[%s1460 + $0x14] sm:%s1451]
                %1473 = vst [vmem:[%s1461 + $0x14] sm:%s1451] %v1472
                %v1474 = vld [vmem:[%s1460 + $0x18] sm:%s1451]
                %1475 = vst [vmem:[%s1461 + $0x18] sm:%s1451] %v1474
                %v1476 = vld [vmem:[%s1460 + $0x1c] sm:%s1451]
                %1477 = vst [vmem:[%s1461 + $0x1c] sm:%s1451] %v1476
                %v1478 = vld [vmem:[%s1460 + $0x20] sm:%s1451]
                %1479 = vst [vmem:[%s1461 + $0x20] sm:%s1451] %v1478
                %v1480 = vld [vmem:[%s1460 + $0x24] sm:%s1451]
                %1481 = vst [vmem:[%s1461 + $0x24] sm:%s1451] %v1480
                %v1482 = vld [vmem:[%s1460 + $0x28] sm:%s1451]
                %1483 = vst [vmem:[%s1461 + $0x28] sm:%s1451] %v1482
                %v1484 = vld [vmem:[%s1460 + $0x2c] sm:%s1451]
                %1485 = vst [vmem:[%s1461 + $0x2c] sm:%s1451] %v1484
                %v1486 = vld [vmem:[%s1460 + $0x30] sm:%s1451]
                %1487 = vst [vmem:[%s1461 + $0x30] sm:%s1451] %v1486
                %v1488 = vld [vmem:[%s1460 + $0x34] sm:%s1451]
                %1489 = vst [vmem:[%s1461 + $0x34] sm:%s1451] %v1488
                %v1490 = vld [vmem:[%s1460 + $0x38] sm:%s1451]
                %1491 = vst [vmem:[%s1461 + $0x38] sm:%s1451] %v1490
                %v1492 = vld [vmem:[%s1460 + $0x3c] sm:%s1451]
                %1493 = vst [vmem:[%s1461 + $0x3c] sm:%s1451] %v1492
                %v1494 = vld [vmem:[%s1460 + $0x40] sm:%s1451]
                %1495 = vst [vmem:[%s1461 + $0x40] sm:%s1451] %v1494
                %v1496 = vld [vmem:[%s1460 + $0x44] sm:%s1451]
                %1497 = vst [vmem:[%s1461 + $0x44] sm:%s1451] %v1496
                %v1498 = vld [vmem:[%s1460 + $0x48] sm:%s1451]
                %1499 = vst [vmem:[%s1461 + $0x48] sm:%s1451] %v1498
                %v1500 = vld [vmem:[%s1460 + $0x4c] sm:%s1451]
                %1501 = vst [vmem:[%s1461 + $0x4c] sm:%s1451] %v1500
                %v1502 = vld [vmem:[%s1460 + $0x50] sm:%s1451]
                %1503 = vst [vmem:[%s1461 + $0x50] sm:%s1451] %v1502
                %v1504 = vld [vmem:[%s1460 + $0x54] sm:%s1451]
                %1505 = vst [vmem:[%s1461 + $0x54] sm:%s1451] %v1504
                %v1506 = vld [vmem:[%s1460 + $0x58] sm:%s1451]
                %1507 = vst [vmem:[%s1461 + $0x58] sm:%s1451] %v1506
                %v1508 = vld [vmem:[%s1460 + $0x5c] sm:%s1451]
                %1509 = vst [vmem:[%s1461 + $0x5c] sm:%s1451] %v1508
                %v1510 = vld [vmem:[%s1460 + $0x60] sm:%s1451]
                %1511 = vst [vmem:[%s1461 + $0x60] sm:%s1451] %v1510
                %v1512 = vld [vmem:[%s1460 + $0x64] sm:%s1451]
                %1513 = vst [vmem:[%s1461 + $0x64] sm:%s1451] %v1512
                %v1514 = vld [vmem:[%s1460 + $0x68] sm:%s1451]
                %1515 = vst [vmem:[%s1461 + $0x68] sm:%s1451] %v1514
                %v1516 = vld [vmem:[%s1460 + $0x6c] sm:%s1451]
                %1517 = vst [vmem:[%s1461 + $0x6c] sm:%s1451] %v1516
                %v1518 = vld [vmem:[%s1460 + $0x70] sm:%s1451]
                %1519 = vst [vmem:[%s1461 + $0x70] sm:%s1451] %v1518
                %v1520 = vld [vmem:[%s1460 + $0x74] sm:%s1451]
                %1521 = vst [vmem:[%s1461 + $0x74] sm:%s1451] %v1520
                %v1522 = vld [vmem:[%s1460 + $0x78] sm:%s1451]
                %1523 = vst [vmem:[%s1461 + $0x78] sm:%s1451] %v1522
                %v1524 = vld [vmem:[%s1460 + $0x7c] sm:%s1451]
                %1525 = vst [vmem:[%s1461 + $0x7c] sm:%s1451] %v1524
                %s1526 = sadd.s32 1, %s1459
                %p1527 = scmp.ge.s32.totalorder %s1526, %s1452
                %s1528 = scalar_select %p1527, 0, %s1526
                %s1529 = smul.u32 %s1528, 128
                %s1530 = smul.u32 %s1528, 128
                %s1531 = scalar_lea.vmem %s1431, %s1529 [#allocation4]
                %s1532 = scalar_lea.vmem %s1442, %s1530
              $region61: #{net_forward.11} parent=55 // loop_footer
                %s1456 = sadd.s32 %s1454, 1
              $region62: #{net_forward.11} parent=55 // loop_footer_branch
                %1453 = sbr.rel target = $region58
              $region63: #{net_forward.11} parent=55 // loop_exit
                _
              %s1533 = sshrl.u32 %s1438, 5
              %s1534 = sand.u32 %s1438, 31
              %s1535 = smul.u32 %s1533, 32
              %s1536 = smul.u32 4, %s1535
              %s1537 = scalar_lea.vmem %s1431, %s1536 [#allocation4]
              %s1538 = smul.u32 4, %s1535
              %s1539 = scalar_lea.vmem %s1442, %s1538
              // While loop
              $region64: #{net_forward.11} parent=55 // loop_pre_header
                _
              $region65: #{net_forward.11} parent=55 // loop_header
                %s1541 = sphi 0, %s1543
                %p1542 = scmp.ge.s32.totalorder %s1541, %s1534
                %s1546 = sphi 0, %s1553
                %s1547 = sphi %s1537, %s1556
                %s1548 = sphi %s1539, %s1557
              $region66: #{net_forward.11} parent=55 // loop_header_branch
                %1545 = sbr.rel (%p1542) target = $region70
              $region67: #{net_forward.11} parent=55 // loop_body
                %v1549 = vld [vmem:[%s1547] sm:%s1451]
                %1550 = vst [vmem:[%s1548] sm:%s1451] %v1549
                %s1551 = sadd.s32 1, %s1546
                %p1552 = scmp.ge.s32.totalorder %s1551, %s1534
                %s1553 = scalar_select %p1552, 0, %s1551
                %s1554 = smul.u32 %s1553, 4
                %s1555 = smul.u32 %s1553, 4
                %s1556 = scalar_lea.vmem %s1537, %s1554 [#allocation4]
                %s1557 = scalar_lea.vmem %s1539, %s1555
              $region68: #{net_forward.11} parent=55 // loop_footer
                %s1543 = sadd.s32 %s1541, 1
              $region69: #{net_forward.11} parent=55 // loop_footer_branch
                %1540 = sbr.rel target = $region65
              $region70: #{net_forward.11} parent=55 // loop_exit
                _
            $region56: #{net_forward.11} parent=47 // pred_fallthru
              _
          $region48: #{net_forward.11} parent=43 // pred_fallthru
            _
          %1668 = vnop
        $region44: #{net_forward.11} parent=35 // pred_fallthru
          _
      $region36: #{net_forward.11} parent=5 // pred_fallthru
        _
      %p1669 = scmp.le.s32.totalorder 2, %s11
      // Predicated region
      $region89: #{net_forward.11} parent=5 // pred_check
        %p1670 = pneg %p1669
      $region90: #{net_forward.11} parent=5 // pred_check_branch
        %1672 = sbr.rel (%p1670) target = $region92
      $region91: #{net_forward.11} parent=5 // pred_region
        %s1673 = ssub.s32 %s11, 2
        // Predicated region
        $region93: #{net_forward.11} parent=91 // pred_check
          %p1674 = pneg %p129
        $region94: #{net_forward.11} parent=91 // pred_check_branch
          %1676 = sbr.rel (%p1674) target = $region96
        $region95: #{net_forward.11} parent=91 // pred_region
          %s1677 = sand.u32 %s114, 1
          %s1678 = sand.u32 %s114, 1
          %s1679 = smul.addr %s1678, 256
          %s1680 = scalar_lea.vmem [#allocation4], %s1679
        $region96: #{net_forward.11} parent=91 // pred_fallthru
          _
      $region92: #{net_forward.11} parent=5 // pred_fallthru
        _
    $region6: #{net_forward.11} parent=1 // loop_footer
      %s15 = sadd.s32 1, %s11
    $region7: #{net_forward.11} parent=1 // loop_footer_branch
      %10 = sbr.rel target = $region3
    $region8: #{net_forward.11} parent=1 // loop_exit
      _
    %1681 = vsyncpa [#allocation3], 1
    %s1682 = scalar_lea.sflag [#allocation3], 1
    %1683 = vsyncpa %s1682, 1

// kernel: net_forward.12
$region0: #{net_forward.12}
  #allocation0 [shape = 'u32[]', space=smem, size = 0x4, offset = 0x4, fixed_abs, tag = 'smem constant byte address 0x4 - core index']
  #allocation1 [shape = 'u32[72,128]{1,0:T(1,128)}', space=vmem, size = 0x9000, scoped, tag = 'internal scratch']
  %s0 = inlined_call_operand.vmem [shape: bf16[200,144], index: 0, kind: input, shape index: {}]
  %s1 = inlined_call_operand.vmem [shape: bf16[144,24], index: 1, kind: input, shape index: {}]
  %s2 = inlined_call_operand.vmem [shape: f32[1,24], index: 2, kind: input, shape index: {}]
  %s3 = inlined_call_operand.vmem [shape: f32[2], index: 3, kind: input, shape index: {}]
  %s4 = inlined_call_operand.vmem [shape: bf16[200,24], index: 4, kind: output, shape index: {}]
  %s5 = sld [smem:[#allocation0]]
  $region30: #{net_forward.12} parent=0
    _
  %s7 = ssub.s32 1, %s5
  %s8 = scalar_select 0, %s7, %s5
  $region1: #{net_forward.12} parent=0
    #allocation2 [shape = 'u8[512]{0}', space=smem, size = 0x200, scoped, tag = 'input window, operand 3, single buffered']
    #allocation3 [shape = 's32[1]{0}', space=sflag, size = 0x4, scoped, tag = 'scoped memory for net_forward.12']
    %9 = vsyncpa [#allocation3], 0
    // Predicated region
    $region2: #{net_forward.12} parent=1 // pred_check
      _
    $region3: #{net_forward.12} parent=1 // pred_check_branch
      %11 = sbr.rel (0) target = $region5
    $region4: #{net_forward.12} parent=1 // pred_region
      _
    $region5: #{net_forward.12} parent=1 // pred_fallthru
      _
    // Predicated region
    $region6: #{net_forward.12} parent=1 // pred_check
      _
    $region7: #{net_forward.12} parent=1 // pred_check_branch
      %13 = sbr.rel (0) target = $region9
    $region8: #{net_forward.12} parent=1 // pred_region
      _
    $region9: #{net_forward.12} parent=1 // pred_fallthru
      _
    // Predicated region
    $region10: #{net_forward.12} parent=1 // pred_check
      _
    $region11: #{net_forward.12} parent=1 // pred_check_branch
      %15 = sbr.rel (0) target = $region13
    $region12: #{net_forward.12} parent=1 // pred_region
      _
    $region13: #{net_forward.12} parent=1 // pred_fallthru
      _
    // Predicated region
    $region14: #{net_forward.12} parent=1 // pred_check
      _
    $region15: #{net_forward.12} parent=1 // pred_check_branch
      %17 = sbr.rel (0) target = $region17
    $region16: #{net_forward.12} parent=1 // pred_region
      %19 = vsyncadd [#allocation3], 0
      %s21 = sshll.u32 %s3, 4
      %s22 = int_to_ptr.vmem [resolvable:$true] %s21
      %24 = dma.vmem_to_smem %s22, 16, [#allocation2], [#allocation3]
    $region17: #{net_forward.12} parent=1 // pred_fallthru
      _
    // Predicated region
    $region18: #{net_forward.12} parent=1 // pred_check
      _
    $region19: #{net_forward.12} parent=1 // pred_check_branch
      %26 = sbr.rel (0) target = $region21
    $region20: #{net_forward.12} parent=1 // pred_region
      %28 = dma.done [#allocation3], 16
    $region21: #{net_forward.12} parent=1 // pred_fallthru
      _
    %29 = sfence
    %v31 = vld [vmem:[%s0] sm:$0xff]
    %v32 = vld [vmem:[%s0 + $0x8] sm:$0xff]
    %v33 = vld [vmem:[%s0 + $0x10] sm:$0xff]
    %v34 = vld [vmem:[%s0 + $0x18] sm:$0xff]
    %v35 = vld [vmem:[%s0 + $0x20] sm:$0xff]
    %v36 = vld [vmem:[%s0 + $0x28] sm:$0xff]
    %v37 = vld [vmem:[%s0 + $0x30] sm:$0xff]
    %v38 = vld [vmem:[%s0 + $0x38] sm:$0xff]
    %v39 = vld [vmem:[%s0 + $0x40] sm:$0xff]
    %v40 = vld [vmem:[%s0 + $0x48] sm:$0xff]
    %v41 = vld [vmem:[%s0 + $0x50] sm:$0xff]
    %v42 = vld [vmem:[%s0 + $0x58] sm:$0xff]
    %v43 = vld [vmem:[%s0 + $0x60] sm:$0xff]
    %v44 = vld [vmem:[%s0 + $0x68] sm:$0xff]
    %v45 = vld [vmem:[%s0 + $0x70] sm:$0xff]
    %v46 = vld [vmem:[%s0 + $0x78] sm:$0xff]
    %v47 = vld [vmem:[%s0 + $0x80] sm:$0xff]
    %v48 = vld [vmem:[%s0 + $0x88] sm:$0xff]
    %v49 = vld [vmem:[%s0 + $0x90] sm:$0xff]
    %v50 = vld [vmem:[%s0 + $0x98] sm:$0xff]
    %v51 = vld [vmem:[%s0 + $0xa0] sm:$0xff]
    %v52 = vld [vmem:[%s0 + $0xa8] sm:$0xff]
    %v53 = vld [vmem:[%s0 + $0xb0] sm:$0xff]
    %v54 = vld [vmem:[%s0 + $0xb8] sm:$0xff]
    %v55 = vld [vmem:[%s0 + $0xc0] sm:$0xff]
    %v56 = vld [vmem:[%s1] sm:$0xf]
    %v57 = vld [vmem:[%s1 + $0x4] sm:$0xf]
    %v58 = vld [vmem:[%s1 + $0x8] sm:$0xf]
    %v59 = vld [vmem:[%s1 + $0xc] sm:$0xf]
    %v60 = vld [vmem:[%s1 + $0x10] sm:$0xf]
    %v61 = vld [vmem:[%s1 + $0x14] sm:$0xf]
    %v62 = vld [vmem:[%s1 + $0x18] sm:$0xf]
    %v63 = vld [vmem:[%s1 + $0x1c] sm:$0xf]
    %v64 = vld [vmem:[%s1 + $0x20] sm:$0xf]
    %v65 = vld [vmem:[%s1 + $0x24] sm:$0xf]
    %v66 = vld [vmem:[%s1 + $0x28] sm:$0xf]
    %v67 = vld [vmem:[%s1 + $0x2c] sm:$0xf]
    %v68 = vld [vmem:[%s1 + $0x30] sm:$0xf]
    %v69 = vld [vmem:[%s1 + $0x34] sm:$0xf]
    %v70 = vld [vmem:[%s1 + $0x38] sm:$0xf]
    %v71 = vld [vmem:[%s1 + $0x3c] sm:$0xf]
    %v72 = vld [vmem:[%s1 + $0x40] sm:$0xf]
    %v73 = vld [vmem:[%s1 + $0x44] sm:$0xf]
    %v74 = vld [vmem:[%s2] sm:$0x1]
    %v76 = vperm.slane %v74, 0
    %v103 = vunpack.c.l.b16 %v31
    %v104 = vunpack.c.h.b16 %v31
    %v105 = vunpack.c.l.b16 %v32
    %v106 = vunpack.c.h.b16 %v32
    %v107 = vunpack.c.l.b16 %v33
    %v108 = vunpack.c.h.b16 %v33
    %v109 = vunpack.c.l.b16 %v34
    %v110 = vunpack.c.h.b16 %v34
    %v111 = vunpack.c.l.b16 %v35
    %v112 = vunpack.c.h.b16 %v35
    %v113 = vunpack.c.l.b16 %v36
    %v114 = vunpack.c.h.b16 %v36
    %v115 = vunpack.c.l.b16 %v37
    %v116 = vunpack.c.h.b16 %v37
    %v117 = vunpack.c.l.b16 %v38
    %v118 = vunpack.c.h.b16 %v38
    %v119 = vunpack.c.l.b16 %v39
    %v120 = vunpack.c.h.b16 %v39
    %v121 = vunpack.c.l.b16 %v40
    %v122 = vunpack.c.h.b16 %v40
    %v123 = vunpack.c.l.b16 %v41
    %v124 = vunpack.c.h.b16 %v41
    %v125 = vunpack.c.l.b16 %v42
    %v126 = vunpack.c.h.b16 %v42
    %v127 = vunpack.c.l.b16 %v43
    %v128 = vunpack.c.h.b16 %v43
    %v129 = vunpack.c.l.b16 %v44
    %v130 = vunpack.c.h.b16 %v44
    %v131 = vunpack.c.l.b16 %v45
    %v132 = vunpack.c.h.b16 %v45
    %v133 = vunpack.c.l.b16 %v46
    %v134 = vunpack.c.h.b16 %v46
    %v135 = vunpack.c.l.b16 %v47
    %v136 = vunpack.c.h.b16 %v47
    %v137 = vunpack.c.l.b16 %v48
    %v138 = vunpack.c.h.b16 %v48
    %v139 = vunpack.c.l.b16 %v49
    %v140 = vunpack.c.h.b16 %v49
    %v141 = vunpack.c.l.b16 %v50
    %v142 = vunpack.c.h.b16 %v50
    %v143 = vunpack.c.l.b16 %v51
    %v144 = vunpack.c.h.b16 %v51
    %v145 = vunpack.c.l.b16 %v52
    %v146 = vunpack.c.h.b16 %v52
    %v147 = vunpack.c.l.b16 %v53
    %v148 = vunpack.c.h.b16 %v53
    %v149 = vunpack.c.l.b16 %v54
    %v150 = vunpack.c.h.b16 %v54
    %v151 = vunpack.c.l.b16 %v55
    %v152 = vunpack.c.h.b16 %v55
    %v153 = vpack.c.b16 %v105, %v103
    %v154 = vpack.c.b16 %v106, %v104
    %v155 = vpack.c.b16 %v109, %v107
    %v156 = vpack.c.b16 %v110, %v108
    %v157 = vpack.c.b16 %v113, %v111
    %v158 = vpack.c.b16 %v114, %v112
    %v159 = vpack.c.b16 %v117, %v115
    %v160 = vpack.c.b16 %v118, %v116
    %v161 = vpack.c.b16 %v121, %v119
    %v162 = vpack.c.b16 %v122, %v120
    %v163 = vpack.c.b16 %v125, %v123
    %v164 = vpack.c.b16 %v126, %v124
    %v165 = vpack.c.b16 %v129, %v127
    %v166 = vpack.c.b16 %v130, %v128
    %v167 = vpack.c.b16 %v133, %v131
    %v168 = vpack.c.b16 %v134, %v132
    %v169 = vpack.c.b16 %v137, %v135
    %v170 = vpack.c.b16 %v138, %v136
    %v171 = vpack.c.b16 %v141, %v139
    %v172 = vpack.c.b16 %v142, %v140
    %v173 = vpack.c.b16 %v145, %v143
    %v174 = vpack.c.b16 %v146, %v144
    %v175 = vpack.c.b16 %v149, %v147
    %v176 = vpack.c.b16 %v150, %v148
    %v177 = vpack.c.b16 %v151, %v151
    %v178 = vpack.c.b16 %v152, %v152
    %v210 = vunpack.c.l.b16 %v56
    %v211 = vunpack.c.l.b16 %v57
    %v212 = vunpack.c.l.b16 %v58
    %v213 = vunpack.c.l.b16 %v59
    %v214 = vunpack.c.l.b16 %v60
    %v215 = vunpack.c.l.b16 %v61
    %v216 = vunpack.c.l.b16 %v62
    %v217 = vunpack.c.l.b16 %v63
    %v218 = vunpack.c.l.b16 %v64
    %v219 = vunpack.c.l.b16 %v65
    %v220 = vunpack.c.l.b16 %v66
    %v221 = vunpack.c.l.b16 %v67
    %v222 = vunpack.c.l.b16 %v68
    %v223 = vunpack.c.l.b16 %v69
    %v224 = vunpack.c.l.b16 %v70
    %v225 = vunpack.c.l.b16 %v71
    %v226 = vunpack.c.l.b16 %v72
    %v227 = vunpack.c.l.b16 %v73
    %v228 = vpack.c.b16 %v211, %v210
    %v229 = vpack.c.b16 %v213, %v212
    %v230 = vpack.c.b16 %v215, %v214
    %v231 = vpack.c.b16 %v217, %v216
    %v232 = vpack.c.b16 %v219, %v218
    %v233 = vpack.c.b16 %v221, %v220
    %v234 = vpack.c.b16 %v223, %v222
    %v235 = vpack.c.b16 %v225, %v224
    %v236 = vpack.c.b16 %v227, %v226
    %vm246 = vcmask 130048
    %v248 = vsel %vm246, %v154, 0
    %v251 = vsel %vm246, %v156, 0
    %v254 = vsel %vm246, %v158, 0
    %v257 = vsel %vm246, %v160, 0
    %v260 = vsel %vm246, %v162, 0
    %v263 = vsel %vm246, %v164, 0
    %v266 = vsel %vm246, %v166, 0
    %v269 = vsel %vm246, %v168, 0
    %v272 = vsel %vm246, %v170, 0
    %v275 = vsel %vm246, %v172, 0
    %v278 = vsel %vm246, %v174, 0
    %v281 = vsel %vm246, %v176, 0
    %v284 = vsel %vm246, %v178, 0
    %286 = vmatpush.bf16.msra.mxu0 %v235
    %287 = vmatpush.bf16.msra.mxu0 %v234
    %288 = vmatpush.bf16.msra.mxu0 %v233
    %289 = vmatpush.bf16.msra.mxu0 %v232
    %290 = vmatpush.bf16.msra.mxu0 %v231
    %291 = vmatpush.bf16.msra.mxu0 %v230
    %292 = vmatpush.bf16.msra.mxu0 %v229
    %293 = vmatpush.bf16.msra.mxu0 %v228
    %294 = vmatmul.bf16.gmra.mxu0 %v153
    %v295 = vpop.f32.mrf.mxu0
    %v296 = vadd.f32 %v76, %v295
    %v297 = vpop.f32.mrf.mxu0
    %v298 = vadd.f32 %v76, %v297
    %299 = vmatmul.bf16.gmra.mxu0 %v155
    %v300 = vpop.f32.mrf.mxu0
    %v301 = vadd.f32 %v76, %v300
    %v302 = vpop.f32.mrf.mxu0
    %v303 = vadd.f32 %v76, %v302
    %304 = vmatmul.bf16.gmra.mxu0 %v157
    %v305 = vpop.f32.mrf.mxu0
    %v306 = vadd.f32 %v76, %v305
    %v307 = vpop.f32.mrf.mxu0
    %v308 = vadd.f32 %v76, %v307
    %309 = vmatmul.bf16.gmra.mxu0 %v159
    %v310 = vpop.f32.mrf.mxu0
    %v311 = vadd.f32 %v76, %v310
    %v312 = vpop.f32.mrf.mxu0
    %v313 = vadd.f32 %v76, %v312
    %314 = vmatmul.bf16.gmra.mxu0 %v161
    %v315 = vpop.f32.mrf.mxu0
    %v316 = vadd.f32 %v76, %v315
    %v317 = vpop.f32.mrf.mxu0
    %v318 = vadd.f32 %v76, %v317
    %319 = vmatmul.bf16.gmra.mxu0 %v163
    %v320 = vpop.f32.mrf.mxu0
    %v321 = vadd.f32 %v76, %v320
    %v322 = vpop.f32.mrf.mxu0
    %v323 = vadd.f32 %v76, %v322
    %324 = vmatmul.bf16.gmra.mxu0 %v165
    %v325 = vpop.f32.mrf.mxu0
    %v326 = vadd.f32 %v76, %v325
    %v327 = vpop.f32.mrf.mxu0
    %v328 = vadd.f32 %v76, %v327
    %329 = vmatmul.bf16.gmra.mxu0 %v167
    %v330 = vpop.f32.mrf.mxu0
    %v331 = vadd.f32 %v76, %v330
    %v332 = vpop.f32.mrf.mxu0
    %v333 = vadd.f32 %v76, %v332
    %334 = vmatmul.bf16.gmra.mxu0 %v169
    %v335 = vpop.f32.mrf.mxu0
    %v336 = vadd.f32 %v76, %v335
    %v337 = vpop.f32.mrf.mxu0
    %v338 = vadd.f32 %v76, %v337
    %339 = vmatmul.bf16.gmra.mxu0 %v171
    %v340 = vpop.f32.mrf.mxu0
    %v341 = vadd.f32 %v76, %v340
    %v342 = vpop.f32.mrf.mxu0
    %v343 = vadd.f32 %v76, %v342
    %344 = vmatmul.bf16.gmra.mxu0 %v173
    %v345 = vpop.f32.mrf.mxu0
    %v346 = vadd.f32 %v76, %v345
    %v347 = vpop.f32.mrf.mxu0
    %v348 = vadd.f32 %v76, %v347
    %349 = vmatmul.bf16.gmra.mxu0 %v175
    %v350 = vpop.f32.mrf.mxu0
    %v351 = vadd.f32 %v76, %v350
    %v352 = vpop.f32.mrf.mxu0
    %v353 = vadd.f32 %v76, %v352
    %354 = vmatmul.bf16.gmra.mxu0 %v177
    %v355 = vpop.f32.mrf.mxu0
    %v356 = vadd.f32 %v76, %v355
    %v357 = vpop.f32.mrf.mxu0
    %358 = vdwg.mxu0
    %359 = vmatpush.bf16.msra.mxu0 0
    %360 = vmatpush.bf16.msra.mxu0 0
    %361 = vmatpush.bf16.msra.mxu0 0
    %362 = vmatpush.bf16.msra.mxu0 0
    %363 = vmatpush.bf16.msra.mxu0 0
    %364 = vmatpush.bf16.msra.mxu0 0
    %365 = vmatpush.bf16.msra.mxu0 0
    %366 = vmatpush.bf16.msra.mxu0 %v236
    %367 = vmatmul.bf16.gmra.mxu0 %v248
    %v368 = vpop.f32.mrf.mxu0
    %v369 = vadd.f32 %v296, %v368
    %v370 = vpop.f32.mrf.mxu0
    %v371 = vadd.f32 %v298, %v370
    %372 = vmatmul.bf16.gmra.mxu0 %v251
    %v373 = vpop.f32.mrf.mxu0
    %v374 = vadd.f32 %v301, %v373
    %v375 = vpop.f32.mrf.mxu0
    %v376 = vadd.f32 %v303, %v375
    %377 = vmatmul.bf16.gmra.mxu0 %v254
    %v378 = vpop.f32.mrf.mxu0
    %v379 = vadd.f32 %v306, %v378
    %v380 = vpop.f32.mrf.mxu0
    %v381 = vadd.f32 %v308, %v380
    %382 = vmatmul.bf16.gmra.mxu0 %v257
    %v383 = vpop.f32.mrf.mxu0
    %v384 = vadd.f32 %v311, %v383
    %v385 = vpop.f32.mrf.mxu0
    %v386 = vadd.f32 %v313, %v385
    %387 = vmatmul.bf16.gmra.mxu0 %v260
    %v388 = vpop.f32.mrf.mxu0
    %v389 = vadd.f32 %v316, %v388
    %v390 = vpop.f32.mrf.mxu0
    %v391 = vadd.f32 %v318, %v390
    %392 = vmatmul.bf16.gmra.mxu0 %v263
    %v393 = vpop.f32.mrf.mxu0
    %v394 = vadd.f32 %v321, %v393
    %v395 = vpop.f32.mrf.mxu0
    %v396 = vadd.f32 %v323, %v395
    %397 = vmatmul.bf16.gmra.mxu0 %v266
    %v398 = vpop.f32.mrf.mxu0
    %v399 = vadd.f32 %v326, %v398
    %v400 = vpop.f32.mrf.mxu0
    %v401 = vadd.f32 %v328, %v400
    %402 = vmatmul.bf16.gmra.mxu0 %v269
    %v403 = vpop.f32.mrf.mxu0
    %v404 = vadd.f32 %v331, %v403
    %v405 = vpop.f32.mrf.mxu0
    %v406 = vadd.f32 %v333, %v405
    %407 = vmatmul.bf16.gmra.mxu0 %v272
    %v408 = vpop.f32.mrf.mxu0
    %v409 = vadd.f32 %v336, %v408
    %v410 = vpop.f32.mrf.mxu0
    %v411 = vadd.f32 %v338, %v410
    %412 = vmatmul.bf16.gmra.mxu0 %v275
    %v413 = vpop.f32.mrf.mxu0
    %v414 = vadd.f32 %v341, %v413
    %v415 = vpop.f32.mrf.mxu0
    %v416 = vadd.f32 %v343, %v415
    %417 = vmatmul.bf16.gmra.mxu0 %v278
    %v418 = vpop.f32.mrf.mxu0
    %v419 = vadd.f32 %v346, %v418
    %v420 = vpop.f32.mrf.mxu0
    %v421 = vadd.f32 %v348, %v420
    %422 = vmatmul.bf16.gmra.mxu0 %v281
    %v423 = vpop.f32.mrf.mxu0
    %v424 = vadd.f32 %v351, %v423
    %v425 = vpop.f32.mrf.mxu0
    %v426 = vadd.f32 %v353, %v425
    %427 = vmatmul.bf16.gmra.mxu0 %v284
    %v428 = vpop.f32.mrf.mxu0
    %v429 = vadd.f32 %v356, %v428
    %v430 = vpop.f32.mrf.mxu0
    %431 = vdwg.mxu0
    %s432 = sld [smem:[#allocation2]]
    %vm433 = vcmp.ge.f32.partialorder %v369, 0.0
    %vm434 = vcmp.ge.f32.partialorder %v371, 0.0
    %vm435 = vcmp.ge.f32.partialorder %v374, 0.0
    %vm436 = vcmp.ge.f32.partialorder %v376, 0.0
    %vm437 = vcmp.ge.f32.partialorder %v379, 0.0
    %vm438 = vcmp.ge.f32.partialorder %v381, 0.0
    %vm439 = vcmp.ge.f32.partialorder %v384, 0.0
    %vm440 = vcmp.ge.f32.partialorder %v386, 0.0
    %vm441 = vcmp.ge.f32.partialorder %v389, 0.0
    %vm442 = vcmp.ge.f32.partialorder %v391, 0.0
    %vm443 = vcmp.ge.f32.partialorder %v394, 0.0
    %vm444 = vcmp.ge.f32.partialorder %v396, 0.0
    %vm445 = vcmp.ge.f32.partialorder %v399, 0.0
    %vm446 = vcmp.ge.f32.partialorder %v401, 0.0
    %vm447 = vcmp.ge.f32.partialorder %v404, 0.0
    %vm448 = vcmp.ge.f32.partialorder %v406, 0.0
    %vm449 = vcmp.ge.f32.partialorder %v409, 0.0
    %vm450 = vcmp.ge.f32.partialorder %v411, 0.0
    %vm451 = vcmp.ge.f32.partialorder %v414, 0.0
    %vm452 = vcmp.ge.f32.partialorder %v416, 0.0
    %vm453 = vcmp.ge.f32.partialorder %v419, 0.0
    %vm454 = vcmp.ge.f32.partialorder %v421, 0.0
    %vm455 = vcmp.ge.f32.partialorder %v424, 0.0
    %vm456 = vcmp.ge.f32.partialorder %v426, 0.0
    %vm457 = vcmp.ge.f32.partialorder %v429, 0.0
    %v458 = vstv %s432
    %v459 = vmul.f32 %v458, %v369
    %v460 = vmul.f32 %v458, %v371
    %v461 = vmul.f32 %v458, %v374
    %v462 = vmul.f32 %v458, %v376
    %v463 = vmul.f32 %v458, %v379
    %v464 = vmul.f32 %v458, %v381
    %v465 = vmul.f32 %v458, %v384
    %v466 = vmul.f32 %v458, %v386
    %v467 = vmul.f32 %v458, %v389
    %v468 = vmul.f32 %v458, %v391
    %v469 = vmul.f32 %v458, %v394
    %v470 = vmul.f32 %v458, %v396
    %v471 = vmul.f32 %v458, %v399
    %v472 = vmul.f32 %v458, %v401
    %v473 = vmul.f32 %v458, %v404
    %v474 = vmul.f32 %v458, %v406
    %v475 = vmul.f32 %v458, %v409
    %v476 = vmul.f32 %v458, %v411
    %v477 = vmul.f32 %v458, %v414
    %v478 = vmul.f32 %v458, %v416
    %v479 = vmul.f32 %v458, %v419
    %v480 = vmul.f32 %v458, %v421
    %v481 = vmul.f32 %v458, %v424
    %v482 = vmul.f32 %v458, %v426
    %v483 = vmul.f32 %v458, %v429
    %v484 = vsel %vm433, %v369, %v459
    %v485 = vsel %vm434, %v371, %v460
    %v486 = vsel %vm435, %v374, %v461
    %v487 = vsel %vm436, %v376, %v462
    %v488 = vsel %vm437, %v379, %v463
    %v489 = vsel %vm438, %v381, %v464
    %v490 = vsel %vm439, %v384, %v465
    %v491 = vsel %vm440, %v386, %v466
    %v492 = vsel %vm441, %v389, %v467
    %v493 = vsel %vm442, %v391, %v468
    %v494 = vsel %vm443, %v394, %v469
    %v495 = vsel %vm444, %v396, %v470
    %v496 = vsel %vm445, %v399, %v471
    %v497 = vsel %vm446, %v401, %v472
    %v498 = vsel %vm447, %v404, %v473
    %v499 = vsel %vm448, %v406, %v474
    %v500 = vsel %vm449, %v409, %v475
    %v501 = vsel %vm450, %v411, %v476
    %v502 = vsel %vm451, %v414, %v477
    %v503 = vsel %vm452, %v416, %v478
    %v504 = vsel %vm453, %v419, %v479
    %v505 = vsel %vm454, %v421, %v480
    %v506 = vsel %vm455, %v424, %v481
    %v507 = vsel %vm456, %v426, %v482
    %v508 = vsel %vm457, %v429, %v483
    %v509 = vpack.c.bf16 %v484, %v484
    %v510 = vpack.c.bf16 %v485, %v485
    %v511 = vpack.c.bf16 %v486, %v486
    %v512 = vpack.c.bf16 %v487, %v487
    %v513 = vpack.c.bf16 %v488, %v488
    %v514 = vpack.c.bf16 %v489, %v489
    %v515 = vpack.c.bf16 %v490, %v490
    %v516 = vpack.c.bf16 %v491, %v491
    %v517 = vpack.c.bf16 %v492, %v492
    %v518 = vpack.c.bf16 %v493, %v493
    %v519 = vpack.c.bf16 %v494, %v494
    %v520 = vpack.c.bf16 %v495, %v495
    %v521 = vpack.c.bf16 %v496, %v496
    %v522 = vpack.c.bf16 %v497, %v497
    %v523 = vpack.c.bf16 %v498, %v498
    %v524 = vpack.c.bf16 %v499, %v499
    %v525 = vpack.c.bf16 %v500, %v500
    %v526 = vpack.c.bf16 %v501, %v501
    %v527 = vpack.c.bf16 %v502, %v502
    %v528 = vpack.c.bf16 %v503, %v503
    %v529 = vpack.c.bf16 %v504, %v504
    %v530 = vpack.c.bf16 %v505, %v505
    %v531 = vpack.c.bf16 %v506, %v506
    %v532 = vpack.c.bf16 %v507, %v507
    %v533 = vpack.c.bf16 %v508, %v508
    %vm534 = vcmask 191488
    %535 = vst.msk [vmem:[%s4] sm:$0xf] %vm534, %v509
    %536 = vst.msk [vmem:[%s4 + $0x4] sm:$0xf] %vm534, %v510
    %537 = vst.msk [vmem:[%s4 + $0x8] sm:$0xf] %vm534, %v511
    %538 = vst.msk [vmem:[%s4 + $0xc] sm:$0xf] %vm534, %v512
    %539 = vst.msk [vmem:[%s4 + $0x10] sm:$0xf] %vm534, %v513
    %540 = vst.msk [vmem:[%s4 + $0x14] sm:$0xf] %vm534, %v514
    %541 = vst.msk [vmem:[%s4 + $0x18] sm:$0xf] %vm534, %v515
    %542 = vst.msk [vmem:[%s4 + $0x1c] sm:$0xf] %vm534, %v516
    %543 = vst.msk [vmem:[%s4 + $0x20] sm:$0xf] %vm534, %v517
    %544 = vst.msk [vmem:[%s4 + $0x24] sm:$0xf] %vm534, %v518
    %545 = vst.msk [vmem:[%s4 + $0x28] sm:$0xf] %vm534, %v519
    %546 = vst.msk [vmem:[%s4 + $0x2c] sm:$0xf] %vm534, %v520
    %547 = vst.msk [vmem:[%s4 + $0x30] sm:$0xf] %vm534, %v521
    %548 = vst.msk [vmem:[%s4 + $0x34] sm:$0xf] %vm534, %v522
    %549 = vst.msk [vmem:[%s4 + $0x38] sm:$0xf] %vm534, %v523
    %550 = vst.msk [vmem:[%s4 + $0x3c] sm:$0xf] %vm534, %v524
    %551 = vst.msk [vmem:[%s4 + $0x40] sm:$0xf] %vm534, %v525
    %552 = vst.msk [vmem:[%s4 + $0x44] sm:$0xf] %vm534, %v526
    %553 = vst.msk [vmem:[%s4 + $0x48] sm:$0xf] %vm534, %v527
    %554 = vst.msk [vmem:[%s4 + $0x4c] sm:$0xf] %vm534, %v528
    %555 = vst.msk [vmem:[%s4 + $0x50] sm:$0xf] %vm534, %v529
    %556 = vst.msk [vmem:[%s4 + $0x54] sm:$0xf] %vm534, %v530
    %557 = vst.msk [vmem:[%s4 + $0x58] sm:$0xf] %vm534, %v531
    %558 = vst.msk [vmem:[%s4 + $0x5c] sm:$0xf] %vm534, %v532
    %559 = vst.msk [vmem:[%s4 + $0x60] sm:$0xf] %vm534, %v533
    // Predicated region
    $region22: #{net_forward.12} parent=1 // pred_check
      _
    $region23: #{net_forward.12} parent=1 // pred_check_branch
      %561 = sbr.rel (0) target = $region25
    $region24: #{net_forward.12} parent=1 // pred_region
      _
    $region25: #{net_forward.12} parent=1 // pred_fallthru
      _
    // Predicated region
    $region26: #{net_forward.12} parent=1 // pred_check
      _
    $region27: #{net_forward.12} parent=1 // pred_check_branch
      %563 = sbr.rel (0) target = $region29
    $region28: #{net_forward.12} parent=1 // pred_region
      _
    $region29: #{net_forward.12} parent=1 // pred_fallthru
      _
    %564 = vsyncpa [#allocation3], 1

// kernel: net_forward.13
$region0: #{net_forward.13}
  #allocation0 [shape = 'u32[]', space=smem, size = 0x4, offset = 0x4, fixed_abs, tag = 'smem constant byte address 0x4 - core index']
  #allocation1 [shape = 'u32[72,128]{1,0:T(1,128)}', space=vmem, size = 0x9000, scoped, tag = 'internal scratch']
  %s0 = inlined_call_operand.vmem [shape: bf16[128,216], index: 0, kind: input, shape index: {}]
  %s1 = inlined_call_operand.vmem [shape: bf16[216,24], index: 1, kind: input, shape index: {}]
  %s2 = inlined_call_operand.vmem [shape: f32[1,24], index: 2, kind: input, shape index: {}]
  %s3 = inlined_call_operand.vmem [shape: f32[2], index: 3, kind: input, shape index: {}]
  %s4 = inlined_call_operand.vmem [shape: bf16[128,24], index: 4, kind: output, shape index: {}]
  %s5 = sld [smem:[#allocation0]]
  $region30: #{net_forward.13} parent=0
    _
  %s7 = ssub.s32 1, %s5
  %s8 = scalar_select 0, %s7, %s5
  $region1: #{net_forward.13} parent=0
    #allocation2 [shape = 'u8[512]{0}', space=smem, size = 0x200, scoped, tag = 'input window, operand 3, single buffered']
    #allocation3 [shape = 's32[1]{0}', space=sflag, size = 0x4, scoped, tag = 'scoped memory for net_forward.13']
    %9 = vsyncpa [#allocation3], 0
    // Predicated region
    $region2: #{net_forward.13} parent=1 // pred_check
      _
    $region3: #{net_forward.13} parent=1 // pred_check_branch
      %11 = sbr.rel (0) target = $region5
    $region4: #{net_forward.13} parent=1 // pred_region
      _
    $region5: #{net_forward.13} parent=1 // pred_fallthru
      _
    // Predicated region
    $region6: #{net_forward.13} parent=1 // pred_check
      _
    $region7: #{net_forward.13} parent=1 // pred_check_branch
      %13 = sbr.rel (0) target = $region9
    $region8: #{net_forward.13} parent=1 // pred_region
      _
    $region9: #{net_forward.13} parent=1 // pred_fallthru
      _
    // Predicated region
    $region10: #{net_forward.13} parent=1 // pred_check
      _
    $region11: #{net_forward.13} parent=1 // pred_check_branch
      %15 = sbr.rel (0) target = $region13
    $region12: #{net_forward.13} parent=1 // pred_region
      _
    $region13: #{net_forward.13} parent=1 // pred_fallthru
      _
    // Predicated region
    $region14: #{net_forward.13} parent=1 // pred_check
      _
    $region15: #{net_forward.13} parent=1 // pred_check_branch
      %17 = sbr.rel (0) target = $region17
    $region16: #{net_forward.13} parent=1 // pred_region
      %19 = vsyncadd [#allocation3], 0
      %s21 = sshll.u32 %s3, 4
      %s22 = int_to_ptr.vmem [resolvable:$true] %s21
      %24 = dma.vmem_to_smem %s22, 16, [#allocation2], [#allocation3]
    $region17: #{net_forward.13} parent=1 // pred_fallthru
      _
    // Predicated region
    $region18: #{net_forward.13} parent=1 // pred_check
      _
    $region19: #{net_forward.13} parent=1 // pred_check_branch
      %26 = sbr.rel (0) target = $region21
    $region20: #{net_forward.13} parent=1 // pred_region
      %28 = dma.done [#allocation3], 16
    $region21: #{net_forward.13} parent=1 // pred_fallthru
      _
    %29 = sfence
    %v31 = vld [vmem:[%s0] sm:$0xff]
    %v32 = vld [vmem:[%s0 + $0x8] sm:$0xff]
    %v33 = vld [vmem:[%s0 + $0x10] sm:$0xff]
    %v34 = vld [vmem:[%s0 + $0x18] sm:$0xff]
    %v35 = vld [vmem:[%s0 + $0x20] sm:$0xff]
    %v36 = vld [vmem:[%s0 + $0x28] sm:$0xff]
    %v37 = vld [vmem:[%s0 + $0x30] sm:$0xff]
    %v38 = vld [vmem:[%s0 + $0x38] sm:$0xff]
    %v39 = vld [vmem:[%s0 + $0x40] sm:$0xff]
    %v40 = vld [vmem:[%s0 + $0x48] sm:$0xff]
    %v41 = vld [vmem:[%s0 + $0x50] sm:$0xff]
    %v42 = vld [vmem:[%s0 + $0x58] sm:$0xff]
    %v43 = vld [vmem:[%s0 + $0x60] sm:$0xff]
    %v44 = vld [vmem:[%s0 + $0x68] sm:$0xff]
    %v45 = vld [vmem:[%s0 + $0x70] sm:$0xff]
    %v46 = vld [vmem:[%s0 + $0x78] sm:$0xff]
    %v47 = vld [vmem:[%s1] sm:$0xf]
    %v48 = vld [vmem:[%s1 + $0x4] sm:$0xf]
    %v49 = vld [vmem:[%s1 + $0x8] sm:$0xf]
    %v50 = vld [vmem:[%s1 + $0xc] sm:$0xf]
    %v51 = vld [vmem:[%s1 + $0x10] sm:$0xf]
    %v52 = vld [vmem:[%s1 + $0x14] sm:$0xf]
    %v53 = vld [vmem:[%s1 + $0x18] sm:$0xf]
    %v54 = vld [vmem:[%s1 + $0x1c] sm:$0xf]
    %v55 = vld [vmem:[%s1 + $0x20] sm:$0xf]
    %v56 = vld [vmem:[%s1 + $0x24] sm:$0xf]
    %v57 = vld [vmem:[%s1 + $0x28] sm:$0xf]
    %v58 = vld [vmem:[%s1 + $0x2c] sm:$0xf]
    %v59 = vld [vmem:[%s1 + $0x30] sm:$0xf]
    %v60 = vld [vmem:[%s1 + $0x34] sm:$0xf]
    %v61 = vld [vmem:[%s1 + $0x38] sm:$0xf]
    %v62 = vld [vmem:[%s1 + $0x3c] sm:$0xf]
    %v63 = vld [vmem:[%s1 + $0x40] sm:$0xf]
    %v64 = vld [vmem:[%s1 + $0x44] sm:$0xf]
    %v65 = vld [vmem:[%s1 + $0x48] sm:$0xf]
    %v66 = vld [vmem:[%s1 + $0x4c] sm:$0xf]
    %v67 = vld [vmem:[%s1 + $0x50] sm:$0xf]
    %v68 = vld [vmem:[%s1 + $0x54] sm:$0xf]
    %v69 = vld [vmem:[%s1 + $0x58] sm:$0xf]
    %v70 = vld [vmem:[%s1 + $0x5c] sm:$0xf]
    %v71 = vld [vmem:[%s1 + $0x60] sm:$0xf]
    %v72 = vld [vmem:[%s1 + $0x64] sm:$0xf]
    %v73 = vld [vmem:[%s1 + $0x68] sm:$0xf]
    %v74 = vld [vmem:[%s2] sm:$0x1]
    %v76 = vperm.slane %v74, 0
    %v94 = vunpack.c.l.b16 %v31
    %v95 = vunpack.c.h.b16 %v31
    %v96 = vunpack.c.l.b16 %v32
    %v97 = vunpack.c.h.b16 %v32
    %v98 = vunpack.c.l.b16 %v33
    %v99 = vunpack.c.h.b16 %v33
    %v100 = vunpack.c.l.b16 %v34
    %v101 = vunpack.c.h.b16 %v34
    %v102 = vunpack.c.l.b16 %v35
    %v103 = vunpack.c.h.b16 %v35
    %v104 = vunpack.c.l.b16 %v36
    %v105 = vunpack.c.h.b16 %v36
    %v106 = vunpack.c.l.b16 %v37
    %v107 = vunpack.c.h.b16 %v37
    %v108 = vunpack.c.l.b16 %v38
    %v109 = vunpack.c.h.b16 %v38
    %v110 = vunpack.c.l.b16 %v39
    %v111 = vunpack.c.h.b16 %v39
    %v112 = vunpack.c.l.b16 %v40
    %v113 = vunpack.c.h.b16 %v40
    %v114 = vunpack.c.l.b16 %v41
    %v115 = vunpack.c.h.b16 %v41
    %v116 = vunpack.c.l.b16 %v42
    %v117 = vunpack.c.h.b16 %v42
    %v118 = vunpack.c.l.b16 %v43
    %v119 = vunpack.c.h.b16 %v43
    %v120 = vunpack.c.l.b16 %v44
    %v121 = vunpack.c.h.b16 %v44
    %v122 = vunpack.c.l.b16 %v45
    %v123 = vunpack.c.h.b16 %v45
    %v124 = vunpack.c.l.b16 %v46
    %v125 = vunpack.c.h.b16 %v46
    %v126 = vpack.c.b16 %v96, %v94
    %v127 = vpack.c.b16 %v97, %v95
    %v128 = vpack.c.b16 %v100, %v98
    %v129 = vpack.c.b16 %v101, %v99
    %v130 = vpack.c.b16 %v104, %v102
    %v131 = vpack.c.b16 %v105, %v103
    %v132 = vpack.c.b16 %v108, %v106
    %v133 = vpack.c.b16 %v109, %v107
    %v134 = vpack.c.b16 %v112, %v110
    %v135 = vpack.c.b16 %v113, %v111
    %v136 = vpack.c.b16 %v116, %v114
    %v137 = vpack.c.b16 %v117, %v115
    %v138 = vpack.c.b16 %v120, %v118
    %v139 = vpack.c.b16 %v121, %v119
    %v140 = vpack.c.b16 %v124, %v122
    %v141 = vpack.c.b16 %v125, %v123
    %v177 = vunpack.c.l.b16 %v47
    %v178 = vunpack.c.l.b16 %v48
    %v179 = vunpack.c.l.b16 %v49
    %v180 = vunpack.c.l.b16 %v50
    %v181 = vunpack.c.l.b16 %v51
    %v182 = vunpack.c.l.b16 %v52
    %v183 = vunpack.c.l.b16 %v53
    %v184 = vunpack.c.l.b16 %v54
    %v185 = vunpack.c.l.b16 %v55
    %v186 = vunpack.c.l.b16 %v56
    %v187 = vunpack.c.l.b16 %v57
    %v188 = vunpack.c.l.b16 %v58
    %v189 = vunpack.c.l.b16 %v59
    %v190 = vunpack.c.l.b16 %v60
    %v191 = vunpack.c.l.b16 %v61
    %v192 = vunpack.c.l.b16 %v62
    %v193 = vunpack.c.l.b16 %v63
    %v194 = vunpack.c.l.b16 %v64
    %v195 = vunpack.c.l.b16 %v65
    %v196 = vunpack.c.l.b16 %v66
    %v197 = vunpack.c.l.b16 %v67
    %v198 = vunpack.c.l.b16 %v68
    %v199 = vunpack.c.l.b16 %v69
    %v200 = vunpack.c.l.b16 %v70
    %v201 = vunpack.c.l.b16 %v71
    %v202 = vunpack.c.l.b16 %v72
    %v203 = vunpack.c.l.b16 %v73
    %v204 = vpack.c.b16 %v178, %v177
    %v205 = vpack.c.b16 %v180, %v179
    %v206 = vpack.c.b16 %v182, %v181
    %v207 = vpack.c.b16 %v184, %v183
    %v208 = vpack.c.b16 %v186, %v185
    %v209 = vpack.c.b16 %v188, %v187
    %v210 = vpack.c.b16 %v190, %v189
    %v211 = vpack.c.b16 %v192, %v191
    %v212 = vpack.c.b16 %v194, %v193
    %v213 = vpack.c.b16 %v196, %v195
    %v214 = vpack.c.b16 %v198, %v197
    %v215 = vpack.c.b16 %v200, %v199
    %v216 = vpack.c.b16 %v202, %v201
    %v217 = vpack.c.b16 %v203, %v203
    %vm231 = vcmask 719872
    %v233 = vsel %vm231, %v127, 0
    %v236 = vsel %vm231, %v129, 0
    %v239 = vsel %vm231, %v131, 0
    %v242 = vsel %vm231, %v133, 0
    %v245 = vsel %vm231, %v135, 0
    %v248 = vsel %vm231, %v137, 0
    %v251 = vsel %vm231, %v139, 0
    %v254 = vsel %vm231, %v141, 0
    %vm256 = vcmask 1043456
    %v258 = vsel %vm256, %v217, 0
    %260 = vmatpush.bf16.msra.mxu0 %v211
    %261 = vmatpush.bf16.msra.mxu0 %v210
    %262 = vmatpush.bf16.msra.mxu0 %v209
    %263 = vmatpush.bf16.msra.mxu0 %v208
    %264 = vmatpush.bf16.msra.mxu0 %v207
    %265 = vmatpush.bf16.msra.mxu0 %v206
    %266 = vmatpush.bf16.msra.mxu0 %v205
    %267 = vmatpush.bf16.msra.mxu0 %v204
    %268 = vmatmul.bf16.gmra.mxu0 %v126
    %v269 = vpop.f32.mrf.mxu0
    %v270 = vadd.f32 %v76, %v269
    %v271 = vpop.f32.mrf.mxu0
    %v272 = vadd.f32 %v76, %v271
    %273 = vmatmul.bf16.gmra.mxu0 %v128
    %v274 = vpop.f32.mrf.mxu0
    %v275 = vadd.f32 %v76, %v274
    %v276 = vpop.f32.mrf.mxu0
    %v277 = vadd.f32 %v76, %v276
    %278 = vmatmul.bf16.gmra.mxu0 %v130
    %v279 = vpop.f32.mrf.mxu0
    %v280 = vadd.f32 %v76, %v279
    %v281 = vpop.f32.mrf.mxu0
    %v282 = vadd.f32 %v76, %v281
    %283 = vmatmul.bf16.gmra.mxu0 %v132
    %v284 = vpop.f32.mrf.mxu0
    %v285 = vadd.f32 %v76, %v284
    %v286 = vpop.f32.mrf.mxu0
    %v287 = vadd.f32 %v76, %v286
    %288 = vmatmul.bf16.gmra.mxu0 %v134
    %v289 = vpop.f32.mrf.mxu0
    %v290 = vadd.f32 %v76, %v289
    %v291 = vpop.f32.mrf.mxu0
    %v292 = vadd.f32 %v76, %v291
    %293 = vmatmul.bf16.gmra.mxu0 %v136
    %v294 = vpop.f32.mrf.mxu0
    %v295 = vadd.f32 %v76, %v294
    %v296 = vpop.f32.mrf.mxu0
    %v297 = vadd.f32 %v76, %v296
    %298 = vmatmul.bf16.gmra.mxu0 %v138
    %v299 = vpop.f32.mrf.mxu0
    %v300 = vadd.f32 %v76, %v299
    %v301 = vpop.f32.mrf.mxu0
    %v302 = vadd.f32 %v76, %v301
    %303 = vmatmul.bf16.gmra.mxu0 %v140
    %v304 = vpop.f32.mrf.mxu0
    %v305 = vadd.f32 %v76, %v304
    %v306 = vpop.f32.mrf.mxu0
    %v307 = vadd.f32 %v76, %v306
    %308 = vdwg.mxu0
    %309 = vmatpush.bf16.msra.mxu0 0
    %310 = vmatpush.bf16.msra.mxu0 0
    %311 = vmatpush.bf16.msra.mxu0 %v258
    %312 = vmatpush.bf16.msra.mxu0 %v216
    %313 = vmatpush.bf16.msra.mxu0 %v215
    %314 = vmatpush.bf16.msra.mxu0 %v214
    %315 = vmatpush.bf16.msra.mxu0 %v213
    %316 = vmatpush.bf16.msra.mxu0 %v212
    %317 = vmatmul.bf16.gmra.mxu0 %v233
    %v318 = vpop.f32.mrf.mxu0
    %v319 = vadd.f32 %v270, %v318
    %v320 = vpop.f32.mrf.mxu0
    %v321 = vadd.f32 %v272, %v320
    %322 = vmatmul.bf16.gmra.mxu0 %v236
    %v323 = vpop.f32.mrf.mxu0
    %v324 = vadd.f32 %v275, %v323
    %v325 = vpop.f32.mrf.mxu0
    %v326 = vadd.f32 %v277, %v325
    %327 = vmatmul.bf16.gmra.mxu0 %v239
    %v328 = vpop.f32.mrf.mxu0
    %v329 = vadd.f32 %v280, %v328
    %v330 = vpop.f32.mrf.mxu0
    %v331 = vadd.f32 %v282, %v330
    %332 = vmatmul.bf16.gmra.mxu0 %v242
    %v333 = vpop.f32.mrf.mxu0
    %v334 = vadd.f32 %v285, %v333
    %v335 = vpop.f32.mrf.mxu0
    %v336 = vadd.f32 %v287, %v335
    %337 = vmatmul.bf16.gmra.mxu0 %v245
    %v338 = vpop.f32.mrf.mxu0
    %v339 = vadd.f32 %v290, %v338
    %v340 = vpop.f32.mrf.mxu0
    %v341 = vadd.f32 %v292, %v340
    %342 = vmatmul.bf16.gmra.mxu0 %v248
    %v343 = vpop.f32.mrf.mxu0
    %v344 = vadd.f32 %v295, %v343
    %v345 = vpop.f32.mrf.mxu0
    %v346 = vadd.f32 %v297, %v345
    %347 = vmatmul.bf16.gmra.mxu0 %v251
    %v348 = vpop.f32.mrf.mxu0
    %v349 = vadd.f32 %v300, %v348
    %v350 = vpop.f32.mrf.mxu0
    %v351 = vadd.f32 %v302, %v350
    %352 = vmatmul.bf16.gmra.mxu0 %v254
    %v353 = vpop.f32.mrf.mxu0
    %v354 = vadd.f32 %v305, %v353
    %v355 = vpop.f32.mrf.mxu0
    %v356 = vadd.f32 %v307, %v355
    %357 = vdwg.mxu0
    %s358 = sld [smem:[#allocation2]]
    %vm359 = vcmp.ge.f32.partialorder %v319, 0.0
    %vm360 = vcmp.ge.f32.partialorder %v321, 0.0
    %vm361 = vcmp.ge.f32.partialorder %v324, 0.0
    %vm362 = vcmp.ge.f32.partialorder %v326, 0.0
    %vm363 = vcmp.ge.f32.partialorder %v329, 0.0
    %vm364 = vcmp.ge.f32.partialorder %v331, 0.0
    %vm365 = vcmp.ge.f32.partialorder %v334, 0.0
    %vm366 = vcmp.ge.f32.partialorder %v336, 0.0
    %vm367 = vcmp.ge.f32.partialorder %v339, 0.0
    %vm368 = vcmp.ge.f32.partialorder %v341, 0.0
    %vm369 = vcmp.ge.f32.partialorder %v344, 0.0
    %vm370 = vcmp.ge.f32.partialorder %v346, 0.0
    %vm371 = vcmp.ge.f32.partialorder %v349, 0.0
    %vm372 = vcmp.ge.f32.partialorder %v351, 0.0
    %vm373 = vcmp.ge.f32.partialorder %v354, 0.0
    %vm374 = vcmp.ge.f32.partialorder %v356, 0.0
    %v375 = vstv %s358
    %v376 = vmul.f32 %v375, %v319
    %v377 = vmul.f32 %v375, %v321
    %v378 = vmul.f32 %v375, %v324
    %v379 = vmul.f32 %v375, %v326
    %v380 = vmul.f32 %v375, %v329
    %v381 = vmul.f32 %v375, %v331
    %v382 = vmul.f32 %v375, %v334
    %v383 = vmul.f32 %v375, %v336
    %v384 = vmul.f32 %v375, %v339
    %v385 = vmul.f32 %v375, %v341
    %v386 = vmul.f32 %v375, %v344
    %v387 = vmul.f32 %v375, %v346
    %v388 = vmul.f32 %v375, %v349
    %v389 = vmul.f32 %v375, %v351
    %v390 = vmul.f32 %v375, %v354
    %v391 = vmul.f32 %v375, %v356
    %v392 = vsel %vm359, %v319, %v376
    %v393 = vsel %vm360, %v321, %v377
    %v394 = vsel %vm361, %v324, %v378
    %v395 = vsel %vm362, %v326, %v379
    %v396 = vsel %vm363, %v329, %v380
    %v397 = vsel %vm364, %v331, %v381
    %v398 = vsel %vm365, %v334, %v382
    %v399 = vsel %vm366, %v336, %v383
    %v400 = vsel %vm367, %v339, %v384
    %v401 = vsel %vm368, %v341, %v385
    %v402 = vsel %vm369, %v344, %v386
    %v403 = vsel %vm370, %v346, %v387
    %v404 = vsel %vm371, %v349, %v388
    %v405 = vsel %vm372, %v351, %v389
    %v406 = vsel %vm373, %v354, %v390
    %v407 = vsel %vm374, %v356, %v391
    %v408 = vpack.c.bf16 %v392, %v392
    %v409 = vpack.c.bf16 %v393, %v393
    %v410 = vpack.c.bf16 %v394, %v394
    %v411 = vpack.c.bf16 %v395, %v395
    %v412 = vpack.c.bf16 %v396, %v396
    %v413 = vpack.c.bf16 %v397, %v397
    %v414 = vpack.c.bf16 %v398, %v398
    %v415 = vpack.c.bf16 %v399, %v399
    %v416 = vpack.c.bf16 %v400, %v400
    %v417 = vpack.c.bf16 %v401, %v401
    %v418 = vpack.c.bf16 %v402, %v402
    %v419 = vpack.c.bf16 %v403, %v403
    %v420 = vpack.c.bf16 %v404, %v404
    %v421 = vpack.c.bf16 %v405, %v405
    %v422 = vpack.c.bf16 %v406, %v406
    %v423 = vpack.c.bf16 %v407, %v407
    %vm424 = vcmask 191488
    %425 = vst.msk [vmem:[%s4] sm:$0xf] %vm424, %v408
    %426 = vst.msk [vmem:[%s4 + $0x4] sm:$0xf] %vm424, %v409
    %427 = vst.msk [vmem:[%s4 + $0x8] sm:$0xf] %vm424, %v410
    %428 = vst.msk [vmem:[%s4 + $0xc] sm:$0xf] %vm424, %v411
    %429 = vst.msk [vmem:[%s4 + $0x10] sm:$0xf] %vm424, %v412
    %430 = vst.msk [vmem:[%s4 + $0x14] sm:$0xf] %vm424, %v413
    %431 = vst.msk [vmem:[%s4 + $0x18] sm:$0xf] %vm424, %v414
    %432 = vst.msk [vmem:[%s4 + $0x1c] sm:$0xf] %vm424, %v415
    %433 = vst.msk [vmem:[%s4 + $0x20] sm:$0xf] %vm424, %v416
    %434 = vst.msk [vmem:[%s4 + $0x24] sm:$0xf] %vm424, %v417
    %435 = vst.msk [vmem:[%s4 + $0x28] sm:$0xf] %vm424, %v418
    %436 = vst.msk [vmem:[%s4 + $0x2c] sm:$0xf] %vm424, %v419
    %437 = vst.msk [vmem:[%s4 + $0x30] sm:$0xf] %vm424, %v420
    %438 = vst.msk [vmem:[%s4 + $0x34] sm:$0xf] %vm424, %v421
    %439 = vst.msk [vmem:[%s4 + $0x38] sm:$0xf] %vm424, %v422
    %440 = vst.msk [vmem:[%s4 + $0x3c] sm:$0xf] %vm424, %v423
    // Predicated region
    $region22: #{net_forward.13} parent=1 // pred_check
      _
    $region23: #{net_forward.13} parent=1 // pred_check_branch
      %442 = sbr.rel (0) target = $region25
    $region24: #{net_forward.13} parent=1 // pred_region
      _
    $region25: #{net_forward.13} parent=1 // pred_fallthru
      _
    // Predicated region
    $region26: #{net_forward.13} parent=1 // pred_check
      _
    $region27: #{net_forward.13} parent=1 // pred_check_branch
      %444 = sbr.rel (0) target = $region29
    $region28: #{net_forward.13} parent=1 // pred_region
      _
    $region29: #{net_forward.13} parent=1 // pred_fallthru
      _
    %445 = vsyncpa [#allocation3], 1

// kernel: net_forward.14
$region0: #{net_forward.14}
  #allocation0 [shape = 'u32[]', space=smem, size = 0x4, offset = 0x4, fixed_abs, tag = 'smem constant byte address 0x4 - core index']
  #allocation1 [shape = 'u32[72,128]{1,0:T(1,128)}', space=vmem, size = 0x9000, scoped, tag = 'internal scratch']
  %s0 = inlined_call_operand.vmem [shape: bf16[32,216], index: 0, kind: input, shape index: {}]
  %s1 = inlined_call_operand.vmem [shape: bf16[216,40], index: 1, kind: input, shape index: {}]
  %s2 = inlined_call_operand.vmem [shape: f32[1,40], index: 2, kind: input, shape index: {}]
  %s3 = inlined_call_operand.vmem [shape: f32[2], index: 3, kind: input, shape index: {}]
  %s4 = inlined_call_operand.vmem [shape: bf16[32,40], index: 4, kind: output, shape index: {}]
  %s5 = sld [smem:[#allocation0]]
  $region30: #{net_forward.14} parent=0
    _
  %s7 = ssub.s32 1, %s5
  %s8 = scalar_select 0, %s7, %s5
  $region1: #{net_forward.14} parent=0
    #allocation2 [shape = 'u8[512]{0}', space=smem, size = 0x200, scoped, tag = 'input window, operand 3, single buffered']
    #allocation3 [shape = 's32[1]{0}', space=sflag, size = 0x4, scoped, tag = 'scoped memory for net_forward.14']
    %9 = vsyncpa [#allocation3], 0
    // Predicated region
    $region2: #{net_forward.14} parent=1 // pred_check
      _
    $region3: #{net_forward.14} parent=1 // pred_check_branch
      %11 = sbr.rel (0) target = $region5
    $region4: #{net_forward.14} parent=1 // pred_region
      _
    $region5: #{net_forward.14} parent=1 // pred_fallthru
      _
    // Predicated region
    $region6: #{net_forward.14} parent=1 // pred_check
      _
    $region7: #{net_forward.14} parent=1 // pred_check_branch
      %13 = sbr.rel (0) target = $region9
    $region8: #{net_forward.14} parent=1 // pred_region
      _
    $region9: #{net_forward.14} parent=1 // pred_fallthru
      _
    // Predicated region
    $region10: #{net_forward.14} parent=1 // pred_check
      _
    $region11: #{net_forward.14} parent=1 // pred_check_branch
      %15 = sbr.rel (0) target = $region13
    $region12: #{net_forward.14} parent=1 // pred_region
      _
    $region13: #{net_forward.14} parent=1 // pred_fallthru
      _
    // Predicated region
    $region14: #{net_forward.14} parent=1 // pred_check
      _
    $region15: #{net_forward.14} parent=1 // pred_check_branch
      %17 = sbr.rel (0) target = $region17
    $region16: #{net_forward.14} parent=1 // pred_region
      %19 = vsyncadd [#allocation3], 0
      %s21 = sshll.u32 %s3, 4
      %s22 = int_to_ptr.vmem [resolvable:$true] %s21
      %24 = dma.vmem_to_smem %s22, 16, [#allocation2], [#allocation3]
    $region17: #{net_forward.14} parent=1 // pred_fallthru
      _
    // Predicated region
    $region18: #{net_forward.14} parent=1 // pred_check
      _
    $region19: #{net_forward.14} parent=1 // pred_check_branch
      %26 = sbr.rel (0) target = $region21
    $region20: #{net_forward.14} parent=1 // pred_region
      %28 = dma.done [#allocation3], 16
    $region21: #{net_forward.14} parent=1 // pred_fallthru
      _
    %29 = sfence
    %v31 = vld [vmem:[%s0] sm:$0xff]
    %v32 = vld [vmem:[%s0 + $0x8] sm:$0xff]
    %v33 = vld [vmem:[%s0 + $0x10] sm:$0xff]
    %v34 = vld [vmem:[%s0 + $0x18] sm:$0xff]
    %v35 = vld [vmem:[%s1] sm:$0xf]
    %v36 = vld [vmem:[%s1 + $0x4] sm:$0xf]
    %v37 = vld [vmem:[%s1 + $0x8] sm:$0xf]
    %v38 = vld [vmem:[%s1 + $0xc] sm:$0xf]
    %v39 = vld [vmem:[%s1 + $0x10] sm:$0xf]
    %v40 = vld [vmem:[%s1 + $0x14] sm:$0xf]
    %v41 = vld [vmem:[%s1 + $0x18] sm:$0xf]
    %v42 = vld [vmem:[%s1 + $0x1c] sm:$0xf]
    %v43 = vld [vmem:[%s1 + $0x20] sm:$0xf]
    %v44 = vld [vmem:[%s1 + $0x24] sm:$0xf]
    %v45 = vld [vmem:[%s1 + $0x28] sm:$0xf]
    %v46 = vld [vmem:[%s1 + $0x2c] sm:$0xf]
    %v47 = vld [vmem:[%s1 + $0x30] sm:$0xf]
    %v48 = vld [vmem:[%s1 + $0x34] sm:$0xf]
    %v49 = vld [vmem:[%s1 + $0x38] sm:$0xf]
    %v50 = vld [vmem:[%s1 + $0x3c] sm:$0xf]
    %v51 = vld [vmem:[%s1 + $0x40] sm:$0xf]
    %v52 = vld [vmem:[%s1 + $0x44] sm:$0xf]
    %v53 = vld [vmem:[%s1 + $0x48] sm:$0xf]
    %v54 = vld [vmem:[%s1 + $0x4c] sm:$0xf]
    %v55 = vld [vmem:[%s1 + $0x50] sm:$0xf]
    %v56 = vld [vmem:[%s1 + $0x54] sm:$0xf]
    %v57 = vld [vmem:[%s1 + $0x58] sm:$0xf]
    %v58 = vld [vmem:[%s1 + $0x5c] sm:$0xf]
    %v59 = vld [vmem:[%s1 + $0x60] sm:$0xf]
    %v60 = vld [vmem:[%s1 + $0x64] sm:$0xf]
    %v61 = vld [vmem:[%s1 + $0x68] sm:$0xf]
    %v62 = vld [vmem:[%s2] sm:$0x1]
    %v64 = vperm.slane %v62, 0
    %v70 = vunpack.c.l.b16 %v31
    %v71 = vunpack.c.h.b16 %v31
    %v72 = vunpack.c.l.b16 %v32
    %v73 = vunpack.c.h.b16 %v32
    %v74 = vunpack.c.l.b16 %v33
    %v75 = vunpack.c.h.b16 %v33
    %v76 = vunpack.c.l.b16 %v34
    %v77 = vunpack.c.h.b16 %v34
    %v78 = vpack.c.b16 %v72, %v70
    %v79 = vpack.c.b16 %v73, %v71
    %v80 = vpack.c.b16 %v76, %v74
    %v81 = vpack.c.b16 %v77, %v75
    %v111 = vunpack.c.l.b16 %v35
    %v112 = vunpack.c.l.b16 %v36
    %v113 = vunpack.c.l.b16 %v37
    %v114 = vunpack.c.l.b16 %v38
    %v115 = vunpack.c.l.b16 %v39
    %v116 = vunpack.c.l.b16 %v40
    %v117 = vunpack.c.l.b16 %v41
    %v118 = vunpack.c.l.b16 %v42
    %v119 = vunpack.c.l.b16 %v43
    %v120 = vunpack.c.l.b16 %v44
    %v121 = vunpack.c.l.b16 %v45
    %v122 = vunpack.c.l.b16 %v46
    %v123 = vunpack.c.l.b16 %v47
    %v124 = vunpack.c.l.b16 %v48
    %v125 = vunpack.c.l.b16 %v49
    %v126 = vunpack.c.l.b16 %v50
    %v127 = vunpack.c.l.b16 %v51
    %v128 = vunpack.c.l.b16 %v52
    %v129 = vunpack.c.l.b16 %v53
    %v130 = vunpack.c.l.b16 %v54
    %v131 = vunpack.c.l.b16 %v55
    %v132 = vunpack.c.l.b16 %v56
    %v133 = vunpack.c.l.b16 %v57
    %v134 = vunpack.c.l.b16 %v58
    %v135 = vunpack.c.l.b16 %v59
    %v136 = vunpack.c.l.b16 %v60
    %v137 = vunpack.c.l.b16 %v61
    %v138 = vpack.c.b16 %v112, %v111
    %v139 = vpack.c.b16 %v114, %v113
    %v140 = vpack.c.b16 %v116, %v115
    %v141 = vpack.c.b16 %v118, %v117
    %v142 = vpack.c.b16 %v120, %v119
    %v143 = vpack.c.b16 %v122, %v121
    %v144 = vpack.c.b16 %v124, %v123
    %v145 = vpack.c.b16 %v126, %v125
    %v146 = vpack.c.b16 %v128, %v127
    %v147 = vpack.c.b16 %v130, %v129
    %v148 = vpack.c.b16 %v132, %v131
    %v149 = vpack.c.b16 %v134, %v133
    %v150 = vpack.c.b16 %v136, %v135
    %v151 = vpack.c.b16 %v137, %v137
    %vm165 = vcmask 719872
    %v167 = vsel %vm165, %v79, 0
    %v170 = vsel %vm165, %v81, 0
    %vm172 = vcmask 1043456
    %v174 = vsel %vm172, %v151, 0
    %176 = vmatpush.bf16.msra.mxu0 %v145
    %177 = vmatpush.bf16.msra.mxu0 %v144
    %178 = vmatpush.bf16.msra.mxu0 %v143
    %179 = vmatpush.bf16.msra.mxu0 %v142
    %180 = vmatpush.bf16.msra.mxu0 %v141
    %181 = vmatpush.bf16.msra.mxu0 %v140
    %182 = vmatpush.bf16.msra.mxu0 %v139
    %183 = vmatpush.bf16.msra.mxu0 %v138
    %184 = vmatmul.bf16.gmra.mxu0 %v78
    %v185 = vpop.f32.mrf.mxu0
    %v186 = vadd.f32 %v64, %v185
    %v187 = vpop.f32.mrf.mxu0
    %v188 = vadd.f32 %v64, %v187
    %189 = vmatmul.bf16.gmra.mxu0 %v80
    %v190 = vpop.f32.mrf.mxu0
    %v191 = vadd.f32 %v64, %v190
    %v192 = vpop.f32.mrf.mxu0
    %v193 = vadd.f32 %v64, %v192
    %194 = vdwg.mxu0
    %195 = vmatpush.bf16.msra.mxu0 0
    %196 = vmatpush.bf16.msra.mxu0 0
    %197 = vmatpush.bf16.msra.mxu0 %v174
    %198 = vmatpush.bf16.msra.mxu0 %v150
    %199 = vmatpush.bf16.msra.mxu0 %v149
    %200 = vmatpush.bf16.msra.mxu0 %v148
    %201 = vmatpush.bf16.msra.mxu0 %v147
    %202 = vmatpush.bf16.msra.mxu0 %v146
    %203 = vmatmul.bf16.gmra.mxu0 %v167
    %v204 = vpop.f32.mrf.mxu0
    %v205 = vadd.f32 %v186, %v204
    %v206 = vpop.f32.mrf.mxu0
    %v207 = vadd.f32 %v188, %v206
    %208 = vmatmul.bf16.gmra.mxu0 %v170
    %v209 = vpop.f32.mrf.mxu0
    %v210 = vadd.f32 %v191, %v209
    %v211 = vpop.f32.mrf.mxu0
    %v212 = vadd.f32 %v193, %v211
    %213 = vdwg.mxu0
    %s214 = sld [smem:[#allocation2]]
    %vm215 = vcmp.ge.f32.partialorder %v205, 0.0
    %vm216 = vcmp.ge.f32.partialorder %v207, 0.0
    %vm217 = vcmp.ge.f32.partialorder %v210, 0.0
    %vm218 = vcmp.ge.f32.partialorder %v212, 0.0
    %v219 = vstv %s214
    %v220 = vmul.f32 %v219, %v205
    %v221 = vmul.f32 %v219, %v207
    %v222 = vmul.f32 %v219, %v210
    %v223 = vmul.f32 %v219, %v212
    %v224 = vsel %vm215, %v205, %v220
    %v225 = vsel %vm216, %v207, %v221
    %v226 = vsel %vm217, %v210, %v222
    %v227 = vsel %vm218, %v212, %v223
    %v228 = vpack.c.bf16 %v224, %v224
    %v229 = vpack.c.bf16 %v225, %v225
    %v230 = vpack.c.bf16 %v226, %v226
    %v231 = vpack.c.bf16 %v227, %v227
    %vm232 = vcmask 322560
    %233 = vst.msk [vmem:[%s4] sm:$0xf] %vm232, %v228
    %234 = vst.msk [vmem:[%s4 + $0x4] sm:$0xf] %vm232, %v229
    %235 = vst.msk [vmem:[%s4 + $0x8] sm:$0xf] %vm232, %v230
    %236 = vst.msk [vmem:[%s4 + $0xc] sm:$0xf] %vm232, %v231
    // Predicated region
    $region22: #{net_forward.14} parent=1 // pred_check
      _
    $region23: #{net_forward.14} parent=1 // pred_check_branch
      %238 = sbr.rel (0) target = $region25
    $region24: #{net_forward.14} parent=1 // pred_region
      _
    $region25: #{net_forward.14} parent=1 // pred_fallthru
      _
    // Predicated region
    $region26: #{net_forward.14} parent=1 // pred_check
      _
    $region27: #{net_forward.14} parent=1 // pred_check_branch
      %240 = sbr.rel (0) target = $region29
    $region28: #{net_forward.14} parent=1 // pred_region
      _
    $region29: #{net_forward.14} parent=1 // pred_fallthru
      _
    %241 = vsyncpa [#allocation3], 1

// kernel: net_forward.15
$region0: #{net_forward.15}
  #allocation0 [shape = 'u32[]', space=smem, size = 0x4, offset = 0x4, fixed_abs, tag = 'smem constant byte address 0x4 - core index']
  #allocation1 [shape = 'u32[72,128]{1,0:T(1,128)}', space=vmem, size = 0x9000, scoped, tag = 'internal scratch']
  %s0 = inlined_call_operand.vmem [shape: bf16[32,360], index: 0, kind: input, shape index: {}]
  %s1 = inlined_call_operand.vmem [shape: bf16[360,120], index: 1, kind: input, shape index: {}]
  %s2 = inlined_call_operand.vmem [shape: f32[1,120], index: 2, kind: input, shape index: {}]
  %s3 = inlined_call_operand.vmem [shape: f32[2], index: 3, kind: input, shape index: {}]
  %s4 = inlined_call_operand.vmem [shape: bf16[32,120], index: 4, kind: output, shape index: {}]
  %s5 = sld [smem:[#allocation0]]
  $region30: #{net_forward.15} parent=0
    _
  %s7 = ssub.s32 1, %s5
  %s8 = scalar_select 0, %s7, %s5
  $region1: #{net_forward.15} parent=0
    #allocation2 [shape = 'u8[512]{0}', space=smem, size = 0x200, scoped, tag = 'input window, operand 3, single buffered']
    #allocation3 [shape = 's32[1]{0}', space=sflag, size = 0x4, scoped, tag = 'scoped memory for net_forward.15']
    %9 = vsyncpa [#allocation3], 0
    // Predicated region
    $region2: #{net_forward.15} parent=1 // pred_check
      _
    $region3: #{net_forward.15} parent=1 // pred_check_branch
      %11 = sbr.rel (0) target = $region5
    $region4: #{net_forward.15} parent=1 // pred_region
      _
    $region5: #{net_forward.15} parent=1 // pred_fallthru
      _
    // Predicated region
    $region6: #{net_forward.15} parent=1 // pred_check
      _
    $region7: #{net_forward.15} parent=1 // pred_check_branch
      %13 = sbr.rel (0) target = $region9
    $region8: #{net_forward.15} parent=1 // pred_region
      _
    $region9: #{net_forward.15} parent=1 // pred_fallthru
      _
    // Predicated region
    $region10: #{net_forward.15} parent=1 // pred_check
      _
    $region11: #{net_forward.15} parent=1 // pred_check_branch
      %15 = sbr.rel (0) target = $region13
    $region12: #{net_forward.15} parent=1 // pred_region
      _
    $region13: #{net_forward.15} parent=1 // pred_fallthru
      _
    // Predicated region
    $region14: #{net_forward.15} parent=1 // pred_check
      _
    $region15: #{net_forward.15} parent=1 // pred_check_branch
      %17 = sbr.rel (0) target = $region17
    $region16: #{net_forward.15} parent=1 // pred_region
      %19 = vsyncadd [#allocation3], 0
      %s21 = sshll.u32 %s3, 4
      %s22 = int_to_ptr.vmem [resolvable:$true] %s21
      %24 = dma.vmem_to_smem %s22, 16, [#allocation2], [#allocation3]
    $region17: #{net_forward.15} parent=1 // pred_fallthru
      _
    // Predicated region
    $region18: #{net_forward.15} parent=1 // pred_check
      _
    $region19: #{net_forward.15} parent=1 // pred_check_branch
      %26 = sbr.rel (0) target = $region21
    $region20: #{net_forward.15} parent=1 // pred_region
      %28 = dma.done [#allocation3], 16
    $region21: #{net_forward.15} parent=1 // pred_fallthru
      _
    %29 = sfence
    %v31 = vld [vmem:[%s0] sm:$0xff]
    %v32 = vld [vmem:[%s0 + $0x8] sm:$0xf]
    %v33 = vld [vmem:[%s0 + $0xc] sm:$0xff]
    %v34 = vld [vmem:[%s0 + $0x14] sm:$0xf]
    %v35 = vld [vmem:[%s0 + $0x18] sm:$0xff]
    %v36 = vld [vmem:[%s0 + $0x20] sm:$0xf]
    %v37 = vld [vmem:[%s0 + $0x24] sm:$0xff]
    %v38 = vld [vmem:[%s0 + $0x2c] sm:$0xf]
    %v39 = vld [vmem:[%s1] sm:$0xf]
    %v40 = vld [vmem:[%s1 + $0x4] sm:$0xf]
    %v41 = vld [vmem:[%s1 + $0x8] sm:$0xf]
    %v42 = vld [vmem:[%s1 + $0xc] sm:$0xf]
    %v43 = vld [vmem:[%s1 + $0x10] sm:$0xf]
    %v44 = vld [vmem:[%s1 + $0x14] sm:$0xf]
    %v45 = vld [vmem:[%s1 + $0x18] sm:$0xf]
    %v46 = vld [vmem:[%s1 + $0x1c] sm:$0xf]
    %v47 = vld [vmem:[%s1 + $0x20] sm:$0xf]
    %v48 = vld [vmem:[%s1 + $0x24] sm:$0xf]
    %v49 = vld [vmem:[%s1 + $0x28] sm:$0xf]
    %v50 = vld [vmem:[%s1 + $0x2c] sm:$0xf]
    %v51 = vld [vmem:[%s1 + $0x30] sm:$0xf]
    %v52 = vld [vmem:[%s1 + $0x34] sm:$0xf]
    %v53 = vld [vmem:[%s1 + $0x38] sm:$0xf]
    %v54 = vld [vmem:[%s1 + $0x3c] sm:$0xf]
    %v55 = vld [vmem:[%s1 + $0x40] sm:$0xf]
    %v56 = vld [vmem:[%s1 + $0x44] sm:$0xf]
    %v57 = vld [vmem:[%s1 + $0x48] sm:$0xf]
    %v58 = vld [vmem:[%s1 + $0x4c] sm:$0xf]
    %v59 = vld [vmem:[%s1 + $0x50] sm:$0xf]
    %v60 = vld [vmem:[%s1 + $0x54] sm:$0xf]
    %v61 = vld [vmem:[%s1 + $0x58] sm:$0xf]
    %v62 = vld [vmem:[%s1 + $0x5c] sm:$0xf]
    %v63 = vld [vmem:[%s1 + $0x60] sm:$0xf]
    %v64 = vld [vmem:[%s1 + $0x64] sm:$0xf]
    %v65 = vld [vmem:[%s1 + $0x68] sm:$0xf]
    %v66 = vld [vmem:[%s1 + $0x6c] sm:$0xf]
    %v67 = vld [vmem:[%s1 + $0x70] sm:$0xf]
    %v68 = vld [vmem:[%s1 + $0x74] sm:$0xf]
    %v69 = vld [vmem:[%s1 + $0x78] sm:$0xf]
    %v70 = vld [vmem:[%s1 + $0x7c] sm:$0xf]
    %v71 = vld [vmem:[%s1 + $0x80] sm:$0xf]
    %v72 = vld [vmem:[%s1 + $0x84] sm:$0xf]
    %v73 = vld [vmem:[%s1 + $0x88] sm:$0xf]
    %v74 = vld [vmem:[%s1 + $0x8c] sm:$0xf]
    %v75 = vld [vmem:[%s1 + $0x90] sm:$0xf]
    %v76 = vld [vmem:[%s1 + $0x94] sm:$0xf]
    %v77 = vld [vmem:[%s1 + $0x98] sm:$0xf]
    %v78 = vld [vmem:[%s1 + $0x9c] sm:$0xf]
    %v79 = vld [vmem:[%s1 + $0xa0] sm:$0xf]
    %v80 = vld [vmem:[%s1 + $0xa4] sm:$0xf]
    %v81 = vld [vmem:[%s1 + $0xa8] sm:$0xf]
    %v82 = vld [vmem:[%s1 + $0xac] sm:$0xf]
    %v83 = vld [vmem:[%s1 + $0xb0] sm:$0xf]
    %v84 = vld [vmem:[%s2] sm:$0x1]
    %v86 = vperm.slane %v84, 0
    %v96 = vunpack.c.l.b16 %v31
    %v97 = vunpack.c.h.b16 %v31
    %v98 = vunpack.c.l.b16 %v32
    %v99 = vunpack.c.l.b16 %v33
    %v100 = vunpack.c.h.b16 %v33
    %v101 = vunpack.c.l.b16 %v34
    %v102 = vunpack.c.l.b16 %v35
    %v103 = vunpack.c.h.b16 %v35
    %v104 = vunpack.c.l.b16 %v36
    %v105 = vunpack.c.l.b16 %v37
    %v106 = vunpack.c.h.b16 %v37
    %v107 = vunpack.c.l.b16 %v38
    %v108 = vpack.c.b16 %v99, %v96
    %v109 = vpack.c.b16 %v100, %v97
    %v110 = vpack.c.b16 %v101, %v98
    %v111 = vpack.c.b16 %v105, %v102
    %v112 = vpack.c.b16 %v106, %v103
    %v113 = vpack.c.b16 %v107, %v104
    %v163 = vunpack.c.l.b16 %v39
    %v164 = vunpack.c.l.b16 %v40
    %v165 = vunpack.c.l.b16 %v41
    %v166 = vunpack.c.l.b16 %v42
    %v167 = vunpack.c.l.b16 %v43
    %v168 = vunpack.c.l.b16 %v44
    %v169 = vunpack.c.l.b16 %v45
    %v170 = vunpack.c.l.b16 %v46
    %v171 = vunpack.c.l.b16 %v47
    %v172 = vunpack.c.l.b16 %v48
    %v173 = vunpack.c.l.b16 %v49
    %v174 = vunpack.c.l.b16 %v50
    %v175 = vunpack.c.l.b16 %v51
    %v176 = vunpack.c.l.b16 %v52
    %v177 = vunpack.c.l.b16 %v53
    %v178 = vunpack.c.l.b16 %v54
    %v179 = vunpack.c.l.b16 %v55
    %v180 = vunpack.c.l.b16 %v56
    %v181 = vunpack.c.l.b16 %v57
    %v182 = vunpack.c.l.b16 %v58
    %v183 = vunpack.c.l.b16 %v59
    %v184 = vunpack.c.l.b16 %v60
    %v185 = vunpack.c.l.b16 %v61
    %v186 = vunpack.c.l.b16 %v62
    %v187 = vunpack.c.l.b16 %v63
    %v188 = vunpack.c.l.b16 %v64
    %v189 = vunpack.c.l.b16 %v65
    %v190 = vunpack.c.l.b16 %v66
    %v191 = vunpack.c.l.b16 %v67
    %v192 = vunpack.c.l.b16 %v68
    %v193 = vunpack.c.l.b16 %v69
    %v194 = vunpack.c.l.b16 %v70
    %v195 = vunpack.c.l.b16 %v71
    %v196 = vunpack.c.l.b16 %v72
    %v197 = vunpack.c.l.b16 %v73
    %v198 = vunpack.c.l.b16 %v74
    %v199 = vunpack.c.l.b16 %v75
    %v200 = vunpack.c.l.b16 %v76
    %v201 = vunpack.c.l.b16 %v77
    %v202 = vunpack.c.l.b16 %v78
    %v203 = vunpack.c.l.b16 %v79
    %v204 = vunpack.c.l.b16 %v80
    %v205 = vunpack.c.l.b16 %v81
    %v206 = vunpack.c.l.b16 %v82
    %v207 = vunpack.c.l.b16 %v83
    %v208 = vpack.c.b16 %v164, %v163
    %v209 = vpack.c.b16 %v166, %v165
    %v210 = vpack.c.b16 %v168, %v167
    %v211 = vpack.c.b16 %v170, %v169
    %v212 = vpack.c.b16 %v172, %v171
    %v213 = vpack.c.b16 %v174, %v173
    %v214 = vpack.c.b16 %v176, %v175
    %v215 = vpack.c.b16 %v178, %v177
    %v216 = vpack.c.b16 %v180, %v179
    %v217 = vpack.c.b16 %v182, %v181
    %v218 = vpack.c.b16 %v184, %v183
    %v219 = vpack.c.b16 %v186, %v185
    %v220 = vpack.c.b16 %v188, %v187
    %v221 = vpack.c.b16 %v190, %v189
    %v222 = vpack.c.b16 %v192, %v191
    %v223 = vpack.c.b16 %v194, %v193
    %v224 = vpack.c.b16 %v196, %v195
    %v225 = vpack.c.b16 %v198, %v197
    %v226 = vpack.c.b16 %v200, %v199
    %v227 = vpack.c.b16 %v202, %v201
    %v228 = vpack.c.b16 %v204, %v203
    %v229 = vpack.c.b16 %v206, %v205
    %v230 = vpack.c.b16 %v207, %v207
    %vm253 = vcmask 850944
    %v255 = vsel %vm253, %v110, 0
    %v258 = vsel %vm253, %v113, 0
    %vm260 = vcmask 1043456
    %v262 = vsel %vm260, %v230, 0
    %264 = vmatpush.bf16.msra.mxu0 %v215
    %265 = vmatpush.bf16.msra.mxu0 %v214
    %266 = vmatpush.bf16.msra.mxu0 %v213
    %267 = vmatpush.bf16.msra.mxu0 %v212
    %268 = vmatpush.bf16.msra.mxu0 %v211
    %269 = vmatpush.bf16.msra.mxu0 %v210
    %270 = vmatpush.bf16.msra.mxu0 %v209
    %271 = vmatpush.bf16.msra.mxu0 %v208
    %272 = vmatmul.bf16.gmra.mxu0 %v108
    %v273 = vpop.f32.mrf.mxu0
    %v274 = vadd.f32 %v86, %v273
    %v275 = vpop.f32.mrf.mxu0
    %v276 = vadd.f32 %v86, %v275
    %277 = vmatmul.bf16.gmra.mxu0 %v111
    %v278 = vpop.f32.mrf.mxu0
    %v279 = vadd.f32 %v86, %v278
    %v280 = vpop.f32.mrf.mxu0
    %v281 = vadd.f32 %v86, %v280
    %282 = vdwg.mxu0
    %283 = vmatpush.bf16.msra.mxu0 %v223
    %284 = vmatpush.bf16.msra.mxu0 %v222
    %285 = vmatpush.bf16.msra.mxu0 %v221
    %286 = vmatpush.bf16.msra.mxu0 %v220
    %287 = vmatpush.bf16.msra.mxu0 %v219
    %288 = vmatpush.bf16.msra.mxu0 %v218
    %289 = vmatpush.bf16.msra.mxu0 %v217
    %290 = vmatpush.bf16.msra.mxu0 %v216
    %291 = vmatmul.bf16.gmra.mxu0 %v109
    %v292 = vpop.f32.mrf.mxu0
    %v293 = vadd.f32 %v274, %v292
    %v294 = vpop.f32.mrf.mxu0
    %v295 = vadd.f32 %v276, %v294
    %296 = vmatmul.bf16.gmra.mxu0 %v112
    %v297 = vpop.f32.mrf.mxu0
    %v298 = vadd.f32 %v279, %v297
    %v299 = vpop.f32.mrf.mxu0
    %v300 = vadd.f32 %v281, %v299
    %301 = vdwg.mxu0
    %302 = vmatpush.bf16.msra.mxu0 0
    %303 = vmatpush.bf16.msra.mxu0 %v262
    %304 = vmatpush.bf16.msra.mxu0 %v229
    %305 = vmatpush.bf16.msra.mxu0 %v228
    %306 = vmatpush.bf16.msra.mxu0 %v227
    %307 = vmatpush.bf16.msra.mxu0 %v226
    %308 = vmatpush.bf16.msra.mxu0 %v225
    %309 = vmatpush.bf16.msra.mxu0 %v224
    %310 = vmatmul.bf16.gmra.mxu0 %v255
    %v311 = vpop.f32.mrf.mxu0
    %v312 = vadd.f32 %v293, %v311
    %v313 = vpop.f32.mrf.mxu0
    %v314 = vadd.f32 %v295, %v313
    %315 = vmatmul.bf16.gmra.mxu0 %v258
    %v316 = vpop.f32.mrf.mxu0
    %v317 = vadd.f32 %v298, %v316
    %v318 = vpop.f32.mrf.mxu0
    %v319 = vadd.f32 %v300, %v318
    %320 = vdwg.mxu0
    %v321 = vlaneseq
    %v322 = vand.u32 %v321, 127
    %vm323 = vcmp.lt.s32.totalorder %v322, 80
    %s324 = sld [smem:[#allocation2]]
    %s325 = sld [smem:[#allocation2 + $0x1]]
    %v326 = vstv %s324
    %v327 = vstv %s325
    %v328 = vsel %vm323, %v326, %v327
    %vm329 = vcmp.ge.f32.partialorder %v312, 0.0
    %vm330 = vcmp.ge.f32.partialorder %v314, 0.0
    %vm331 = vcmp.ge.f32.partialorder %v317, 0.0
    %vm332 = vcmp.ge.f32.partialorder %v319, 0.0
    %v333 = vmul.f32 %v328, %v312
    %v334 = vmul.f32 %v328, %v314
    %v335 = vmul.f32 %v328, %v317
    %v336 = vmul.f32 %v328, %v319
    %v337 = vsel %vm329, %v312, %v333
    %v338 = vsel %vm330, %v314, %v334
    %v339 = vsel %vm331, %v317, %v335
    %v340 = vsel %vm332, %v319, %v336
    %v341 = vpack.c.bf16 %v337, %v337
    %v342 = vpack.c.bf16 %v338, %v338
    %v343 = vpack.c.bf16 %v339, %v339
    %v344 = vpack.c.bf16 %v340, %v340
    %vm345 = vcmask 977920
    %346 = vst.msk [vmem:[%s4] sm:$0xf] %vm345, %v341
    %347 = vst.msk [vmem:[%s4 + $0x4] sm:$0xf] %vm345, %v342
    %348 = vst.msk [vmem:[%s4 + $0x8] sm:$0xf] %vm345, %v343
    %349 = vst.msk [vmem:[%s4 + $0xc] sm:$0xf] %vm345, %v344
    // Predicated region
    $region22: #{net_forward.15} parent=1 // pred_check
      _
    $region23: #{net_forward.15} parent=1 // pred_check_branch
      %351 = sbr.rel (0) target = $region25
    $region24: #{net_forward.15} parent=1 // pred_region
      _
    $region25: #{net_forward.15} parent=1 // pred_fallthru
      _
    // Predicated region
    $region26: #{net_forward.15} parent=1 // pred_check
      _
    $region27: #{net_forward.15} parent=1 // pred_check_branch
      %353 = sbr.rel (0) target = $region29
    $region28: #{net_forward.15} parent=1 // pred_region
      _
    $region29: #{net_forward.15} parent=1 // pred_fallthru
      _
    %354 = vsyncpa [#allocation3], 1

// kernel: net_forward.17
$region0: #{net_forward.17}
  #allocation0 [shape = 'u32[]', space=smem, size = 0x4, offset = 0x4, fixed_abs, tag = 'smem constant byte address 0x4 - core index']
  #allocation1 [shape = 'u32[72,128]{1,0:T(1,128)}', space=vmem, size = 0x9000, scoped, tag = 'internal scratch']
  %s0 = inlined_call_operand.vmem [shape: bf16[2,640], index: 0, kind: input, shape index: {}]
  %s1 = inlined_call_operand.vmem [shape: bf16[640,128], index: 1, kind: input, shape index: {}]
  %s2 = inlined_call_operand.vmem [shape: f32[1,128], index: 2, kind: input, shape index: {}]
  %s3 = inlined_call_operand.vmem [shape: bf16[128,128], index: 3, kind: input, shape index: {}]
  %s4 = inlined_call_operand.vmem [shape: f32[1,128], index: 4, kind: input, shape index: {}]
  %s5 = inlined_call_operand.vmem [shape: bf16[128,2], index: 5, kind: input, shape index: {}]
  %s6 = inlined_call_operand.vmem [shape: f32[1,2], index: 6, kind: input, shape index: {}]
  %s7 = inlined_call_operand.vmem [shape: f32[2], index: 7, kind: input, shape index: {}]
  %s8 = inlined_call_operand.hbm [shape: f32[2,2], index: 8, kind: output, shape index: {}]
  %s9 = sld [smem:[#allocation0]]
  $region46: #{net_forward.17} parent=0
    _
  %s11 = ssub.s32 1, %s9
  %s12 = scalar_select 0, %s11, %s9
  $region1: #{net_forward.17} parent=0
    #allocation2 [shape = 'u8[512]{0}', space=smem, size = 0x200, scoped, tag = 'input window, operand 7, single buffered']
    #allocation3 [shape = 's32[1]{0}', space=sflag, size = 0x4, scoped, tag = 'scoped memory for net_forward.17']
    #allocation4 [shape = 's32[1]{0}', space=sflag, size = 0x4, scoped, tag = 'scoped memory for net_forward.17']
    #allocation5 [shape = 'u8[1024]{0}', space=vmem, size = 0x400, scoped, tag = 'output window, operand 0, single buffered']
    %13 = vsyncpa [#allocation4], 0
    %14 = vsyncpa [#allocation3], 0
    // Predicated region
    $region2: #{net_forward.17} parent=1 // pred_check
      _
    $region3: #{net_forward.17} parent=1 // pred_check_branch
      %16 = sbr.rel (0) target = $region5
    $region4: #{net_forward.17} parent=1 // pred_region
      _
    $region5: #{net_forward.17} parent=1 // pred_fallthru
      _
    // Predicated region
    $region6: #{net_forward.17} parent=1 // pred_check
      _
    $region7: #{net_forward.17} parent=1 // pred_check_branch
      %18 = sbr.rel (0) target = $region9
    $region8: #{net_forward.17} parent=1 // pred_region
      _
    $region9: #{net_forward.17} parent=1 // pred_fallthru
      _
    // Predicated region
    $region10: #{net_forward.17} parent=1 // pred_check
      _
    $region11: #{net_forward.17} parent=1 // pred_check_branch
      %20 = sbr.rel (0) target = $region13
    $region12: #{net_forward.17} parent=1 // pred_region
      _
    $region13: #{net_forward.17} parent=1 // pred_fallthru
      _
    // Predicated region
    $region14: #{net_forward.17} parent=1 // pred_check
      _
    $region15: #{net_forward.17} parent=1 // pred_check_branch
      %22 = sbr.rel (0) target = $region17
    $region16: #{net_forward.17} parent=1 // pred_region
      _
    $region17: #{net_forward.17} parent=1 // pred_fallthru
      _
    // Predicated region
    $region18: #{net_forward.17} parent=1 // pred_check
      _
    $region19: #{net_forward.17} parent=1 // pred_check_branch
      %24 = sbr.rel (0) target = $region21
    $region20: #{net_forward.17} parent=1 // pred_region
      _
    $region21: #{net_forward.17} parent=1 // pred_fallthru
      _
    // Predicated region
    $region22: #{net_forward.17} parent=1 // pred_check
      _
    $region23: #{net_forward.17} parent=1 // pred_check_branch
      %26 = sbr.rel (0) target = $region25
    $region24: #{net_forward.17} parent=1 // pred_region
      _
    $region25: #{net_forward.17} parent=1 // pred_fallthru
      _
    // Predicated region
    $region26: #{net_forward.17} parent=1 // pred_check
      _
    $region27: #{net_forward.17} parent=1 // pred_check_branch
      %28 = sbr.rel (0) target = $region29
    $region28: #{net_forward.17} parent=1 // pred_region
      _
    $region29: #{net_forward.17} parent=1 // pred_fallthru
      _
    // Predicated region
    $region30: #{net_forward.17} parent=1 // pred_check
      _
    $region31: #{net_forward.17} parent=1 // pred_check_branch
      %30 = sbr.rel (0) target = $region33
    $region32: #{net_forward.17} parent=1 // pred_region
      %32 = vsyncadd [#allocation4], 0
      %s34 = sshll.u32 %s7, 4
      %s35 = int_to_ptr.vmem [resolvable:$true] %s34
      %37 = dma.vmem_to_smem %s35, 16, [#allocation2], [#allocation4]
    $region33: #{net_forward.17} parent=1 // pred_fallthru
      _
    // Predicated region
    $region34: #{net_forward.17} parent=1 // pred_check
      _
    $region35: #{net_forward.17} parent=1 // pred_check_branch
      %39 = sbr.rel (0) target = $region37
    $region36: #{net_forward.17} parent=1 // pred_region
      %41 = dma.done [#allocation4], 16
    $region37: #{net_forward.17} parent=1 // pred_fallthru
      _
    %42 = sfence
    %v43 = vld [vmem:[%s0] sm:$0x1f]
    %v44 = vld [vmem:[%s1] sm:$0xf]
    %v45 = vld [vmem:[%s1 + $0x4] sm:$0xf]
    %v46 = vld [vmem:[%s1 + $0x8] sm:$0xf]
    %v47 = vld [vmem:[%s1 + $0xc] sm:$0xf]
    %v48 = vld [vmem:[%s1 + $0x10] sm:$0xf]
    %v49 = vld [vmem:[%s1 + $0x14] sm:$0xf]
    %v50 = vld [vmem:[%s1 + $0x18] sm:$0xf]
    %v51 = vld [vmem:[%s1 + $0x1c] sm:$0xf]
    %v52 = vld [vmem:[%s1 + $0x20] sm:$0xf]
    %v53 = vld [vmem:[%s1 + $0x24] sm:$0xf]
    %v54 = vld [vmem:[%s1 + $0x28] sm:$0xf]
    %v55 = vld [vmem:[%s1 + $0x2c] sm:$0xf]
    %v56 = vld [vmem:[%s1 + $0x30] sm:$0xf]
    %v57 = vld [vmem:[%s1 + $0x34] sm:$0xf]
    %v58 = vld [vmem:[%s1 + $0x38] sm:$0xf]
    %v59 = vld [vmem:[%s1 + $0x3c] sm:$0xf]
    %v60 = vld [vmem:[%s1 + $0x40] sm:$0xf]
    %v61 = vld [vmem:[%s1 + $0x44] sm:$0xf]
    %v62 = vld [vmem:[%s1 + $0x48] sm:$0xf]
    %v63 = vld [vmem:[%s1 + $0x4c] sm:$0xf]
    %v64 = vld [vmem:[%s1 + $0x50] sm:$0xf]
    %v65 = vld [vmem:[%s1 + $0x54] sm:$0xf]
    %v66 = vld [vmem:[%s1 + $0x58] sm:$0xf]
    %v67 = vld [vmem:[%s1 + $0x5c] sm:$0xf]
    %v68 = vld [vmem:[%s1 + $0x60] sm:$0xf]
    %v69 = vld [vmem:[%s1 + $0x64] sm:$0xf]
    %v70 = vld [vmem:[%s1 + $0x68] sm:$0xf]
    %v71 = vld [vmem:[%s1 + $0x6c] sm:$0xf]
    %v72 = vld [vmem:[%s1 + $0x70] sm:$0xf]
    %v73 = vld [vmem:[%s1 + $0x74] sm:$0xf]
    %v74 = vld [vmem:[%s1 + $0x78] sm:$0xf]
    %v75 = vld [vmem:[%s1 + $0x7c] sm:$0xf]
    %v76 = vld [vmem:[%s1 + $0x80] sm:$0xf]
    %v77 = vld [vmem:[%s1 + $0x84] sm:$0xf]
    %v78 = vld [vmem:[%s1 + $0x88] sm:$0xf]
    %v79 = vld [vmem:[%s1 + $0x8c] sm:$0xf]
    %v80 = vld [vmem:[%s1 + $0x90] sm:$0xf]
    %v81 = vld [vmem:[%s1 + $0x94] sm:$0xf]
    %v82 = vld [vmem:[%s1 + $0x98] sm:$0xf]
    %v83 = vld [vmem:[%s1 + $0x9c] sm:$0xf]
    %v84 = vld [vmem:[%s1 + $0xa0] sm:$0xf]
    %v85 = vld [vmem:[%s1 + $0xa4] sm:$0xf]
    %v86 = vld [vmem:[%s1 + $0xa8] sm:$0xf]
    %v87 = vld [vmem:[%s1 + $0xac] sm:$0xf]
    %v88 = vld [vmem:[%s1 + $0xb0] sm:$0xf]
    %v89 = vld [vmem:[%s1 + $0xb4] sm:$0xf]
    %v90 = vld [vmem:[%s1 + $0xb8] sm:$0xf]
    %v91 = vld [vmem:[%s1 + $0xbc] sm:$0xf]
    %v92 = vld [vmem:[%s1 + $0xc0] sm:$0xf]
    %v93 = vld [vmem:[%s1 + $0xc4] sm:$0xf]
    %v94 = vld [vmem:[%s1 + $0xc8] sm:$0xf]
    %v95 = vld [vmem:[%s1 + $0xcc] sm:$0xf]
    %v96 = vld [vmem:[%s1 + $0xd0] sm:$0xf]
    %v97 = vld [vmem:[%s1 + $0xd4] sm:$0xf]
    %v98 = vld [vmem:[%s1 + $0xd8] sm:$0xf]
    %v99 = vld [vmem:[%s1 + $0xdc] sm:$0xf]
    %v100 = vld [vmem:[%s1 + $0xe0] sm:$0xf]
    %v101 = vld [vmem:[%s1 + $0xe4] sm:$0xf]
    %v102 = vld [vmem:[%s1 + $0xe8] sm:$0xf]
    %v103 = vld [vmem:[%s1 + $0xec] sm:$0xf]
    %v104 = vld [vmem:[%s1 + $0xf0] sm:$0xf]
    %v105 = vld [vmem:[%s1 + $0xf4] sm:$0xf]
    %v106 = vld [vmem:[%s1 + $0xf8] sm:$0xf]
    %v107 = vld [vmem:[%s1 + $0xfc] sm:$0xf]
    %v108 = vld [vmem:[%s1 + $0x100] sm:$0xf]
    %v109 = vld [vmem:[%s1 + $0x104] sm:$0xf]
    %v110 = vld [vmem:[%s1 + $0x108] sm:$0xf]
    %v111 = vld [vmem:[%s1 + $0x10c] sm:$0xf]
    %v112 = vld [vmem:[%s1 + $0x110] sm:$0xf]
    %v113 = vld [vmem:[%s1 + $0x114] sm:$0xf]
    %v114 = vld [vmem:[%s1 + $0x118] sm:$0xf]
    %v115 = vld [vmem:[%s1 + $0x11c] sm:$0xf]
    %v116 = vld [vmem:[%s1 + $0x120] sm:$0xf]
    %v117 = vld [vmem:[%s1 + $0x124] sm:$0xf]
    %v118 = vld [vmem:[%s1 + $0x128] sm:$0xf]
    %v119 = vld [vmem:[%s1 + $0x12c] sm:$0xf]
    %v120 = vld [vmem:[%s1 + $0x130] sm:$0xf]
    %v121 = vld [vmem:[%s1 + $0x134] sm:$0xf]
    %v122 = vld [vmem:[%s1 + $0x138] sm:$0xf]
    %v123 = vld [vmem:[%s1 + $0x13c] sm:$0xf]
    %v124 = vld [vmem:[%s2] sm:$0x1]
    %v126 = vperm.slane %v124, 0
    %129 = vst [vmem:[#allocation1] ss:$9 sm:$0xff] %v43
    %v130 = vld [vmem:[#allocation1] sm:$0xff]
    %v131 = vld [vmem:[#allocation1 + $0x9] sm:$0xff]
    %v132 = vld [vmem:[#allocation1 + $0x12] sm:$0xff]
    %v133 = vld [vmem:[#allocation1 + $0x1b] sm:$0xff]
    %v134 = vld [vmem:[#allocation1 + $0x24] sm:$0xff]
    %v220 = vunpack.c.l.b16 %v44
    %v221 = vunpack.c.l.b16 %v45
    %v222 = vunpack.c.l.b16 %v46
    %v223 = vunpack.c.l.b16 %v47
    %v224 = vunpack.c.l.b16 %v48
    %v225 = vunpack.c.l.b16 %v49
    %v226 = vunpack.c.l.b16 %v50
    %v227 = vunpack.c.l.b16 %v51
    %v228 = vunpack.c.l.b16 %v52
    %v229 = vunpack.c.l.b16 %v53
    %v230 = vunpack.c.l.b16 %v54
    %v231 = vunpack.c.l.b16 %v55
    %v232 = vunpack.c.l.b16 %v56
    %v233 = vunpack.c.l.b16 %v57
    %v234 = vunpack.c.l.b16 %v58
    %v235 = vunpack.c.l.b16 %v59
    %v236 = vunpack.c.l.b16 %v60
    %v237 = vunpack.c.l.b16 %v61
    %v238 = vunpack.c.l.b16 %v62
    %v239 = vunpack.c.l.b16 %v63
    %v240 = vunpack.c.l.b16 %v64
    %v241 = vunpack.c.l.b16 %v65
    %v242 = vunpack.c.l.b16 %v66
    %v243 = vunpack.c.l.b16 %v67
    %v244 = vunpack.c.l.b16 %v68
    %v245 = vunpack.c.l.b16 %v69
    %v246 = vunpack.c.l.b16 %v70
    %v247 = vunpack.c.l.b16 %v71
    %v248 = vunpack.c.l.b16 %v72
    %v249 = vunpack.c.l.b16 %v73
    %v250 = vunpack.c.l.b16 %v74
    %v251 = vunpack.c.l.b16 %v75
    %v252 = vunpack.c.l.b16 %v76
    %v253 = vunpack.c.l.b16 %v77
    %v254 = vunpack.c.l.b16 %v78
    %v255 = vunpack.c.l.b16 %v79
    %v256 = vunpack.c.l.b16 %v80
    %v257 = vunpack.c.l.b16 %v81
    %v258 = vunpack.c.l.b16 %v82
    %v259 = vunpack.c.l.b16 %v83
    %v260 = vunpack.c.l.b16 %v84
    %v261 = vunpack.c.l.b16 %v85
    %v262 = vunpack.c.l.b16 %v86
    %v263 = vunpack.c.l.b16 %v87
    %v264 = vunpack.c.l.b16 %v88
    %v265 = vunpack.c.l.b16 %v89
    %v266 = vunpack.c.l.b16 %v90
    %v267 = vunpack.c.l.b16 %v91
    %v268 = vunpack.c.l.b16 %v92
    %v269 = vunpack.c.l.b16 %v93
    %v270 = vunpack.c.l.b16 %v94
    %v271 = vunpack.c.l.b16 %v95
    %v272 = vunpack.c.l.b16 %v96
    %v273 = vunpack.c.l.b16 %v97
    %v274 = vunpack.c.l.b16 %v98
    %v275 = vunpack.c.l.b16 %v99
    %v276 = vunpack.c.l.b16 %v100
    %v277 = vunpack.c.l.b16 %v101
    %v278 = vunpack.c.l.b16 %v102
    %v279 = vunpack.c.l.b16 %v103
    %v280 = vunpack.c.l.b16 %v104
    %v281 = vunpack.c.l.b16 %v105
    %v282 = vunpack.c.l.b16 %v106
    %v283 = vunpack.c.l.b16 %v107
    %v284 = vunpack.c.l.b16 %v108
    %v285 = vunpack.c.l.b16 %v109
    %v286 = vunpack.c.l.b16 %v110
    %v287 = vunpack.c.l.b16 %v111
    %v288 = vunpack.c.l.b16 %v112
    %v289 = vunpack.c.l.b16 %v113
    %v290 = vunpack.c.l.b16 %v114
    %v291 = vunpack.c.l.b16 %v115
    %v292 = vunpack.c.l.b16 %v116
    %v293 = vunpack.c.l.b16 %v117
    %v294 = vunpack.c.l.b16 %v118
    %v295 = vunpack.c.l.b16 %v119
    %v296 = vunpack.c.l.b16 %v120
    %v297 = vunpack.c.l.b16 %v121
    %v298 = vunpack.c.l.b16 %v122
    %v299 = vunpack.c.l.b16 %v123
    %v300 = vpack.c.b16 %v221, %v220
    %v301 = vpack.c.b16 %v223, %v222
    %v302 = vpack.c.b16 %v225, %v224
    %v303 = vpack.c.b16 %v227, %v226
    %v304 = vpack.c.b16 %v229, %v228
    %v305 = vpack.c.b16 %v231, %v230
    %v306 = vpack.c.b16 %v233, %v232
    %v307 = vpack.c.b16 %v235, %v234
    %v308 = vpack.c.b16 %v237, %v236
    %v309 = vpack.c.b16 %v239, %v238
    %v310 = vpack.c.b16 %v241, %v240
    %v311 = vpack.c.b16 %v243, %v242
    %v312 = vpack.c.b16 %v245, %v244
    %v313 = vpack.c.b16 %v247, %v246
    %v314 = vpack.c.b16 %v249, %v248
    %v315 = vpack.c.b16 %v251, %v250
    %v316 = vpack.c.b16 %v253, %v252
    %v317 = vpack.c.b16 %v255, %v254
    %v318 = vpack.c.b16 %v257, %v256
    %v319 = vpack.c.b16 %v259, %v258
    %v320 = vpack.c.b16 %v261, %v260
    %v321 = vpack.c.b16 %v263, %v262
    %v322 = vpack.c.b16 %v265, %v264
    %v323 = vpack.c.b16 %v267, %v266
    %v324 = vpack.c.b16 %v269, %v268
    %v325 = vpack.c.b16 %v271, %v270
    %v326 = vpack.c.b16 %v273, %v272
    %v327 = vpack.c.b16 %v275, %v274
    %v328 = vpack.c.b16 %v277, %v276
    %v329 = vpack.c.b16 %v279, %v278
    %v330 = vpack.c.b16 %v281, %v280
    %v331 = vpack.c.b16 %v283, %v282
    %v332 = vpack.c.b16 %v285, %v284
    %v333 = vpack.c.b16 %v287, %v286
    %v334 = vpack.c.b16 %v289, %v288
    %v335 = vpack.c.b16 %v291, %v290
    %v336 = vpack.c.b16 %v293, %v292
    %v337 = vpack.c.b16 %v295, %v294
    %v338 = vpack.c.b16 %v297, %v296
    %v339 = vpack.c.b16 %v299, %v298
    %380 = vmatpush.bf16.msra.mxu0 %v307
    %381 = vmatpush.bf16.msra.mxu0 %v306
    %382 = vmatpush.bf16.msra.mxu0 %v305
    %383 = vmatpush.bf16.msra.mxu0 %v304
    %384 = vmatpush.bf16.msra.mxu0 %v303
    %385 = vmatpush.bf16.msra.mxu0 %v302
    %386 = vmatpush.bf16.msra.mxu0 %v301
    %387 = vmatpush.bf16.msra.mxu0 %v300
    %388 = vmatmul.bf16.gmra.mxu0 %v130
    %v389 = vpop.f32.mrf.mxu0
    %v390 = vadd.f32 %v126, %v389
    %v391 = vpop.f32.mrf.mxu0
    %392 = vdwg.mxu0
    %393 = vmatpush.bf16.msra.mxu0 %v315
    %394 = vmatpush.bf16.msra.mxu0 %v314
    %395 = vmatpush.bf16.msra.mxu0 %v313
    %396 = vmatpush.bf16.msra.mxu0 %v312
    %397 = vmatpush.bf16.msra.mxu0 %v311
    %398 = vmatpush.bf16.msra.mxu0 %v310
    %399 = vmatpush.bf16.msra.mxu0 %v309
    %400 = vmatpush.bf16.msra.mxu0 %v308
    %401 = vmatmul.bf16.gmra.mxu0 %v131
    %v402 = vpop.f32.mrf.mxu0
    %v403 = vadd.f32 %v390, %v402
    %v404 = vpop.f32.mrf.mxu0
    %405 = vdwg.mxu0
    %406 = vmatpush.bf16.msra.mxu0 %v323
    %407 = vmatpush.bf16.msra.mxu0 %v322
    %408 = vmatpush.bf16.msra.mxu0 %v321
    %409 = vmatpush.bf16.msra.mxu0 %v320
    %410 = vmatpush.bf16.msra.mxu0 %v319
    %411 = vmatpush.bf16.msra.mxu0 %v318
    %412 = vmatpush.bf16.msra.mxu0 %v317
    %413 = vmatpush.bf16.msra.mxu0 %v316
    %414 = vmatmul.bf16.gmra.mxu0 %v132
    %v415 = vpop.f32.mrf.mxu0
    %v416 = vadd.f32 %v403, %v415
    %v417 = vpop.f32.mrf.mxu0
    %418 = vdwg.mxu0
    %419 = vmatpush.bf16.msra.mxu0 %v331
    %420 = vmatpush.bf16.msra.mxu0 %v330
    %421 = vmatpush.bf16.msra.mxu0 %v329
    %422 = vmatpush.bf16.msra.mxu0 %v328
    %423 = vmatpush.bf16.msra.mxu0 %v327
    %424 = vmatpush.bf16.msra.mxu0 %v326
    %425 = vmatpush.bf16.msra.mxu0 %v325
    %426 = vmatpush.bf16.msra.mxu0 %v324
    %427 = vmatmul.bf16.gmra.mxu0 %v133
    %v428 = vpop.f32.mrf.mxu0
    %v429 = vadd.f32 %v416, %v428
    %v430 = vpop.f32.mrf.mxu0
    %431 = vdwg.mxu0
    %432 = vmatpush.bf16.msra.mxu0 %v339
    %433 = vmatpush.bf16.msra.mxu0 %v338
    %434 = vmatpush.bf16.msra.mxu0 %v337
    %435 = vmatpush.bf16.msra.mxu0 %v336
    %436 = vmatpush.bf16.msra.mxu0 %v335
    %437 = vmatpush.bf16.msra.mxu0 %v334
    %438 = vmatpush.bf16.msra.mxu0 %v333
    %439 = vmatpush.bf16.msra.mxu0 %v332
    %440 = vmatmul.bf16.gmra.mxu0 %v134
    %v441 = vpop.f32.mrf.mxu0
    %v442 = vadd.f32 %v429, %v441
    %v443 = vpop.f32.mrf.mxu0
    %444 = vdwg.mxu0
    %vm445 = vcmp.ge.f32.partialorder %v442, 0.0
    %s446 = sld [smem:[#allocation2]]
    %v447 = vstv %s446
    %v448 = vmul.f32 %v447, %v442
    %v449 = vsel %vm445, %v442, %v448
    %v450 = vpack.c.bf16 %v449, %v449
    %v451 = vld [vmem:[%s3] sm:$0xf]
    %v452 = vld [vmem:[%s3 + $0x4] sm:$0xf]
    %v453 = vld [vmem:[%s3 + $0x8] sm:$0xf]
    %v454 = vld [vmem:[%s3 + $0xc] sm:$0xf]
    %v455 = vld [vmem:[%s3 + $0x10] sm:$0xf]
    %v456 = vld [vmem:[%s3 + $0x14] sm:$0xf]
    %v457 = vld [vmem:[%s3 + $0x18] sm:$0xf]
    %v458 = vld [vmem:[%s3 + $0x1c] sm:$0xf]
    %v459 = vld [vmem:[%s3 + $0x20] sm:$0xf]
    %v460 = vld [vmem:[%s3 + $0x24] sm:$0xf]
    %v461 = vld [vmem:[%s3 + $0x28] sm:$0xf]
    %v462 = vld [vmem:[%s3 + $0x2c] sm:$0xf]
    %v463 = vld [vmem:[%s3 + $0x30] sm:$0xf]
    %v464 = vld [vmem:[%s3 + $0x34] sm:$0xf]
    %v465 = vld [vmem:[%s3 + $0x38] sm:$0xf]
    %v466 = vld [vmem:[%s3 + $0x3c] sm:$0xf]
    %v467 = vld [vmem:[%s4] sm:$0x1]
    %v469 = vperm.slane %v467, 0
    %v487 = vunpack.c.l.b16 %v451
    %v488 = vunpack.c.l.b16 %v452
    %v489 = vunpack.c.l.b16 %v453
    %v490 = vunpack.c.l.b16 %v454
    %v491 = vunpack.c.l.b16 %v455
    %v492 = vunpack.c.l.b16 %v456
    %v493 = vunpack.c.l.b16 %v457
    %v494 = vunpack.c.l.b16 %v458
    %v495 = vunpack.c.l.b16 %v459
    %v496 = vunpack.c.l.b16 %v460
    %v497 = vunpack.c.l.b16 %v461
    %v498 = vunpack.c.l.b16 %v462
    %v499 = vunpack.c.l.b16 %v463
    %v500 = vunpack.c.l.b16 %v464
    %v501 = vunpack.c.l.b16 %v465
    %v502 = vunpack.c.l.b16 %v466
    %v503 = vpack.c.b16 %v488, %v487
    %v504 = vpack.c.b16 %v490, %v489
    %v505 = vpack.c.b16 %v492, %v491
    %v506 = vpack.c.b16 %v494, %v493
    %v507 = vpack.c.b16 %v496, %v495
    %v508 = vpack.c.b16 %v498, %v497
    %v509 = vpack.c.b16 %v500, %v499
    %v510 = vpack.c.b16 %v502, %v501
    %519 = vmatpush.bf16.msra.mxu0 %v510
    %520 = vmatpush.bf16.msra.mxu0 %v509
    %521 = vmatpush.bf16.msra.mxu0 %v508
    %522 = vmatpush.bf16.msra.mxu0 %v507
    %523 = vmatpush.bf16.msra.mxu0 %v506
    %524 = vmatpush.bf16.msra.mxu0 %v505
    %525 = vmatpush.bf16.msra.mxu0 %v504
    %526 = vmatpush.bf16.msra.mxu0 %v503
    %527 = vmatmul.bf16.gmra.mxu0 %v450
    %v528 = vpop.f32.mrf.mxu0
    %v529 = vadd.f32 %v469, %v528
    %v530 = vpop.f32.mrf.mxu0
    %531 = vdwg.mxu0
    %vm532 = vcmp.ge.f32.partialorder %v529, 0.0
    %s533 = sld [smem:[#allocation2 + $0x1]]
    %v534 = vstv %s533
    %v535 = vmul.f32 %v534, %v529
    %v536 = vsel %vm532, %v529, %v535
    %v537 = vpack.c.bf16 %v536, %v536
    %v538 = vld [vmem:[%s5] sm:$0xf]
    %v539 = vld [vmem:[%s5 + $0x4] sm:$0xf]
    %v540 = vld [vmem:[%s5 + $0x8] sm:$0xf]
    %v541 = vld [vmem:[%s5 + $0xc] sm:$0xf]
    %v542 = vld [vmem:[%s5 + $0x10] sm:$0xf]
    %v543 = vld [vmem:[%s5 + $0x14] sm:$0xf]
    %v544 = vld [vmem:[%s5 + $0x18] sm:$0xf]
    %v545 = vld [vmem:[%s5 + $0x1c] sm:$0xf]
    %v546 = vld [vmem:[%s5 + $0x20] sm:$0xf]
    %v547 = vld [vmem:[%s5 + $0x24] sm:$0xf]
    %v548 = vld [vmem:[%s5 + $0x28] sm:$0xf]
    %v549 = vld [vmem:[%s5 + $0x2c] sm:$0xf]
    %v550 = vld [vmem:[%s5 + $0x30] sm:$0xf]
    %v551 = vld [vmem:[%s5 + $0x34] sm:$0xf]
    %v552 = vld [vmem:[%s5 + $0x38] sm:$0xf]
    %v553 = vld [vmem:[%s5 + $0x3c] sm:$0xf]
    %v554 = vld [vmem:[%s6] sm:$0x1]
    %v556 = vperm.slane %v554, 0
    %v574 = vunpack.c.l.b16 %v538
    %v575 = vunpack.c.l.b16 %v539
    %v576 = vunpack.c.l.b16 %v540
    %v577 = vunpack.c.l.b16 %v541
    %v578 = vunpack.c.l.b16 %v542
    %v579 = vunpack.c.l.b16 %v543
    %v580 = vunpack.c.l.b16 %v544
    %v581 = vunpack.c.l.b16 %v545
    %v582 = vunpack.c.l.b16 %v546
    %v583 = vunpack.c.l.b16 %v547
    %v584 = vunpack.c.l.b16 %v548
    %v585 = vunpack.c.l.b16 %v549
    %v586 = vunpack.c.l.b16 %v550
    %v587 = vunpack.c.l.b16 %v551
    %v588 = vunpack.c.l.b16 %v552
    %v589 = vunpack.c.l.b16 %v553
    %v590 = vpack.c.b16 %v575, %v574
    %v591 = vpack.c.b16 %v577, %v576
    %v592 = vpack.c.b16 %v579, %v578
    %v593 = vpack.c.b16 %v581, %v580
    %v594 = vpack.c.b16 %v583, %v582
    %v595 = vpack.c.b16 %v585, %v584
    %v596 = vpack.c.b16 %v587, %v586
    %v597 = vpack.c.b16 %v589, %v588
    %606 = vmatpush.bf16.msra.mxu0 %v597
    %607 = vmatpush.bf16.msra.mxu0 %v596
    %608 = vmatpush.bf16.msra.mxu0 %v595
    %609 = vmatpush.bf16.msra.mxu0 %v594
    %610 = vmatpush.bf16.msra.mxu0 %v593
    %611 = vmatpush.bf16.msra.mxu0 %v592
    %612 = vmatpush.bf16.msra.mxu0 %v591
    %613 = vmatpush.bf16.msra.mxu0 %v590
    %614 = vmatmul.bf16.gmra.mxu0 %v537
    %v615 = vpop.f32.mrf.mxu0
    %v616 = vadd.f32 %v556, %v615
    %v617 = vpop.f32.mrf.mxu0
    %618 = vdwg.mxu0
    %vm619 = vcmask 9216
    %v620 = vsel %vm619, %v616, -inf
    %621 = vmax.xlane.f32.xlu0 %v620
    %v622 = vpop.xlane.xlu0 %621
    %v623 = vsub.f32 %v616, %v622
    %v624 = vmul.f32 %v623, 1.442695
    %v625 = vpow.pop %v624
    %v626 = vsel %vm619, %v625, 0.0
    %627 = vadd.xlane.f32.xlu0 %v626
    %v628 = vpop.xlane.xlu0 %627
    %v629 = vrcp.pop %v628
    %v630 = vmul.f32 %v628, %v629
    %v631 = vsub.f32 1.0, %v630
    %v632 = vmul.f32 %v629, %v631
    %v633 = vadd.f32 %v629, %v632
    %vm634 = vweird.f32 %v628
    %vm635 = vweird.f32 %v629
    %vm636 = vmor %vm634, %vm635
    %v637 = vsel %vm636, %v629, %v633
    %v638 = vand.u32 2147483647, %v628
    %vm639 = vcmp.eq.f32.partialorder %v638, 8.507059e+37
    %v640 = vand.u32 %v628, 2147483648
    %v641 = vor.u32 1.1754944e-38, %v640
    %v642 = vsel %vm639, %v641, %v637
    %v643 = vmul.f32 %v625, %v642
    %644 = vst.msk [vmem:[#allocation5] sm:$0x3] %vm619, %v643
    // Predicated region
    $region38: #{net_forward.17} parent=1 // pred_check
      _
    $region39: #{net_forward.17} parent=1 // pred_check_branch
      %646 = sbr.rel (0) target = $region41
    $region40: #{net_forward.17} parent=1 // pred_region
      %648 = vsyncadd [#allocation3], 0
      %s650 = sshll.u32 [#allocation5], 4
      %s651 = int_to_ptr.vmem [resolvable:$true] %s650
      %s652 = sshll.u32 %s8, 4
      %s653 = int_to_ptr.hbm [resolvable:$true] %s652
      %655 = dma.vmem_to_hbm [thread:$0]  %s651, 32, %s653, [#allocation3]
    $region41: #{net_forward.17} parent=1 // pred_fallthru
      _
    // Predicated region
    $region42: #{net_forward.17} parent=1 // pred_check
      _
    $region43: #{net_forward.17} parent=1 // pred_check_branch
      %657 = sbr.rel (0) target = $region45
    $region44: #{net_forward.17} parent=1 // pred_region
      %659 = dma.done [#allocation3], 32
    $region45: #{net_forward.17} parent=1 // pred_fallthru
      _
    %660 = vsyncpa [#allocation3], 1
    %661 = vsyncpa [#allocation4], 1

// kernel: net_forward.16
$region0: #{net_forward.16}
  #allocation0 [shape = 'u32[]', space=smem, size = 0x4, offset = 0x4, fixed_abs, tag = 'smem constant byte address 0x4 - core index']
  #allocation1 [shape = 'u32[72,128]{1,0:T(1,128)}', space=vmem, size = 0x9000, scoped, tag = 'internal scratch']
  %s0 = inlined_call_operand.vmem [shape: bf16[2,1280], index: 0, kind: input, shape index: {}]
  %s1 = inlined_call_operand.vmem [shape: bf16[1280,128], index: 1, kind: input, shape index: {}]
  %s2 = inlined_call_operand.vmem [shape: f32[1,128], index: 2, kind: input, shape index: {}]
  %s3 = inlined_call_operand.vmem [shape: bf16[128,128], index: 3, kind: input, shape index: {}]
  %s4 = inlined_call_operand.vmem [shape: f32[1,128], index: 4, kind: input, shape index: {}]
  %s5 = inlined_call_operand.vmem [shape: bf16[128,42], index: 5, kind: input, shape index: {}]
  %s6 = inlined_call_operand.vmem [shape: f32[1,42], index: 6, kind: input, shape index: {}]
  %s7 = inlined_call_operand.vmem [shape: f32[2], index: 7, kind: input, shape index: {}]
  %s8 = inlined_call_operand.hbm [shape: f32[2,42], index: 8, kind: output, shape index: {}]
  %s9 = sld [smem:[#allocation0]]
  $region46: #{net_forward.16} parent=0
    _
  %s11 = ssub.s32 1, %s9
  %s12 = scalar_select 0, %s11, %s9
  $region1: #{net_forward.16} parent=0
    #allocation2 [shape = 'u8[512]{0}', space=smem, size = 0x200, scoped, tag = 'input window, operand 7, single buffered']
    #allocation3 [shape = 's32[1]{0}', space=sflag, size = 0x4, scoped, tag = 'scoped memory for net_forward.16']
    #allocation4 [shape = 's32[1]{0}', space=sflag, size = 0x4, scoped, tag = 'scoped memory for net_forward.16']
    #allocation5 [shape = 'u8[1024]{0}', space=vmem, size = 0x400, scoped, tag = 'output window, operand 0, single buffered']
    %13 = vsyncpa [#allocation4], 0
    %14 = vsyncpa [#allocation3], 0
    // Predicated region
    $region2: #{net_forward.16} parent=1 // pred_check
      _
    $region3: #{net_forward.16} parent=1 // pred_check_branch
      %16 = sbr.rel (0) target = $region5
    $region4: #{net_forward.16} parent=1 // pred_region
      _
    $region5: #{net_forward.16} parent=1 // pred_fallthru
      _
    // Predicated region
    $region6: #{net_forward.16} parent=1 // pred_check
      _
    $region7: #{net_forward.16} parent=1 // pred_check_branch
      %18 = sbr.rel (0) target = $region9
    $region8: #{net_forward.16} parent=1 // pred_region
      _
    $region9: #{net_forward.16} parent=1 // pred_fallthru
      _
    // Predicated region
    $region10: #{net_forward.16} parent=1 // pred_check
      _
    $region11: #{net_forward.16} parent=1 // pred_check_branch
      %20 = sbr.rel (0) target = $region13
    $region12: #{net_forward.16} parent=1 // pred_region
      _
    $region13: #{net_forward.16} parent=1 // pred_fallthru
      _
    // Predicated region
    $region14: #{net_forward.16} parent=1 // pred_check
      _
    $region15: #{net_forward.16} parent=1 // pred_check_branch
      %22 = sbr.rel (0) target = $region17
    $region16: #{net_forward.16} parent=1 // pred_region
      _
    $region17: #{net_forward.16} parent=1 // pred_fallthru
      _
    // Predicated region
    $region18: #{net_forward.16} parent=1 // pred_check
      _
    $region19: #{net_forward.16} parent=1 // pred_check_branch
      %24 = sbr.rel (0) target = $region21
    $region20: #{net_forward.16} parent=1 // pred_region
      _
    $region21: #{net_forward.16} parent=1 // pred_fallthru
      _
    // Predicated region
    $region22: #{net_forward.16} parent=1 // pred_check
      _
    $region23: #{net_forward.16} parent=1 // pred_check_branch
      %26 = sbr.rel (0) target = $region25
    $region24: #{net_forward.16} parent=1 // pred_region
      _
    $region25: #{net_forward.16} parent=1 // pred_fallthru
      _
    // Predicated region
    $region26: #{net_forward.16} parent=1 // pred_check
      _
    $region27: #{net_forward.16} parent=1 // pred_check_branch
      %28 = sbr.rel (0) target = $region29
    $region28: #{net_forward.16} parent=1 // pred_region
      _
    $region29: #{net_forward.16} parent=1 // pred_fallthru
      _
    // Predicated region
    $region30: #{net_forward.16} parent=1 // pred_check
      _
    $region31: #{net_forward.16} parent=1 // pred_check_branch
      %30 = sbr.rel (0) target = $region33
    $region32: #{net_forward.16} parent=1 // pred_region
      %32 = vsyncadd [#allocation4], 0
      %s34 = sshll.u32 %s7, 4
      %s35 = int_to_ptr.vmem [resolvable:$true] %s34
      %37 = dma.vmem_to_smem %s35, 16, [#allocation2], [#allocation4]
    $region33: #{net_forward.16} parent=1 // pred_fallthru
      _
    // Predicated region
    $region34: #{net_forward.16} parent=1 // pred_check
      _
    $region35: #{net_forward.16} parent=1 // pred_check_branch
      %39 = sbr.rel (0) target = $region37
    $region36: #{net_forward.16} parent=1 // pred_region
      %41 = dma.done [#allocation4], 16
    $region37: #{net_forward.16} parent=1 // pred_fallthru
      _
    %42 = sfence
    %v43 = vld [vmem:[%s0] sm:$0xff]
    %v44 = vld [vmem:[%s0 + $0x8] sm:$0x3]
    %v45 = vld [vmem:[%s1] sm:$0xf]
    %v46 = vld [vmem:[%s1 + $0x4] sm:$0xf]
    %v47 = vld [vmem:[%s1 + $0x8] sm:$0xf]
    %v48 = vld [vmem:[%s1 + $0xc] sm:$0xf]
    %v49 = vld [vmem:[%s1 + $0x10] sm:$0xf]
    %v50 = vld [vmem:[%s1 + $0x14] sm:$0xf]
    %v51 = vld [vmem:[%s1 + $0x18] sm:$0xf]
    %v52 = vld [vmem:[%s1 + $0x1c] sm:$0xf]
    %v53 = vld [vmem:[%s1 + $0x20] sm:$0xf]
    %v54 = vld [vmem:[%s1 + $0x24] sm:$0xf]
    %v55 = vld [vmem:[%s1 + $0x28] sm:$0xf]
    %v56 = vld [vmem:[%s1 + $0x2c] sm:$0xf]
    %v57 = vld [vmem:[%s1 + $0x30] sm:$0xf]
    %v58 = vld [vmem:[%s1 + $0x34] sm:$0xf]
    %v59 = vld [vmem:[%s1 + $0x38] sm:$0xf]
    %v60 = vld [vmem:[%s1 + $0x3c] sm:$0xf]
    %v61 = vld [vmem:[%s1 + $0x40] sm:$0xf]
    %v62 = vld [vmem:[%s1 + $0x44] sm:$0xf]
    %v63 = vld [vmem:[%s1 + $0x48] sm:$0xf]
    %v64 = vld [vmem:[%s1 + $0x4c] sm:$0xf]
    %v65 = vld [vmem:[%s1 + $0x50] sm:$0xf]
    %v66 = vld [vmem:[%s1 + $0x54] sm:$0xf]
    %v67 = vld [vmem:[%s1 + $0x58] sm:$0xf]
    %v68 = vld [vmem:[%s1 + $0x5c] sm:$0xf]
    %v69 = vld [vmem:[%s1 + $0x60] sm:$0xf]
    %v70 = vld [vmem:[%s1 + $0x64] sm:$0xf]
    %v71 = vld [vmem:[%s1 + $0x68] sm:$0xf]
    %v72 = vld [vmem:[%s1 + $0x6c] sm:$0xf]
    %v73 = vld [vmem:[%s1 + $0x70] sm:$0xf]
    %v74 = vld [vmem:[%s1 + $0x74] sm:$0xf]
    %v75 = vld [vmem:[%s1 + $0x78] sm:$0xf]
    %v76 = vld [vmem:[%s1 + $0x7c] sm:$0xf]
    %v77 = vld [vmem:[%s1 + $0x80] sm:$0xf]
    %v78 = vld [vmem:[%s1 + $0x84] sm:$0xf]
    %v79 = vld [vmem:[%s1 + $0x88] sm:$0xf]
    %v80 = vld [vmem:[%s1 + $0x8c] sm:$0xf]
    %v81 = vld [vmem:[%s1 + $0x90] sm:$0xf]
    %v82 = vld [vmem:[%s1 + $0x94] sm:$0xf]
    %v83 = vld [vmem:[%s1 + $0x98] sm:$0xf]
    %v84 = vld [vmem:[%s1 + $0x9c] sm:$0xf]
    %v85 = vld [vmem:[%s1 + $0xa0] sm:$0xf]
    %v86 = vld [vmem:[%s1 + $0xa4] sm:$0xf]
    %v87 = vld [vmem:[%s1 + $0xa8] sm:$0xf]
    %v88 = vld [vmem:[%s1 + $0xac] sm:$0xf]
    %v89 = vld [vmem:[%s1 + $0xb0] sm:$0xf]
    %v90 = vld [vmem:[%s1 + $0xb4] sm:$0xf]
    %v91 = vld [vmem:[%s1 + $0xb8] sm:$0xf]
    %v92 = vld [vmem:[%s1 + $0xbc] sm:$0xf]
    %v93 = vld [vmem:[%s1 + $0xc0] sm:$0xf]
    %v94 = vld [vmem:[%s1 + $0xc4] sm:$0xf]
    %v95 = vld [vmem:[%s1 + $0xc8] sm:$0xf]
    %v96 = vld [vmem:[%s1 + $0xcc] sm:$0xf]
    %v97 = vld [vmem:[%s1 + $0xd0] sm:$0xf]
    %v98 = vld [vmem:[%s1 + $0xd4] sm:$0xf]
    %v99 = vld [vmem:[%s1 + $0xd8] sm:$0xf]
    %v100 = vld [vmem:[%s1 + $0xdc] sm:$0xf]
    %v101 = vld [vmem:[%s1 + $0xe0] sm:$0xf]
    %v102 = vld [vmem:[%s1 + $0xe4] sm:$0xf]
    %v103 = vld [vmem:[%s1 + $0xe8] sm:$0xf]
    %v104 = vld [vmem:[%s1 + $0xec] sm:$0xf]
    %v105 = vld [vmem:[%s1 + $0xf0] sm:$0xf]
    %v106 = vld [vmem:[%s1 + $0xf4] sm:$0xf]
    %v107 = vld [vmem:[%s1 + $0xf8] sm:$0xf]
    %v108 = vld [vmem:[%s1 + $0xfc] sm:$0xf]
    %v109 = vld [vmem:[%s1 + $0x100] sm:$0xf]
    %v110 = vld [vmem:[%s1 + $0x104] sm:$0xf]
    %v111 = vld [vmem:[%s1 + $0x108] sm:$0xf]
    %v112 = vld [vmem:[%s1 + $0x10c] sm:$0xf]
    %v113 = vld [vmem:[%s1 + $0x110] sm:$0xf]
    %v114 = vld [vmem:[%s1 + $0x114] sm:$0xf]
    %v115 = vld [vmem:[%s1 + $0x118] sm:$0xf]
    %v116 = vld [vmem:[%s1 + $0x11c] sm:$0xf]
    %v117 = vld [vmem:[%s1 + $0x120] sm:$0xf]
    %v118 = vld [vmem:[%s1 + $0x124] sm:$0xf]
    %v119 = vld [vmem:[%s1 + $0x128] sm:$0xf]
    %v120 = vld [vmem:[%s1 + $0x12c] sm:$0xf]
    %v121 = vld [vmem:[%s1 + $0x130] sm:$0xf]
    %v122 = vld [vmem:[%s1 + $0x134] sm:$0xf]
    %v123 = vld [vmem:[%s1 + $0x138] sm:$0xf]
    %v124 = vld [vmem:[%s1 + $0x13c] sm:$0xf]
    %v125 = vld [vmem:[%s1 + $0x140] sm:$0xf]
    %v126 = vld [vmem:[%s1 + $0x144] sm:$0xf]
    %v127 = vld [vmem:[%s1 + $0x148] sm:$0xf]
    %v128 = vld [vmem:[%s1 + $0x14c] sm:$0xf]
    %v129 = vld [vmem:[%s1 + $0x150] sm:$0xf]
    %v130 = vld [vmem:[%s1 + $0x154] sm:$0xf]
    %v131 = vld [vmem:[%s1 + $0x158] sm:$0xf]
    %v132 = vld [vmem:[%s1 + $0x15c] sm:$0xf]
    %v133 = vld [vmem:[%s1 + $0x160] sm:$0xf]
    %v134 = vld [vmem:[%s1 + $0x164] sm:$0xf]
    %v135 = vld [vmem:[%s1 + $0x168] sm:$0xf]
    %v136 = vld [vmem:[%s1 + $0x16c] sm:$0xf]
    %v137 = vld [vmem:[%s1 + $0x170] sm:$0xf]
    %v138 = vld [vmem:[%s1 + $0x174] sm:$0xf]
    %v139 = vld [vmem:[%s1 + $0x178] sm:$0xf]
    %v140 = vld [vmem:[%s1 + $0x17c] sm:$0xf]
    %v141 = vld [vmem:[%s1 + $0x180] sm:$0xf]
    %v142 = vld [vmem:[%s1 + $0x184] sm:$0xf]
    %v143 = vld [vmem:[%s1 + $0x188] sm:$0xf]
    %v144 = vld [vmem:[%s1 + $0x18c] sm:$0xf]
    %v145 = vld [vmem:[%s1 + $0x190] sm:$0xf]
    %v146 = vld [vmem:[%s1 + $0x194] sm:$0xf]
    %v147 = vld [vmem:[%s1 + $0x198] sm:$0xf]
    %v148 = vld [vmem:[%s1 + $0x19c] sm:$0xf]
    %v149 = vld [vmem:[%s1 + $0x1a0] sm:$0xf]
    %v150 = vld [vmem:[%s1 + $0x1a4] sm:$0xf]
    %v151 = vld [vmem:[%s1 + $0x1a8] sm:$0xf]
    %v152 = vld [vmem:[%s1 + $0x1ac] sm:$0xf]
    %v153 = vld [vmem:[%s1 + $0x1b0] sm:$0xf]
    %v154 = vld [vmem:[%s1 + $0x1b4] sm:$0xf]
    %v155 = vld [vmem:[%s1 + $0x1b8] sm:$0xf]
    %v156 = vld [vmem:[%s1 + $0x1bc] sm:$0xf]
    %v157 = vld [vmem:[%s1 + $0x1c0] sm:$0xf]
    %v158 = vld [vmem:[%s1 + $0x1c4] sm:$0xf]
    %v159 = vld [vmem:[%s1 + $0x1c8] sm:$0xf]
    %v160 = vld [vmem:[%s1 + $0x1cc] sm:$0xf]
    %v161 = vld [vmem:[%s1 + $0x1d0] sm:$0xf]
    %v162 = vld [vmem:[%s1 + $0x1d4] sm:$0xf]
    %v163 = vld [vmem:[%s1 + $0x1d8] sm:$0xf]
    %v164 = vld [vmem:[%s1 + $0x1dc] sm:$0xf]
    %v165 = vld [vmem:[%s1 + $0x1e0] sm:$0xf]
    %v166 = vld [vmem:[%s1 + $0x1e4] sm:$0xf]
    %v167 = vld [vmem:[%s1 + $0x1e8] sm:$0xf]
    %v168 = vld [vmem:[%s1 + $0x1ec] sm:$0xf]
    %v169 = vld [vmem:[%s1 + $0x1f0] sm:$0xf]
    %v170 = vld [vmem:[%s1 + $0x1f4] sm:$0xf]
    %v171 = vld [vmem:[%s1 + $0x1f8] sm:$0xf]
    %v172 = vld [vmem:[%s1 + $0x1fc] sm:$0xf]
    %v173 = vld [vmem:[%s1 + $0x200] sm:$0xf]
    %v174 = vld [vmem:[%s1 + $0x204] sm:$0xf]
    %v175 = vld [vmem:[%s1 + $0x208] sm:$0xf]
    %v176 = vld [vmem:[%s1 + $0x20c] sm:$0xf]
    %v177 = vld [vmem:[%s1 + $0x210] sm:$0xf]
    %v178 = vld [vmem:[%s1 + $0x214] sm:$0xf]
    %v179 = vld [vmem:[%s1 + $0x218] sm:$0xf]
    %v180 = vld [vmem:[%s1 + $0x21c] sm:$0xf]
    %v181 = vld [vmem:[%s1 + $0x220] sm:$0xf]
    %v182 = vld [vmem:[%s1 + $0x224] sm:$0xf]
    %v183 = vld [vmem:[%s1 + $0x228] sm:$0xf]
    %v184 = vld [vmem:[%s1 + $0x22c] sm:$0xf]
    %v185 = vld [vmem:[%s1 + $0x230] sm:$0xf]
    %v186 = vld [vmem:[%s1 + $0x234] sm:$0xf]
    %v187 = vld [vmem:[%s1 + $0x238] sm:$0xf]
    %v188 = vld [vmem:[%s1 + $0x23c] sm:$0xf]
    %v189 = vld [vmem:[%s1 + $0x240] sm:$0xf]
    %v190 = vld [vmem:[%s1 + $0x244] sm:$0xf]
    %v191 = vld [vmem:[%s1 + $0x248] sm:$0xf]
    %v192 = vld [vmem:[%s1 + $0x24c] sm:$0xf]
    %v193 = vld [vmem:[%s1 + $0x250] sm:$0xf]
    %v194 = vld [vmem:[%s1 + $0x254] sm:$0xf]
    %v195 = vld [vmem:[%s1 + $0x258] sm:$0xf]
    %v196 = vld [vmem:[%s1 + $0x25c] sm:$0xf]
    %v197 = vld [vmem:[%s1 + $0x260] sm:$0xf]
    %v198 = vld [vmem:[%s1 + $0x264] sm:$0xf]
    %v199 = vld [vmem:[%s1 + $0x268] sm:$0xf]
    %v200 = vld [vmem:[%s1 + $0x26c] sm:$0xf]
    %v201 = vld [vmem:[%s1 + $0x270] sm:$0xf]
    %v202 = vld [vmem:[%s1 + $0x274] sm:$0xf]
    %v203 = vld [vmem:[%s1 + $0x278] sm:$0xf]
    %v204 = vld [vmem:[%s1 + $0x27c] sm:$0xf]
    %v205 = vld [vmem:[%s2] sm:$0x1]
    %v207 = vperm.slane %v205, 0
    %210 = vst [vmem:[#allocation1] ss:$9 sm:$0xff] %v43
    %v211 = vld [vmem:[#allocation1] sm:$0xff]
    %v212 = vld [vmem:[#allocation1 + $0x9] sm:$0xff]
    %v213 = vld [vmem:[#allocation1 + $0x12] sm:$0xff]
    %v214 = vld [vmem:[#allocation1 + $0x1b] sm:$0xff]
    %v215 = vld [vmem:[#allocation1 + $0x24] sm:$0xff]
    %v216 = vld [vmem:[#allocation1 + $0x2d] sm:$0xff]
    %v217 = vld [vmem:[#allocation1 + $0x36] sm:$0xff]
    %v218 = vld [vmem:[#allocation1 + $0x3f] sm:$0xff]
    %220 = vst [vmem:[#allocation1] ss:$9 sm:$0xff] %v44
    %v221 = vld [vmem:[#allocation1] sm:$0xff]
    %v222 = vld [vmem:[#allocation1 + $0x9] sm:$0xff]
    %v393 = vunpack.c.l.b16 %v45
    %v394 = vunpack.c.l.b16 %v46
    %v395 = vunpack.c.l.b16 %v47
    %v396 = vunpack.c.l.b16 %v48
    %v397 = vunpack.c.l.b16 %v49
    %v398 = vunpack.c.l.b16 %v50
    %v399 = vunpack.c.l.b16 %v51
    %v400 = vunpack.c.l.b16 %v52
    %v401 = vunpack.c.l.b16 %v53
    %v402 = vunpack.c.l.b16 %v54
    %v403 = vunpack.c.l.b16 %v55
    %v404 = vunpack.c.l.b16 %v56
    %v405 = vunpack.c.l.b16 %v57
    %v406 = vunpack.c.l.b16 %v58
    %v407 = vunpack.c.l.b16 %v59
    %v408 = vunpack.c.l.b16 %v60
    %v409 = vunpack.c.l.b16 %v61
    %v410 = vunpack.c.l.b16 %v62
    %v411 = vunpack.c.l.b16 %v63
    %v412 = vunpack.c.l.b16 %v64
    %v413 = vunpack.c.l.b16 %v65
    %v414 = vunpack.c.l.b16 %v66
    %v415 = vunpack.c.l.b16 %v67
    %v416 = vunpack.c.l.b16 %v68
    %v417 = vunpack.c.l.b16 %v69
    %v418 = vunpack.c.l.b16 %v70
    %v419 = vunpack.c.l.b16 %v71
    %v420 = vunpack.c.l.b16 %v72
    %v421 = vunpack.c.l.b16 %v73
    %v422 = vunpack.c.l.b16 %v74
    %v423 = vunpack.c.l.b16 %v75
    %v424 = vunpack.c.l.b16 %v76
    %v425 = vunpack.c.l.b16 %v77
    %v426 = vunpack.c.l.b16 %v78
    %v427 = vunpack.c.l.b16 %v79
    %v428 = vunpack.c.l.b16 %v80
    %v429 = vunpack.c.l.b16 %v81
    %v430 = vunpack.c.l.b16 %v82
    %v431 = vunpack.c.l.b16 %v83
    %v432 = vunpack.c.l.b16 %v84
    %v433 = vunpack.c.l.b16 %v85
    %v434 = vunpack.c.l.b16 %v86
    %v435 = vunpack.c.l.b16 %v87
    %v436 = vunpack.c.l.b16 %v88
    %v437 = vunpack.c.l.b16 %v89
    %v438 = vunpack.c.l.b16 %v90
    %v439 = vunpack.c.l.b16 %v91
    %v440 = vunpack.c.l.b16 %v92
    %v441 = vunpack.c.l.b16 %v93
    %v442 = vunpack.c.l.b16 %v94
    %v443 = vunpack.c.l.b16 %v95
    %v444 = vunpack.c.l.b16 %v96
    %v445 = vunpack.c.l.b16 %v97
    %v446 = vunpack.c.l.b16 %v98
    %v447 = vunpack.c.l.b16 %v99
    %v448 = vunpack.c.l.b16 %v100
    %v449 = vunpack.c.l.b16 %v101
    %v450 = vunpack.c.l.b16 %v102
    %v451 = vunpack.c.l.b16 %v103
    %v452 = vunpack.c.l.b16 %v104
    %v453 = vunpack.c.l.b16 %v105
    %v454 = vunpack.c.l.b16 %v106
    %v455 = vunpack.c.l.b16 %v107
    %v456 = vunpack.c.l.b16 %v108
    %v457 = vunpack.c.l.b16 %v109
    %v458 = vunpack.c.l.b16 %v110
    %v459 = vunpack.c.l.b16 %v111
    %v460 = vunpack.c.l.b16 %v112
    %v461 = vunpack.c.l.b16 %v113
    %v462 = vunpack.c.l.b16 %v114
    %v463 = vunpack.c.l.b16 %v115
    %v464 = vunpack.c.l.b16 %v116
    %v465 = vunpack.c.l.b16 %v117
    %v466 = vunpack.c.l.b16 %v118
    %v467 = vunpack.c.l.b16 %v119
    %v468 = vunpack.c.l.b16 %v120
    %v469 = vunpack.c.l.b16 %v121
    %v470 = vunpack.c.l.b16 %v122
    %v471 = vunpack.c.l.b16 %v123
    %v472 = vunpack.c.l.b16 %v124
    %v473 = vunpack.c.l.b16 %v125
    %v474 = vunpack.c.l.b16 %v126
    %v475 = vunpack.c.l.b16 %v127
    %v476 = vunpack.c.l.b16 %v128
    %v477 = vunpack.c.l.b16 %v129
    %v478 = vunpack.c.l.b16 %v130
    %v479 = vunpack.c.l.b16 %v131
    %v480 = vunpack.c.l.b16 %v132
    %v481 = vunpack.c.l.b16 %v133
    %v482 = vunpack.c.l.b16 %v134
    %v483 = vunpack.c.l.b16 %v135
    %v484 = vunpack.c.l.b16 %v136
    %v485 = vunpack.c.l.b16 %v137
    %v486 = vunpack.c.l.b16 %v138
    %v487 = vunpack.c.l.b16 %v139
    %v488 = vunpack.c.l.b16 %v140
    %v489 = vunpack.c.l.b16 %v141
    %v490 = vunpack.c.l.b16 %v142
    %v491 = vunpack.c.l.b16 %v143
    %v492 = vunpack.c.l.b16 %v144
    %v493 = vunpack.c.l.b16 %v145
    %v494 = vunpack.c.l.b16 %v146
    %v495 = vunpack.c.l.b16 %v147
    %v496 = vunpack.c.l.b16 %v148
    %v497 = vunpack.c.l.b16 %v149
    %v498 = vunpack.c.l.b16 %v150
    %v499 = vunpack.c.l.b16 %v151
    %v500 = vunpack.c.l.b16 %v152
    %v501 = vunpack.c.l.b16 %v153
    %v502 = vunpack.c.l.b16 %v154
    %v503 = vunpack.c.l.b16 %v155
    %v504 = vunpack.c.l.b16 %v156
    %v505 = vunpack.c.l.b16 %v157
    %v506 = vunpack.c.l.b16 %v158
    %v507 = vunpack.c.l.b16 %v159
    %v508 = vunpack.c.l.b16 %v160
    %v509 = vunpack.c.l.b16 %v161
    %v510 = vunpack.c.l.b16 %v162
    %v511 = vunpack.c.l.b16 %v163
    %v512 = vunpack.c.l.b16 %v164
    %v513 = vunpack.c.l.b16 %v165
    %v514 = vunpack.c.l.b16 %v166
    %v515 = vunpack.c.l.b16 %v167
    %v516 = vunpack.c.l.b16 %v168
    %v517 = vunpack.c.l.b16 %v169
    %v518 = vunpack.c.l.b16 %v170
    %v519 = vunpack.c.l.b16 %v171
    %v520 = vunpack.c.l.b16 %v172
    %v521 = vunpack.c.l.b16 %v173
    %v522 = vunpack.c.l.b16 %v174
    %v523 = vunpack.c.l.b16 %v175
    %v524 = vunpack.c.l.b16 %v176
    %v525 = vunpack.c.l.b16 %v177
    %v526 = vunpack.c.l.b16 %v178
    %v527 = vunpack.c.l.b16 %v179
    %v528 = vunpack.c.l.b16 %v180
    %v529 = vunpack.c.l.b16 %v181
    %v530 = vunpack.c.l.b16 %v182
    %v531 = vunpack.c.l.b16 %v183
    %v532 = vunpack.c.l.b16 %v184
    %v533 = vunpack.c.l.b16 %v185
    %v534 = vunpack.c.l.b16 %v186
    %v535 = vunpack.c.l.b16 %v187
    %v536 = vunpack.c.l.b16 %v188
    %v537 = vunpack.c.l.b16 %v189
    %v538 = vunpack.c.l.b16 %v190
    %v539 = vunpack.c.l.b16 %v191
    %v540 = vunpack.c.l.b16 %v192
    %v541 = vunpack.c.l.b16 %v193
    %v542 = vunpack.c.l.b16 %v194
    %v543 = vunpack.c.l.b16 %v195
    %v544 = vunpack.c.l.b16 %v196
    %v545 = vunpack.c.l.b16 %v197
    %v546 = vunpack.c.l.b16 %v198
    %v547 = vunpack.c.l.b16 %v199
    %v548 = vunpack.c.l.b16 %v200
    %v549 = vunpack.c.l.b16 %v201
    %v550 = vunpack.c.l.b16 %v202
    %v551 = vunpack.c.l.b16 %v203
    %v552 = vunpack.c.l.b16 %v204
    %v553 = vpack.c.b16 %v394, %v393
    %v554 = vpack.c.b16 %v396, %v395
    %v555 = vpack.c.b16 %v398, %v397
    %v556 = vpack.c.b16 %v400, %v399
    %v557 = vpack.c.b16 %v402, %v401
    %v558 = vpack.c.b16 %v404, %v403
    %v559 = vpack.c.b16 %v406, %v405
    %v560 = vpack.c.b16 %v408, %v407
    %v561 = vpack.c.b16 %v410, %v409
    %v562 = vpack.c.b16 %v412, %v411
    %v563 = vpack.c.b16 %v414, %v413
    %v564 = vpack.c.b16 %v416, %v415
    %v565 = vpack.c.b16 %v418, %v417
    %v566 = vpack.c.b16 %v420, %v419
    %v567 = vpack.c.b16 %v422, %v421
    %v568 = vpack.c.b16 %v424, %v423
    %v569 = vpack.c.b16 %v426, %v425
    %v570 = vpack.c.b16 %v428, %v427
    %v571 = vpack.c.b16 %v430, %v429
    %v572 = vpack.c.b16 %v432, %v431
    %v573 = vpack.c.b16 %v434, %v433
    %v574 = vpack.c.b16 %v436, %v435
    %v575 = vpack.c.b16 %v438, %v437
    %v576 = vpack.c.b16 %v440, %v439
    %v577 = vpack.c.b16 %v442, %v441
    %v578 = vpack.c.b16 %v444, %v443
    %v579 = vpack.c.b16 %v446, %v445
    %v580 = vpack.c.b16 %v448, %v447
    %v581 = vpack.c.b16 %v450, %v449
    %v582 = vpack.c.b16 %v452, %v451
    %v583 = vpack.c.b16 %v454, %v453
    %v584 = vpack.c.b16 %v456, %v455
    %v585 = vpack.c.b16 %v458, %v457
    %v586 = vpack.c.b16 %v460, %v459
    %v587 = vpack.c.b16 %v462, %v461
    %v588 = vpack.c.b16 %v464, %v463
    %v589 = vpack.c.b16 %v466, %v465
    %v590 = vpack.c.b16 %v468, %v467
    %v591 = vpack.c.b16 %v470, %v469
    %v592 = vpack.c.b16 %v472, %v471
    %v593 = vpack.c.b16 %v474, %v473
    %v594 = vpack.c.b16 %v476, %v475
    %v595 = vpack.c.b16 %v478, %v477
    %v596 = vpack.c.b16 %v480, %v479
    %v597 = vpack.c.b16 %v482, %v481
    %v598 = vpack.c.b16 %v484, %v483
    %v599 = vpack.c.b16 %v486, %v485
    %v600 = vpack.c.b16 %v488, %v487
    %v601 = vpack.c.b16 %v490, %v489
    %v602 = vpack.c.b16 %v492, %v491
    %v603 = vpack.c.b16 %v494, %v493
    %v604 = vpack.c.b16 %v496, %v495
    %v605 = vpack.c.b16 %v498, %v497
    %v606 = vpack.c.b16 %v500, %v499
    %v607 = vpack.c.b16 %v502, %v501
    %v608 = vpack.c.b16 %v504, %v503
    %v609 = vpack.c.b16 %v506, %v505
    %v610 = vpack.c.b16 %v508, %v507
    %v611 = vpack.c.b16 %v510, %v509
    %v612 = vpack.c.b16 %v512, %v511
    %v613 = vpack.c.b16 %v514, %v513
    %v614 = vpack.c.b16 %v516, %v515
    %v615 = vpack.c.b16 %v518, %v517
    %v616 = vpack.c.b16 %v520, %v519
    %v617 = vpack.c.b16 %v522, %v521
    %v618 = vpack.c.b16 %v524, %v523
    %v619 = vpack.c.b16 %v526, %v525
    %v620 = vpack.c.b16 %v528, %v527
    %v621 = vpack.c.b16 %v530, %v529
    %v622 = vpack.c.b16 %v532, %v531
    %v623 = vpack.c.b16 %v534, %v533
    %v624 = vpack.c.b16 %v536, %v535
    %v625 = vpack.c.b16 %v538, %v537
    %v626 = vpack.c.b16 %v540, %v539
    %v627 = vpack.c.b16 %v542, %v541
    %v628 = vpack.c.b16 %v544, %v543
    %v629 = vpack.c.b16 %v546, %v545
    %v630 = vpack.c.b16 %v548, %v547
    %v631 = vpack.c.b16 %v550, %v549
    %v632 = vpack.c.b16 %v552, %v551
    %713 = vmatpush.bf16.msra.mxu0 %v560
    %714 = vmatpush.bf16.msra.mxu0 %v559
    %715 = vmatpush.bf16.msra.mxu0 %v558
    %716 = vmatpush.bf16.msra.mxu0 %v557
    %717 = vmatpush.bf16.msra.mxu0 %v556
    %718 = vmatpush.bf16.msra.mxu0 %v555
    %719 = vmatpush.bf16.msra.mxu0 %v554
    %720 = vmatpush.bf16.msra.mxu0 %v553
    %721 = vmatmul.bf16.gmra.mxu0 %v211
    %v722 = vpop.f32.mrf.mxu0
    %v723 = vadd.f32 %v207, %v722
    %v724 = vpop.f32.mrf.mxu0
    %725 = vdwg.mxu0
    %726 = vmatpush.bf16.msra.mxu0 %v568
    %727 = vmatpush.bf16.msra.mxu0 %v567
    %728 = vmatpush.bf16.msra.mxu0 %v566
    %729 = vmatpush.bf16.msra.mxu0 %v565
    %730 = vmatpush.bf16.msra.mxu0 %v564
    %731 = vmatpush.bf16.msra.mxu0 %v563
    %732 = vmatpush.bf16.msra.mxu0 %v562
    %733 = vmatpush.bf16.msra.mxu0 %v561
    %734 = vmatmul.bf16.gmra.mxu0 %v212
    %v735 = vpop.f32.mrf.mxu0
    %v736 = vadd.f32 %v723, %v735
    %v737 = vpop.f32.mrf.mxu0
    %738 = vdwg.mxu0
    %739 = vmatpush.bf16.msra.mxu0 %v576
    %740 = vmatpush.bf16.msra.mxu0 %v575
    %741 = vmatpush.bf16.msra.mxu0 %v574
    %742 = vmatpush.bf16.msra.mxu0 %v573
    %743 = vmatpush.bf16.msra.mxu0 %v572
    %744 = vmatpush.bf16.msra.mxu0 %v571
    %745 = vmatpush.bf16.msra.mxu0 %v570
    %746 = vmatpush.bf16.msra.mxu0 %v569
    %747 = vmatmul.bf16.gmra.mxu0 %v213
    %v748 = vpop.f32.mrf.mxu0
    %v749 = vadd.f32 %v736, %v748
    %v750 = vpop.f32.mrf.mxu0
    %751 = vdwg.mxu0
    %752 = vmatpush.bf16.msra.mxu0 %v584
    %753 = vmatpush.bf16.msra.mxu0 %v583
    %754 = vmatpush.bf16.msra.mxu0 %v582
    %755 = vmatpush.bf16.msra.mxu0 %v581
    %756 = vmatpush.bf16.msra.mxu0 %v580
    %757 = vmatpush.bf16.msra.mxu0 %v579
    %758 = vmatpush.bf16.msra.mxu0 %v578
    %759 = vmatpush.bf16.msra.mxu0 %v577
    %760 = vmatmul.bf16.gmra.mxu0 %v214
    %v761 = vpop.f32.mrf.mxu0
    %v762 = vadd.f32 %v749, %v761
    %v763 = vpop.f32.mrf.mxu0
    %764 = vdwg.mxu0
    %765 = vmatpush.bf16.msra.mxu0 %v592
    %766 = vmatpush.bf16.msra.mxu0 %v591
    %767 = vmatpush.bf16.msra.mxu0 %v590
    %768 = vmatpush.bf16.msra.mxu0 %v589
    %769 = vmatpush.bf16.msra.mxu0 %v588
    %770 = vmatpush.bf16.msra.mxu0 %v587
    %771 = vmatpush.bf16.msra.mxu0 %v586
    %772 = vmatpush.bf16.msra.mxu0 %v585
    %773 = vmatmul.bf16.gmra.mxu0 %v215
    %v774 = vpop.f32.mrf.mxu0
    %v775 = vadd.f32 %v762, %v774
    %v776 = vpop.f32.mrf.mxu0
    %777 = vdwg.mxu0
    %778 = vmatpush.bf16.msra.mxu0 %v600
    %779 = vmatpush.bf16.msra.mxu0 %v599
    %780 = vmatpush.bf16.msra.mxu0 %v598
    %781 = vmatpush.bf16.msra.mxu0 %v597
    %782 = vmatpush.bf16.msra.mxu0 %v596
    %783 = vmatpush.bf16.msra.mxu0 %v595
    %784 = vmatpush.bf16.msra.mxu0 %v594
    %785 = vmatpush.bf16.msra.mxu0 %v593
    %786 = vmatmul.bf16.gmra.mxu0 %v216
    %v787 = vpop.f32.mrf.mxu0
    %v788 = vadd.f32 %v775, %v787
    %v789 = vpop.f32.mrf.mxu0
    %790 = vdwg.mxu0
    %791 = vmatpush.bf16.msra.mxu0 %v608
    %792 = vmatpush.bf16.msra.mxu0 %v607
    %793 = vmatpush.bf16.msra.mxu0 %v606
    %794 = vmatpush.bf16.msra.mxu0 %v605
    %795 = vmatpush.bf16.msra.mxu0 %v604
    %796 = vmatpush.bf16.msra.mxu0 %v603
    %797 = vmatpush.bf16.msra.mxu0 %v602
    %798 = vmatpush.bf16.msra.mxu0 %v601
    %799 = vmatmul.bf16.gmra.mxu0 %v217
    %v800 = vpop.f32.mrf.mxu0
    %v801 = vadd.f32 %v788, %v800
    %v802 = vpop.f32.mrf.mxu0
    %803 = vdwg.mxu0
    %804 = vmatpush.bf16.msra.mxu0 %v616
    %805 = vmatpush.bf16.msra.mxu0 %v615
    %806 = vmatpush.bf16.msra.mxu0 %v614
    %807 = vmatpush.bf16.msra.mxu0 %v613
    %808 = vmatpush.bf16.msra.mxu0 %v612
    %809 = vmatpush.bf16.msra.mxu0 %v611
    %810 = vmatpush.bf16.msra.mxu0 %v610
    %811 = vmatpush.bf16.msra.mxu0 %v609
    %812 = vmatmul.bf16.gmra.mxu0 %v218
    %v813 = vpop.f32.mrf.mxu0
    %v814 = vadd.f32 %v801, %v813
    %v815 = vpop.f32.mrf.mxu0
    %816 = vdwg.mxu0
    %817 = vmatpush.bf16.msra.mxu0 %v624
    %818 = vmatpush.bf16.msra.mxu0 %v623
    %819 = vmatpush.bf16.msra.mxu0 %v622
    %820 = vmatpush.bf16.msra.mxu0 %v621
    %821 = vmatpush.bf16.msra.mxu0 %v620
    %822 = vmatpush.bf16.msra.mxu0 %v619
    %823 = vmatpush.bf16.msra.mxu0 %v618
    %824 = vmatpush.bf16.msra.mxu0 %v617
    %825 = vmatmul.bf16.gmra.mxu0 %v221
    %v826 = vpop.f32.mrf.mxu0
    %v827 = vadd.f32 %v814, %v826
    %v828 = vpop.f32.mrf.mxu0
    %829 = vdwg.mxu0
    %830 = vmatpush.bf16.msra.mxu0 %v632
    %831 = vmatpush.bf16.msra.mxu0 %v631
    %832 = vmatpush.bf16.msra.mxu0 %v630
    %833 = vmatpush.bf16.msra.mxu0 %v629
    %834 = vmatpush.bf16.msra.mxu0 %v628
    %835 = vmatpush.bf16.msra.mxu0 %v627
    %836 = vmatpush.bf16.msra.mxu0 %v626
    %837 = vmatpush.bf16.msra.mxu0 %v625
    %838 = vmatmul.bf16.gmra.mxu0 %v222
    %v839 = vpop.f32.mrf.mxu0
    %v840 = vadd.f32 %v827, %v839
    %v841 = vpop.f32.mrf.mxu0
    %842 = vdwg.mxu0
    %vm843 = vcmp.ge.f32.partialorder %v840, 0.0
    %s844 = sld [smem:[#allocation2]]
    %v845 = vstv %s844
    %v846 = vmul.f32 %v845, %v840
    %v847 = vsel %vm843, %v840, %v846
    %v848 = vpack.c.bf16 %v847, %v847
    %v849 = vld [vmem:[%s3] sm:$0xf]
    %v850 = vld [vmem:[%s3 + $0x4] sm:$0xf]
    %v851 = vld [vmem:[%s3 + $0x8] sm:$0xf]
    %v852 = vld [vmem:[%s3 + $0xc] sm:$0xf]
    %v853 = vld [vmem:[%s3 + $0x10] sm:$0xf]
    %v854 = vld [vmem:[%s3 + $0x14] sm:$0xf]
    %v855 = vld [vmem:[%s3 + $0x18] sm:$0xf]
    %v856 = vld [vmem:[%s3 + $0x1c] sm:$0xf]
    %v857 = vld [vmem:[%s3 + $0x20] sm:$0xf]
    %v858 = vld [vmem:[%s3 + $0x24] sm:$0xf]
    %v859 = vld [vmem:[%s3 + $0x28] sm:$0xf]
    %v860 = vld [vmem:[%s3 + $0x2c] sm:$0xf]
    %v861 = vld [vmem:[%s3 + $0x30] sm:$0xf]
    %v862 = vld [vmem:[%s3 + $0x34] sm:$0xf]
    %v863 = vld [vmem:[%s3 + $0x38] sm:$0xf]
    %v864 = vld [vmem:[%s3 + $0x3c] sm:$0xf]
    %v865 = vld [vmem:[%s4] sm:$0x1]
    %v867 = vperm.slane %v865, 0
    %v885 = vunpack.c.l.b16 %v849
    %v886 = vunpack.c.l.b16 %v850
    %v887 = vunpack.c.l.b16 %v851
    %v888 = vunpack.c.l.b16 %v852
    %v889 = vunpack.c.l.b16 %v853
    %v890 = vunpack.c.l.b16 %v854
    %v891 = vunpack.c.l.b16 %v855
    %v892 = vunpack.c.l.b16 %v856
    %v893 = vunpack.c.l.b16 %v857
    %v894 = vunpack.c.l.b16 %v858
    %v895 = vunpack.c.l.b16 %v859
    %v896 = vunpack.c.l.b16 %v860
    %v897 = vunpack.c.l.b16 %v861
    %v898 = vunpack.c.l.b16 %v862
    %v899 = vunpack.c.l.b16 %v863
    %v900 = vunpack.c.l.b16 %v864
    %v901 = vpack.c.b16 %v886, %v885
    %v902 = vpack.c.b16 %v888, %v887
    %v903 = vpack.c.b16 %v890, %v889
    %v904 = vpack.c.b16 %v892, %v891
    %v905 = vpack.c.b16 %v894, %v893
    %v906 = vpack.c.b16 %v896, %v895
    %v907 = vpack.c.b16 %v898, %v897
    %v908 = vpack.c.b16 %v900, %v899
    %917 = vmatpush.bf16.msra.mxu0 %v908
    %918 = vmatpush.bf16.msra.mxu0 %v907
    %919 = vmatpush.bf16.msra.mxu0 %v906
    %920 = vmatpush.bf16.msra.mxu0 %v905
    %921 = vmatpush.bf16.msra.mxu0 %v904
    %922 = vmatpush.bf16.msra.mxu0 %v903
    %923 = vmatpush.bf16.msra.mxu0 %v902
    %924 = vmatpush.bf16.msra.mxu0 %v901
    %925 = vmatmul.bf16.gmra.mxu0 %v848
    %v926 = vpop.f32.mrf.mxu0
    %v927 = vadd.f32 %v867, %v926
    %v928 = vpop.f32.mrf.mxu0
    %929 = vdwg.mxu0
    %vm930 = vcmp.ge.f32.partialorder %v927, 0.0
    %s931 = sld [smem:[#allocation2 + $0x1]]
    %v932 = vstv %s931
    %v933 = vmul.f32 %v932, %v927
    %v934 = vsel %vm930, %v927, %v933
    %v935 = vpack.c.bf16 %v934, %v934
    %v936 = vld [vmem:[%s5] sm:$0xf]
    %v937 = vld [vmem:[%s5 + $0x4] sm:$0xf]
    %v938 = vld [vmem:[%s5 + $0x8] sm:$0xf]
    %v939 = vld [vmem:[%s5 + $0xc] sm:$0xf]
    %v940 = vld [vmem:[%s5 + $0x10] sm:$0xf]
    %v941 = vld [vmem:[%s5 + $0x14] sm:$0xf]
    %v942 = vld [vmem:[%s5 + $0x18] sm:$0xf]
    %v943 = vld [vmem:[%s5 + $0x1c] sm:$0xf]
    %v944 = vld [vmem:[%s5 + $0x20] sm:$0xf]
    %v945 = vld [vmem:[%s5 + $0x24] sm:$0xf]
    %v946 = vld [vmem:[%s5 + $0x28] sm:$0xf]
    %v947 = vld [vmem:[%s5 + $0x2c] sm:$0xf]
    %v948 = vld [vmem:[%s5 + $0x30] sm:$0xf]
    %v949 = vld [vmem:[%s5 + $0x34] sm:$0xf]
    %v950 = vld [vmem:[%s5 + $0x38] sm:$0xf]
    %v951 = vld [vmem:[%s5 + $0x3c] sm:$0xf]
    %v952 = vld [vmem:[%s6] sm:$0x1]
    %v954 = vperm.slane %v952, 0
    %v972 = vunpack.c.l.b16 %v936
    %v973 = vunpack.c.l.b16 %v937
    %v974 = vunpack.c.l.b16 %v938
    %v975 = vunpack.c.l.b16 %v939
    %v976 = vunpack.c.l.b16 %v940
    %v977 = vunpack.c.l.b16 %v941
    %v978 = vunpack.c.l.b16 %v942
    %v979 = vunpack.c.l.b16 %v943
    %v980 = vunpack.c.l.b16 %v944
    %v981 = vunpack.c.l.b16 %v945
    %v982 = vunpack.c.l.b16 %v946
    %v983 = vunpack.c.l.b16 %v947
    %v984 = vunpack.c.l.b16 %v948
    %v985 = vunpack.c.l.b16 %v949
    %v986 = vunpack.c.l.b16 %v950
    %v987 = vunpack.c.l.b16 %v951
    %v988 = vpack.c.b16 %v973, %v972
    %v989 = vpack.c.b16 %v975, %v974
    %v990 = vpack.c.b16 %v977, %v976
    %v991 = vpack.c.b16 %v979, %v978
    %v992 = vpack.c.b16 %v981, %v980
    %v993 = vpack.c.b16 %v983, %v982
    %v994 = vpack.c.b16 %v985, %v984
    %v995 = vpack.c.b16 %v987, %v986
    %1004 = vmatpush.bf16.msra.mxu0 %v995
    %1005 = vmatpush.bf16.msra.mxu0 %v994
    %1006 = vmatpush.bf16.msra.mxu0 %v993
    %1007 = vmatpush.bf16.msra.mxu0 %v992
    %1008 = vmatpush.bf16.msra.mxu0 %v991
    %1009 = vmatpush.bf16.msra.mxu0 %v990
    %1010 = vmatpush.bf16.msra.mxu0 %v989
    %1011 = vmatpush.bf16.msra.mxu0 %v988
    %1012 = vmatmul.bf16.gmra.mxu0 %v935
    %v1013 = vpop.f32.mrf.mxu0
    %v1014 = vadd.f32 %v954, %v1013
    %v1015 = vpop.f32.mrf.mxu0
    %1016 = vdwg.mxu0
    %vm1017 = vcmask 336896
    %1018 = vst.msk [vmem:[#allocation5] sm:$0x3] %vm1017, %v1014
    // Predicated region
    $region38: #{net_forward.16} parent=1 // pred_check
      _
    $region39: #{net_forward.16} parent=1 // pred_check_branch
      %1020 = sbr.rel (0) target = $region41
    $region40: #{net_forward.16} parent=1 // pred_region
      %1022 = vsyncadd [#allocation3], 0
      %s1024 = sshll.u32 [#allocation5], 4
      %s1025 = int_to_ptr.vmem [resolvable:$true] %s1024
      %s1026 = sshll.u32 %s8, 4
      %s1027 = int_to_ptr.hbm [resolvable:$true] %s1026
      %1029 = dma.vmem_to_hbm [thread:$0]  %s1025, 32, %s1027, [#allocation3]
    $region41: #{net_forward.16} parent=1 // pred_fallthru
      _
    // Predicated region
    $region42: #{net_forward.16} parent=1 // pred_check
      _
    $region43: #{net_forward.16} parent=1 // pred_check_branch
      %1031 = sbr.rel (0) target = $region45
    $region44: #{net_forward.16} parent=1 // pred_region
      %1033 = dma.done [#allocation3], 32
    $region45: #{net_forward.16} parent=1 // pred_fallthru
      _
    %1034 = vsyncpa [#allocation3], 1
    %1035 = vsyncpa [#allocation4], 1

</llo_original>
